<compile_context>
chip_gen: v5e
topology: v5e:2x2
jax: 0.10.0
libtpu: 0.0.40
codegen_flags: <defaults>
</compile_context>

<pallas_src>
import functools
import numpy as np
import jax
import jax.numpy as jnp
from jax.experimental import pallas as pl
from jax.experimental.pallas import tpu as pltpu

# ----------------- config (small stand-in for model_config) -----------------
NUM_GENES    = 256          # original forward hard-codes 19264; kept small here
PAD_TOKEN_ID = NUM_GENES    # model_config['pad_token_id'] (extra pos-emb row)
HIDDEN       = 128          # model_config['encoder']['hidden_dim']
FFN          = 256
N_HEADS      = 4
HEAD_DIM     = HIDDEN // N_HEADS
N_LAYERS     = 2
N_CLASS      = 12
NC_PAD       = 128          # lane-dense padded class dim (sliced to N_CLASS in wrapper)
BN_EPS       = 1e-6
LN_EPS       = 1e-5
SEQ_BUCKET   = 128          # seq padded to a multiple of this (also the KV / pool tile)


def _pick_tm(m, cap=512):
    # bigger M tiles amortize the ~0.35us/step overhead for the memory-bound kernels
    for t in (1024, 512, 256, 128, 64, 32, 16, 8):
        if t <= cap and m % t == 0:
            return t
    return m


# ----------------------------- Pallas kernels -------------------------------
def _embed_kernel(x_ref, pos_ref, w_ref, b_ref, o_ref):
    # token_emb ~ Linear(1,H): outer-product broadcast on the VPU, fused with pos-emb add.
    o_ref[...] = (x_ref[...] * w_ref[...] + b_ref[...] + pos_ref[...]).astype(o_ref.dtype)


def _embed(x, pos, w_tok, b_tok, tm):
    M, H = pos.shape
    return pl.pallas_call(
        _embed_kernel,
        grid=(M // tm,),
        in_specs=[
            pl.BlockSpec((tm, 1), lambda i: (i, 0)),
            pl.BlockSpec((tm, H), lambda i: (i, 0)),
            pl.BlockSpec((1, H), lambda i: (0, 0)),
            pl.BlockSpec((1, H), lambda i: (0, 0)),
        ],
        out_specs=pl.BlockSpec((tm, H), lambda i: (i, 0)),
        out_shape=jax.ShapeDtypeStruct((M, H), jnp.bfloat16),
        compiler_params=pltpu.CompilerParams(dimension_semantics=("parallel",)),
    )(x, pos, w_tok, b_tok)


def _attn_kernel(hq_ref, hkv_ref, bias_ref, wqkv_ref, bqkv_ref, wo_ref, bo_ref,
                 g_ref, beta_ref, o_ref, q_sc, m_sc, l_sc, acc_sc,
                 *, n_heads, head_dim, scale, ln_eps):
    kv_i = pl.program_id(1)
    H = n_heads * head_dim

    @pl.when(kv_i == 0)
    def _():
        # Q projection once per batch row (full-K (S,H)@(H,H) matmul), scale folded in.
        x = hq_ref[0]                                                # (S, H) bf16
        q = jnp.dot(x, wqkv_ref[:, :H], preferred_element_type=jnp.float32)
        q_sc[...] = ((q + bqkv_ref[:, :H]) * scale).astype(jnp.bfloat16)
        m_sc[...] = jnp.full_like(m_sc, -jnp.inf)
        l_sc[...] = jnp.zeros_like(l_sc)
        acc_sc[...] = jnp.zeros_like(acc_sc)

    # K / V for this KV tile, computed on the fly (no Q/K/V HBM round trip).
    ht = hkv_ref[0]                                                  # (TK, H) bf16
    k = (jnp.dot(ht, wqkv_ref[:, H:2 * H], preferred_element_type=jnp.float32)
         + bqkv_ref[:, H:2 * H]).astype(jnp.bfloat16)
    v = (jnp.dot(ht, wqkv_ref[:, 2 * H:], preferred_element_type=jnp.float32)
         + bqkv_ref[:, 2 * H:]).astype(jnp.bfloat16)
    bias = bias_ref[0]                                               # (1, TK) f32

    for h in range(n_heads):                                         # heads unrolled at trace time
        hs = slice(h * head_dim, (h + 1) * head_dim)
        qh = q_sc[:, hs]                                             # (S, DH) bf16
        # trans-B contraction on the last dims (no in-kernel transpose of K).
        s = jax.lax.dot_general(qh, k[:, hs], (((1,), (1,)), ((), ())),
                                preferred_element_type=jnp.float32)  # (S, TK) f32
        s = s + bias
        m_prev = m_sc[h]                                             # (S, 1)
        m_new = jnp.maximum(m_prev, jnp.max(s, axis=-1, keepdims=True))
        alpha = jnp.exp(m_prev - m_new)
        p = jnp.exp((s - m_new).astype(jnp.bfloat16))                # bf16 exp (EUP), bf16 for MXU
        l_sc[h] = alpha * l_sc[h] + jnp.sum(p.astype(jnp.float32), axis=-1, keepdims=True)
        acc_sc[:, hs] = alpha * acc_sc[:, hs] + jnp.dot(p, v[:, hs],
                                                        preferred_element_type=jnp.float32)
        m_sc[h] = m_new

    @pl.when(kv_i == pl.num_programs(1) - 1)
    def _():
        # normalize per head into the (now free) bf16 q scratch, then ONE full-K
        # (S,H)@(H,H) out-projection, fused with residual + LayerNorm1 epilogue.
        for h in range(n_heads):
            hs = slice(h * head_dim, (h + 1) * head_dim)
            inv_l = pl.reciprocal(l_sc[h], approx=True)
            q_sc[:, hs] = (acc_sc[:, hs] * inv_l).astype(jnp.bfloat16)
        proj = jnp.dot(q_sc[...], wo_ref[...], preferred_element_type=jnp.float32)
        x = hq_ref[0].astype(jnp.float32) + proj + bo_ref[...]
        mu = jnp.mean(x, axis=-1, keepdims=True)
        var = jnp.mean(jnp.square(x - mu), axis=-1, keepdims=True)
        o_ref[0] = ((x - mu) * jax.lax.rsqrt(var + ln_eps) * g_ref[...]
                    + beta_ref[...]).astype(o_ref.dtype)


def _attention_block(h, mask_bias, w_qkv, b_qkv, wo, bo, g, beta, tk):
    B, S, H = h.shape
    nkv = S // tk
    return pl.pallas_call(
        functools.partial(_attn_kernel, n_heads=N_HEADS, head_dim=HEAD_DIM,
                          scale=1.0 / float(np.sqrt(HEAD_DIM)), ln_eps=LN_EPS),
        grid=(B, nkv),
        in_specs=[
            pl.BlockSpec((1, S, H), lambda b, k: (b, 0, 0)),          # h: Q source + residual
            pl.BlockSpec((1, tk, H), lambda b, k: (b, k, 0)),         # h: K/V source tile
            pl.BlockSpec((1, 1, tk), lambda b, k: (b, 0, k)),         # key-padding bias tile
            pl.BlockSpec((H, 3 * H), lambda b, k: (0, 0)),            # fused Wq|Wk|Wv
            pl.BlockSpec((1, 3 * H), lambda b, k: (0, 0)),            # fused bias
            pl.BlockSpec((H, H), lambda b, k: (0, 0)),                # wo
            pl.BlockSpec((1, H), lambda b, k: (0, 0)),                # bo
            pl.BlockSpec((1, H), lambda b, k: (0, 0)),                # ln1 gamma
            pl.BlockSpec((1, H), lambda b, k: (0, 0)),                # ln1 beta
        ],
        out_specs=pl.BlockSpec((1, S, H), lambda b, k: (b, 0, 0)),
        out_shape=jax.ShapeDtypeStruct((B, S, H), jnp.bfloat16),
        scratch_shapes=[
            pltpu.VMEM((S, H), jnp.bfloat16),                         # Q (scale folded in)
            pltpu.VMEM((N_HEADS, S, 1), jnp.float32),                 # running max
            pltpu.VMEM((N_HEADS, S, 1), jnp.float32),                 # running sum
            pltpu.VMEM((S, H), jnp.float32),                          # lane-concatenated acc
        ],
        compiler_params=pltpu.CompilerParams(
            dimension_semantics=("parallel", "arbitrary"),
            vmem_limit_bytes=64 * 1024 * 1024),
    )(h, h, mask_bias, w_qkv, b_qkv, wo, bo, g, beta)


def _ffn_kernel(h_ref, w1_ref, b1_ref, w2_ref, b2_ref, g_ref, beta_ref, o_ref, *, ln_eps):
    x = h_ref[...]                                                   # (TM, H) bf16
    t = jnp.dot(x, w1_ref[...], preferred_element_type=jnp.float32) + b1_ref[...]
    t = jnp.maximum(t, 0.0).astype(jnp.bfloat16)                     # bf16 intermediate in VMEM
    y = jnp.dot(t, w2_ref[...], preferred_element_type=jnp.float32) + b2_ref[...]
    r = x.astype(jnp.float32) + y                                    # residual (f32)
    mu = jnp.mean(r, axis=-1, keepdims=True)
    var = jnp.mean(jnp.square(r - mu), axis=-1, keepdims=True)
    o_ref[...] = ((r - mu) * jax.lax.rsqrt(var + ln_eps) * g_ref[...]
                  + beta_ref[...]).astype(o_ref.dtype)


def _ffn_block(h, w1, b1, w2, b2, g, beta, tm):
    M, H = h.shape
    F = w1.shape[1]
    return pl.pallas_call(
        functools.partial(_ffn_kernel, ln_eps=LN_EPS),
        grid=(M // tm,),
        in_specs=[
            pl.BlockSpec((tm, H), lambda i: (i, 0)),
            pl.BlockSpec((H, F), lambda i: (0, 0)),
            pl.BlockSpec((1, F), lambda i: (0, 0)),
            pl.BlockSpec((F, H), lambda i: (0, 0)),
            pl.BlockSpec((1, H), lambda i: (0, 0)),
            pl.BlockSpec((1, H), lambda i: (0, 0)),
            pl.BlockSpec((1, H), lambda i: (0, 0)),
        ],
        out_specs=pl.BlockSpec((tm, H), lambda i: (i, 0)),
        out_shape=jax.ShapeDtypeStruct((M, H), jnp.bfloat16),
        compiler_params=pltpu.CompilerParams(dimension_semantics=("parallel",)),
    )(h, w1, b1, w2, b2, g, beta)


def _ffn_pool_head_kernel(h_ref, pbias_ref, w1_ref, b1_ref, w2_ref, b2_ref, g_ref, beta_ref,
                          mean_ref, var_ref, fw1_ref, fb1_ref, fw2_ref, fb2_ref,
                          o_ref, mx_sc, *, ln_eps, bn_eps):
    s_i = pl.program_id(0)
    B, TS, H = h_ref.shape

    # --- last layer FFN + residual + LayerNorm2 on this S tile (all batches) ---
    x = h_ref[...].reshape(B * TS, H)                                # bf16
    t = jnp.dot(x, w1_ref[...], preferred_element_type=jnp.float32) + b1_ref[...]
    t = jnp.maximum(t, 0.0).astype(jnp.bfloat16)
    y = jnp.dot(t, w2_ref[...], preferred_element_type=jnp.float32) + b2_ref[...]
    r = x.astype(jnp.float32) + y
    mu = jnp.mean(r, axis=-1, keepdims=True)
    var = jnp.mean(jnp.square(r - mu), axis=-1, keepdims=True)
    z = (r - mu) * jax.lax.rsqrt(var + ln_eps) * g_ref[...] + beta_ref[...]

    # --- torch.max(logits, dim=1): running max over seq tiles; layout-padding rows
    #     (>= max_num) are pushed to -3e38 via pbias; per-sample padding rows are
    #     included (matches PyTorch, which sees exactly max_num positions/sample). ---
    z = z.reshape(B, TS, H) + pbias_ref[...]
    tile_max = jnp.max(z, axis=1)                                    # (B, H)

    @pl.when(s_i == 0)
    def _(): mx_sc[...] = tile_max

    @pl.when(s_i > 0)
    def _(): mx_sc[...] = jnp.maximum(mx_sc[...], tile_max)

    @pl.when(s_i == pl.num_programs(0) - 1)
    def _():
        # BatchNorm1d(affine=False, eps=1e-6, eval) + fc1 -> ReLU -> fc2 (lane-padded classes).
        pooled = (mx_sc[...] - mean_ref[...]) * jax.lax.rsqrt(var_ref[...] + bn_eps)
        zz = jnp.dot(pooled.astype(jnp.bfloat16), fw1_ref[...],
                     preferred_element_type=jnp.float32) + fb1_ref[...]
        zz = jnp.maximum(zz, 0.0)
        o_ref[...] = jnp.dot(zz.astype(jnp.bfloat16), fw2_ref[...],
                             preferred_element_type=jnp.float32) + fb2_ref[...]


def _ffn_pool_head(h, pool_bias, lyr, params):
    B, S, H = h.shape
    TS = SEQ_BUCKET
    F = lyr["w1"].shape[1]
    n1 = params["fc_w1"].shape[1]
    n2 = params["fc_w2"].shape[1]
    return pl.pallas_call(
        functools.partial(_ffn_pool_head_kernel, ln_eps=LN_EPS, bn_eps=BN_EPS),
        grid=(S // TS,),
        in_specs=[
            pl.BlockSpec((B, TS, H), lambda s: (0, s, 0)),
            pl.BlockSpec((1, TS, 1), lambda s: (0, s, 0)),
            pl.BlockSpec((H, F), lambda s: (0, 0)),
            pl.BlockSpec((1, F), lambda s: (0, 0)),
            pl.BlockSpec((F, H), lambda s: (0, 0)),
            pl.BlockSpec((1, H), lambda s: (0, 0)),
            pl.BlockSpec((1, H), lambda s: (0, 0)),
            pl.BlockSpec((1, H), lambda s: (0, 0)),
            pl.BlockSpec((1, H), lambda s: (0, 0)),
            pl.BlockSpec((1, H), lambda s: (0, 0)),
            pl.BlockSpec((H, n1), lambda s: (0, 0)),
            pl.BlockSpec((1, n1), lambda s: (0, 0)),
            pl.BlockSpec((n1, n2), lambda s: (0, 0)),
            pl.BlockSpec((1, n2), lambda s: (0, 0)),
        ],
        out_specs=pl.BlockSpec((B, n2), lambda s: (0, 0)),
        out_shape=jax.ShapeDtypeStruct((B, n2), jnp.float32),
        scratch_shapes=[pltpu.VMEM((B, H), jnp.float32)],
        compiler_params=pltpu.CompilerParams(
            dimension_semantics=("arbitrary",),
            vmem_limit_bytes=64 * 1024 * 1024),
    )(h, pool_bias, lyr["w1"], lyr["b1"], lyr["w2"], lyr["b2"], lyr["ln2_g"], lyr["ln2_b"],
      params["bn_mean"], params["bn_var"],
      params["fc_w1"], params["fc_b1"], params["fc_w2"], params["fc_b2"])


# -------------------------------- glue --------------------------------------
def gather_data(x_np, pad_token_id):
    """NumPy reimplementation of scFoundation gatherData (host-side: the output seq length
    is data dependent).  Nonzero entries are gathered in descending gene-index order; padded
    slots get value/position pad_token_id and padding_mask=True.  The sequence is padded to a
    SEQ_BUCKET multiple so only the bucket (not max_num itself) determines kernel shapes."""
    # TODO(synk): gatherData has a data-dependent output shape, so it stays host-side glue.
    B, G = x_np.shape
    mask = x_np > 0
    counts = mask.sum(axis=1)
    max_num = int(counts.max())
    s_pad = max(SEQ_BUCKET, int(np.ceil(max_num / SEQ_BUCKET)) * SEQ_BUCKET)
    new_data = np.full((B, s_pad), float(pad_token_id), dtype=np.float32)
    pos_ids = np.full((B, s_pad), pad_token_id, dtype=np.int32)
    padding = np.ones((B, s_pad), dtype=bool)
    for b in range(B):
        idx = np.nonzero(mask[b])[0][::-1]          # descending gene index
        n = idx.shape[0]
        new_data[b, :n] = x_np[b, idx]
        pos_ids[b, :n] = idx
        padding[b, :n] = False
    return new_data, pos_ids, padding, max_num


def init_params(key):
    def dense_bf16(k, fi, fo):
        return (0.02 * jax.random.normal(k, (fi, fo), jnp.float32)).astype(jnp.bfloat16)

    keys = iter(jax.random.split(key, 64))
    w2_raw = 0.02 * jax.random.normal(next(keys), (256, N_CLASS), jnp.float32)
    fc_w2 = jnp.zeros((256, NC_PAD), jnp.float32).at[:, :N_CLASS].set(w2_raw).astype(jnp.bfloat16)
    params = {
        "w_tok": 0.02 * jax.random.normal(next(keys), (1, HIDDEN), jnp.float32),
        "b_tok": jnp.zeros((1, HIDDEN), jnp.float32),
        "pos_table": 0.02 * jax.random.normal(next(keys), (NUM_GENES + 1, HIDDEN), jnp.float32),
        "bn_mean": jnp.zeros((1, HIDDEN), jnp.float32),   # BatchNorm1d running stats (eval)
        "bn_var": jnp.ones((1, HIDDEN), jnp.float32),
        "fc_w1": dense_bf16(next(keys), HIDDEN, 256),
        "fc_b1": jnp.zeros((1, 256), jnp.float32),
        "fc_w2": fc_w2,                                    # lane-padded to NC_PAD
        "fc_b2": jnp.zeros((1, NC_PAD), jnp.float32),
        "layers": [],
    }
    for _ in range(N_LAYERS):
        params["layers"].append({
            "w_qkv": dense_bf16(next(keys), HIDDEN, 3 * HIDDEN),   # fused Wq|Wk|Wv
            "b_qkv": jnp.zeros((1, 3 * HIDDEN), jnp.float32),
            "wo": dense_bf16(next(keys), HIDDEN, HIDDEN),
            "bo": jnp.zeros((1, HIDDEN), jnp.float32),
            "ln1_g": jnp.ones((1, HIDDEN), jnp.float32),
            "ln1_b": jnp.zeros((1, HIDDEN), jnp.float32),
            "w1": dense_bf16(next(keys), HIDDEN, FFN),
            "b1": jnp.zeros((1, FFN), jnp.float32),
            "w2": dense_bf16(next(keys), FFN, HIDDEN),
            "b2": jnp.zeros((1, HIDDEN), jnp.float32),
            "ln2_g": jnp.ones((1, HIDDEN), jnp.float32),
            "ln2_b": jnp.zeros((1, HIDDEN), jnp.float32),
        })
    return params


@jax.jit
def _forward_device(params, x_g, pos_ids, pad_mask, seq_valid):
    B, S = x_g.shape
    M = B * S
    TM = _pick_tm(M)
    TK = SEQ_BUCKET

    mask_bias = jnp.where(pad_mask[:, None, :], -1e9, 0.0).astype(jnp.float32)   # (B,1,S)
    # TODO(synk): pos_emb row-gather stays an XLA jnp.take (an in-kernel gather over the full
    #             table would need either one tiny grid step per row or a dynamic-gather op).
    pos = jnp.take(params["pos_table"], pos_ids, axis=0).reshape(M, HIDDEN)

    # token_emb + pos_emb fused (VPU broadcast, no K=1 MXU matmul); bf16 activations.
    h = _embed(x_g.reshape(M, 1), pos, params["w_tok"], params["b_tok"], TM)

    # only layout-padding rows (>= max_num) are excluded from the max (matches PyTorch,
    # which sees exactly max_num positions per sample).
    pool_bias = jnp.where(jnp.arange(S, dtype=jnp.int32)[None, :, None] >= seq_valid,
                          -3e38, 0.0).astype(jnp.float32)                         # (1,S,1)

    logits_pad = None
    n_layers = len(params["layers"])
    for li, lyr in enumerate(params["layers"]):
        h = _attention_block(h.reshape(B, S, HIDDEN), mask_bias,
                             lyr["w_qkv"], lyr["b_qkv"], lyr["wo"], lyr["bo"],
                             lyr["ln1_g"], lyr["ln1_b"], TK)                      # (B,S,H) bf16
        if li < n_layers - 1:
            h = _ffn_block(h.reshape(M, HIDDEN), lyr["w1"], lyr["b1"], lyr["w2"], lyr["b2"],
                           lyr["ln2_g"], lyr["ln2_b"], TM)                        # (M,H) bf16
        else:
            # last layer: FFN + max-pool + BatchNorm + fc head fused; (B,S,H) never hits HBM.
            logits_pad = _ffn_pool_head(h, pool_bias, lyr, params)                # (B,NC_PAD)
    return logits_pad[:, :N_CLASS]


def forward(params, x_np):
    x_g, pos_ids, pad_mask, max_num = gather_data(x_np, PAD_TOKEN_ID)
    return _forward_device(params,
                           jnp.asarray(x_g, jnp.float32),
                           jnp.asarray(pos_ids, jnp.int32),
                           jnp.asarray(pad_mask),
                           jnp.int32(max_num))


if __name__ == "__main__":
    key = jax.random.PRNGKey(0)
    pkey, xkey = jax.random.split(key)
    params = init_params(pkey)

    B = 2
    x = jax.random.normal(xkey, (B, NUM_GENES), jnp.float32)   # ~half entries > 0
    x_np = np.asarray(x, dtype=np.float32)

    logits = forward(params, x_np)
    jax.block_until_ready(logits)
    assert logits.shape == (B, N_CLASS)
    assert bool(jnp.all(jnp.isfinite(logits)))
    print("KERNEL_OK")
</pallas_src>

<mosaic_0001>
module attributes {stable_mosaic.version = 11 : i64} {
  func.func @_embed_kernel(%arg0: i32, %arg1: memref<256x1xf32, #tpu.memory_space<vmem>>, %arg2: memref<256x128xf32, #tpu.memory_space<vmem>>, %arg3: memref<1x128xf32, #tpu.memory_space<vmem>>, %arg4: memref<1x128xf32, #tpu.memory_space<vmem>>, %arg5: memref<256x128xbf16, #tpu.memory_space<vmem>>) attributes {dimension_semantics = [#tpu.dimension_semantics<parallel>], iteration_bounds = array<i64: 1>, scalar_prefetch = 0 : i64, scratch_operands = 0 : i64, tpu.core_type = #tpu.core_type<tc>, window_params = [{transform_indices = @transform_0, window_bounds = array<i64: 256, 1>}, {transform_indices = @transform_1, window_bounds = array<i64: 256, 128>}, {pipeline_mode = #tpu.pipeline_mode<synchronous>, transform_indices = @transform_2, window_bounds = array<i64: 1, 128>}, {pipeline_mode = #tpu.pipeline_mode<synchronous>, transform_indices = @transform_3, window_bounds = array<i64: 1, 128>}, {transform_indices = @transform_4, window_bounds = array<i64: 256, 128>}]} {
    %c0 = arith.constant 0 : index
    %c0_0 = arith.constant 0 : index
    %0 = vector.load %arg1[%c0, %c0_0] : memref<256x1xf32, #tpu.memory_space<vmem>>, vector<256x1xf32>
    %c0_1 = arith.constant 0 : index
    %c0_2 = arith.constant 0 : index
    %1 = vector.load %arg3[%c0_1, %c0_2] : memref<1x128xf32, #tpu.memory_space<vmem>>, vector<1x128xf32>
    %2 = vector.broadcast %0 : vector<256x1xf32> to vector<256x128xf32>
    %3 = vector.broadcast %1 : vector<1x128xf32> to vector<256x128xf32>
    %4 = arith.mulf %2, %3 : vector<256x128xf32>
    %c0_3 = arith.constant 0 : index
    %c0_4 = arith.constant 0 : index
    %5 = vector.load %arg4[%c0_3, %c0_4] : memref<1x128xf32, #tpu.memory_space<vmem>>, vector<1x128xf32>
    %6 = vector.broadcast %5 : vector<1x128xf32> to vector<256x128xf32>
    %7 = arith.addf %4, %6 : vector<256x128xf32>
    %c0_5 = arith.constant 0 : index
    %c0_6 = arith.constant 0 : index
    %8 = vector.load %arg2[%c0_5, %c0_6] : memref<256x128xf32, #tpu.memory_space<vmem>>, vector<256x128xf32>
    %9 = arith.addf %7, %8 : vector<256x128xf32>
    %10 = arith.truncf %9 : vector<256x128xf32> to vector<256x128xbf16>
    %c0_7 = arith.constant 0 : index
    %c0_8 = arith.constant 0 : index
    %11 = vector.load %arg5[%c0_7, %c0_8] : memref<256x128xbf16, #tpu.memory_space<vmem>>, vector<256x128xbf16>
    tpu.vector_store %arg5[%c0_7, %c0_8], %10 {strides = array<i32>} : memref<256x128xbf16, #tpu.memory_space<vmem>>, vector<256x128xbf16>,
    return
  }
  func.func @transform_0(%arg0: i32) -> (i32, i32) {
    %c0_i32 = arith.constant 0 : i32
    %c0_i32_0 = arith.constant 0 : i32
    return %arg0, %c0_i32 : i32, i32
  }
  func.func @transform_1(%arg0: i32) -> (i32, i32) {
    %c0_i32 = arith.constant 0 : i32
    %c0_i32_0 = arith.constant 0 : i32
    return %arg0, %c0_i32 : i32, i32
  }
  func.func @transform_2(%arg0: i32) -> (i32, i32) {
    %c0_i32 = arith.constant 0 : i32
    %c0_i32_0 = arith.constant 0 : i32
    %c0_i32_1 = arith.constant 0 : i32
    return %c0_i32, %c0_i32_0 : i32, i32
  }
  func.func @transform_3(%arg0: i32) -> (i32, i32) {
    %c0_i32 = arith.constant 0 : i32
    %c0_i32_0 = arith.constant 0 : i32
    %c0_i32_1 = arith.constant 0 : i32
    return %c0_i32, %c0_i32_0 : i32, i32
  }
  func.func @transform_4(%arg0: i32) -> (i32, i32) {
    %c0_i32 = arith.constant 0 : i32
    %c0_i32_0 = arith.constant 0 : i32
    return %arg0, %c0_i32 : i32, i32
  }
}

module attributes {stable_mosaic.version = 11 : i64} {
  func.func @_attn_kernel(%arg0: i32, %arg1: i32, %arg2: memref<1x128x128xbf16, #tpu.memory_space<vmem>>, %arg3: memref<1x128x128xbf16, #tpu.memory_space<vmem>>, %arg4: memref<1x1x128xf32, #tpu.memory_space<vmem>>, %arg5: memref<128x384xbf16, #tpu.memory_space<vmem>>, %arg6: memref<1x384xf32, #tpu.memory_space<vmem>>, %arg7: memref<128x128xbf16, #tpu.memory_space<vmem>>, %arg8: memref<1x128xf32, #tpu.memory_space<vmem>>, %arg9: memref<1x128xf32, #tpu.memory_space<vmem>>, %arg10: memref<1x128xf32, #tpu.memory_space<vmem>>, %arg11: memref<1x128x128xbf16, #tpu.memory_space<vmem>>, %arg12: memref<128x128xbf16, #tpu.memory_space<vmem>>, %arg13: memref<4x128x1xf32, #tpu.memory_space<vmem>>, %arg14: memref<4x128x1xf32, #tpu.memory_space<vmem>>, %arg15: memref<128x128xf32, #tpu.memory_space<vmem>>) attributes {dimension_semantics = [#tpu.dimension_semantics<parallel>, #tpu.dimension_semantics<arbitrary>], iteration_bounds = array<i64: 2, 1>, scalar_prefetch = 0 : i64, scratch_operands = 4 : i64, tpu.core_type = #tpu.core_type<tc>, window_params = [{transform_indices = @transform_0, window_bounds = array<i64: 1, 128, 128>}, {transform_indices = @transform_1, window_bounds = array<i64: 1, 128, 128>}, {transform_indices = @transform_2, window_bounds = array<i64: 1, 1, 128>}, {pipeline_mode = #tpu.pipeline_mode<synchronous>, transform_indices = @transform_3, window_bounds = array<i64: 128, 384>}, {pipeline_mode = #tpu.pipeline_mode<synchronous>, transform_indices = @transform_4, window_bounds = array<i64: 1, 384>}, {pipeline_mode = #tpu.pipeline_mode<synchronous>, transform_indices = @transform_5, window_bounds = array<i64: 128, 128>}, {pipeline_mode = #tpu.pipeline_mode<synchronous>, transform_indices = @transform_6, window_bounds = array<i64: 1, 128>}, {pipeline_mode = #tpu.pipeline_mode<synchronous>, transform_indices = @transform_7, window_bounds = array<i64: 1, 128>}, {pipeline_mode = #tpu.pipeline_mode<synchronous>, transform_indices = @transform_8, window_bounds = array<i64: 1, 128>}, {transform_indices = @transform_9, window_bounds = array<i64: 1, 128, 128>}]} {
    %c0_i32 = arith.constant 0 : i32
    %0 = arith.cmpi eq, %arg1, %c0_i32 : i32
    %1 = arith.extui %0 : i1 to i32
    %c0_i32_0 = arith.constant 0 : i32
    %2 = arith.cmpi ne, %1, %c0_i32_0 : i32
    scf.if %2 {
      %c0_97 = arith.constant 0 : index
      %c0_98 = arith.constant 0 : index
      %c0_99 = arith.constant 0 : index
      %166 = vector.load %arg2[%c0_97, %c0_98, %c0_99] : memref<1x128x128xbf16, #tpu.memory_space<vmem>>, vector<1x128x128xbf16>
      %167 = vector.shape_cast %166 : vector<1x128x128xbf16> to vector<128x128xbf16>
      %c0_100 = arith.constant 0 : index
      %c0_101 = arith.constant 0 : index
      %168 = vector.load %arg5[%c0_100, %c0_101] : memref<128x384xbf16, #tpu.memory_space<vmem>>, vector<128x128xbf16>
      %cst_102 = arith.constant dense<0.000000e+00> : vector<128x128xf32>
      %169 = tpu.matmul %167, %168, %cst_102 {dimension_numbers = #tpu.dot_dimension_numbers<[1], [0], [0], [1], [0, 0, 1, 1], [], []>} : vector<128x128xbf16>, vector<128x128xbf16>, vector<128x128xf32> -> vector<128x128xf32>
      %c0_103 = arith.constant 0 : index
      %c0_104 = arith.constant 0 : index
      %170 = vector.load %arg6[%c0_103, %c0_104] : memref<1x384xf32, #tpu.memory_space<vmem>>, vector<1x128xf32>
      %171 = vector.broadcast %170 : vector<1x128xf32> to vector<128x128xf32>
      %172 = arith.addf %169, %171 : vector<128x128xf32>
      %cst_105 = arith.constant 0.176776692 : f32
      %173 = vector.broadcast %cst_105 : f32 to vector<128x128xf32>
      %174 = arith.mulf %172, %173 : vector<128x128xf32>
      %175 = arith.truncf %174 : vector<128x128xf32> to vector<128x128xbf16>
      %c0_106 = arith.constant 0 : index
      %c0_107 = arith.constant 0 : index
      %176 = vector.load %arg12[%c0_106, %c0_107] : memref<128x128xbf16, #tpu.memory_space<vmem>>, vector<128x128xbf16>
      tpu.vector_store %arg12[%c0_106, %c0_107], %175 {strides = array<i32>} : memref<128x128xbf16, #tpu.memory_space<vmem>>, vector<128x128xbf16>,
      %cst_108 = arith.constant 0xFF800000 : f32
      %177 = vector.broadcast %cst_108 : f32 to vector<4x128x1xf32>
      %c0_109 = arith.constant 0 : index
      %c0_110 = arith.constant 0 : index
      %c0_111 = arith.constant 0 : index
      %178 = vector.load %arg13[%c0_109, %c0_110, %c0_111] : memref<4x128x1xf32, #tpu.memory_space<vmem>>, vector<4x128x1xf32>
      tpu.vector_store %arg13[%c0_109, %c0_110, %c0_111], %177 {strides = array<i32>} : memref<4x128x1xf32, #tpu.memory_space<vmem>>, vector<4x128x1xf32>,
      %cst_112 = arith.constant 0.000000e+00 : f32
      %179 = vector.broadcast %cst_112 : f32 to vector<4x128x1xf32>
      %c0_113 = arith.constant 0 : index
      %c0_114 = arith.constant 0 : index
      %c0_115 = arith.constant 0 : index
      %180 = vector.load %arg14[%c0_113, %c0_114, %c0_115] : memref<4x128x1xf32, #tpu.memory_space<vmem>>, vector<4x128x1xf32>
      tpu.vector_store %arg14[%c0_113, %c0_114, %c0_115], %179 {strides = array<i32>} : memref<4x128x1xf32, #tpu.memory_space<vmem>>, vector<4x128x1xf32>,
      %cst_116 = arith.constant 0.000000e+00 : f32
      %181 = vector.broadcast %cst_116 : f32 to vector<128x128xf32>
      %c0_117 = arith.constant 0 : index
      %c0_118 = arith.constant 0 : index
      %182 = vector.load %arg15[%c0_117, %c0_118] : memref<128x128xf32, #tpu.memory_space<vmem>>, vector<128x128xf32>
      tpu.vector_store %arg15[%c0_117, %c0_118], %181 {strides = array<i32>} : memref<128x128xf32, #tpu.memory_space<vmem>>, vector<128x128xf32>,
    } else {
    }
    %c0 = arith.constant 0 : index
    %c0_1 = arith.constant 0 : index
    %c0_2 = arith.constant 0 : index
    %3 = vector.load %arg3[%c0, %c0_1, %c0_2] : memref<1x128x128xbf16, #tpu.memory_space<vmem>>, vector<1x128x128xbf16>
    %4 = vector.shape_cast %3 : vector<1x128x128xbf16> to vector<128x128xbf16>
    %c0_3 = arith.constant 0 : index
    %c128 = arith.constant 128 : index
    %5 = vector.load %arg5[%c0_3, %c128] : memref<128x384xbf16, #tpu.memory_space<vmem>>, vector<128x128xbf16>
    %cst = arith.constant dense<0.000000e+00> : vector<128x128xf32>
    %6 = tpu.matmul %4, %5, %cst {dimension_numbers = #tpu.dot_dimension_numbers<[1], [0], [0], [1], [0, 0, 1, 1], [], []>} : vector<128x128xbf16>, vector<128x128xbf16>, vector<128x128xf32> -> vector<128x128xf32>
    %c0_4 = arith.constant 0 : index
    %c128_5 = arith.constant 128 : index
    %7 = vector.load %arg6[%c0_4, %c128_5] : memref<1x384xf32, #tpu.memory_space<vmem>>, vector<1x128xf32>
    %8 = vector.broadcast %7 : vector<1x128xf32> to vector<128x128xf32>
    %9 = arith.addf %6, %8 : vector<128x128xf32>
    %10 = arith.truncf %9 : vector<128x128xf32> to vector<128x128xbf16>
    %c0_6 = arith.constant 0 : index
    %c256 = arith.constant 256 : index
    %11 = vector.load %arg5[%c0_6, %c256] : memref<128x384xbf16, #tpu.memory_space<vmem>>, vector<128x128xbf16>
    %cst_7 = arith.constant dense<0.000000e+00> : vector<128x128xf32>
    %12 = tpu.matmul %4, %11, %cst_7 {dimension_numbers = #tpu.dot_dimension_numbers<[1], [0], [0], [1], [0, 0, 1, 1], [], []>} : vector<128x128xbf16>, vector<128x128xbf16>, vector<128x128xf32> -> vector<128x128xf32>
    %c0_8 = arith.constant 0 : index
    %c256_9 = arith.constant 256 : index
    %13 = vector.load %arg6[%c0_8, %c256_9] : memref<1x384xf32, #tpu.memory_space<vmem>>, vector<1x128xf32>
    %14 = vector.broadcast %13 : vector<1x128xf32> to vector<128x128xf32>
    %15 = arith.addf %12, %14 : vector<128x128xf32>
    %16 = arith.truncf %15 : vector<128x128xf32> to vector<128x128xbf16>
    %c0_10 = arith.constant 0 : index
    %c0_11 = arith.constant 0 : index
    %c0_12 = arith.constant 0 : index
    %17 = vector.load %arg4[%c0_10, %c0_11, %c0_12] : memref<1x1x128xf32, #tpu.memory_space<vmem>>, vector<1x1x128xf32>
    %18 = vector.shape_cast %17 : vector<1x1x128xf32> to vector<1x128xf32>
    %c0_13 = arith.constant 0 : index
    %c0_14 = arith.constant 0 : index
    %19 = vector.load %arg12[%c0_13, %c0_14] : memref<128x128xbf16, #tpu.memory_space<vmem>>, vector<128x32xbf16>
    %20 = vector.extract_strided_slice %10 {offsets = [0, 0], sizes = [128, 32], strides = [1, 1]} : vector<128x128xbf16> to vector<128x32xbf16>
    %cst_15 = arith.constant dense<0.000000e+00> : vector<128x128xf32>
    %21 = tpu.matmul %19, %20, %cst_15 {dimension_numbers = #tpu.dot_dimension_numbers<[1], [1], [0], [0], [0, 0, 1, 0], [], []>} : vector<128x32xbf16>, vector<128x32xbf16>, vector<128x128xf32> -> vector<128x128xf32>
    %22 = vector.broadcast %18 : vector<1x128xf32> to vector<128x128xf32>
    %23 = arith.addf %21, %22 : vector<128x128xf32>
    %c0_16 = arith.constant 0 : index
    %c0_17 = arith.constant 0 : index
    %c0_18 = arith.constant 0 : index
    %24 = vector.load %arg13[%c0_16, %c0_17, %c0_18] : memref<4x128x1xf32, #tpu.memory_space<vmem>>, vector<1x128x1xf32>
    %25 = vector.shape_cast %24 : vector<1x128x1xf32> to vector<128x1xf32>
    %cst_19 = arith.constant dense<0xFF800000> : vector<128xf32>
    %26 = vector.multi_reduction <maximumf>, %23, %cst_19 [1] : vector<128x128xf32> to vector<128xf32>
    %27 = vector.shape_cast %26 : vector<128xf32> to vector<128x1xf32>
    %28 = arith.maximumf %25, %27 : vector<128x1xf32>
    %29 = arith.subf %25, %28 : vector<128x1xf32>
    %30 = math.exp %29 : vector<128x1xf32>
    %31 = vector.broadcast %28 : vector<128x1xf32> to vector<128x128xf32>
    %32 = arith.subf %23, %31 : vector<128x128xf32>
    %33 = arith.truncf %32 : vector<128x128xf32> to vector<128x128xbf16>
    %34 = math.exp %33 : vector<128x128xbf16>
    %c0_20 = arith.constant 0 : index
    %c0_21 = arith.constant 0 : index
    %c0_22 = arith.constant 0 : index
    %35 = vector.load %arg14[%c0_20, %c0_21, %c0_22] : memref<4x128x1xf32, #tpu.memory_space<vmem>>, vector<1x128x1xf32>
    %36 = vector.shape_cast %35 : vector<1x128x1xf32> to vector<128x1xf32>
    %37 = arith.mulf %30, %36 : vector<128x1xf32>
    %38 = arith.extf %34 : vector<128x128xbf16> to vector<128x128xf32>
    %cst_23 = arith.constant dense<0.000000e+00> : vector<128xf32>
    %39 = vector.multi_reduction <add>, %38, %cst_23 [1] : vector<128x128xf32> to vector<128xf32>
    %40 = vector.shape_cast %39 : vector<128xf32> to vector<128x1xf32>
    %41 = arith.addf %37, %40 : vector<128x1xf32>
    %c0_24 = arith.constant 0 : index
    %c0_25 = arith.constant 0 : index
    %c0_26 = arith.constant 0 : index
    %42 = vector.load %arg14[%c0_24, %c0_25, %c0_26] : memref<4x128x1xf32, #tpu.memory_space<vmem>>, vector<1x128x1xf32>
    %43 = vector.shape_cast %42 : vector<1x128x1xf32> to vector<128x1xf32>
    %44 = vector.shape_cast %41 : vector<128x1xf32> to vector<1x128x1xf32>
    tpu.vector_store %arg14[%c0_24, %c0_25, %c0_26], %44 {strides = array<i32>} : memref<4x128x1xf32, #tpu.memory_space<vmem>>, vector<1x128x1xf32>,
    %c0_27 = arith.constant 0 : index
    %c0_28 = arith.constant 0 : index
    %45 = vector.load %arg15[%c0_27, %c0_28] : memref<128x128xf32, #tpu.memory_space<vmem>>, vector<128x32xf32>
    %46 = vector.broadcast %30 : vector<128x1xf32> to vector<128x32xf32>
    %47 = arith.mulf %46, %45 : vector<128x32xf32>
    %48 = vector.extract_strided_slice %16 {offsets = [0, 0], sizes = [128, 32], strides = [1, 1]} : vector<128x128xbf16> to vector<128x32xbf16>
    %cst_29 = arith.constant dense<0.000000e+00> : vector<128x32xf32>
    %49 = tpu.matmul %34, %48, %cst_29 {dimension_numbers = #tpu.dot_dimension_numbers<[1], [0], [0], [1], [0, 0, 1, 1], [], []>} : vector<128x128xbf16>, vector<128x32xbf16>, vector<128x32xf32> -> vector<128x32xf32>
    %50 = arith.addf %47, %49 : vector<128x32xf32>
    %c0_30 = arith.constant 0 : index
    %c0_31 = arith.constant 0 : index
    %51 = vector.load %arg15[%c0_30, %c0_31] : memref<128x128xf32, #tpu.memory_space<vmem>>, vector<128x32xf32>
    tpu.vector_store %arg15[%c0_30, %c0_31], %50 {strides = array<i32>} : memref<128x128xf32, #tpu.memory_space<vmem>>, vector<128x32xf32>,
    %c0_32 = arith.constant 0 : index
    %c0_33 = arith.constant 0 : index
    %c0_34 = arith.constant 0 : index
    %52 = vector.load %arg13[%c0_32, %c0_33, %c0_34] : memref<4x128x1xf32, #tpu.memory_space<vmem>>, vector<1x128x1xf32>
    %53 = vector.shape_cast %52 : vector<1x128x1xf32> to vector<128x1xf32>
    %54 = vector.shape_cast %28 : vector<128x1xf32> to vector<1x128x1xf32>
    tpu.vector_store %arg13[%c0_32, %c0_33, %c0_34], %54 {strides = array<i32>} : memref<4x128x1xf32, #tpu.memory_space<vmem>>, vector<1x128x1xf32>,
    %c0_35 = arith.constant 0 : index
    %c32 = arith.constant 32 : index
    %55 = vector.load %arg12[%c0_35, %c32] : memref<128x128xbf16, #tpu.memory_space<vmem>>, vector<128x32xbf16>
    %56 = vector.extract_strided_slice %10 {offsets = [0, 32], sizes = [128, 32], strides = [1, 1]} : vector<128x128xbf16> to vector<128x32xbf16>
    %cst_36 = arith.constant dense<0.000000e+00> : vector<128x128xf32>
    %57 = tpu.matmul %55, %56, %cst_36 {dimension_numbers = #tpu.dot_dimension_numbers<[1], [1], [0], [0], [0, 0, 1, 0], [], []>} : vector<128x32xbf16>, vector<128x32xbf16>, vector<128x128xf32> -> vector<128x128xf32>
    %58 = vector.broadcast %18 : vector<1x128xf32> to vector<128x128xf32>
    %59 = arith.addf %57, %58 : vector<128x128xf32>
    %c1 = arith.constant 1 : index
    %c0_37 = arith.constant 0 : index
    %c0_38 = arith.constant 0 : index
    %60 = vector.load %arg13[%c1, %c0_37, %c0_38] : memref<4x128x1xf32, #tpu.memory_space<vmem>>, vector<1x128x1xf32>
    %61 = vector.shape_cast %60 : vector<1x128x1xf32> to vector<128x1xf32>
    %cst_39 = arith.constant dense<0xFF800000> : vector<128xf32>
    %62 = vector.multi_reduction <maximumf>, %59, %cst_39 [1] : vector<128x128xf32> to vector<128xf32>
    %63 = vector.shape_cast %62 : vector<128xf32> to vector<128x1xf32>
    %64 = arith.maximumf %61, %63 : vector<128x1xf32>
    %65 = arith.subf %61, %64 : vector<128x1xf32>
    %66 = math.exp %65 : vector<128x1xf32>
    %67 = vector.broadcast %64 : vector<128x1xf32> to vector<128x128xf32>
    %68 = arith.subf %59, %67 : vector<128x128xf32>
    %69 = arith.truncf %68 : vector<128x128xf32> to vector<128x128xbf16>
    %70 = math.exp %69 : vector<128x128xbf16>
    %c1_40 = arith.constant 1 : index
    %c0_41 = arith.constant 0 : index
    %c0_42 = arith.constant 0 : index
    %71 = vector.load %arg14[%c1_40, %c0_41, %c0_42] : memref<4x128x1xf32, #tpu.memory_space<vmem>>, vector<1x128x1xf32>
    %72 = vector.shape_cast %71 : vector<1x128x1xf32> to vector<128x1xf32>
    %73 = arith.mulf %66, %72 : vector<128x1xf32>
    %74 = arith.extf %70 : vector<128x128xbf16> to vector<128x128xf32>
    %cst_43 = arith.constant dense<0.000000e+00> : vector<128xf32>
    %75 = vector.multi_reduction <add>, %74, %cst_43 [1] : vector<128x128xf32> to vector<128xf32>
    %76 = vector.shape_cast %75 : vector<128xf32> to vector<128x1xf32>
    %77 = arith.addf %73, %76 : vector<128x1xf32>
    %c1_44 = arith.constant 1 : index
    %c0_45 = arith.constant 0 : index
    %c0_46 = arith.constant 0 : index
    %78 = vector.load %arg14[%c1_44, %c0_45, %c0_46] : memref<4x128x1xf32, #tpu.memory_space<vmem>>, vector<1x128x1xf32>
    %79 = vector.shape_cast %78 : vector<1x128x1xf32> to vector<128x1xf32>
    %80 = vector.shape_cast %77 : vector<128x1xf32> to vector<1x128x1xf32>
    tpu.vector_store %arg14[%c1_44, %c0_45, %c0_46], %80 {strides = array<i32>} : memref<4x128x1xf32, #tpu.memory_space<vmem>>, vector<1x128x1xf32>,
    %c0_47 = arith.constant 0 : index
    %c32_48 = arith.constant 32 : index
    %81 = vector.load %arg15[%c0_47, %c32_48] : memref<128x128xf32, #tpu.memory_space<vmem>>, vector<128x32xf32>
    %82 = vector.broadcast %66 : vector<128x1xf32> to vector<128x32xf32>
    %83 = arith.mulf %82, %81 : vector<128x32xf32>
    %84 = vector.extract_strided_slice %16 {offsets = [0, 32], sizes = [128, 32], strides = [1, 1]} : vector<128x128xbf16> to vector<128x32xbf16>
    %cst_49 = arith.constant dense<0.000000e+00> : vector<128x32xf32>
    %85 = tpu.matmul %70, %84, %cst_49 {dimension_numbers = #tpu.dot_dimension_numbers<[1], [0], [0], [1], [0, 0, 1, 1], [], []>} : vector<128x128xbf16>, vector<128x32xbf16>, vector<128x32xf32> -> vector<128x32xf32>
    %86 = arith.addf %83, %85 : vector<128x32xf32>
    %c0_50 = arith.constant 0 : index
    %c32_51 = arith.constant 32 : index
    %87 = vector.load %arg15[%c0_50, %c32_51] : memref<128x128xf32, #tpu.memory_space<vmem>>, vector<128x32xf32>
    tpu.vector_store %arg15[%c0_50, %c32_51], %86 {strides = array<i32>} : memref<128x128xf32, #tpu.memory_space<vmem>>, vector<128x32xf32>,
    %c1_52 = arith.constant 1 : index
    %c0_53 = arith.constant 0 : index
    %c0_54 = arith.constant 0 : index
    %88 = vector.load %arg13[%c1_52, %c0_53, %c0_54] : memref<4x128x1xf32, #tpu.memory_space<vmem>>, vector<1x128x1xf32>
    %89 = vector.shape_cast %88 : vector<1x128x1xf32> to vector<128x1xf32>
    %90 = vector.shape_cast %64 : vector<128x1xf32> to vector<1x128x1xf32>
    tpu.vector_store %arg13[%c1_52, %c0_53, %c0_54], %90 {strides = array<i32>} : memref<4x128x1xf32, #tpu.memory_space<vmem>>, vector<1x128x1xf32>,
    %c0_55 = arith.constant 0 : index
    %c64 = arith.constant 64 : index
    %91 = vector.load %arg12[%c0_55, %c64] : memref<128x128xbf16, #tpu.memory_space<vmem>>, vector<128x32xbf16>
    %92 = vector.extract_strided_slice %10 {offsets = [0, 64], sizes = [128, 32], strides = [1, 1]} : vector<128x128xbf16> to vector<128x32xbf16>
    %cst_56 = arith.constant dense<0.000000e+00> : vector<128x128xf32>
    %93 = tpu.matmul %91, %92, %cst_56 {dimension_numbers = #tpu.dot_dimension_numbers<[1], [1], [0], [0], [0, 0, 1, 0], [], []>} : vector<128x32xbf16>, vector<128x32xbf16>, vector<128x128xf32> -> vector<128x128xf32>
    %94 = vector.broadcast %18 : vector<1x128xf32> to vector<128x128xf32>
    %95 = arith.addf %93, %94 : vector<128x128xf32>
    %c2 = arith.constant 2 : index
    %c0_57 = arith.constant 0 : index
    %c0_58 = arith.constant 0 : index
    %96 = vector.load %arg13[%c2, %c0_57, %c0_58] : memref<4x128x1xf32, #tpu.memory_space<vmem>>, vector<1x128x1xf32>
    %97 = vector.shape_cast %96 : vector<1x128x1xf32> to vector<128x1xf32>
    %cst_59 = arith.constant dense<0xFF800000> : vector<128xf32>
    %98 = vector.multi_reduction <maximumf>, %95, %cst_59 [1] : vector<128x128xf32> to vector<128xf32>
    %99 = vector.shape_cast %98 : vector<128xf32> to vector<128x1xf32>
    %100 = arith.maximumf %97, %99 : vector<128x1xf32>
    %101 = arith.subf %97, %100 : vector<128x1xf32>
    %102 = math.exp %101 : vector<128x1xf32>
    %103 = vector.broadcast %100 : vector<128x1xf32> to vector<128x128xf32>
    %104 = arith.subf %95, %103 : vector<128x128xf32>
    %105 = arith.truncf %104 : vector<128x128xf32> to vector<128x128xbf16>
    %106 = math.exp %105 : vector<128x128xbf16>
    %c2_60 = arith.constant 2 : index
    %c0_61 = arith.constant 0 : index
    %c0_62 = arith.constant 0 : index
    %107 = vector.load %arg14[%c2_60, %c0_61, %c0_62] : memref<4x128x1xf32, #tpu.memory_space<vmem>>, vector<1x128x1xf32>
    %108 = vector.shape_cast %107 : vector<1x128x1xf32> to vector<128x1xf32>
    %109 = arith.mulf %102, %108 : vector<128x1xf32>
    %110 = arith.extf %106 : vector<128x128xbf16> to vector<128x128xf32>
    %cst_63 = arith.constant dense<0.000000e+00> : vector<128xf32>
    %111 = vector.multi_reduction <add>, %110, %cst_63 [1] : vector<128x128xf32> to vector<128xf32>
    %112 = vector.shape_cast %111 : vector<128xf32> to vector<128x1xf32>
    %113 = arith.addf %109, %112 : vector<128x1xf32>
    %c2_64 = arith.constant 2 : index
    %c0_65 = arith.constant 0 : index
    %c0_66 = arith.constant 0 : index
    %114 = vector.load %arg14[%c2_64, %c0_65, %c0_66] : memref<4x128x1xf32, #tpu.memory_space<vmem>>, vector<1x128x1xf32>
    %115 = vector.shape_cast %114 : vector<1x128x1xf32> to vector<128x1xf32>
    %116 = vector.shape_cast %113 : vector<128x1xf32> to vector<1x128x1xf32>
    tpu.vector_store %arg14[%c2_64, %c0_65, %c0_66], %116 {strides = array<i32>} : memref<4x128x1xf32, #tpu.memory_space<vmem>>, vector<1x128x1xf32>,
    %c0_67 = arith.constant 0 : index
    %c64_68 = arith.constant 64 : index
    %117 = vector.load %arg15[%c0_67, %c64_68] : memref<128x128xf32, #tpu.memory_space<vmem>>, vector<128x32xf32>
    %118 = vector.broadcast %102 : vector<128x1xf32> to vector<128x32xf32>
    %119 = arith.mulf %118, %117 : vector<128x32xf32>
    %120 = vector.extract_strided_slice %16 {offsets = [0, 64], sizes = [128, 32], strides = [1, 1]} : vector<128x128xbf16> to vector<128x32xbf16>
    %cst_69 = arith.constant dense<0.000000e+00> : vector<128x32xf32>
    %121 = tpu.matmul %106, %120, %cst_69 {dimension_numbers = #tpu.dot_dimension_numbers<[1], [0], [0], [1], [0, 0, 1, 1], [], []>} : vector<128x128xbf16>, vector<128x32xbf16>, vector<128x32xf32> -> vector<128x32xf32>
    %122 = arith.addf %119, %121 : vector<128x32xf32>
    %c0_70 = arith.constant 0 : index
    %c64_71 = arith.constant 64 : index
    %123 = vector.load %arg15[%c0_70, %c64_71] : memref<128x128xf32, #tpu.memory_space<vmem>>, vector<128x32xf32>
    tpu.vector_store %arg15[%c0_70, %c64_71], %122 {strides = array<i32>} : memref<128x128xf32, #tpu.memory_space<vmem>>, vector<128x32xf32>,
    %c2_72 = arith.constant 2 : index
    %c0_73 = arith.constant 0 : index
    %c0_74 = arith.constant 0 : index
    %124 = vector.load %arg13[%c2_72, %c0_73, %c0_74] : memref<4x128x1xf32, #tpu.memory_space<vmem>>, vector<1x128x1xf32>
    %125 = vector.shape_cast %124 : vector<1x128x1xf32> to vector<128x1xf32>
    %126 = vector.shape_cast %100 : vector<128x1xf32> to vector<1x128x1xf32>
    tpu.vector_store %arg13[%c2_72, %c0_73, %c0_74], %126 {strides = array<i32>} : memref<4x128x1xf32, #tpu.memory_space<vmem>>, vector<1x128x1xf32>,
    %c0_75 = arith.constant 0 : index
    %c96 = arith.constant 96 : index
    %127 = vector.load %arg12[%c0_75, %c96] : memref<128x128xbf16, #tpu.memory_space<vmem>>, vector<128x32xbf16>
    %128 = vector.extract_strided_slice %10 {offsets = [0, 96], sizes = [128, 32], strides = [1, 1]} : vector<128x128xbf16> to vector<128x32xbf16>
    %cst_76 = arith.constant dense<0.000000e+00> : vector<128x128xf32>
    %129 = tpu.matmul %127, %128, %cst_76 {dimension_numbers = #tpu.dot_dimension_numbers<[1], [1], [0], [0], [0, 0, 1, 0], [], []>} : vector<128x32xbf16>, vector<128x32xbf16>, vector<128x128xf32> -> vector<128x128xf32>
    %130 = vector.broadcast %18 : vector<1x128xf32> to vector<128x128xf32>
    %131 = arith.addf %129, %130 : vector<128x128xf32>
    %c3 = arith.constant 3 : index
    %c0_77 = arith.constant 0 : index
    %c0_78 = arith.constant 0 : index
    %132 = vector.load %arg13[%c3, %c0_77, %c0_78] : memref<4x128x1xf32, #tpu.memory_space<vmem>>, vector<1x128x1xf32>
    %133 = vector.shape_cast %132 : vector<1x128x1xf32> to vector<128x1xf32>
    %cst_79 = arith.constant dense<0xFF800000> : vector<128xf32>
    %134 = vector.multi_reduction <maximumf>, %131, %cst_79 [1] : vector<128x128xf32> to vector<128xf32>
    %135 = vector.shape_cast %134 : vector<128xf32> to vector<128x1xf32>
    %136 = arith.maximumf %133, %135 : vector<128x1xf32>
    %137 = arith.subf %133, %136 : vector<128x1xf32>
    %138 = math.exp %137 : vector<128x1xf32>
    %139 = vector.broadcast %136 : vector<128x1xf32> to vector<128x128xf32>
    %140 = arith.subf %131, %139 : vector<128x128xf32>
    %141 = arith.truncf %140 : vector<128x128xf32> to vector<128x128xbf16>
    %142 = math.exp %141 : vector<128x128xbf16>
    %c3_80 = arith.constant 3 : index
    %c0_81 = arith.constant 0 : index
    %c0_82 = arith.constant 0 : index
    %143 = vector.load %arg14[%c3_80, %c0_81, %c0_82] : memref<4x128x1xf32, #tpu.memory_space<vmem>>, vector<1x128x1xf32>
    %144 = vector.shape_cast %143 : vector<1x128x1xf32> to vector<128x1xf32>
    %145 = arith.mulf %138, %144 : vector<128x1xf32>
    %146 = arith.extf %142 : vector<128x128xbf16> to vector<128x128xf32>
    %cst_83 = arith.constant dense<0.000000e+00> : vector<128xf32>
    %147 = vector.multi_reduction <add>, %146, %cst_83 [1] : vector<128x128xf32> to vector<128xf32>
    %148 = vector.shape_cast %147 : vector<128xf32> to vector<128x1xf32>
    %149 = arith.addf %145, %148 : vector<128x1xf32>
    %c3_84 = arith.constant 3 : index
    %c0_85 = arith.constant 0 : index
    %c0_86 = arith.constant 0 : index
    %150 = vector.load %arg14[%c3_84, %c0_85, %c0_86] : memref<4x128x1xf32, #tpu.memory_space<vmem>>, vector<1x128x1xf32>
    %151 = vector.shape_cast %150 : vector<1x128x1xf32> to vector<128x1xf32>
    %152 = vector.shape_cast %149 : vector<128x1xf32> to vector<1x128x1xf32>
    tpu.vector_store %arg14[%c3_84, %c0_85, %c0_86], %152 {strides = array<i32>} : memref<4x128x1xf32, #tpu.memory_space<vmem>>, vector<1x128x1xf32>,
    %c0_87 = arith.constant 0 : index
    %c96_88 = arith.constant 96 : index
    %153 = vector.load %arg15[%c0_87, %c96_88] : memref<128x128xf32, #tpu.memory_space<vmem>>, vector<128x32xf32>
    %154 = vector.broadcast %138 : vector<128x1xf32> to vector<128x32xf32>
    %155 = arith.mulf %154, %153 : vector<128x32xf32>
    %156 = vector.extract_strided_slice %16 {offsets = [0, 96], sizes = [128, 32], strides = [1, 1]} : vector<128x128xbf16> to vector<128x32xbf16>
    %cst_89 = arith.constant dense<0.000000e+00> : vector<128x32xf32>
    %157 = tpu.matmul %142, %156, %cst_89 {dimension_numbers = #tpu.dot_dimension_numbers<[1], [0], [0], [1], [0, 0, 1, 1], [], []>} : vector<128x128xbf16>, vector<128x32xbf16>, vector<128x32xf32> -> vector<128x32xf32>
    %158 = arith.addf %155, %157 : vector<128x32xf32>
    %c0_90 = arith.constant 0 : index
    %c96_91 = arith.constant 96 : index
    %159 = vector.load %arg15[%c0_90, %c96_91] : memref<128x128xf32, #tpu.memory_space<vmem>>, vector<128x32xf32>
    tpu.vector_store %arg15[%c0_90, %c96_91], %158 {strides = array<i32>} : memref<128x128xf32, #tpu.memory_space<vmem>>, vector<128x32xf32>,
    %c3_92 = arith.constant 3 : index
    %c0_93 = arith.constant 0 : index
    %c0_94 = arith.constant 0 : index
    %160 = vector.load %arg13[%c3_92, %c0_93, %c0_94] : memref<4x128x1xf32, #tpu.memory_space<vmem>>, vector<1x128x1xf32>
    %161 = vector.shape_cast %160 : vector<1x128x1xf32> to vector<128x1xf32>
    %162 = vector.shape_cast %136 : vector<128x1xf32> to vector<1x128x1xf32>
    tpu.vector_store %arg13[%c3_92, %c0_93, %c0_94], %162 {strides = array<i32>} : memref<4x128x1xf32, #tpu.memory_space<vmem>>, vector<1x128x1xf32>,
    %c0_i32_95 = arith.constant 0 : i32
    %163 = arith.cmpi eq, %arg1, %c0_i32_95 : i32
    %164 = arith.extui %163 : i1 to i32
    %c0_i32_96 = arith.constant 0 : i32
    %165 = arith.cmpi ne, %164, %c0_i32_96 : i32
    scf.if %165 {
      %c0_97 = arith.constant 0 : index
      %c0_98 = arith.constant 0 : index
      %c0_99 = arith.constant 0 : index
      %166 = vector.load %arg14[%c0_97, %c0_98, %c0_99] : memref<4x128x1xf32, #tpu.memory_space<vmem>>, vector<1x128x1xf32>
      %167 = vector.shape_cast %166 : vector<1x128x1xf32> to vector<128x1xf32>
      %168 = tpu.reciprocal %167 {approx = true} : vector<128x1xf32> -> vector<128x1xf32>
      %c0_100 = arith.constant 0 : index
      %c0_101 = arith.constant 0 : index
      %169 = vector.load %arg15[%c0_100, %c0_101] : memref<128x128xf32, #tpu.memory_space<vmem>>, vector<128x32xf32>
      %170 = vector.broadcast %168 : vector<128x1xf32> to vector<128x32xf32>
      %171 = arith.mulf %169, %170 : vector<128x32xf32>
      %172 = arith.truncf %171 : vector<128x32xf32> to vector<128x32xbf16>
      %c0_102 = arith.constant 0 : index
      %c0_103 = arith.constant 0 : index
      %173 = vector.load %arg12[%c0_102, %c0_103] : memref<128x128xbf16, #tpu.memory_space<vmem>>, vector<128x32xbf16>
      tpu.vector_store %arg12[%c0_102, %c0_103], %172 {strides = array<i32>} : memref<128x128xbf16, #tpu.memory_space<vmem>>, vector<128x32xbf16>,
      %c1_104 = arith.constant 1 : index
      %c0_105 = arith.constant 0 : index
      %c0_106 = arith.constant 0 : index
      %174 = vector.load %arg14[%c1_104, %c0_105, %c0_106] : memref<4x128x1xf32, #tpu.memory_space<vmem>>, vector<1x128x1xf32>
      %175 = vector.shape_cast %174 : vector<1x128x1xf32> to vector<128x1xf32>
      %176 = tpu.reciprocal %175 {approx = true} : vector<128x1xf32> -> vector<128x1xf32>
      %c0_107 = arith.constant 0 : index
      %c32_108 = arith.constant 32 : index
      %177 = vector.load %arg15[%c0_107, %c32_108] : memref<128x128xf32, #tpu.memory_space<vmem>>, vector<128x32xf32>
      %178 = vector.broadcast %176 : vector<128x1xf32> to vector<128x32xf32>
      %179 = arith.mulf %177, %178 : vector<128x32xf32>
      %180 = arith.truncf %179 : vector<128x32xf32> to vector<128x32xbf16>
      %c0_109 = arith.constant 0 : index
      %c32_110 = arith.constant 32 : index
      %181 = vector.load %arg12[%c0_109, %c32_110] : memref<128x128xbf16, #tpu.memory_space<vmem>>, vector<128x32xbf16>
      tpu.vector_store %arg12[%c0_109, %c32_110], %180 {strides = array<i32>} : memref<128x128xbf16, #tpu.memory_space<vmem>>, vector<128x32xbf16>,
      %c2_111 = arith.constant 2 : index
      %c0_112 = arith.constant 0 : index
      %c0_113 = arith.constant 0 : index
      %182 = vector.load %arg14[%c2_111, %c0_112, %c0_113] : memref<4x128x1xf32, #tpu.memory_space<vmem>>, vector<1x128x1xf32>
      %183 = vector.shape_cast %182 : vector<1x128x1xf32> to vector<128x1xf32>
      %184 = tpu.reciprocal %183 {approx = true} : vector<128x1xf32> -> vector<128x1xf32>
      %c0_114 = arith.constant 0 : index
      %c64_115 = arith.constant 64 : index
      %185 = vector.load %arg15[%c0_114, %c64_115] : memref<128x128xf32, #tpu.memory_space<vmem>>, vector<128x32xf32>
      %186 = vector.broadcast %184 : vector<128x1xf32> to vector<128x32xf32>
      %187 = arith.mulf %185, %186 : vector<128x32xf32>
      %188 = arith.truncf %187 : vector<128x32xf32> to vector<128x32xbf16>
      %c0_116 = arith.constant 0 : index
      %c64_117 = arith.constant 64 : index
      %189 = vector.load %arg12[%c0_116, %c64_117] : memref<128x128xbf16, #tpu.memory_space<vmem>>, vector<128x32xbf16>
      tpu.vector_store %arg12[%c0_116, %c64_117], %188 {strides = array<i32>} : memref<128x128xbf16, #tpu.memory_space<vmem>>, vector<128x32xbf16>,
      %c3_118 = arith.constant 3 : index
      %c0_119 = arith.constant 0 : index
      %c0_120 = arith.constant 0 : index
      %190 = vector.load %arg14[%c3_118, %c0_119, %c0_120] : memref<4x128x1xf32, #tpu.memory_space<vmem>>, vector<1x128x1xf32>
      %191 = vector.shape_cast %190 : vector<1x128x1xf32> to vector<128x1xf32>
      %192 = tpu.reciprocal %191 {approx = true} : vector<128x1xf32> -> vector<128x1xf32>
      %c0_121 = arith.constant 0 : index
      %c96_122 = arith.constant 96 : index
      %193 = vector.load %arg15[%c0_121, %c96_122] : memref<128x128xf32, #tpu.memory_space<vmem>>, vector<128x32xf32>
      %194 = vector.broadcast %192 : vector<128x1xf32> to vector<128x32xf32>
      %195 = arith.mulf %193, %194 : vector<128x32xf32>
      %196 = arith.truncf %195 : vector<128x32xf32> to vector<128x32xbf16>
      %c0_123 = arith.constant 0 : index
      %c96_124 = arith.constant 96 : index
      %197 = vector.load %arg12[%c0_123, %c96_124] : memref<128x128xbf16, #tpu.memory_space<vmem>>, vector<128x32xbf16>
      tpu.vector_store %arg12[%c0_123, %c96_124], %196 {strides = array<i32>} : memref<128x128xbf16, #tpu.memory_space<vmem>>, vector<128x32xbf16>,
      %c0_125 = arith.constant 0 : index
      %c0_126 = arith.constant 0 : index
      %198 = vector.load %arg12[%c0_125, %c0_126] : memref<128x128xbf16, #tpu.memory_space<vmem>>, vector<128x128xbf16>
      %c0_127 = arith.constant 0 : index
      %c0_128 = arith.constant 0 : index
      %199 = vector.load %arg7[%c0_127, %c0_128] : memref<128x128xbf16, #tpu.memory_space<vmem>>, vector<128x128xbf16>
      %cst_129 = arith.constant dense<0.000000e+00> : vector<128x128xf32>
      %200 = tpu.matmul %198, %199, %cst_129 {dimension_numbers = #tpu.dot_dimension_numbers<[1], [0], [0], [1], [0, 0, 1, 1], [], []>} : vector<128x128xbf16>, vector<128x128xbf16>, vector<128x128xf32> -> vector<128x128xf32>
      %c0_130 = arith.constant 0 : index
      %c0_131 = arith.constant 0 : index
      %c0_132 = arith.constant 0 : index
      %201 = vector.load %arg2[%c0_130, %c0_131, %c0_132] : memref<1x128x128xbf16, #tpu.memory_space<vmem>>, vector<1x128x128xbf16>
      %202 = vector.shape_cast %201 : vector<1x128x128xbf16> to vector<128x128xbf16>
      %203 = arith.extf %202 : vector<128x128xbf16> to vector<128x128xf32>
      %204 = arith.addf %203, %200 : vector<128x128xf32>
      %c0_133 = arith.constant 0 : index
      %c0_134 = arith.constant 0 : index
      %205 = vector.load %arg8[%c0_133, %c0_134] : memref<1x128xf32, #tpu.memory_space<vmem>>, vector<1x128xf32>
      %206 = vector.broadcast %205 : vector<1x128xf32> to vector<128x128xf32>
      %207 = arith.addf %204, %206 : vector<128x128xf32>
      %cst_135 = arith.constant dense<0.000000e+00> : vector<128xf32>
      %208 = vector.multi_reduction <add>, %207, %cst_135 [1] : vector<128x128xf32> to vector<128xf32>
      %209 = vector.shape_cast %208 : vector<128xf32> to vector<128x1xf32>
      %cst_136 = arith.constant 1.280000e+02 : f32
      %210 = vector.broadcast %cst_136 : f32 to vector<128x1xf32>
      %211 = arith.divf %209, %210 : vector<128x1xf32>
      %212 = vector.broadcast %211 : vector<128x1xf32> to vector<128x128xf32>
      %213 = arith.subf %207, %212 : vector<128x128xf32>
      %214 = arith.mulf %213, %213 : vector<128x128xf32>
      %cst_137 = arith.constant dense<0.000000e+00> : vector<128xf32>
      %215 = vector.multi_reduction <add>, %214, %cst_137 [1] : vector<128x128xf32> to vector<128xf32>
      %216 = vector.shape_cast %215 : vector<128xf32> to vector<128x1xf32>
      %cst_138 = arith.constant 1.280000e+02 : f32
      %217 = vector.broadcast %cst_138 : f32 to vector<128x1xf32>
      %218 = arith.divf %216, %217 : vector<128x1xf32>
      %219 = vector.broadcast %211 : vector<128x1xf32> to vector<128x128xf32>
      %220 = arith.subf %207, %219 : vector<128x128xf32>
      %cst_139 = arith.constant 9.99999974E-6 : f32
      %221 = vector.broadcast %cst_139 : f32 to vector<128x1xf32>
      %222 = arith.addf %218, %221 : vector<128x1xf32>
      %223 = math.rsqrt %222 : vector<128x1xf32>
      %224 = vector.broadcast %223 : vector<128x1xf32> to vector<128x128xf32>
      %225 = arith.mulf %220, %224 : vector<128x128xf32>
      %c0_140 = arith.constant 0 : index
      %c0_141 = arith.constant 0 : index
      %226 = vector.load %arg9[%c0_140, %c0_141] : memref<1x128xf32, #tpu.memory_space<vmem>>, vector<1x128xf32>
      %227 = vector.broadcast %226 : vector<1x128xf32> to vector<128x128xf32>
      %228 = arith.mulf %225, %227 : vector<128x128xf32>
      %c0_142 = arith.constant 0 : index
      %c0_143 = arith.constant 0 : index
      %229 = vector.load %arg10[%c0_142, %c0_143] : memref<1x128xf32, #tpu.memory_space<vmem>>, vector<1x128xf32>
      %230 = vector.broadcast %229 : vector<1x128xf32> to vector<128x128xf32>
      %231 = arith.addf %228, %230 : vector<128x128xf32>
      %232 = arith.truncf %231 : vector<128x128xf32> to vector<128x128xbf16>
      %c0_144 = arith.constant 0 : index
      %c0_145 = arith.constant 0 : index
      %c0_146 = arith.constant 0 : index
      %233 = vector.load %arg11[%c0_144, %c0_145, %c0_146] : memref<1x128x128xbf16, #tpu.memory_space<vmem>>, vector<1x128x128xbf16>
      %234 = vector.shape_cast %233 : vector<1x128x128xbf16> to vector<128x128xbf16>
      %235 = vector.shape_cast %232 : vector<128x128xbf16> to vector<1x128x128xbf16>
      tpu.vector_store %arg11[%c0_144, %c0_145, %c0_146], %235 {strides = array<i32>} : memref<1x128x128xbf16, #tpu.memory_space<vmem>>, vector<1x128x128xbf16>,
    } else {
    }
    return
  }
  func.func @transform_0(%arg0: i32, %arg1: i32) -> (i32, i32, i32) {
    %c0_i32 = arith.constant 0 : i32
    %c0_i32_0 = arith.constant 0 : i32
    %c0_i32_1 = arith.constant 0 : i32
    return %arg0, %c0_i32, %c0_i32_0 : i32, i32, i32
  }
  func.func @transform_1(%arg0: i32, %arg1: i32) -> (i32, i32, i32) {
    %c0_i32 = arith.constant 0 : i32
    %c0_i32_0 = arith.constant 0 : i32
    return %arg0, %arg1, %c0_i32 : i32, i32, i32
  }
  func.func @transform_2(%arg0: i32, %arg1: i32) -> (i32, i32, i32) {
    %c0_i32 = arith.constant 0 : i32
    %c0_i32_0 = arith.constant 0 : i32
    return %arg0, %c0_i32, %arg1 : i32, i32, i32
  }
  func.func @transform_3(%arg0: i32, %arg1: i32) -> (i32, i32) {
    %c0_i32 = arith.constant 0 : i32
    %c0_i32_0 = arith.constant 0 : i32
    %c0_i32_1 = arith.constant 0 : i32
    return %c0_i32, %c0_i32_0 : i32, i32
  }
  func.func @transform_4(%arg0: i32, %arg1: i32) -> (i32, i32) {
    %c0_i32 = arith.constant 0 : i32
    %c0_i32_0 = arith.constant 0 : i32
    %c0_i32_1 = arith.constant 0 : i32
    return %c0_i32, %c0_i32_0 : i32, i32
  }
  func.func @transform_5(%arg0: i32, %arg1: i32) -> (i32, i32) {
    %c0_i32 = arith.constant 0 : i32
    %c0_i32_0 = arith.constant 0 : i32
    %c0_i32_1 = arith.constant 0 : i32
    return %c0_i32, %c0_i32_0 : i32, i32
  }
  func.func @transform_6(%arg0: i32, %arg1: i32) -> (i32, i32) {
    %c0_i32 = arith.constant 0 : i32
    %c0_i32_0 = arith.constant 0 : i32
    %c0_i32_1 = arith.constant 0 : i32
    return %c0_i32, %c0_i32_0 : i32, i32
  }
  func.func @transform_7(%arg0: i32, %arg1: i32) -> (i32, i32) {
    %c0_i32 = arith.constant 0 : i32
    %c0_i32_0 = arith.constant 0 : i32
    %c0_i32_1 = arith.constant 0 : i32
    return %c0_i32, %c0_i32_0 : i32, i32
  }
  func.func @transform_8(%arg0: i32, %arg1: i32) -> (i32, i32) {
    %c0_i32 = arith.constant 0 : i32
    %c0_i32_0 = arith.constant 0 : i32
    %c0_i32_1 = arith.constant 0 : i32
    return %c0_i32, %c0_i32_0 : i32, i32
  }
  func.func @transform_9(%arg0: i32, %arg1: i32) -> (i32, i32, i32) {
    %c0_i32 = arith.constant 0 : i32
    %c0_i32_0 = arith.constant 0 : i32
    %c0_i32_1 = arith.constant 0 : i32
    return %arg0, %c0_i32, %c0_i32_0 : i32, i32, i32
  }
}

module attributes {stable_mosaic.version = 11 : i64} {
  func.func @_ffn_kernel(%arg0: i32, %arg1: memref<256x128xbf16, #tpu.memory_space<vmem>>, %arg2: memref<128x256xbf16, #tpu.memory_space<vmem>>, %arg3: memref<1x256xf32, #tpu.memory_space<vmem>>, %arg4: memref<256x128xbf16, #tpu.memory_space<vmem>>, %arg5: memref<1x128xf32, #tpu.memory_space<vmem>>, %arg6: memref<1x128xf32, #tpu.memory_space<vmem>>, %arg7: memref<1x128xf32, #tpu.memory_space<vmem>>, %arg8: memref<256x128xbf16, #tpu.memory_space<vmem>>) attributes {dimension_semantics = [#tpu.dimension_semantics<parallel>], iteration_bounds = array<i64: 1>, scalar_prefetch = 0 : i64, scratch_operands = 0 : i64, tpu.core_type = #tpu.core_type<tc>, window_params = [{transform_indices = @transform_0, window_bounds = array<i64: 256, 128>}, {pipeline_mode = #tpu.pipeline_mode<synchronous>, transform_indices = @transform_1, window_bounds = array<i64: 128, 256>}, {pipeline_mode = #tpu.pipeline_mode<synchronous>, transform_indices = @transform_2, window_bounds = array<i64: 1, 256>}, {pipeline_mode = #tpu.pipeline_mode<synchronous>, transform_indices = @transform_3, window_bounds = array<i64: 256, 128>}, {pipeline_mode = #tpu.pipeline_mode<synchronous>, transform_indices = @transform_4, window_bounds = array<i64: 1, 128>}, {pipeline_mode = #tpu.pipeline_mode<synchronous>, transform_indices = @transform_5, window_bounds = array<i64: 1, 128>}, {pipeline_mode = #tpu.pipeline_mode<synchronous>, transform_indices = @transform_6, window_bounds = array<i64: 1, 128>}, {transform_indices = @transform_7, window_bounds = array<i64: 256, 128>}]} {
    %c0 = arith.constant 0 : index
    %c0_0 = arith.constant 0 : index
    %0 = vector.load %arg1[%c0, %c0_0] : memref<256x128xbf16, #tpu.memory_space<vmem>>, vector<256x128xbf16>
    %c0_1 = arith.constant 0 : index
    %c0_2 = arith.constant 0 : index
    %1 = vector.load %arg2[%c0_1, %c0_2] : memref<128x256xbf16, #tpu.memory_space<vmem>>, vector<128x256xbf16>
    %cst = arith.constant dense<0.000000e+00> : vector<256x256xf32>
    %2 = tpu.matmul %0, %1, %cst {dimension_numbers = #tpu.dot_dimension_numbers<[1], [0], [0], [1], [0, 0, 1, 1], [], []>} : vector<256x128xbf16>, vector<128x256xbf16>, vector<256x256xf32> -> vector<256x256xf32>
    %c0_3 = arith.constant 0 : index
    %c0_4 = arith.constant 0 : index
    %3 = vector.load %arg3[%c0_3, %c0_4] : memref<1x256xf32, #tpu.memory_space<vmem>>, vector<1x256xf32>
    %4 = vector.broadcast %3 : vector<1x256xf32> to vector<256x256xf32>
    %5 = arith.addf %2, %4 : vector<256x256xf32>
    %cst_5 = arith.constant 0.000000e+00 : f32
    %6 = vector.broadcast %cst_5 : f32 to vector<256x256xf32>
    %7 = arith.maximumf %5, %6 : vector<256x256xf32>
    %8 = arith.truncf %7 : vector<256x256xf32> to vector<256x256xbf16>
    %c0_6 = arith.constant 0 : index
    %c0_7 = arith.constant 0 : index
    %9 = vector.load %arg4[%c0_6, %c0_7] : memref<256x128xbf16, #tpu.memory_space<vmem>>, vector<256x128xbf16>
    %cst_8 = arith.constant dense<0.000000e+00> : vector<256x128xf32>
    %10 = tpu.matmul %8, %9, %cst_8 {dimension_numbers = #tpu.dot_dimension_numbers<[1], [0], [0], [1], [0, 0, 1, 1], [], []>} : vector<256x256xbf16>, vector<256x128xbf16>, vector<256x128xf32> -> vector<256x128xf32>
    %c0_9 = arith.constant 0 : index
    %c0_10 = arith.constant 0 : index
    %11 = vector.load %arg5[%c0_9, %c0_10] : memref<1x128xf32, #tpu.memory_space<vmem>>, vector<1x128xf32>
    %12 = vector.broadcast %11 : vector<1x128xf32> to vector<256x128xf32>
    %13 = arith.addf %10, %12 : vector<256x128xf32>
    %14 = arith.extf %0 : vector<256x128xbf16> to vector<256x128xf32>
    %15 = arith.addf %14, %13 : vector<256x128xf32>
    %cst_11 = arith.constant dense<0.000000e+00> : vector<256xf32>
    %16 = vector.multi_reduction <add>, %15, %cst_11 [1] : vector<256x128xf32> to vector<256xf32>
    %17 = vector.shape_cast %16 : vector<256xf32> to vector<256x1xf32>
    %cst_12 = arith.constant 1.280000e+02 : f32
    %18 = vector.broadcast %cst_12 : f32 to vector<256x1xf32>
    %19 = arith.divf %17, %18 : vector<256x1xf32>
    %20 = vector.broadcast %19 : vector<256x1xf32> to vector<256x128xf32>
    %21 = arith.subf %15, %20 : vector<256x128xf32>
    %22 = arith.mulf %21, %21 : vector<256x128xf32>
    %cst_13 = arith.constant dense<0.000000e+00> : vector<256xf32>
    %23 = vector.multi_reduction <add>, %22, %cst_13 [1] : vector<256x128xf32> to vector<256xf32>
    %24 = vector.shape_cast %23 : vector<256xf32> to vector<256x1xf32>
    %cst_14 = arith.constant 1.280000e+02 : f32
    %25 = vector.broadcast %cst_14 : f32 to vector<256x1xf32>
    %26 = arith.divf %24, %25 : vector<256x1xf32>
    %27 = vector.broadcast %19 : vector<256x1xf32> to vector<256x128xf32>
    %28 = arith.subf %15, %27 : vector<256x128xf32>
    %cst_15 = arith.constant 9.99999974E-6 : f32
    %29 = vector.broadcast %cst_15 : f32 to vector<256x1xf32>
    %30 = arith.addf %26, %29 : vector<256x1xf32>
    %31 = math.rsqrt %30 : vector<256x1xf32>
    %32 = vector.broadcast %31 : vector<256x1xf32> to vector<256x128xf32>
    %33 = arith.mulf %28, %32 : vector<256x128xf32>
    %c0_16 = arith.constant 0 : index
    %c0_17 = arith.constant 0 : index
    %34 = vector.load %arg6[%c0_16, %c0_17] : memref<1x128xf32, #tpu.memory_space<vmem>>, vector<1x128xf32>
    %35 = vector.broadcast %34 : vector<1x128xf32> to vector<256x128xf32>
    %36 = arith.mulf %33, %35 : vector<256x128xf32>
    %c0_18 = arith.constant 0 : index
    %c0_19 = arith.constant 0 : index
    %37 = vector.load %arg7[%c0_18, %c0_19] : memref<1x128xf32, #tpu.memory_space<vmem>>, vector<1x128xf32>
    %38 = vector.broadcast %37 : vector<1x128xf32> to vector<256x128xf32>
    %39 = arith.addf %36, %38 : vector<256x128xf32>
    %40 = arith.truncf %39 : vector<256x128xf32> to vector<256x128xbf16>
    %c0_20 = arith.constant 0 : index
    %c0_21 = arith.constant 0 : index
    %41 = vector.load %arg8[%c0_20, %c0_21] : memref<256x128xbf16, #tpu.memory_space<vmem>>, vector<256x128xbf16>
    tpu.vector_store %arg8[%c0_20, %c0_21], %40 {strides = array<i32>} : memref<256x128xbf16, #tpu.memory_space<vmem>>, vector<256x128xbf16>,
    return
  }
  func.func @transform_0(%arg0: i32) -> (i32, i32) {
    %c0_i32 = arith.constant 0 : i32
    %c0_i32_0 = arith.constant 0 : i32
    return %arg0, %c0_i32 : i32, i32
  }
  func.func @transform_1(%arg0: i32) -> (i32, i32) {
    %c0_i32 = arith.constant 0 : i32
    %c0_i32_0 = arith.constant 0 : i32
    %c0_i32_1 = arith.constant 0 : i32
    return %c0_i32, %c0_i32_0 : i32, i32
  }
  func.func @transform_2(%arg0: i32) -> (i32, i32) {
    %c0_i32 = arith.constant 0 : i32
    %c0_i32_0 = arith.constant 0 : i32
    %c0_i32_1 = arith.constant 0 : i32
    return %c0_i32, %c0_i32_0 : i32, i32
  }
  func.func @transform_3(%arg0: i32) -> (i32, i32) {
    %c0_i32 = arith.constant 0 : i32
    %c0_i32_0 = arith.constant 0 : i32
    %c0_i32_1 = arith.constant 0 : i32
    return %c0_i32, %c0_i32_0 : i32, i32
  }
  func.func @transform_4(%arg0: i32) -> (i32, i32) {
    %c0_i32 = arith.constant 0 : i32
    %c0_i32_0 = arith.constant 0 : i32
    %c0_i32_1 = arith.constant 0 : i32
    return %c0_i32, %c0_i32_0 : i32, i32
  }
  func.func @transform_5(%arg0: i32) -> (i32, i32) {
    %c0_i32 = arith.constant 0 : i32
    %c0_i32_0 = arith.constant 0 : i32
    %c0_i32_1 = arith.constant 0 : i32
    return %c0_i32, %c0_i32_0 : i32, i32
  }
  func.func @transform_6(%arg0: i32) -> (i32, i32) {
    %c0_i32 = arith.constant 0 : i32
    %c0_i32_0 = arith.constant 0 : i32
    %c0_i32_1 = arith.constant 0 : i32
    return %c0_i32, %c0_i32_0 : i32, i32
  }
  func.func @transform_7(%arg0: i32) -> (i32, i32) {
    %c0_i32 = arith.constant 0 : i32
    %c0_i32_0 = arith.constant 0 : i32
    return %arg0, %c0_i32 : i32, i32
  }
}

module attributes {stable_mosaic.version = 11 : i64} {
  func.func @_ffn_pool_head_kernel(%arg0: i32, %arg1: memref<2x128x128xbf16, #tpu.memory_space<vmem>>, %arg2: memref<1x128x1xf32, #tpu.memory_space<vmem>>, %arg3: memref<128x256xbf16, #tpu.memory_space<vmem>>, %arg4: memref<1x256xf32, #tpu.memory_space<vmem>>, %arg5: memref<256x128xbf16, #tpu.memory_space<vmem>>, %arg6: memref<1x128xf32, #tpu.memory_space<vmem>>, %arg7: memref<1x128xf32, #tpu.memory_space<vmem>>, %arg8: memref<1x128xf32, #tpu.memory_space<vmem>>, %arg9: memref<1x128xf32, #tpu.memory_space<vmem>>, %arg10: memref<1x128xf32, #tpu.memory_space<vmem>>, %arg11: memref<128x256xbf16, #tpu.memory_space<vmem>>, %arg12: memref<1x256xf32, #tpu.memory_space<vmem>>, %arg13: memref<256x128xbf16, #tpu.memory_space<vmem>>, %arg14: memref<1x128xf32, #tpu.memory_space<vmem>>, %arg15: memref<2x128xf32, #tpu.memory_space<vmem>>, %arg16: memref<2x128xf32, #tpu.memory_space<vmem>>) attributes {dimension_semantics = [#tpu.dimension_semantics<arbitrary>], iteration_bounds = array<i64: 1>, scalar_prefetch = 0 : i64, scratch_operands = 1 : i64, tpu.core_type = #tpu.core_type<tc>, window_params = [{transform_indices = @transform_0, window_bounds = array<i64: 2, 128, 128>}, {transform_indices = @transform_1, window_bounds = array<i64: 1, 128, 1>}, {pipeline_mode = #tpu.pipeline_mode<synchronous>, transform_indices = @transform_2, window_bounds = array<i64: 128, 256>}, {pipeline_mode = #tpu.pipeline_mode<synchronous>, transform_indices = @transform_3, window_bounds = array<i64: 1, 256>}, {pipeline_mode = #tpu.pipeline_mode<synchronous>, transform_indices = @transform_4, window_bounds = array<i64: 256, 128>}, {pipeline_mode = #tpu.pipeline_mode<synchronous>, transform_indices = @transform_5, window_bounds = array<i64: 1, 128>}, {pipeline_mode = #tpu.pipeline_mode<synchronous>, transform_indices = @transform_6, window_bounds = array<i64: 1, 128>}, {pipeline_mode = #tpu.pipeline_mode<synchronous>, transform_indices = @transform_7, window_bounds = array<i64: 1, 128>}, {pipeline_mode = #tpu.pipeline_mode<synchronous>, transform_indices = @transform_8, window_bounds = array<i64: 1, 128>}, {pipeline_mode = #tpu.pipeline_mode<synchronous>, transform_indices = @transform_9, window_bounds = array<i64: 1, 128>}, {pipeline_mode = #tpu.pipeline_mode<synchronous>, transform_indices = @transform_10, window_bounds = array<i64: 128, 256>}, {pipeline_mode = #tpu.pipeline_mode<synchronous>, transform_indices = @transform_11, window_bounds = array<i64: 1, 256>}, {pipeline_mode = #tpu.pipeline_mode<synchronous>, transform_indices = @transform_12, window_bounds = array<i64: 256, 128>}, {pipeline_mode = #tpu.pipeline_mode<synchronous>, transform_indices = @transform_13, window_bounds = array<i64: 1, 128>}, {pipeline_mode = #tpu.pipeline_mode<synchronous>, transform_indices = @transform_14, window_bounds = array<i64: 2, 128>}]} {
    %c0 = arith.constant 0 : index
    %c0_0 = arith.constant 0 : index
    %c0_1 = arith.constant 0 : index
    %0 = vector.load %arg1[%c0, %c0_0, %c0_1] : memref<2x128x128xbf16, #tpu.memory_space<vmem>>, vector<2x128x128xbf16>
    %1 = vector.shape_cast %0 : vector<2x128x128xbf16> to vector<256x128xbf16>
    %c0_2 = arith.constant 0 : index
    %c0_3 = arith.constant 0 : index
    %2 = vector.load %arg3[%c0_2, %c0_3] : memref<128x256xbf16, #tpu.memory_space<vmem>>, vector<128x256xbf16>
    %cst = arith.constant dense<0.000000e+00> : vector<256x256xf32>
    %3 = tpu.matmul %1, %2, %cst {dimension_numbers = #tpu.dot_dimension_numbers<[1], [0], [0], [1], [0, 0, 1, 1], [], []>} : vector<256x128xbf16>, vector<128x256xbf16>, vector<256x256xf32> -> vector<256x256xf32>
    %c0_4 = arith.constant 0 : index
    %c0_5 = arith.constant 0 : index
    %4 = vector.load %arg4[%c0_4, %c0_5] : memref<1x256xf32, #tpu.memory_space<vmem>>, vector<1x256xf32>
    %5 = vector.broadcast %4 : vector<1x256xf32> to vector<256x256xf32>
    %6 = arith.addf %3, %5 : vector<256x256xf32>
    %cst_6 = arith.constant 0.000000e+00 : f32
    %7 = vector.broadcast %cst_6 : f32 to vector<256x256xf32>
    %8 = arith.maximumf %6, %7 : vector<256x256xf32>
    %9 = arith.truncf %8 : vector<256x256xf32> to vector<256x256xbf16>
    %c0_7 = arith.constant 0 : index
    %c0_8 = arith.constant 0 : index
    %10 = vector.load %arg5[%c0_7, %c0_8] : memref<256x128xbf16, #tpu.memory_space<vmem>>, vector<256x128xbf16>
    %cst_9 = arith.constant dense<0.000000e+00> : vector<256x128xf32>
    %11 = tpu.matmul %9, %10, %cst_9 {dimension_numbers = #tpu.dot_dimension_numbers<[1], [0], [0], [1], [0, 0, 1, 1], [], []>} : vector<256x256xbf16>, vector<256x128xbf16>, vector<256x128xf32> -> vector<256x128xf32>
    %c0_10 = arith.constant 0 : index
    %c0_11 = arith.constant 0 : index
    %12 = vector.load %arg6[%c0_10, %c0_11] : memref<1x128xf32, #tpu.memory_space<vmem>>, vector<1x128xf32>
    %13 = vector.broadcast %12 : vector<1x128xf32> to vector<256x128xf32>
    %14 = arith.addf %11, %13 : vector<256x128xf32>
    %15 = arith.extf %1 : vector<256x128xbf16> to vector<256x128xf32>
    %16 = arith.addf %15, %14 : vector<256x128xf32>
    %cst_12 = arith.constant dense<0.000000e+00> : vector<256xf32>
    %17 = vector.multi_reduction <add>, %16, %cst_12 [1] : vector<256x128xf32> to vector<256xf32>
    %18 = vector.shape_cast %17 : vector<256xf32> to vector<256x1xf32>
    %cst_13 = arith.constant 1.280000e+02 : f32
    %19 = vector.broadcast %cst_13 : f32 to vector<256x1xf32>
    %20 = arith.divf %18, %19 : vector<256x1xf32>
    %21 = vector.broadcast %20 : vector<256x1xf32> to vector<256x128xf32>
    %22 = arith.subf %16, %21 : vector<256x128xf32>
    %23 = arith.mulf %22, %22 : vector<256x128xf32>
    %cst_14 = arith.constant dense<0.000000e+00> : vector<256xf32>
    %24 = vector.multi_reduction <add>, %23, %cst_14 [1] : vector<256x128xf32> to vector<256xf32>
    %25 = vector.shape_cast %24 : vector<256xf32> to vector<256x1xf32>
    %cst_15 = arith.constant 1.280000e+02 : f32
    %26 = vector.broadcast %cst_15 : f32 to vector<256x1xf32>
    %27 = arith.divf %25, %26 : vector<256x1xf32>
    %28 = vector.broadcast %20 : vector<256x1xf32> to vector<256x128xf32>
    %29 = arith.subf %16, %28 : vector<256x128xf32>
    %cst_16 = arith.constant 9.99999974E-6 : f32
    %30 = vector.broadcast %cst_16 : f32 to vector<256x1xf32>
    %31 = arith.addf %27, %30 : vector<256x1xf32>
    %32 = math.rsqrt %31 : vector<256x1xf32>
    %33 = vector.broadcast %32 : vector<256x1xf32> to vector<256x128xf32>
    %34 = arith.mulf %29, %33 : vector<256x128xf32>
    %c0_17 = arith.constant 0 : index
    %c0_18 = arith.constant 0 : index
    %35 = vector.load %arg7[%c0_17, %c0_18] : memref<1x128xf32, #tpu.memory_space<vmem>>, vector<1x128xf32>
    %36 = vector.broadcast %35 : vector<1x128xf32> to vector<256x128xf32>
    %37 = arith.mulf %34, %36 : vector<256x128xf32>
    %c0_19 = arith.constant 0 : index
    %c0_20 = arith.constant 0 : index
    %38 = vector.load %arg8[%c0_19, %c0_20] : memref<1x128xf32, #tpu.memory_space<vmem>>, vector<1x128xf32>
    %39 = vector.broadcast %38 : vector<1x128xf32> to vector<256x128xf32>
    %40 = arith.addf %37, %39 : vector<256x128xf32>
    %41 = vector.shape_cast %40 : vector<256x128xf32> to vector<2x128x128xf32>
    %c0_21 = arith.constant 0 : index
    %c0_22 = arith.constant 0 : index
    %c0_23 = arith.constant 0 : index
    %42 = vector.load %arg2[%c0_21, %c0_22, %c0_23] : memref<1x128x1xf32, #tpu.memory_space<vmem>>, vector<1x128x1xf32>
    %43 = vector.broadcast %42 : vector<1x128x1xf32> to vector<2x128x128xf32>
    %44 = arith.addf %41, %43 : vector<2x128x128xf32>
    %cst_24 = arith.constant dense<0xFF800000> : vector<2x128xf32>
    %45 = vector.multi_reduction <maximumf>, %44, %cst_24 [1] : vector<2x128x128xf32> to vector<2x128xf32>
    %c0_i32 = arith.constant 0 : i32
    %46 = arith.cmpi eq, %arg0, %c0_i32 : i32
    %47 = arith.extui %46 : i1 to i32
    %c0_i32_25 = arith.constant 0 : i32
    %48 = arith.cmpi ne, %47, %c0_i32_25 : i32
    scf.if %48 {
      %c0_30 = arith.constant 0 : index
      %c0_31 = arith.constant 0 : index
      %55 = vector.load %arg16[%c0_30, %c0_31] : memref<2x128xf32, #tpu.memory_space<vmem>>, vector<2x128xf32>
      tpu.vector_store %arg16[%c0_30, %c0_31], %45 {strides = array<i32>} : memref<2x128xf32, #tpu.memory_space<vmem>>, vector<2x128xf32>,
    } else {
    }
    %c0_i32_26 = arith.constant 0 : i32
    %49 = arith.cmpi sgt, %arg0, %c0_i32_26 : i32
    %50 = arith.extui %49 : i1 to i32
    %c0_i32_27 = arith.constant 0 : i32
    %51 = arith.cmpi ne, %50, %c0_i32_27 : i32
    scf.if %51 {
      %c0_30 = arith.constant 0 : index
      %c0_31 = arith.constant 0 : index
      %55 = vector.load %arg16[%c0_30, %c0_31] : memref<2x128xf32, #tpu.memory_space<vmem>>, vector<2x128xf32>
      %56 = arith.maximumf %55, %45 : vector<2x128xf32>
      %c0_32 = arith.constant 0 : index
      %c0_33 = arith.constant 0 : index
      %57 = vector.load %arg16[%c0_32, %c0_33] : memref<2x128xf32, #tpu.memory_space<vmem>>, vector<2x128xf32>
      tpu.vector_store %arg16[%c0_32, %c0_33], %56 {strides = array<i32>} : memref<2x128xf32, #tpu.memory_space<vmem>>, vector<2x128xf32>,
    } else {
    }
    %c0_i32_28 = arith.constant 0 : i32
    %52 = arith.cmpi eq, %arg0, %c0_i32_28 : i32
    %53 = arith.extui %52 : i1 to i32
    %c0_i32_29 = arith.constant 0 : i32
    %54 = arith.cmpi ne, %53, %c0_i32_29 : i32
    scf.if %54 {
      %c0_30 = arith.constant 0 : index
      %c0_31 = arith.constant 0 : index
      %55 = vector.load %arg16[%c0_30, %c0_31] : memref<2x128xf32, #tpu.memory_space<vmem>>, vector<2x128xf32>
      %c0_32 = arith.constant 0 : index
      %c0_33 = arith.constant 0 : index
      %56 = vector.load %arg9[%c0_32, %c0_33] : memref<1x128xf32, #tpu.memory_space<vmem>>, vector<1x128xf32>
      %57 = vector.broadcast %56 : vector<1x128xf32> to vector<2x128xf32>
      %58 = arith.subf %55, %57 : vector<2x128xf32>
      %c0_34 = arith.constant 0 : index
      %c0_35 = arith.constant 0 : index
      %59 = vector.load %arg10[%c0_34, %c0_35] : memref<1x128xf32, #tpu.memory_space<vmem>>, vector<1x128xf32>
      %cst_36 = arith.constant 9.99999997E-7 : f32
      %60 = vector.broadcast %cst_36 : f32 to vector<1x128xf32>
      %61 = arith.addf %59, %60 : vector<1x128xf32>
      %62 = math.rsqrt %61 : vector<1x128xf32>
      %63 = vector.broadcast %62 : vector<1x128xf32> to vector<2x128xf32>
      %64 = arith.mulf %58, %63 : vector<2x128xf32>
      %65 = arith.truncf %64 : vector<2x128xf32> to vector<2x128xbf16>
      %c0_37 = arith.constant 0 : index
      %c0_38 = arith.constant 0 : index
      %66 = vector.load %arg11[%c0_37, %c0_38] : memref<128x256xbf16, #tpu.memory_space<vmem>>, vector<128x256xbf16>
      %cst_39 = arith.constant dense<0.000000e+00> : vector<2x256xf32>
      %67 = tpu.matmul %65, %66, %cst_39 {dimension_numbers = #tpu.dot_dimension_numbers<[1], [0], [0], [1], [0, 0, 1, 1], [], []>} : vector<2x128xbf16>, vector<128x256xbf16>, vector<2x256xf32> -> vector<2x256xf32>
      %c0_40 = arith.constant 0 : index
      %c0_41 = arith.constant 0 : index
      %68 = vector.load %arg12[%c0_40, %c0_41] : memref<1x256xf32, #tpu.memory_space<vmem>>, vector<1x256xf32>
      %69 = vector.broadcast %68 : vector<1x256xf32> to vector<2x256xf32>
      %70 = arith.addf %67, %69 : vector<2x256xf32>
      %cst_42 = arith.constant 0.000000e+00 : f32
      %71 = vector.broadcast %cst_42 : f32 to vector<2x256xf32>
      %72 = arith.maximumf %70, %71 : vector<2x256xf32>
      %73 = arith.truncf %72 : vector<2x256xf32> to vector<2x256xbf16>
      %c0_43 = arith.constant 0 : index
      %c0_44 = arith.constant 0 : index
      %74 = vector.load %arg13[%c0_43, %c0_44] : memref<256x128xbf16, #tpu.memory_space<vmem>>, vector<256x128xbf16>
      %cst_45 = arith.constant dense<0.000000e+00> : vector<2x128xf32>
      %75 = tpu.matmul %73, %74, %cst_45 {dimension_numbers = #tpu.dot_dimension_numbers<[1], [0], [0], [1], [0, 0, 1, 1], [], []>} : vector<2x256xbf16>, vector<256x128xbf16>, vector<2x128xf32> -> vector<2x128xf32>
      %c0_46 = arith.constant 0 : index
      %c0_47 = arith.constant 0 : index
      %76 = vector.load %arg14[%c0_46, %c0_47] : memref<1x128xf32, #tpu.memory_space<vmem>>, vector<1x128xf32>
      %77 = vector.broadcast %76 : vector<1x128xf32> to vector<2x128xf32>
      %78 = arith.addf %75, %77 : vector<2x128xf32>
      %c0_48 = arith.constant 0 : index
      %c0_49 = arith.constant 0 : index
      %79 = vector.load %arg15[%c0_48, %c0_49] : memref<2x128xf32, #tpu.memory_space<vmem>>, vector<2x128xf32>
      tpu.vector_store %arg15[%c0_48, %c0_49], %78 {strides = array<i32>} : memref<2x128xf32, #tpu.memory_space<vmem>>, vector<2x128xf32>,
    } else {
    }
    return
  }
  func.func @transform_0(%arg0: i32) -> (i32, i32, i32) {
    %c0_i32 = arith.constant 0 : i32
    %c0_i32_0 = arith.constant 0 : i32
    %c0_i32_1 = arith.constant 0 : i32
    return %c0_i32, %arg0, %c0_i32_0 : i32, i32, i32
  }
  func.func @transform_1(%arg0: i32) -> (i32, i32, i32) {
    %c0_i32 = arith.constant 0 : i32
    %c0_i32_0 = arith.constant 0 : i32
    %c0_i32_1 = arith.constant 0 : i32
    return %c0_i32, %arg0, %c0_i32_0 : i32, i32, i32
  }
  func.func @transform_2(%arg0: i32) -> (i32, i32) {
    %c0_i32 = arith.constant 0 : i32
    %c0_i32_0 = arith.constant 0 : i32
    %c0_i32_1 = arith.constant 0 : i32
    return %c0_i32, %c0_i32_0 : i32, i32
  }
  func.func @transform_3(%arg0: i32) -> (i32, i32) {
    %c0_i32 = arith.constant 0 : i32
    %c0_i32_0 = arith.constant 0 : i32
    %c0_i32_1 = arith.constant 0 : i32
    return %c0_i32, %c0_i32_0 : i32, i32
  }
  func.func @transform_4(%arg0: i32) -> (i32, i32) {
    %c0_i32 = arith.constant 0 : i32
    %c0_i32_0 = arith.constant 0 : i32
    %c0_i32_1 = arith.constant 0 : i32
    return %c0_i32, %c0_i32_0 : i32, i32
  }
  func.func @transform_5(%arg0: i32) -> (i32, i32) {
    %c0_i32 = arith.constant 0 : i32
    %c0_i32_0 = arith.constant 0 : i32
    %c0_i32_1 = arith.constant 0 : i32
    return %c0_i32, %c0_i32_0 : i32, i32
  }
  func.func @transform_6(%arg0: i32) -> (i32, i32) {
    %c0_i32 = arith.constant 0 : i32
    %c0_i32_0 = arith.constant 0 : i32
    %c0_i32_1 = arith.constant 0 : i32
    return %c0_i32, %c0_i32_0 : i32, i32
  }
  func.func @transform_7(%arg0: i32) -> (i32, i32) {
    %c0_i32 = arith.constant 0 : i32
    %c0_i32_0 = arith.constant 0 : i32
    %c0_i32_1 = arith.constant 0 : i32
    return %c0_i32, %c0_i32_0 : i32, i32
  }
  func.func @transform_8(%arg0: i32) -> (i32, i32) {
    %c0_i32 = arith.constant 0 : i32
    %c0_i32_0 = arith.constant 0 : i32
    %c0_i32_1 = arith.constant 0 : i32
    return %c0_i32, %c0_i32_0 : i32, i32
  }
  func.func @transform_9(%arg0: i32) -> (i32, i32) {
    %c0_i32 = arith.constant 0 : i32
    %c0_i32_0 = arith.constant 0 : i32
    %c0_i32_1 = arith.constant 0 : i32
    return %c0_i32, %c0_i32_0 : i32, i32
  }
  func.func @transform_10(%arg0: i32) -> (i32, i32) {
    %c0_i32 = arith.constant 0 : i32
    %c0_i32_0 = arith.constant 0 : i32
    %c0_i32_1 = arith.constant 0 : i32
    return %c0_i32, %c0_i32_0 : i32, i32
  }
  func.func @transform_11(%arg0: i32) -> (i32, i32) {
    %c0_i32 = arith.constant 0 : i32
    %c0_i32_0 = arith.constant 0 : i32
    %c0_i32_1 = arith.constant 0 : i32
    return %c0_i32, %c0_i32_0 : i32, i32
  }
  func.func @transform_12(%arg0: i32) -> (i32, i32) {
    %c0_i32 = arith.constant 0 : i32
    %c0_i32_0 = arith.constant 0 : i32
    %c0_i32_1 = arith.constant 0 : i32
    return %c0_i32, %c0_i32_0 : i32, i32
  }
  func.func @transform_13(%arg0: i32) -> (i32, i32) {
    %c0_i32 = arith.constant 0 : i32
    %c0_i32_0 = arith.constant 0 : i32
    %c0_i32_1 = arith.constant 0 : i32
    return %c0_i32, %c0_i32_0 : i32, i32
  }
  func.func @transform_14(%arg0: i32) -> (i32, i32) {
    %c0_i32 = arith.constant 0 : i32
    %c0_i32_0 = arith.constant 0 : i32
    %c0_i32_1 = arith.constant 0 : i32
    return %c0_i32, %c0_i32_0 : i32, i32
  }
}

</mosaic_0001>

<llo_original>
// kernel: _forward_device.5
$region0: #{_forward_device.5}
  #allocation0 [shape = 'u32[]', space=smem, size = 0x4, offset = 0x4, fixed_abs, tag = 'smem constant byte address 0x4 - core index']
  #allocation1 [shape = 'u32[72,128]{1,0:T(1,128)}', space=vmem, size = 0x9000, scoped, tag = 'internal scratch']
  %s0 = inlined_call_operand.vmem [shape: f32[256,1], index: 0, kind: input, shape index: {}]
  %s1 = inlined_call_operand.vmem [shape: f32[256,128], index: 1, kind: input, shape index: {}]
  %s2 = inlined_call_operand.vmem [shape: f32[1,128], index: 2, kind: input, shape index: {}]
  %s3 = inlined_call_operand.vmem [shape: f32[1,128], index: 3, kind: input, shape index: {}]
  %s4 = inlined_call_operand.vmem [shape: bf16[256,128], index: 4, kind: output, shape index: {}]
  %s5 = sld [smem:[#allocation0]]
  $region26: #{_forward_device.5} parent=0
    _
  %s7 = ssub.s32 1, %s5
  %s8 = scalar_select 0, %s7, %s5
  // Predicated region
  $region2: #{_forward_device.5} parent=0 // pred_check
    _
  $region3: #{_forward_device.5} parent=0 // pred_check_branch
    %10 = sbr.rel (0) target = $region5
  $region4: #{_forward_device.5} parent=0 // pred_region
    _
  $region5: #{_forward_device.5} parent=0 // pred_fallthru
    _
  // Predicated region
  $region6: #{_forward_device.5} parent=0 // pred_check
    _
  $region7: #{_forward_device.5} parent=0 // pred_check_branch
    %12 = sbr.rel (0) target = $region9
  $region8: #{_forward_device.5} parent=0 // pred_region
    _
  $region9: #{_forward_device.5} parent=0 // pred_fallthru
    _
  // Predicated region
  $region10: #{_forward_device.5} parent=0 // pred_check
    _
  $region11: #{_forward_device.5} parent=0 // pred_check_branch
    %14 = sbr.rel (0) target = $region13
  $region12: #{_forward_device.5} parent=0 // pred_region
    _
  $region13: #{_forward_device.5} parent=0 // pred_fallthru
    _
  // Predicated region
  $region14: #{_forward_device.5} parent=0 // pred_check
    _
  $region15: #{_forward_device.5} parent=0 // pred_check_branch
    %16 = sbr.rel (0) target = $region17
  $region16: #{_forward_device.5} parent=0 // pred_region
    _
  $region17: #{_forward_device.5} parent=0 // pred_fallthru
    _
  %v17 = vld [vmem:[%s0] sm:$0xff]
  %v18 = vld [vmem:[%s0 + $0x8] sm:$0xff]
  %v19 = vld [vmem:[%s0 + $0x10] sm:$0xff]
  %v20 = vld [vmem:[%s0 + $0x18] sm:$0xff]
  %v21 = vld [vmem:[%s0 + $0x20] sm:$0xff]
  %v22 = vld [vmem:[%s0 + $0x28] sm:$0xff]
  %v23 = vld [vmem:[%s0 + $0x30] sm:$0xff]
  %v24 = vld [vmem:[%s0 + $0x38] sm:$0xff]
  %v25 = vld [vmem:[%s0 + $0x40] sm:$0xff]
  %v26 = vld [vmem:[%s0 + $0x48] sm:$0xff]
  %v27 = vld [vmem:[%s0 + $0x50] sm:$0xff]
  %v28 = vld [vmem:[%s0 + $0x58] sm:$0xff]
  %v29 = vld [vmem:[%s0 + $0x60] sm:$0xff]
  %v30 = vld [vmem:[%s0 + $0x68] sm:$0xff]
  %v31 = vld [vmem:[%s0 + $0x70] sm:$0xff]
  %v32 = vld [vmem:[%s0 + $0x78] sm:$0xff]
  %v33 = vld [vmem:[%s0 + $0x80] sm:$0xff]
  %v34 = vld [vmem:[%s0 + $0x88] sm:$0xff]
  %v35 = vld [vmem:[%s0 + $0x90] sm:$0xff]
  %v36 = vld [vmem:[%s0 + $0x98] sm:$0xff]
  %v37 = vld [vmem:[%s0 + $0xa0] sm:$0xff]
  %v38 = vld [vmem:[%s0 + $0xa8] sm:$0xff]
  %v39 = vld [vmem:[%s0 + $0xb0] sm:$0xff]
  %v40 = vld [vmem:[%s0 + $0xb8] sm:$0xff]
  %v41 = vld [vmem:[%s0 + $0xc0] sm:$0xff]
  %v42 = vld [vmem:[%s0 + $0xc8] sm:$0xff]
  %v43 = vld [vmem:[%s0 + $0xd0] sm:$0xff]
  %v44 = vld [vmem:[%s0 + $0xd8] sm:$0xff]
  %v45 = vld [vmem:[%s0 + $0xe0] sm:$0xff]
  %v46 = vld [vmem:[%s0 + $0xe8] sm:$0xff]
  %v47 = vld [vmem:[%s0 + $0xf0] sm:$0xff]
  %v48 = vld [vmem:[%s0 + $0xf8] sm:$0xff]
  %v49 = vld [vmem:[%s2] sm:$0x1]
  %51 = vset.pattern.permute.xlu0 0
  %52 = vperm.xlu0 %51, %v17
  %v53 = vpop.permute.xlu0 %52
  %56 = vset.pattern.permute.xlu0 0
  %57 = vperm.xlu0 %56, %v18
  %v58 = vpop.permute.xlu0 %57
  %61 = vset.pattern.permute.xlu0 0
  %62 = vperm.xlu0 %61, %v19
  %v63 = vpop.permute.xlu0 %62
  %66 = vset.pattern.permute.xlu0 0
  %67 = vperm.xlu0 %66, %v20
  %v68 = vpop.permute.xlu0 %67
  %71 = vset.pattern.permute.xlu0 0
  %72 = vperm.xlu0 %71, %v21
  %v73 = vpop.permute.xlu0 %72
  %76 = vset.pattern.permute.xlu0 0
  %77 = vperm.xlu0 %76, %v22
  %v78 = vpop.permute.xlu0 %77
  %81 = vset.pattern.permute.xlu0 0
  %82 = vperm.xlu0 %81, %v23
  %v83 = vpop.permute.xlu0 %82
  %86 = vset.pattern.permute.xlu0 0
  %87 = vperm.xlu0 %86, %v24
  %v88 = vpop.permute.xlu0 %87
  %91 = vset.pattern.permute.xlu0 0
  %92 = vperm.xlu0 %91, %v25
  %v93 = vpop.permute.xlu0 %92
  %96 = vset.pattern.permute.xlu0 0
  %97 = vperm.xlu0 %96, %v26
  %v98 = vpop.permute.xlu0 %97
  %101 = vset.pattern.permute.xlu0 0
  %102 = vperm.xlu0 %101, %v27
  %v103 = vpop.permute.xlu0 %102
  %106 = vset.pattern.permute.xlu0 0
  %107 = vperm.xlu0 %106, %v28
  %v108 = vpop.permute.xlu0 %107
  %111 = vset.pattern.permute.xlu0 0
  %112 = vperm.xlu0 %111, %v29
  %v113 = vpop.permute.xlu0 %112
  %116 = vset.pattern.permute.xlu0 0
  %117 = vperm.xlu0 %116, %v30
  %v118 = vpop.permute.xlu0 %117
  %121 = vset.pattern.permute.xlu0 0
  %122 = vperm.xlu0 %121, %v31
  %v123 = vpop.permute.xlu0 %122
  %126 = vset.pattern.permute.xlu0 0
  %127 = vperm.xlu0 %126, %v32
  %v128 = vpop.permute.xlu0 %127
  %131 = vset.pattern.permute.xlu0 0
  %132 = vperm.xlu0 %131, %v33
  %v133 = vpop.permute.xlu0 %132
  %136 = vset.pattern.permute.xlu0 0
  %137 = vperm.xlu0 %136, %v34
  %v138 = vpop.permute.xlu0 %137
  %141 = vset.pattern.permute.xlu0 0
  %142 = vperm.xlu0 %141, %v35
  %v143 = vpop.permute.xlu0 %142
  %146 = vset.pattern.permute.xlu0 0
  %147 = vperm.xlu0 %146, %v36
  %v148 = vpop.permute.xlu0 %147
  %151 = vset.pattern.permute.xlu0 0
  %152 = vperm.xlu0 %151, %v37
  %v153 = vpop.permute.xlu0 %152
  %156 = vset.pattern.permute.xlu0 0
  %157 = vperm.xlu0 %156, %v38
  %v158 = vpop.permute.xlu0 %157
  %161 = vset.pattern.permute.xlu0 0
  %162 = vperm.xlu0 %161, %v39
  %v163 = vpop.permute.xlu0 %162
  %166 = vset.pattern.permute.xlu0 0
  %167 = vperm.xlu0 %166, %v40
  %v168 = vpop.permute.xlu0 %167
  %171 = vset.pattern.permute.xlu0 0
  %172 = vperm.xlu0 %171, %v41
  %v173 = vpop.permute.xlu0 %172
  %176 = vset.pattern.permute.xlu0 0
  %177 = vperm.xlu0 %176, %v42
  %v178 = vpop.permute.xlu0 %177
  %181 = vset.pattern.permute.xlu0 0
  %182 = vperm.xlu0 %181, %v43
  %v183 = vpop.permute.xlu0 %182
  %186 = vset.pattern.permute.xlu0 0
  %187 = vperm.xlu0 %186, %v44
  %v188 = vpop.permute.xlu0 %187
  %191 = vset.pattern.permute.xlu0 0
  %192 = vperm.xlu0 %191, %v45
  %v193 = vpop.permute.xlu0 %192
  %196 = vset.pattern.permute.xlu0 0
  %197 = vperm.xlu0 %196, %v46
  %v198 = vpop.permute.xlu0 %197
  %201 = vset.pattern.permute.xlu0 0
  %202 = vperm.xlu0 %201, %v47
  %v203 = vpop.permute.xlu0 %202
  %206 = vset.pattern.permute.xlu0 0
  %207 = vperm.xlu0 %206, %v48
  %v208 = vpop.permute.xlu0 %207
  %v211 = vperm.slane %v49, 0
  %v213 = vmul.f32 %v53, %v211
  %v214 = vmul.f32 %v58, %v211
  %v215 = vmul.f32 %v63, %v211
  %v216 = vmul.f32 %v68, %v211
  %v217 = vmul.f32 %v73, %v211
  %v218 = vmul.f32 %v78, %v211
  %v219 = vmul.f32 %v83, %v211
  %v220 = vmul.f32 %v88, %v211
  %v221 = vmul.f32 %v93, %v211
  %v222 = vmul.f32 %v98, %v211
  %v223 = vmul.f32 %v103, %v211
  %v224 = vmul.f32 %v108, %v211
  %v225 = vmul.f32 %v113, %v211
  %v226 = vmul.f32 %v118, %v211
  %v227 = vmul.f32 %v123, %v211
  %v228 = vmul.f32 %v128, %v211
  %v229 = vmul.f32 %v133, %v211
  %v230 = vmul.f32 %v138, %v211
  %v231 = vmul.f32 %v143, %v211
  %v232 = vmul.f32 %v148, %v211
  %v233 = vmul.f32 %v153, %v211
  %v234 = vmul.f32 %v158, %v211
  %v235 = vmul.f32 %v163, %v211
  %v236 = vmul.f32 %v168, %v211
  %v237 = vmul.f32 %v173, %v211
  %v238 = vmul.f32 %v178, %v211
  %v239 = vmul.f32 %v183, %v211
  %v240 = vmul.f32 %v188, %v211
  %v241 = vmul.f32 %v193, %v211
  %v242 = vmul.f32 %v198, %v211
  %v243 = vmul.f32 %v203, %v211
  %v244 = vmul.f32 %v208, %v211
  %v245 = vld [vmem:[%s3] sm:$0x1]
  %v247 = vperm.slane %v245, 0
  %v249 = vadd.f32 %v213, %v247
  %v250 = vadd.f32 %v214, %v247
  %v251 = vadd.f32 %v215, %v247
  %v252 = vadd.f32 %v216, %v247
  %v253 = vadd.f32 %v217, %v247
  %v254 = vadd.f32 %v218, %v247
  %v255 = vadd.f32 %v219, %v247
  %v256 = vadd.f32 %v220, %v247
  %v257 = vadd.f32 %v221, %v247
  %v258 = vadd.f32 %v222, %v247
  %v259 = vadd.f32 %v223, %v247
  %v260 = vadd.f32 %v224, %v247
  %v261 = vadd.f32 %v225, %v247
  %v262 = vadd.f32 %v226, %v247
  %v263 = vadd.f32 %v227, %v247
  %v264 = vadd.f32 %v228, %v247
  %v265 = vadd.f32 %v229, %v247
  %v266 = vadd.f32 %v230, %v247
  %v267 = vadd.f32 %v231, %v247
  %v268 = vadd.f32 %v232, %v247
  %v269 = vadd.f32 %v233, %v247
  %v270 = vadd.f32 %v234, %v247
  %v271 = vadd.f32 %v235, %v247
  %v272 = vadd.f32 %v236, %v247
  %v273 = vadd.f32 %v237, %v247
  %v274 = vadd.f32 %v238, %v247
  %v275 = vadd.f32 %v239, %v247
  %v276 = vadd.f32 %v240, %v247
  %v277 = vadd.f32 %v241, %v247
  %v278 = vadd.f32 %v242, %v247
  %v279 = vadd.f32 %v243, %v247
  %v280 = vadd.f32 %v244, %v247
  %v281 = vld [vmem:[%s1] sm:$0xff]
  %v282 = vld [vmem:[%s1 + $0x8] sm:$0xff]
  %v283 = vld [vmem:[%s1 + $0x10] sm:$0xff]
  %v284 = vld [vmem:[%s1 + $0x18] sm:$0xff]
  %v285 = vld [vmem:[%s1 + $0x20] sm:$0xff]
  %v286 = vld [vmem:[%s1 + $0x28] sm:$0xff]
  %v287 = vld [vmem:[%s1 + $0x30] sm:$0xff]
  %v288 = vld [vmem:[%s1 + $0x38] sm:$0xff]
  %v289 = vld [vmem:[%s1 + $0x40] sm:$0xff]
  %v290 = vld [vmem:[%s1 + $0x48] sm:$0xff]
  %v291 = vld [vmem:[%s1 + $0x50] sm:$0xff]
  %v292 = vld [vmem:[%s1 + $0x58] sm:$0xff]
  %v293 = vld [vmem:[%s1 + $0x60] sm:$0xff]
  %v294 = vld [vmem:[%s1 + $0x68] sm:$0xff]
  %v295 = vld [vmem:[%s1 + $0x70] sm:$0xff]
  %v296 = vld [vmem:[%s1 + $0x78] sm:$0xff]
  %v297 = vld [vmem:[%s1 + $0x80] sm:$0xff]
  %v298 = vld [vmem:[%s1 + $0x88] sm:$0xff]
  %v299 = vld [vmem:[%s1 + $0x90] sm:$0xff]
  %v300 = vld [vmem:[%s1 + $0x98] sm:$0xff]
  %v301 = vld [vmem:[%s1 + $0xa0] sm:$0xff]
  %v302 = vld [vmem:[%s1 + $0xa8] sm:$0xff]
  %v303 = vld [vmem:[%s1 + $0xb0] sm:$0xff]
  %v304 = vld [vmem:[%s1 + $0xb8] sm:$0xff]
  %v305 = vld [vmem:[%s1 + $0xc0] sm:$0xff]
  %v306 = vld [vmem:[%s1 + $0xc8] sm:$0xff]
  %v307 = vld [vmem:[%s1 + $0xd0] sm:$0xff]
  %v308 = vld [vmem:[%s1 + $0xd8] sm:$0xff]
  %v309 = vld [vmem:[%s1 + $0xe0] sm:$0xff]
  %v310 = vld [vmem:[%s1 + $0xe8] sm:$0xff]
  %v311 = vld [vmem:[%s1 + $0xf0] sm:$0xff]
  %v312 = vld [vmem:[%s1 + $0xf8] sm:$0xff]
  %v313 = vadd.f32 %v249, %v281
  %v314 = vadd.f32 %v250, %v282
  %v315 = vadd.f32 %v251, %v283
  %v316 = vadd.f32 %v252, %v284
  %v317 = vadd.f32 %v253, %v285
  %v318 = vadd.f32 %v254, %v286
  %v319 = vadd.f32 %v255, %v287
  %v320 = vadd.f32 %v256, %v288
  %v321 = vadd.f32 %v257, %v289
  %v322 = vadd.f32 %v258, %v290
  %v323 = vadd.f32 %v259, %v291
  %v324 = vadd.f32 %v260, %v292
  %v325 = vadd.f32 %v261, %v293
  %v326 = vadd.f32 %v262, %v294
  %v327 = vadd.f32 %v263, %v295
  %v328 = vadd.f32 %v264, %v296
  %v329 = vadd.f32 %v265, %v297
  %v330 = vadd.f32 %v266, %v298
  %v331 = vadd.f32 %v267, %v299
  %v332 = vadd.f32 %v268, %v300
  %v333 = vadd.f32 %v269, %v301
  %v334 = vadd.f32 %v270, %v302
  %v335 = vadd.f32 %v271, %v303
  %v336 = vadd.f32 %v272, %v304
  %v337 = vadd.f32 %v273, %v305
  %v338 = vadd.f32 %v274, %v306
  %v339 = vadd.f32 %v275, %v307
  %v340 = vadd.f32 %v276, %v308
  %v341 = vadd.f32 %v277, %v309
  %v342 = vadd.f32 %v278, %v310
  %v343 = vadd.f32 %v279, %v311
  %v344 = vadd.f32 %v280, %v312
  %v345 = vpack.c.bf16 %v313, %v313
  %v346 = vpack.c.bf16 %v314, %v314
  %v347 = vpack.c.bf16 %v315, %v315
  %v348 = vpack.c.bf16 %v316, %v316
  %v349 = vpack.c.bf16 %v317, %v317
  %v350 = vpack.c.bf16 %v318, %v318
  %v351 = vpack.c.bf16 %v319, %v319
  %v352 = vpack.c.bf16 %v320, %v320
  %v353 = vpack.c.bf16 %v321, %v321
  %v354 = vpack.c.bf16 %v322, %v322
  %v355 = vpack.c.bf16 %v323, %v323
  %v356 = vpack.c.bf16 %v324, %v324
  %v357 = vpack.c.bf16 %v325, %v325
  %v358 = vpack.c.bf16 %v326, %v326
  %v359 = vpack.c.bf16 %v327, %v327
  %v360 = vpack.c.bf16 %v328, %v328
  %v361 = vpack.c.bf16 %v329, %v329
  %v362 = vpack.c.bf16 %v330, %v330
  %v363 = vpack.c.bf16 %v331, %v331
  %v364 = vpack.c.bf16 %v332, %v332
  %v365 = vpack.c.bf16 %v333, %v333
  %v366 = vpack.c.bf16 %v334, %v334
  %v367 = vpack.c.bf16 %v335, %v335
  %v368 = vpack.c.bf16 %v336, %v336
  %v369 = vpack.c.bf16 %v337, %v337
  %v370 = vpack.c.bf16 %v338, %v338
  %v371 = vpack.c.bf16 %v339, %v339
  %v372 = vpack.c.bf16 %v340, %v340
  %v373 = vpack.c.bf16 %v341, %v341
  %v374 = vpack.c.bf16 %v342, %v342
  %v375 = vpack.c.bf16 %v343, %v343
  %v376 = vpack.c.bf16 %v344, %v344
  %377 = vst [vmem:[%s4] sm:$0xf] %v345
  %378 = vst [vmem:[%s4 + $0x4] sm:$0xf] %v346
  %379 = vst [vmem:[%s4 + $0x8] sm:$0xf] %v347
  %380 = vst [vmem:[%s4 + $0xc] sm:$0xf] %v348
  %381 = vst [vmem:[%s4 + $0x10] sm:$0xf] %v349
  %382 = vst [vmem:[%s4 + $0x14] sm:$0xf] %v350
  %383 = vst [vmem:[%s4 + $0x18] sm:$0xf] %v351
  %384 = vst [vmem:[%s4 + $0x1c] sm:$0xf] %v352
  %385 = vst [vmem:[%s4 + $0x20] sm:$0xf] %v353
  %386 = vst [vmem:[%s4 + $0x24] sm:$0xf] %v354
  %387 = vst [vmem:[%s4 + $0x28] sm:$0xf] %v355
  %388 = vst [vmem:[%s4 + $0x2c] sm:$0xf] %v356
  %389 = vst [vmem:[%s4 + $0x30] sm:$0xf] %v357
  %390 = vst [vmem:[%s4 + $0x34] sm:$0xf] %v358
  %391 = vst [vmem:[%s4 + $0x38] sm:$0xf] %v359
  %392 = vst [vmem:[%s4 + $0x3c] sm:$0xf] %v360
  %393 = vst [vmem:[%s4 + $0x40] sm:$0xf] %v361
  %394 = vst [vmem:[%s4 + $0x44] sm:$0xf] %v362
  %395 = vst [vmem:[%s4 + $0x48] sm:$0xf] %v363
  %396 = vst [vmem:[%s4 + $0x4c] sm:$0xf] %v364
  %397 = vst [vmem:[%s4 + $0x50] sm:$0xf] %v365
  %398 = vst [vmem:[%s4 + $0x54] sm:$0xf] %v366
  %399 = vst [vmem:[%s4 + $0x58] sm:$0xf] %v367
  %400 = vst [vmem:[%s4 + $0x5c] sm:$0xf] %v368
  %401 = vst [vmem:[%s4 + $0x60] sm:$0xf] %v369
  %402 = vst [vmem:[%s4 + $0x64] sm:$0xf] %v370
  %403 = vst [vmem:[%s4 + $0x68] sm:$0xf] %v371
  %404 = vst [vmem:[%s4 + $0x6c] sm:$0xf] %v372
  %405 = vst [vmem:[%s4 + $0x70] sm:$0xf] %v373
  %406 = vst [vmem:[%s4 + $0x74] sm:$0xf] %v374
  %407 = vst [vmem:[%s4 + $0x78] sm:$0xf] %v375
  %408 = vst [vmem:[%s4 + $0x7c] sm:$0xf] %v376
  // Predicated region
  $region18: #{_forward_device.5} parent=0 // pred_check
    _
  $region19: #{_forward_device.5} parent=0 // pred_check_branch
    %410 = sbr.rel (0) target = $region21
  $region20: #{_forward_device.5} parent=0 // pred_region
    _
  $region21: #{_forward_device.5} parent=0 // pred_fallthru
    _
  // Predicated region
  $region22: #{_forward_device.5} parent=0 // pred_check
    _
  $region23: #{_forward_device.5} parent=0 // pred_check_branch
    %412 = sbr.rel (0) target = $region25
  $region24: #{_forward_device.5} parent=0 // pred_region
    _
  $region25: #{_forward_device.5} parent=0 // pred_fallthru
    _

// kernel: _forward_device.7
$region0: #{_forward_device.7}
  #allocation0 [shape = 'u32[]', space=smem, size = 0x4, offset = 0x4, fixed_abs, tag = 'smem constant byte address 0x4 - core index']
  #allocation1 [shape = 'u32[72,128]{1,0:T(1,128)}', space=vmem, size = 0x9000, scoped, tag = 'internal scratch']
  %s0 = inlined_call_operand.vmem [shape: bf16[256,128], index: 0, kind: input, shape index: {}]
  %s1 = inlined_call_operand.vmem [shape: bf16[128,256], index: 1, kind: input, shape index: {}]
  %s2 = inlined_call_operand.vmem [shape: f32[1,256], index: 2, kind: input, shape index: {}]
  %s3 = inlined_call_operand.vmem [shape: bf16[256,128], index: 3, kind: input, shape index: {}]
  %s4 = inlined_call_operand.vmem [shape: f32[1,128], index: 4, kind: input, shape index: {}]
  %s5 = inlined_call_operand.vmem [shape: f32[1,128], index: 5, kind: input, shape index: {}]
  %s6 = inlined_call_operand.vmem [shape: f32[1,128], index: 6, kind: input, shape index: {}]
  %s7 = inlined_call_operand.vmem [shape: bf16[256,128], index: 7, kind: output, shape index: {}]
  %s8 = sld [smem:[#allocation0]]
  $region38: #{_forward_device.7} parent=0
    _
  %s10 = ssub.s32 1, %s8
  %s11 = scalar_select 0, %s10, %s8
  // Predicated region
  $region2: #{_forward_device.7} parent=0 // pred_check
    _
  $region3: #{_forward_device.7} parent=0 // pred_check_branch
    %13 = sbr.rel (0) target = $region5
  $region4: #{_forward_device.7} parent=0 // pred_region
    _
  $region5: #{_forward_device.7} parent=0 // pred_fallthru
    _
  // Predicated region
  $region6: #{_forward_device.7} parent=0 // pred_check
    _
  $region7: #{_forward_device.7} parent=0 // pred_check_branch
    %15 = sbr.rel (0) target = $region9
  $region8: #{_forward_device.7} parent=0 // pred_region
    _
  $region9: #{_forward_device.7} parent=0 // pred_fallthru
    _
  // Predicated region
  $region10: #{_forward_device.7} parent=0 // pred_check
    _
  $region11: #{_forward_device.7} parent=0 // pred_check_branch
    %17 = sbr.rel (0) target = $region13
  $region12: #{_forward_device.7} parent=0 // pred_region
    _
  $region13: #{_forward_device.7} parent=0 // pred_fallthru
    _
  // Predicated region
  $region14: #{_forward_device.7} parent=0 // pred_check
    _
  $region15: #{_forward_device.7} parent=0 // pred_check_branch
    %19 = sbr.rel (0) target = $region17
  $region16: #{_forward_device.7} parent=0 // pred_region
    _
  $region17: #{_forward_device.7} parent=0 // pred_fallthru
    _
  // Predicated region
  $region18: #{_forward_device.7} parent=0 // pred_check
    _
  $region19: #{_forward_device.7} parent=0 // pred_check_branch
    %21 = sbr.rel (0) target = $region21
  $region20: #{_forward_device.7} parent=0 // pred_region
    _
  $region21: #{_forward_device.7} parent=0 // pred_fallthru
    _
  // Predicated region
  $region22: #{_forward_device.7} parent=0 // pred_check
    _
  $region23: #{_forward_device.7} parent=0 // pred_check_branch
    %23 = sbr.rel (0) target = $region25
  $region24: #{_forward_device.7} parent=0 // pred_region
    _
  $region25: #{_forward_device.7} parent=0 // pred_fallthru
    _
  // Predicated region
  $region26: #{_forward_device.7} parent=0 // pred_check
    _
  $region27: #{_forward_device.7} parent=0 // pred_check_branch
    %25 = sbr.rel (0) target = $region29
  $region28: #{_forward_device.7} parent=0 // pred_region
    _
  $region29: #{_forward_device.7} parent=0 // pred_fallthru
    _
  %v26 = vld [vmem:[%s0] sm:$0xf]
  %v27 = vld [vmem:[%s0 + $0x4] sm:$0xf]
  %v28 = vld [vmem:[%s0 + $0x8] sm:$0xf]
  %v29 = vld [vmem:[%s0 + $0xc] sm:$0xf]
  %v30 = vld [vmem:[%s0 + $0x10] sm:$0xf]
  %v31 = vld [vmem:[%s0 + $0x14] sm:$0xf]
  %v32 = vld [vmem:[%s0 + $0x18] sm:$0xf]
  %v33 = vld [vmem:[%s0 + $0x1c] sm:$0xf]
  %v34 = vld [vmem:[%s0 + $0x20] sm:$0xf]
  %v35 = vld [vmem:[%s0 + $0x24] sm:$0xf]
  %v36 = vld [vmem:[%s0 + $0x28] sm:$0xf]
  %v37 = vld [vmem:[%s0 + $0x2c] sm:$0xf]
  %v38 = vld [vmem:[%s0 + $0x30] sm:$0xf]
  %v39 = vld [vmem:[%s0 + $0x34] sm:$0xf]
  %v40 = vld [vmem:[%s0 + $0x38] sm:$0xf]
  %v41 = vld [vmem:[%s0 + $0x3c] sm:$0xf]
  %v42 = vld [vmem:[%s0 + $0x40] sm:$0xf]
  %v43 = vld [vmem:[%s0 + $0x44] sm:$0xf]
  %v44 = vld [vmem:[%s0 + $0x48] sm:$0xf]
  %v45 = vld [vmem:[%s0 + $0x4c] sm:$0xf]
  %v46 = vld [vmem:[%s0 + $0x50] sm:$0xf]
  %v47 = vld [vmem:[%s0 + $0x54] sm:$0xf]
  %v48 = vld [vmem:[%s0 + $0x58] sm:$0xf]
  %v49 = vld [vmem:[%s0 + $0x5c] sm:$0xf]
  %v50 = vld [vmem:[%s0 + $0x60] sm:$0xf]
  %v51 = vld [vmem:[%s0 + $0x64] sm:$0xf]
  %v52 = vld [vmem:[%s0 + $0x68] sm:$0xf]
  %v53 = vld [vmem:[%s0 + $0x6c] sm:$0xf]
  %v54 = vld [vmem:[%s0 + $0x70] sm:$0xf]
  %v55 = vld [vmem:[%s0 + $0x74] sm:$0xf]
  %v56 = vld [vmem:[%s0 + $0x78] sm:$0xf]
  %v57 = vld [vmem:[%s0 + $0x7c] sm:$0xf]
  %v58 = vld [vmem:[%s1] sm:$0xff]
  %v59 = vld [vmem:[%s1 + $0x8] sm:$0xff]
  %v60 = vld [vmem:[%s1 + $0x10] sm:$0xff]
  %v61 = vld [vmem:[%s1 + $0x18] sm:$0xff]
  %v62 = vld [vmem:[%s1 + $0x20] sm:$0xff]
  %v63 = vld [vmem:[%s1 + $0x28] sm:$0xff]
  %v64 = vld [vmem:[%s1 + $0x30] sm:$0xff]
  %v65 = vld [vmem:[%s1 + $0x38] sm:$0xff]
  %v66 = vld [vmem:[%s1 + $0x40] sm:$0xff]
  %v67 = vld [vmem:[%s1 + $0x48] sm:$0xff]
  %v68 = vld [vmem:[%s1 + $0x50] sm:$0xff]
  %v69 = vld [vmem:[%s1 + $0x58] sm:$0xff]
  %v70 = vld [vmem:[%s1 + $0x60] sm:$0xff]
  %v71 = vld [vmem:[%s1 + $0x68] sm:$0xff]
  %v72 = vld [vmem:[%s1 + $0x70] sm:$0xff]
  %v73 = vld [vmem:[%s1 + $0x78] sm:$0xff]
  %v74 = vld [vmem:[%s2] sm:$0x3]
  %v76 = vperm.slane %v74, 0
  %v77 = vperm.slane %v74, 1
  %v112 = vunpack.c.l.b16 %v26
  %v113 = vunpack.c.l.b16 %v27
  %v114 = vunpack.c.l.b16 %v28
  %v115 = vunpack.c.l.b16 %v29
  %v116 = vunpack.c.l.b16 %v30
  %v117 = vunpack.c.l.b16 %v31
  %v118 = vunpack.c.l.b16 %v32
  %v119 = vunpack.c.l.b16 %v33
  %v120 = vunpack.c.l.b16 %v34
  %v121 = vunpack.c.l.b16 %v35
  %v122 = vunpack.c.l.b16 %v36
  %v123 = vunpack.c.l.b16 %v37
  %v124 = vunpack.c.l.b16 %v38
  %v125 = vunpack.c.l.b16 %v39
  %v126 = vunpack.c.l.b16 %v40
  %v127 = vunpack.c.l.b16 %v41
  %v128 = vunpack.c.l.b16 %v42
  %v129 = vunpack.c.l.b16 %v43
  %v130 = vunpack.c.l.b16 %v44
  %v131 = vunpack.c.l.b16 %v45
  %v132 = vunpack.c.l.b16 %v46
  %v133 = vunpack.c.l.b16 %v47
  %v134 = vunpack.c.l.b16 %v48
  %v135 = vunpack.c.l.b16 %v49
  %v136 = vunpack.c.l.b16 %v50
  %v137 = vunpack.c.l.b16 %v51
  %v138 = vunpack.c.l.b16 %v52
  %v139 = vunpack.c.l.b16 %v53
  %v140 = vunpack.c.l.b16 %v54
  %v141 = vunpack.c.l.b16 %v55
  %v142 = vunpack.c.l.b16 %v56
  %v143 = vunpack.c.l.b16 %v57
  %v144 = vpack.c.b16 %v113, %v112
  %v145 = vpack.c.b16 %v115, %v114
  %v146 = vpack.c.b16 %v117, %v116
  %v147 = vpack.c.b16 %v119, %v118
  %v148 = vpack.c.b16 %v121, %v120
  %v149 = vpack.c.b16 %v123, %v122
  %v150 = vpack.c.b16 %v125, %v124
  %v151 = vpack.c.b16 %v127, %v126
  %v152 = vpack.c.b16 %v129, %v128
  %v153 = vpack.c.b16 %v131, %v130
  %v154 = vpack.c.b16 %v133, %v132
  %v155 = vpack.c.b16 %v135, %v134
  %v156 = vpack.c.b16 %v137, %v136
  %v157 = vpack.c.b16 %v139, %v138
  %v158 = vpack.c.b16 %v141, %v140
  %v159 = vpack.c.b16 %v143, %v142
  %v192 = vunpack.c.l.b16 %v58
  %v193 = vunpack.c.h.b16 %v58
  %v194 = vunpack.c.l.b16 %v59
  %v195 = vunpack.c.h.b16 %v59
  %v196 = vunpack.c.l.b16 %v60
  %v197 = vunpack.c.h.b16 %v60
  %v198 = vunpack.c.l.b16 %v61
  %v199 = vunpack.c.h.b16 %v61
  %v200 = vunpack.c.l.b16 %v62
  %v201 = vunpack.c.h.b16 %v62
  %v202 = vunpack.c.l.b16 %v63
  %v203 = vunpack.c.h.b16 %v63
  %v204 = vunpack.c.l.b16 %v64
  %v205 = vunpack.c.h.b16 %v64
  %v206 = vunpack.c.l.b16 %v65
  %v207 = vunpack.c.h.b16 %v65
  %v208 = vunpack.c.l.b16 %v66
  %v209 = vunpack.c.h.b16 %v66
  %v210 = vunpack.c.l.b16 %v67
  %v211 = vunpack.c.h.b16 %v67
  %v212 = vunpack.c.l.b16 %v68
  %v213 = vunpack.c.h.b16 %v68
  %v214 = vunpack.c.l.b16 %v69
  %v215 = vunpack.c.h.b16 %v69
  %v216 = vunpack.c.l.b16 %v70
  %v217 = vunpack.c.h.b16 %v70
  %v218 = vunpack.c.l.b16 %v71
  %v219 = vunpack.c.h.b16 %v71
  %v220 = vunpack.c.l.b16 %v72
  %v221 = vunpack.c.h.b16 %v72
  %v222 = vunpack.c.l.b16 %v73
  %v223 = vunpack.c.h.b16 %v73
  %v224 = vpack.c.b16 %v194, %v192
  %v225 = vpack.c.b16 %v195, %v193
  %v226 = vpack.c.b16 %v198, %v196
  %v227 = vpack.c.b16 %v199, %v197
  %v228 = vpack.c.b16 %v202, %v200
  %v229 = vpack.c.b16 %v203, %v201
  %v230 = vpack.c.b16 %v206, %v204
  %v231 = vpack.c.b16 %v207, %v205
  %v232 = vpack.c.b16 %v210, %v208
  %v233 = vpack.c.b16 %v211, %v209
  %v234 = vpack.c.b16 %v214, %v212
  %v235 = vpack.c.b16 %v215, %v213
  %v236 = vpack.c.b16 %v218, %v216
  %v237 = vpack.c.b16 %v219, %v217
  %v238 = vpack.c.b16 %v222, %v220
  %v239 = vpack.c.b16 %v223, %v221
  %256 = vmatpush.bf16.msra.mxu0 %v238
  %257 = vmatpush.bf16.msra.mxu0 %v236
  %258 = vmatpush.bf16.msra.mxu0 %v234
  %259 = vmatpush.bf16.msra.mxu0 %v232
  %260 = vmatpush.bf16.msra.mxu0 %v230
  %261 = vmatpush.bf16.msra.mxu0 %v228
  %262 = vmatpush.bf16.msra.mxu0 %v226
  %263 = vmatpush.bf16.msra.mxu0 %v224
  %264 = vmatmul.bf16.gmra.mxu0 %v144
  %v265 = vpop.f32.mrf.mxu0
  %v266 = vadd.f32 %v76, %v265
  %v267 = vpop.f32.mrf.mxu0
  %v268 = vadd.f32 %v76, %v267
  %269 = vmatmul.bf16.gmra.mxu0 %v145
  %v270 = vpop.f32.mrf.mxu0
  %v271 = vadd.f32 %v76, %v270
  %v272 = vpop.f32.mrf.mxu0
  %v273 = vadd.f32 %v76, %v272
  %274 = vmatmul.bf16.gmra.mxu0 %v146
  %v275 = vpop.f32.mrf.mxu0
  %v276 = vadd.f32 %v76, %v275
  %v277 = vpop.f32.mrf.mxu0
  %v278 = vadd.f32 %v76, %v277
  %279 = vmatmul.bf16.gmra.mxu0 %v147
  %v280 = vpop.f32.mrf.mxu0
  %v281 = vadd.f32 %v76, %v280
  %v282 = vpop.f32.mrf.mxu0
  %v283 = vadd.f32 %v76, %v282
  %284 = vmatmul.bf16.gmra.mxu0 %v148
  %v285 = vpop.f32.mrf.mxu0
  %v286 = vadd.f32 %v76, %v285
  %v287 = vpop.f32.mrf.mxu0
  %v288 = vadd.f32 %v76, %v287
  %289 = vmatmul.bf16.gmra.mxu0 %v149
  %v290 = vpop.f32.mrf.mxu0
  %v291 = vadd.f32 %v76, %v290
  %v292 = vpop.f32.mrf.mxu0
  %v293 = vadd.f32 %v76, %v292
  %294 = vmatmul.bf16.gmra.mxu0 %v150
  %v295 = vpop.f32.mrf.mxu0
  %v296 = vadd.f32 %v76, %v295
  %v297 = vpop.f32.mrf.mxu0
  %v298 = vadd.f32 %v76, %v297
  %299 = vmatmul.bf16.gmra.mxu0 %v151
  %v300 = vpop.f32.mrf.mxu0
  %v301 = vadd.f32 %v76, %v300
  %v302 = vpop.f32.mrf.mxu0
  %v303 = vadd.f32 %v76, %v302
  %304 = vmatmul.bf16.gmra.mxu0 %v152
  %v305 = vpop.f32.mrf.mxu0
  %v306 = vadd.f32 %v76, %v305
  %v307 = vpop.f32.mrf.mxu0
  %v308 = vadd.f32 %v76, %v307
  %309 = vmatmul.bf16.gmra.mxu0 %v153
  %v310 = vpop.f32.mrf.mxu0
  %v311 = vadd.f32 %v76, %v310
  %v312 = vpop.f32.mrf.mxu0
  %v313 = vadd.f32 %v76, %v312
  %314 = vmatmul.bf16.gmra.mxu0 %v154
  %v315 = vpop.f32.mrf.mxu0
  %v316 = vadd.f32 %v76, %v315
  %v317 = vpop.f32.mrf.mxu0
  %v318 = vadd.f32 %v76, %v317
  %319 = vmatmul.bf16.gmra.mxu0 %v155
  %v320 = vpop.f32.mrf.mxu0
  %v321 = vadd.f32 %v76, %v320
  %v322 = vpop.f32.mrf.mxu0
  %v323 = vadd.f32 %v76, %v322
  %324 = vmatmul.bf16.gmra.mxu0 %v156
  %v325 = vpop.f32.mrf.mxu0
  %v326 = vadd.f32 %v76, %v325
  %v327 = vpop.f32.mrf.mxu0
  %v328 = vadd.f32 %v76, %v327
  %329 = vmatmul.bf16.gmra.mxu0 %v157
  %v330 = vpop.f32.mrf.mxu0
  %v331 = vadd.f32 %v76, %v330
  %v332 = vpop.f32.mrf.mxu0
  %v333 = vadd.f32 %v76, %v332
  %334 = vmatmul.bf16.gmra.mxu0 %v158
  %v335 = vpop.f32.mrf.mxu0
  %v336 = vadd.f32 %v76, %v335
  %v337 = vpop.f32.mrf.mxu0
  %v338 = vadd.f32 %v76, %v337
  %339 = vmatmul.bf16.gmra.mxu0 %v159
  %v340 = vpop.f32.mrf.mxu0
  %v341 = vadd.f32 %v76, %v340
  %v342 = vpop.f32.mrf.mxu0
  %v343 = vadd.f32 %v76, %v342
  %344 = vdwg.mxu0
  %345 = vmatpush.bf16.msra.mxu0 %v239
  %346 = vmatpush.bf16.msra.mxu0 %v237
  %347 = vmatpush.bf16.msra.mxu0 %v235
  %348 = vmatpush.bf16.msra.mxu0 %v233
  %349 = vmatpush.bf16.msra.mxu0 %v231
  %350 = vmatpush.bf16.msra.mxu0 %v229
  %351 = vmatpush.bf16.msra.mxu0 %v227
  %352 = vmatpush.bf16.msra.mxu0 %v225
  %353 = vmatmul.bf16.gmra.mxu0 %v144
  %v354 = vpop.f32.mrf.mxu0
  %v355 = vadd.f32 %v77, %v354
  %v356 = vpop.f32.mrf.mxu0
  %v357 = vadd.f32 %v77, %v356
  %358 = vmatmul.bf16.gmra.mxu0 %v145
  %v359 = vpop.f32.mrf.mxu0
  %v360 = vadd.f32 %v77, %v359
  %v361 = vpop.f32.mrf.mxu0
  %v362 = vadd.f32 %v77, %v361
  %363 = vmatmul.bf16.gmra.mxu0 %v146
  %v364 = vpop.f32.mrf.mxu0
  %v365 = vadd.f32 %v77, %v364
  %v366 = vpop.f32.mrf.mxu0
  %v367 = vadd.f32 %v77, %v366
  %368 = vmatmul.bf16.gmra.mxu0 %v147
  %v369 = vpop.f32.mrf.mxu0
  %v370 = vadd.f32 %v77, %v369
  %v371 = vpop.f32.mrf.mxu0
  %v372 = vadd.f32 %v77, %v371
  %373 = vmatmul.bf16.gmra.mxu0 %v148
  %v374 = vpop.f32.mrf.mxu0
  %v375 = vadd.f32 %v77, %v374
  %v376 = vpop.f32.mrf.mxu0
  %v377 = vadd.f32 %v77, %v376
  %378 = vmatmul.bf16.gmra.mxu0 %v149
  %v379 = vpop.f32.mrf.mxu0
  %v380 = vadd.f32 %v77, %v379
  %v381 = vpop.f32.mrf.mxu0
  %v382 = vadd.f32 %v77, %v381
  %383 = vmatmul.bf16.gmra.mxu0 %v150
  %v384 = vpop.f32.mrf.mxu0
  %v385 = vadd.f32 %v77, %v384
  %v386 = vpop.f32.mrf.mxu0
  %v387 = vadd.f32 %v77, %v386
  %388 = vmatmul.bf16.gmra.mxu0 %v151
  %v389 = vpop.f32.mrf.mxu0
  %v390 = vadd.f32 %v77, %v389
  %v391 = vpop.f32.mrf.mxu0
  %v392 = vadd.f32 %v77, %v391
  %393 = vmatmul.bf16.gmra.mxu0 %v152
  %v394 = vpop.f32.mrf.mxu0
  %v395 = vadd.f32 %v77, %v394
  %v396 = vpop.f32.mrf.mxu0
  %v397 = vadd.f32 %v77, %v396
  %398 = vmatmul.bf16.gmra.mxu0 %v153
  %v399 = vpop.f32.mrf.mxu0
  %v400 = vadd.f32 %v77, %v399
  %v401 = vpop.f32.mrf.mxu0
  %v402 = vadd.f32 %v77, %v401
  %403 = vmatmul.bf16.gmra.mxu0 %v154
  %v404 = vpop.f32.mrf.mxu0
  %v405 = vadd.f32 %v77, %v404
  %v406 = vpop.f32.mrf.mxu0
  %v407 = vadd.f32 %v77, %v406
  %408 = vmatmul.bf16.gmra.mxu0 %v155
  %v409 = vpop.f32.mrf.mxu0
  %v410 = vadd.f32 %v77, %v409
  %v411 = vpop.f32.mrf.mxu0
  %v412 = vadd.f32 %v77, %v411
  %413 = vmatmul.bf16.gmra.mxu0 %v156
  %v414 = vpop.f32.mrf.mxu0
  %v415 = vadd.f32 %v77, %v414
  %v416 = vpop.f32.mrf.mxu0
  %v417 = vadd.f32 %v77, %v416
  %418 = vmatmul.bf16.gmra.mxu0 %v157
  %v419 = vpop.f32.mrf.mxu0
  %v420 = vadd.f32 %v77, %v419
  %v421 = vpop.f32.mrf.mxu0
  %v422 = vadd.f32 %v77, %v421
  %423 = vmatmul.bf16.gmra.mxu0 %v158
  %v424 = vpop.f32.mrf.mxu0
  %v425 = vadd.f32 %v77, %v424
  %v426 = vpop.f32.mrf.mxu0
  %v427 = vadd.f32 %v77, %v426
  %428 = vmatmul.bf16.gmra.mxu0 %v159
  %v429 = vpop.f32.mrf.mxu0
  %v430 = vadd.f32 %v77, %v429
  %v431 = vpop.f32.mrf.mxu0
  %v432 = vadd.f32 %v77, %v431
  %433 = vdwg.mxu0
  %v434 = vmax.f32 %v266, 0.0
  %v435 = vmax.f32 %v355, 0.0
  %v436 = vmax.f32 %v268, 0.0
  %v437 = vmax.f32 %v357, 0.0
  %v438 = vmax.f32 %v271, 0.0
  %v439 = vmax.f32 %v360, 0.0
  %v440 = vmax.f32 %v273, 0.0
  %v441 = vmax.f32 %v362, 0.0
  %v442 = vmax.f32 %v276, 0.0
  %v443 = vmax.f32 %v365, 0.0
  %v444 = vmax.f32 %v278, 0.0
  %v445 = vmax.f32 %v367, 0.0
  %v446 = vmax.f32 %v281, 0.0
  %v447 = vmax.f32 %v370, 0.0
  %v448 = vmax.f32 %v283, 0.0
  %v449 = vmax.f32 %v372, 0.0
  %v450 = vmax.f32 %v286, 0.0
  %v451 = vmax.f32 %v375, 0.0
  %v452 = vmax.f32 %v288, 0.0
  %v453 = vmax.f32 %v377, 0.0
  %v454 = vmax.f32 %v291, 0.0
  %v455 = vmax.f32 %v380, 0.0
  %v456 = vmax.f32 %v293, 0.0
  %v457 = vmax.f32 %v382, 0.0
  %v458 = vmax.f32 %v296, 0.0
  %v459 = vmax.f32 %v385, 0.0
  %v460 = vmax.f32 %v298, 0.0
  %v461 = vmax.f32 %v387, 0.0
  %v462 = vmax.f32 %v301, 0.0
  %v463 = vmax.f32 %v390, 0.0
  %v464 = vmax.f32 %v303, 0.0
  %v465 = vmax.f32 %v392, 0.0
  %v466 = vmax.f32 %v306, 0.0
  %v467 = vmax.f32 %v395, 0.0
  %v468 = vmax.f32 %v308, 0.0
  %v469 = vmax.f32 %v397, 0.0
  %v470 = vmax.f32 %v311, 0.0
  %v471 = vmax.f32 %v400, 0.0
  %v472 = vmax.f32 %v313, 0.0
  %v473 = vmax.f32 %v402, 0.0
  %v474 = vmax.f32 %v316, 0.0
  %v475 = vmax.f32 %v405, 0.0
  %v476 = vmax.f32 %v318, 0.0
  %v477 = vmax.f32 %v407, 0.0
  %v478 = vmax.f32 %v321, 0.0
  %v479 = vmax.f32 %v410, 0.0
  %v480 = vmax.f32 %v323, 0.0
  %v481 = vmax.f32 %v412, 0.0
  %v482 = vmax.f32 %v326, 0.0
  %v483 = vmax.f32 %v415, 0.0
  %v484 = vmax.f32 %v328, 0.0
  %v485 = vmax.f32 %v417, 0.0
  %v486 = vmax.f32 %v331, 0.0
  %v487 = vmax.f32 %v420, 0.0
  %v488 = vmax.f32 %v333, 0.0
  %v489 = vmax.f32 %v422, 0.0
  %v490 = vmax.f32 %v336, 0.0
  %v491 = vmax.f32 %v425, 0.0
  %v492 = vmax.f32 %v338, 0.0
  %v493 = vmax.f32 %v427, 0.0
  %v494 = vmax.f32 %v341, 0.0
  %v495 = vmax.f32 %v430, 0.0
  %v496 = vmax.f32 %v343, 0.0
  %v497 = vmax.f32 %v432, 0.0
  %v498 = vpack.c.bf16 %v436, %v434
  %v499 = vpack.c.bf16 %v437, %v435
  %v500 = vpack.c.bf16 %v440, %v438
  %v501 = vpack.c.bf16 %v441, %v439
  %v502 = vpack.c.bf16 %v444, %v442
  %v503 = vpack.c.bf16 %v445, %v443
  %v504 = vpack.c.bf16 %v448, %v446
  %v505 = vpack.c.bf16 %v449, %v447
  %v506 = vpack.c.bf16 %v452, %v450
  %v507 = vpack.c.bf16 %v453, %v451
  %v508 = vpack.c.bf16 %v456, %v454
  %v509 = vpack.c.bf16 %v457, %v455
  %v510 = vpack.c.bf16 %v460, %v458
  %v511 = vpack.c.bf16 %v461, %v459
  %v512 = vpack.c.bf16 %v464, %v462
  %v513 = vpack.c.bf16 %v465, %v463
  %v514 = vpack.c.bf16 %v468, %v466
  %v515 = vpack.c.bf16 %v469, %v467
  %v516 = vpack.c.bf16 %v472, %v470
  %v517 = vpack.c.bf16 %v473, %v471
  %v518 = vpack.c.bf16 %v476, %v474
  %v519 = vpack.c.bf16 %v477, %v475
  %v520 = vpack.c.bf16 %v480, %v478
  %v521 = vpack.c.bf16 %v481, %v479
  %v522 = vpack.c.bf16 %v484, %v482
  %v523 = vpack.c.bf16 %v485, %v483
  %v524 = vpack.c.bf16 %v488, %v486
  %v525 = vpack.c.bf16 %v489, %v487
  %v526 = vpack.c.bf16 %v492, %v490
  %v527 = vpack.c.bf16 %v493, %v491
  %v528 = vpack.c.bf16 %v496, %v494
  %v529 = vpack.c.bf16 %v497, %v495
  %v530 = vld [vmem:[%s3] sm:$0xf]
  %v531 = vld [vmem:[%s3 + $0x4] sm:$0xf]
  %v532 = vld [vmem:[%s3 + $0x8] sm:$0xf]
  %v533 = vld [vmem:[%s3 + $0xc] sm:$0xf]
  %v534 = vld [vmem:[%s3 + $0x10] sm:$0xf]
  %v535 = vld [vmem:[%s3 + $0x14] sm:$0xf]
  %v536 = vld [vmem:[%s3 + $0x18] sm:$0xf]
  %v537 = vld [vmem:[%s3 + $0x1c] sm:$0xf]
  %v538 = vld [vmem:[%s3 + $0x20] sm:$0xf]
  %v539 = vld [vmem:[%s3 + $0x24] sm:$0xf]
  %v540 = vld [vmem:[%s3 + $0x28] sm:$0xf]
  %v541 = vld [vmem:[%s3 + $0x2c] sm:$0xf]
  %v542 = vld [vmem:[%s3 + $0x30] sm:$0xf]
  %v543 = vld [vmem:[%s3 + $0x34] sm:$0xf]
  %v544 = vld [vmem:[%s3 + $0x38] sm:$0xf]
  %v545 = vld [vmem:[%s3 + $0x3c] sm:$0xf]
  %v546 = vld [vmem:[%s3 + $0x40] sm:$0xf]
  %v547 = vld [vmem:[%s3 + $0x44] sm:$0xf]
  %v548 = vld [vmem:[%s3 + $0x48] sm:$0xf]
  %v549 = vld [vmem:[%s3 + $0x4c] sm:$0xf]
  %v550 = vld [vmem:[%s3 + $0x50] sm:$0xf]
  %v551 = vld [vmem:[%s3 + $0x54] sm:$0xf]
  %v552 = vld [vmem:[%s3 + $0x58] sm:$0xf]
  %v553 = vld [vmem:[%s3 + $0x5c] sm:$0xf]
  %v554 = vld [vmem:[%s3 + $0x60] sm:$0xf]
  %v555 = vld [vmem:[%s3 + $0x64] sm:$0xf]
  %v556 = vld [vmem:[%s3 + $0x68] sm:$0xf]
  %v557 = vld [vmem:[%s3 + $0x6c] sm:$0xf]
  %v558 = vld [vmem:[%s3 + $0x70] sm:$0xf]
  %v559 = vld [vmem:[%s3 + $0x74] sm:$0xf]
  %v560 = vld [vmem:[%s3 + $0x78] sm:$0xf]
  %v561 = vld [vmem:[%s3 + $0x7c] sm:$0xf]
  %v562 = vld [vmem:[%s4] sm:$0x1]
  %v564 = vperm.slane %v562, 0
  %v598 = vunpack.c.l.b16 %v530
  %v599 = vunpack.c.l.b16 %v531
  %v600 = vunpack.c.l.b16 %v532
  %v601 = vunpack.c.l.b16 %v533
  %v602 = vunpack.c.l.b16 %v534
  %v603 = vunpack.c.l.b16 %v535
  %v604 = vunpack.c.l.b16 %v536
  %v605 = vunpack.c.l.b16 %v537
  %v606 = vunpack.c.l.b16 %v538
  %v607 = vunpack.c.l.b16 %v539
  %v608 = vunpack.c.l.b16 %v540
  %v609 = vunpack.c.l.b16 %v541
  %v610 = vunpack.c.l.b16 %v542
  %v611 = vunpack.c.l.b16 %v543
  %v612 = vunpack.c.l.b16 %v544
  %v613 = vunpack.c.l.b16 %v545
  %v614 = vunpack.c.l.b16 %v546
  %v615 = vunpack.c.l.b16 %v547
  %v616 = vunpack.c.l.b16 %v548
  %v617 = vunpack.c.l.b16 %v549
  %v618 = vunpack.c.l.b16 %v550
  %v619 = vunpack.c.l.b16 %v551
  %v620 = vunpack.c.l.b16 %v552
  %v621 = vunpack.c.l.b16 %v553
  %v622 = vunpack.c.l.b16 %v554
  %v623 = vunpack.c.l.b16 %v555
  %v624 = vunpack.c.l.b16 %v556
  %v625 = vunpack.c.l.b16 %v557
  %v626 = vunpack.c.l.b16 %v558
  %v627 = vunpack.c.l.b16 %v559
  %v628 = vunpack.c.l.b16 %v560
  %v629 = vunpack.c.l.b16 %v561
  %v630 = vpack.c.b16 %v599, %v598
  %v631 = vpack.c.b16 %v601, %v600
  %v632 = vpack.c.b16 %v603, %v602
  %v633 = vpack.c.b16 %v605, %v604
  %v634 = vpack.c.b16 %v607, %v606
  %v635 = vpack.c.b16 %v609, %v608
  %v636 = vpack.c.b16 %v611, %v610
  %v637 = vpack.c.b16 %v613, %v612
  %v638 = vpack.c.b16 %v615, %v614
  %v639 = vpack.c.b16 %v617, %v616
  %v640 = vpack.c.b16 %v619, %v618
  %v641 = vpack.c.b16 %v621, %v620
  %v642 = vpack.c.b16 %v623, %v622
  %v643 = vpack.c.b16 %v625, %v624
  %v644 = vpack.c.b16 %v627, %v626
  %v645 = vpack.c.b16 %v629, %v628
  %662 = vmatpush.bf16.msra.mxu0 %v637
  %663 = vmatpush.bf16.msra.mxu0 %v636
  %664 = vmatpush.bf16.msra.mxu0 %v635
  %665 = vmatpush.bf16.msra.mxu0 %v634
  %666 = vmatpush.bf16.msra.mxu0 %v633
  %667 = vmatpush.bf16.msra.mxu0 %v632
  %668 = vmatpush.bf16.msra.mxu0 %v631
  %669 = vmatpush.bf16.msra.mxu0 %v630
  %670 = vmatmul.bf16.gmra.mxu0 %v498
  %v671 = vpop.f32.mrf.mxu0
  %v672 = vadd.f32 %v564, %v671
  %v673 = vpop.f32.mrf.mxu0
  %v674 = vadd.f32 %v564, %v673
  %675 = vmatmul.bf16.gmra.mxu0 %v500
  %v676 = vpop.f32.mrf.mxu0
  %v677 = vadd.f32 %v564, %v676
  %v678 = vpop.f32.mrf.mxu0
  %v679 = vadd.f32 %v564, %v678
  %680 = vmatmul.bf16.gmra.mxu0 %v502
  %v681 = vpop.f32.mrf.mxu0
  %v682 = vadd.f32 %v564, %v681
  %v683 = vpop.f32.mrf.mxu0
  %v684 = vadd.f32 %v564, %v683
  %685 = vmatmul.bf16.gmra.mxu0 %v504
  %v686 = vpop.f32.mrf.mxu0
  %v687 = vadd.f32 %v564, %v686
  %v688 = vpop.f32.mrf.mxu0
  %v689 = vadd.f32 %v564, %v688
  %690 = vmatmul.bf16.gmra.mxu0 %v506
  %v691 = vpop.f32.mrf.mxu0
  %v692 = vadd.f32 %v564, %v691
  %v693 = vpop.f32.mrf.mxu0
  %v694 = vadd.f32 %v564, %v693
  %695 = vmatmul.bf16.gmra.mxu0 %v508
  %v696 = vpop.f32.mrf.mxu0
  %v697 = vadd.f32 %v564, %v696
  %v698 = vpop.f32.mrf.mxu0
  %v699 = vadd.f32 %v564, %v698
  %700 = vmatmul.bf16.gmra.mxu0 %v510
  %v701 = vpop.f32.mrf.mxu0
  %v702 = vadd.f32 %v564, %v701
  %v703 = vpop.f32.mrf.mxu0
  %v704 = vadd.f32 %v564, %v703
  %705 = vmatmul.bf16.gmra.mxu0 %v512
  %v706 = vpop.f32.mrf.mxu0
  %v707 = vadd.f32 %v564, %v706
  %v708 = vpop.f32.mrf.mxu0
  %v709 = vadd.f32 %v564, %v708
  %710 = vmatmul.bf16.gmra.mxu0 %v514
  %v711 = vpop.f32.mrf.mxu0
  %v712 = vadd.f32 %v564, %v711
  %v713 = vpop.f32.mrf.mxu0
  %v714 = vadd.f32 %v564, %v713
  %715 = vmatmul.bf16.gmra.mxu0 %v516
  %v716 = vpop.f32.mrf.mxu0
  %v717 = vadd.f32 %v564, %v716
  %v718 = vpop.f32.mrf.mxu0
  %v719 = vadd.f32 %v564, %v718
  %720 = vmatmul.bf16.gmra.mxu0 %v518
  %v721 = vpop.f32.mrf.mxu0
  %v722 = vadd.f32 %v564, %v721
  %v723 = vpop.f32.mrf.mxu0
  %v724 = vadd.f32 %v564, %v723
  %725 = vmatmul.bf16.gmra.mxu0 %v520
  %v726 = vpop.f32.mrf.mxu0
  %v727 = vadd.f32 %v564, %v726
  %v728 = vpop.f32.mrf.mxu0
  %v729 = vadd.f32 %v564, %v728
  %730 = vmatmul.bf16.gmra.mxu0 %v522
  %v731 = vpop.f32.mrf.mxu0
  %v732 = vadd.f32 %v564, %v731
  %v733 = vpop.f32.mrf.mxu0
  %v734 = vadd.f32 %v564, %v733
  %735 = vmatmul.bf16.gmra.mxu0 %v524
  %v736 = vpop.f32.mrf.mxu0
  %v737 = vadd.f32 %v564, %v736
  %v738 = vpop.f32.mrf.mxu0
  %v739 = vadd.f32 %v564, %v738
  %740 = vmatmul.bf16.gmra.mxu0 %v526
  %v741 = vpop.f32.mrf.mxu0
  %v742 = vadd.f32 %v564, %v741
  %v743 = vpop.f32.mrf.mxu0
  %v744 = vadd.f32 %v564, %v743
  %745 = vmatmul.bf16.gmra.mxu0 %v528
  %v746 = vpop.f32.mrf.mxu0
  %v747 = vadd.f32 %v564, %v746
  %v748 = vpop.f32.mrf.mxu0
  %v749 = vadd.f32 %v564, %v748
  %750 = vdwg.mxu0
  %751 = vmatpush.bf16.msra.mxu0 %v645
  %752 = vmatpush.bf16.msra.mxu0 %v644
  %753 = vmatpush.bf16.msra.mxu0 %v643
  %754 = vmatpush.bf16.msra.mxu0 %v642
  %755 = vmatpush.bf16.msra.mxu0 %v641
  %756 = vmatpush.bf16.msra.mxu0 %v640
  %757 = vmatpush.bf16.msra.mxu0 %v639
  %758 = vmatpush.bf16.msra.mxu0 %v638
  %759 = vmatmul.bf16.gmra.mxu0 %v499
  %v760 = vpop.f32.mrf.mxu0
  %v761 = vadd.f32 %v672, %v760
  %v762 = vpop.f32.mrf.mxu0
  %v763 = vadd.f32 %v674, %v762
  %764 = vmatmul.bf16.gmra.mxu0 %v501
  %v765 = vpop.f32.mrf.mxu0
  %v766 = vadd.f32 %v677, %v765
  %v767 = vpop.f32.mrf.mxu0
  %v768 = vadd.f32 %v679, %v767
  %769 = vmatmul.bf16.gmra.mxu0 %v503
  %v770 = vpop.f32.mrf.mxu0
  %v771 = vadd.f32 %v682, %v770
  %v772 = vpop.f32.mrf.mxu0
  %v773 = vadd.f32 %v684, %v772
  %774 = vmatmul.bf16.gmra.mxu0 %v505
  %v775 = vpop.f32.mrf.mxu0
  %v776 = vadd.f32 %v687, %v775
  %v777 = vpop.f32.mrf.mxu0
  %v778 = vadd.f32 %v689, %v777
  %779 = vmatmul.bf16.gmra.mxu0 %v507
  %v780 = vpop.f32.mrf.mxu0
  %v781 = vadd.f32 %v692, %v780
  %v782 = vpop.f32.mrf.mxu0
  %v783 = vadd.f32 %v694, %v782
  %784 = vmatmul.bf16.gmra.mxu0 %v509
  %v785 = vpop.f32.mrf.mxu0
  %v786 = vadd.f32 %v697, %v785
  %v787 = vpop.f32.mrf.mxu0
  %v788 = vadd.f32 %v699, %v787
  %789 = vmatmul.bf16.gmra.mxu0 %v511
  %v790 = vpop.f32.mrf.mxu0
  %v791 = vadd.f32 %v702, %v790
  %v792 = vpop.f32.mrf.mxu0
  %v793 = vadd.f32 %v704, %v792
  %794 = vmatmul.bf16.gmra.mxu0 %v513
  %v795 = vpop.f32.mrf.mxu0
  %v796 = vadd.f32 %v707, %v795
  %v797 = vpop.f32.mrf.mxu0
  %v798 = vadd.f32 %v709, %v797
  %799 = vmatmul.bf16.gmra.mxu0 %v515
  %v800 = vpop.f32.mrf.mxu0
  %v801 = vadd.f32 %v712, %v800
  %v802 = vpop.f32.mrf.mxu0
  %v803 = vadd.f32 %v714, %v802
  %804 = vmatmul.bf16.gmra.mxu0 %v517
  %v805 = vpop.f32.mrf.mxu0
  %v806 = vadd.f32 %v717, %v805
  %v807 = vpop.f32.mrf.mxu0
  %v808 = vadd.f32 %v719, %v807
  %809 = vmatmul.bf16.gmra.mxu0 %v519
  %v810 = vpop.f32.mrf.mxu0
  %v811 = vadd.f32 %v722, %v810
  %v812 = vpop.f32.mrf.mxu0
  %v813 = vadd.f32 %v724, %v812
  %814 = vmatmul.bf16.gmra.mxu0 %v521
  %v815 = vpop.f32.mrf.mxu0
  %v816 = vadd.f32 %v727, %v815
  %v817 = vpop.f32.mrf.mxu0
  %v818 = vadd.f32 %v729, %v817
  %819 = vmatmul.bf16.gmra.mxu0 %v523
  %v820 = vpop.f32.mrf.mxu0
  %v821 = vadd.f32 %v732, %v820
  %v822 = vpop.f32.mrf.mxu0
  %v823 = vadd.f32 %v734, %v822
  %824 = vmatmul.bf16.gmra.mxu0 %v525
  %v825 = vpop.f32.mrf.mxu0
  %v826 = vadd.f32 %v737, %v825
  %v827 = vpop.f32.mrf.mxu0
  %v828 = vadd.f32 %v739, %v827
  %829 = vmatmul.bf16.gmra.mxu0 %v527
  %v830 = vpop.f32.mrf.mxu0
  %v831 = vadd.f32 %v742, %v830
  %v832 = vpop.f32.mrf.mxu0
  %v833 = vadd.f32 %v744, %v832
  %834 = vmatmul.bf16.gmra.mxu0 %v529
  %v835 = vpop.f32.mrf.mxu0
  %v836 = vadd.f32 %v747, %v835
  %v837 = vpop.f32.mrf.mxu0
  %v838 = vadd.f32 %v749, %v837
  %839 = vdwg.mxu0
  %v840 = vunpack.c.l.bf16 %v26
  %v841 = vunpack.c.l.bf16 %v27
  %v842 = vunpack.c.l.bf16 %v28
  %v843 = vunpack.c.l.bf16 %v29
  %v844 = vunpack.c.l.bf16 %v30
  %v845 = vunpack.c.l.bf16 %v31
  %v846 = vunpack.c.l.bf16 %v32
  %v847 = vunpack.c.l.bf16 %v33
  %v848 = vunpack.c.l.bf16 %v34
  %v849 = vunpack.c.l.bf16 %v35
  %v850 = vunpack.c.l.bf16 %v36
  %v851 = vunpack.c.l.bf16 %v37
  %v852 = vunpack.c.l.bf16 %v38
  %v853 = vunpack.c.l.bf16 %v39
  %v854 = vunpack.c.l.bf16 %v40
  %v855 = vunpack.c.l.bf16 %v41
  %v856 = vunpack.c.l.bf16 %v42
  %v857 = vunpack.c.l.bf16 %v43
  %v858 = vunpack.c.l.bf16 %v44
  %v859 = vunpack.c.l.bf16 %v45
  %v860 = vunpack.c.l.bf16 %v46
  %v861 = vunpack.c.l.bf16 %v47
  %v862 = vunpack.c.l.bf16 %v48
  %v863 = vunpack.c.l.bf16 %v49
  %v864 = vunpack.c.l.bf16 %v50
  %v865 = vunpack.c.l.bf16 %v51
  %v866 = vunpack.c.l.bf16 %v52
  %v867 = vunpack.c.l.bf16 %v53
  %v868 = vunpack.c.l.bf16 %v54
  %v869 = vunpack.c.l.bf16 %v55
  %v870 = vunpack.c.l.bf16 %v56
  %v871 = vunpack.c.l.bf16 %v57
  %v872 = vadd.f32 %v840, %v761
  %v873 = vadd.f32 %v841, %v763
  %v874 = vadd.f32 %v842, %v766
  %v875 = vadd.f32 %v843, %v768
  %v876 = vadd.f32 %v844, %v771
  %v877 = vadd.f32 %v845, %v773
  %v878 = vadd.f32 %v846, %v776
  %v879 = vadd.f32 %v847, %v778
  %v880 = vadd.f32 %v848, %v781
  %v881 = vadd.f32 %v849, %v783
  %v882 = vadd.f32 %v850, %v786
  %v883 = vadd.f32 %v851, %v788
  %v884 = vadd.f32 %v852, %v791
  %v885 = vadd.f32 %v853, %v793
  %v886 = vadd.f32 %v854, %v796
  %v887 = vadd.f32 %v855, %v798
  %v888 = vadd.f32 %v856, %v801
  %v889 = vadd.f32 %v857, %v803
  %v890 = vadd.f32 %v858, %v806
  %v891 = vadd.f32 %v859, %v808
  %v892 = vadd.f32 %v860, %v811
  %v893 = vadd.f32 %v861, %v813
  %v894 = vadd.f32 %v862, %v816
  %v895 = vadd.f32 %v863, %v818
  %v896 = vadd.f32 %v864, %v821
  %v897 = vadd.f32 %v865, %v823
  %v898 = vadd.f32 %v866, %v826
  %v899 = vadd.f32 %v867, %v828
  %v900 = vadd.f32 %v868, %v831
  %v901 = vadd.f32 %v869, %v833
  %v902 = vadd.f32 %v870, %v836
  %v903 = vadd.f32 %v871, %v838
  %904 = vadd.xlane.f32.xlu0 %v872
  %v905 = vpop.xlane.xlu0 %904
  %906 = vadd.xlane.f32.xlu0 %v873
  %v907 = vpop.xlane.xlu0 %906
  %908 = vadd.xlane.f32.xlu0 %v874
  %v909 = vpop.xlane.xlu0 %908
  %910 = vadd.xlane.f32.xlu0 %v875
  %v911 = vpop.xlane.xlu0 %910
  %912 = vadd.xlane.f32.xlu0 %v876
  %v913 = vpop.xlane.xlu0 %912
  %914 = vadd.xlane.f32.xlu0 %v877
  %v915 = vpop.xlane.xlu0 %914
  %916 = vadd.xlane.f32.xlu0 %v878
  %v917 = vpop.xlane.xlu0 %916
  %918 = vadd.xlane.f32.xlu0 %v879
  %v919 = vpop.xlane.xlu0 %918
  %920 = vadd.xlane.f32.xlu0 %v880
  %v921 = vpop.xlane.xlu0 %920
  %922 = vadd.xlane.f32.xlu0 %v881
  %v923 = vpop.xlane.xlu0 %922
  %924 = vadd.xlane.f32.xlu0 %v882
  %v925 = vpop.xlane.xlu0 %924
  %926 = vadd.xlane.f32.xlu0 %v883
  %v927 = vpop.xlane.xlu0 %926
  %928 = vadd.xlane.f32.xlu0 %v884
  %v929 = vpop.xlane.xlu0 %928
  %930 = vadd.xlane.f32.xlu0 %v885
  %v931 = vpop.xlane.xlu0 %930
  %932 = vadd.xlane.f32.xlu0 %v886
  %v933 = vpop.xlane.xlu0 %932
  %934 = vadd.xlane.f32.xlu0 %v887
  %v935 = vpop.xlane.xlu0 %934
  %936 = vadd.xlane.f32.xlu0 %v888
  %v937 = vpop.xlane.xlu0 %936
  %938 = vadd.xlane.f32.xlu0 %v889
  %v939 = vpop.xlane.xlu0 %938
  %940 = vadd.xlane.f32.xlu0 %v890
  %v941 = vpop.xlane.xlu0 %940
  %942 = vadd.xlane.f32.xlu0 %v891
  %v943 = vpop.xlane.xlu0 %942
  %944 = vadd.xlane.f32.xlu0 %v892
  %v945 = vpop.xlane.xlu0 %944
  %946 = vadd.xlane.f32.xlu0 %v893
  %v947 = vpop.xlane.xlu0 %946
  %948 = vadd.xlane.f32.xlu0 %v894
  %v949 = vpop.xlane.xlu0 %948
  %950 = vadd.xlane.f32.xlu0 %v895
  %v951 = vpop.xlane.xlu0 %950
  %952 = vadd.xlane.f32.xlu0 %v896
  %v953 = vpop.xlane.xlu0 %952
  %954 = vadd.xlane.f32.xlu0 %v897
  %v955 = vpop.xlane.xlu0 %954
  %956 = vadd.xlane.f32.xlu0 %v898
  %v957 = vpop.xlane.xlu0 %956
  %958 = vadd.xlane.f32.xlu0 %v899
  %v959 = vpop.xlane.xlu0 %958
  %960 = vadd.xlane.f32.xlu0 %v900
  %v961 = vpop.xlane.xlu0 %960
  %962 = vadd.xlane.f32.xlu0 %v901
  %v963 = vpop.xlane.xlu0 %962
  %964 = vadd.xlane.f32.xlu0 %v902
  %v965 = vpop.xlane.xlu0 %964
  %966 = vadd.xlane.f32.xlu0 %v903
  %v967 = vpop.xlane.xlu0 %966
  %v968 = vrcp.pop 128.0
  %v969 = vmul.f32 128.0, %v968
  %v970 = vsub.f32 1.0, %v969
  %v971 = vmul.f32 %v968, %v970
  %v972 = vadd.f32 %v968, %v971
  %vm973 = vweird.f32 %v968
  %v974 = vsel %vm973, %v968, %v972
  %v975 = vmul.f32 %v905, %v974
  %v976 = vmul.f32 %v907, %v974
  %v977 = vmul.f32 %v909, %v974
  %v978 = vmul.f32 %v911, %v974
  %v979 = vmul.f32 %v913, %v974
  %v980 = vmul.f32 %v915, %v974
  %v981 = vmul.f32 %v917, %v974
  %v982 = vmul.f32 %v919, %v974
  %v983 = vmul.f32 %v921, %v974
  %v984 = vmul.f32 %v923, %v974
  %v985 = vmul.f32 %v925, %v974
  %v986 = vmul.f32 %v927, %v974
  %v987 = vmul.f32 %v929, %v974
  %v988 = vmul.f32 %v931, %v974
  %v989 = vmul.f32 %v933, %v974
  %v990 = vmul.f32 %v935, %v974
  %v991 = vmul.f32 %v937, %v974
  %v992 = vmul.f32 %v939, %v974
  %v993 = vmul.f32 %v941, %v974
  %v994 = vmul.f32 %v943, %v974
  %v995 = vmul.f32 %v945, %v974
  %v996 = vmul.f32 %v947, %v974
  %v997 = vmul.f32 %v949, %v974
  %v998 = vmul.f32 %v951, %v974
  %v999 = vmul.f32 %v953, %v974
  %v1000 = vmul.f32 %v955, %v974
  %v1001 = vmul.f32 %v957, %v974
  %v1002 = vmul.f32 %v959, %v974
  %v1003 = vmul.f32 %v961, %v974
  %v1004 = vmul.f32 %v963, %v974
  %v1005 = vmul.f32 %v965, %v974
  %v1006 = vmul.f32 %v967, %v974
  %v1007 = vsub.f32 %v872, %v975
  %v1008 = vsub.f32 %v873, %v976
  %v1009 = vsub.f32 %v874, %v977
  %v1010 = vsub.f32 %v875, %v978
  %v1011 = vsub.f32 %v876, %v979
  %v1012 = vsub.f32 %v877, %v980
  %v1013 = vsub.f32 %v878, %v981
  %v1014 = vsub.f32 %v879, %v982
  %v1015 = vsub.f32 %v880, %v983
  %v1016 = vsub.f32 %v881, %v984
  %v1017 = vsub.f32 %v882, %v985
  %v1018 = vsub.f32 %v883, %v986
  %v1019 = vsub.f32 %v884, %v987
  %v1020 = vsub.f32 %v885, %v988
  %v1021 = vsub.f32 %v886, %v989
  %v1022 = vsub.f32 %v887, %v990
  %v1023 = vsub.f32 %v888, %v991
  %v1024 = vsub.f32 %v889, %v992
  %v1025 = vsub.f32 %v890, %v993
  %v1026 = vsub.f32 %v891, %v994
  %v1027 = vsub.f32 %v892, %v995
  %v1028 = vsub.f32 %v893, %v996
  %v1029 = vsub.f32 %v894, %v997
  %v1030 = vsub.f32 %v895, %v998
  %v1031 = vsub.f32 %v896, %v999
  %v1032 = vsub.f32 %v897, %v1000
  %v1033 = vsub.f32 %v898, %v1001
  %v1034 = vsub.f32 %v899, %v1002
  %v1035 = vsub.f32 %v900, %v1003
  %v1036 = vsub.f32 %v901, %v1004
  %v1037 = vsub.f32 %v902, %v1005
  %v1038 = vsub.f32 %v903, %v1006
  %v1039 = vmul.f32 %v1007, %v1007
  %v1040 = vmul.f32 %v1008, %v1008
  %v1041 = vmul.f32 %v1009, %v1009
  %v1042 = vmul.f32 %v1010, %v1010
  %v1043 = vmul.f32 %v1011, %v1011
  %v1044 = vmul.f32 %v1012, %v1012
  %v1045 = vmul.f32 %v1013, %v1013
  %v1046 = vmul.f32 %v1014, %v1014
  %v1047 = vmul.f32 %v1015, %v1015
  %v1048 = vmul.f32 %v1016, %v1016
  %v1049 = vmul.f32 %v1017, %v1017
  %v1050 = vmul.f32 %v1018, %v1018
  %v1051 = vmul.f32 %v1019, %v1019
  %v1052 = vmul.f32 %v1020, %v1020
  %v1053 = vmul.f32 %v1021, %v1021
  %v1054 = vmul.f32 %v1022, %v1022
  %v1055 = vmul.f32 %v1023, %v1023
  %v1056 = vmul.f32 %v1024, %v1024
  %v1057 = vmul.f32 %v1025, %v1025
  %v1058 = vmul.f32 %v1026, %v1026
  %v1059 = vmul.f32 %v1027, %v1027
  %v1060 = vmul.f32 %v1028, %v1028
  %v1061 = vmul.f32 %v1029, %v1029
  %v1062 = vmul.f32 %v1030, %v1030
  %v1063 = vmul.f32 %v1031, %v1031
  %v1064 = vmul.f32 %v1032, %v1032
  %v1065 = vmul.f32 %v1033, %v1033
  %v1066 = vmul.f32 %v1034, %v1034
  %v1067 = vmul.f32 %v1035, %v1035
  %v1068 = vmul.f32 %v1036, %v1036
  %v1069 = vmul.f32 %v1037, %v1037
  %v1070 = vmul.f32 %v1038, %v1038
  %1071 = vadd.xlane.f32.xlu0 %v1039
  %v1072 = vpop.xlane.xlu0 %1071
  %1073 = vadd.xlane.f32.xlu0 %v1040
  %v1074 = vpop.xlane.xlu0 %1073
  %1075 = vadd.xlane.f32.xlu0 %v1041
  %v1076 = vpop.xlane.xlu0 %1075
  %1077 = vadd.xlane.f32.xlu0 %v1042
  %v1078 = vpop.xlane.xlu0 %1077
  %1079 = vadd.xlane.f32.xlu0 %v1043
  %v1080 = vpop.xlane.xlu0 %1079
  %1081 = vadd.xlane.f32.xlu0 %v1044
  %v1082 = vpop.xlane.xlu0 %1081
  %1083 = vadd.xlane.f32.xlu0 %v1045
  %v1084 = vpop.xlane.xlu0 %1083
  %1085 = vadd.xlane.f32.xlu0 %v1046
  %v1086 = vpop.xlane.xlu0 %1085
  %1087 = vadd.xlane.f32.xlu0 %v1047
  %v1088 = vpop.xlane.xlu0 %1087
  %1089 = vadd.xlane.f32.xlu0 %v1048
  %v1090 = vpop.xlane.xlu0 %1089
  %1091 = vadd.xlane.f32.xlu0 %v1049
  %v1092 = vpop.xlane.xlu0 %1091
  %1093 = vadd.xlane.f32.xlu0 %v1050
  %v1094 = vpop.xlane.xlu0 %1093
  %1095 = vadd.xlane.f32.xlu0 %v1051
  %v1096 = vpop.xlane.xlu0 %1095
  %1097 = vadd.xlane.f32.xlu0 %v1052
  %v1098 = vpop.xlane.xlu0 %1097
  %1099 = vadd.xlane.f32.xlu0 %v1053
  %v1100 = vpop.xlane.xlu0 %1099
  %1101 = vadd.xlane.f32.xlu0 %v1054
  %v1102 = vpop.xlane.xlu0 %1101
  %1103 = vadd.xlane.f32.xlu0 %v1055
  %v1104 = vpop.xlane.xlu0 %1103
  %1105 = vadd.xlane.f32.xlu0 %v1056
  %v1106 = vpop.xlane.xlu0 %1105
  %1107 = vadd.xlane.f32.xlu0 %v1057
  %v1108 = vpop.xlane.xlu0 %1107
  %1109 = vadd.xlane.f32.xlu0 %v1058
  %v1110 = vpop.xlane.xlu0 %1109
  %1111 = vadd.xlane.f32.xlu0 %v1059
  %v1112 = vpop.xlane.xlu0 %1111
  %1113 = vadd.xlane.f32.xlu0 %v1060
  %v1114 = vpop.xlane.xlu0 %1113
  %1115 = vadd.xlane.f32.xlu0 %v1061
  %v1116 = vpop.xlane.xlu0 %1115
  %1117 = vadd.xlane.f32.xlu0 %v1062
  %v1118 = vpop.xlane.xlu0 %1117
  %1119 = vadd.xlane.f32.xlu0 %v1063
  %v1120 = vpop.xlane.xlu0 %1119
  %1121 = vadd.xlane.f32.xlu0 %v1064
  %v1122 = vpop.xlane.xlu0 %1121
  %1123 = vadd.xlane.f32.xlu0 %v1065
  %v1124 = vpop.xlane.xlu0 %1123
  %1125 = vadd.xlane.f32.xlu0 %v1066
  %v1126 = vpop.xlane.xlu0 %1125
  %1127 = vadd.xlane.f32.xlu0 %v1067
  %v1128 = vpop.xlane.xlu0 %1127
  %1129 = vadd.xlane.f32.xlu0 %v1068
  %v1130 = vpop.xlane.xlu0 %1129
  %1131 = vadd.xlane.f32.xlu0 %v1069
  %v1132 = vpop.xlane.xlu0 %1131
  %1133 = vadd.xlane.f32.xlu0 %v1070
  %v1134 = vpop.xlane.xlu0 %1133
  %v1135 = vmul.f32 %v1072, %v974
  %v1136 = vmul.f32 %v1074, %v974
  %v1137 = vmul.f32 %v1076, %v974
  %v1138 = vmul.f32 %v1078, %v974
  %v1139 = vmul.f32 %v1080, %v974
  %v1140 = vmul.f32 %v1082, %v974
  %v1141 = vmul.f32 %v1084, %v974
  %v1142 = vmul.f32 %v1086, %v974
  %v1143 = vmul.f32 %v1088, %v974
  %v1144 = vmul.f32 %v1090, %v974
  %v1145 = vmul.f32 %v1092, %v974
  %v1146 = vmul.f32 %v1094, %v974
  %v1147 = vmul.f32 %v1096, %v974
  %v1148 = vmul.f32 %v1098, %v974
  %v1149 = vmul.f32 %v1100, %v974
  %v1150 = vmul.f32 %v1102, %v974
  %v1151 = vmul.f32 %v1104, %v974
  %v1152 = vmul.f32 %v1106, %v974
  %v1153 = vmul.f32 %v1108, %v974
  %v1154 = vmul.f32 %v1110, %v974
  %v1155 = vmul.f32 %v1112, %v974
  %v1156 = vmul.f32 %v1114, %v974
  %v1157 = vmul.f32 %v1116, %v974
  %v1158 = vmul.f32 %v1118, %v974
  %v1159 = vmul.f32 %v1120, %v974
  %v1160 = vmul.f32 %v1122, %v974
  %v1161 = vmul.f32 %v1124, %v974
  %v1162 = vmul.f32 %v1126, %v974
  %v1163 = vmul.f32 %v1128, %v974
  %v1164 = vmul.f32 %v1130, %v974
  %v1165 = vmul.f32 %v1132, %v974
  %v1166 = vmul.f32 %v1134, %v974
  %v1167 = vadd.f32 %v1135, 1e-05
  %v1168 = vadd.f32 %v1136, 1e-05
  %v1169 = vadd.f32 %v1137, 1e-05
  %v1170 = vadd.f32 %v1138, 1e-05
  %v1171 = vadd.f32 %v1139, 1e-05
  %v1172 = vadd.f32 %v1140, 1e-05
  %v1173 = vadd.f32 %v1141, 1e-05
  %v1174 = vadd.f32 %v1142, 1e-05
  %v1175 = vadd.f32 %v1143, 1e-05
  %v1176 = vadd.f32 %v1144, 1e-05
  %v1177 = vadd.f32 %v1145, 1e-05
  %v1178 = vadd.f32 %v1146, 1e-05
  %v1179 = vadd.f32 %v1147, 1e-05
  %v1180 = vadd.f32 %v1148, 1e-05
  %v1181 = vadd.f32 %v1149, 1e-05
  %v1182 = vadd.f32 %v1150, 1e-05
  %v1183 = vadd.f32 %v1151, 1e-05
  %v1184 = vadd.f32 %v1152, 1e-05
  %v1185 = vadd.f32 %v1153, 1e-05
  %v1186 = vadd.f32 %v1154, 1e-05
  %v1187 = vadd.f32 %v1155, 1e-05
  %v1188 = vadd.f32 %v1156, 1e-05
  %v1189 = vadd.f32 %v1157, 1e-05
  %v1190 = vadd.f32 %v1158, 1e-05
  %v1191 = vadd.f32 %v1159, 1e-05
  %v1192 = vadd.f32 %v1160, 1e-05
  %v1193 = vadd.f32 %v1161, 1e-05
  %v1194 = vadd.f32 %v1162, 1e-05
  %v1195 = vadd.f32 %v1163, 1e-05
  %v1196 = vadd.f32 %v1164, 1e-05
  %v1197 = vadd.f32 %v1165, 1e-05
  %v1198 = vadd.f32 %v1166, 1e-05
  %v1199 = vrsqrt.pop %v1167
  %v1200 = vmul.f32 %v1199, %v1167
  %v1201 = vmul.f32 %v1200, %v1199
  %v1202 = vmul.f32 0.5, %v1201
  %v1203 = vsub.f32 1.5, %v1202
  %v1204 = vmul.f32 %v1199, %v1203
  %vm1205 = vweird.f32 %v1167
  %vm1206 = vweird.f32 %v1199
  %vm1207 = vmor %vm1205, %vm1206
  %v1208 = vsel %vm1207, %v1199, %v1204
  %v1209 = vrsqrt.pop %v1168
  %v1210 = vmul.f32 %v1209, %v1168
  %v1211 = vmul.f32 %v1210, %v1209
  %v1212 = vmul.f32 0.5, %v1211
  %v1213 = vsub.f32 1.5, %v1212
  %v1214 = vmul.f32 %v1209, %v1213
  %vm1215 = vweird.f32 %v1168
  %vm1216 = vweird.f32 %v1209
  %vm1217 = vmor %vm1215, %vm1216
  %v1218 = vsel %vm1217, %v1209, %v1214
  %v1219 = vrsqrt.pop %v1169
  %v1220 = vmul.f32 %v1219, %v1169
  %v1221 = vmul.f32 %v1220, %v1219
  %v1222 = vmul.f32 0.5, %v1221
  %v1223 = vsub.f32 1.5, %v1222
  %v1224 = vmul.f32 %v1219, %v1223
  %vm1225 = vweird.f32 %v1169
  %vm1226 = vweird.f32 %v1219
  %vm1227 = vmor %vm1225, %vm1226
  %v1228 = vsel %vm1227, %v1219, %v1224
  %v1229 = vrsqrt.pop %v1170
  %v1230 = vmul.f32 %v1229, %v1170
  %v1231 = vmul.f32 %v1230, %v1229
  %v1232 = vmul.f32 0.5, %v1231
  %v1233 = vsub.f32 1.5, %v1232
  %v1234 = vmul.f32 %v1229, %v1233
  %vm1235 = vweird.f32 %v1170
  %vm1236 = vweird.f32 %v1229
  %vm1237 = vmor %vm1235, %vm1236
  %v1238 = vsel %vm1237, %v1229, %v1234
  %v1239 = vrsqrt.pop %v1171
  %v1240 = vmul.f32 %v1239, %v1171
  %v1241 = vmul.f32 %v1240, %v1239
  %v1242 = vmul.f32 0.5, %v1241
  %v1243 = vsub.f32 1.5, %v1242
  %v1244 = vmul.f32 %v1239, %v1243
  %vm1245 = vweird.f32 %v1171
  %vm1246 = vweird.f32 %v1239
  %vm1247 = vmor %vm1245, %vm1246
  %v1248 = vsel %vm1247, %v1239, %v1244
  %v1249 = vrsqrt.pop %v1172
  %v1250 = vmul.f32 %v1249, %v1172
  %v1251 = vmul.f32 %v1250, %v1249
  %v1252 = vmul.f32 0.5, %v1251
  %v1253 = vsub.f32 1.5, %v1252
  %v1254 = vmul.f32 %v1249, %v1253
  %vm1255 = vweird.f32 %v1172
  %vm1256 = vweird.f32 %v1249
  %vm1257 = vmor %vm1255, %vm1256
  %v1258 = vsel %vm1257, %v1249, %v1254
  %v1259 = vrsqrt.pop %v1173
  %v1260 = vmul.f32 %v1259, %v1173
  %v1261 = vmul.f32 %v1260, %v1259
  %v1262 = vmul.f32 0.5, %v1261
  %v1263 = vsub.f32 1.5, %v1262
  %v1264 = vmul.f32 %v1259, %v1263
  %vm1265 = vweird.f32 %v1173
  %vm1266 = vweird.f32 %v1259
  %vm1267 = vmor %vm1265, %vm1266
  %v1268 = vsel %vm1267, %v1259, %v1264
  %v1269 = vrsqrt.pop %v1174
  %v1270 = vmul.f32 %v1269, %v1174
  %v1271 = vmul.f32 %v1270, %v1269
  %v1272 = vmul.f32 0.5, %v1271
  %v1273 = vsub.f32 1.5, %v1272
  %v1274 = vmul.f32 %v1269, %v1273
  %vm1275 = vweird.f32 %v1174
  %vm1276 = vweird.f32 %v1269
  %vm1277 = vmor %vm1275, %vm1276
  %v1278 = vsel %vm1277, %v1269, %v1274
  %v1279 = vrsqrt.pop %v1175
  %v1280 = vmul.f32 %v1279, %v1175
  %v1281 = vmul.f32 %v1280, %v1279
  %v1282 = vmul.f32 0.5, %v1281
  %v1283 = vsub.f32 1.5, %v1282
  %v1284 = vmul.f32 %v1279, %v1283
  %vm1285 = vweird.f32 %v1175
  %vm1286 = vweird.f32 %v1279
  %vm1287 = vmor %vm1285, %vm1286
  %v1288 = vsel %vm1287, %v1279, %v1284
  %v1289 = vrsqrt.pop %v1176
  %v1290 = vmul.f32 %v1289, %v1176
  %v1291 = vmul.f32 %v1290, %v1289
  %v1292 = vmul.f32 0.5, %v1291
  %v1293 = vsub.f32 1.5, %v1292
  %v1294 = vmul.f32 %v1289, %v1293
  %vm1295 = vweird.f32 %v1176
  %vm1296 = vweird.f32 %v1289
  %vm1297 = vmor %vm1295, %vm1296
  %v1298 = vsel %vm1297, %v1289, %v1294
  %v1299 = vrsqrt.pop %v1177
  %v1300 = vmul.f32 %v1299, %v1177
  %v1301 = vmul.f32 %v1300, %v1299
  %v1302 = vmul.f32 0.5, %v1301
  %v1303 = vsub.f32 1.5, %v1302
  %v1304 = vmul.f32 %v1299, %v1303
  %vm1305 = vweird.f32 %v1177
  %vm1306 = vweird.f32 %v1299
  %vm1307 = vmor %vm1305, %vm1306
  %v1308 = vsel %vm1307, %v1299, %v1304
  %v1309 = vrsqrt.pop %v1178
  %v1310 = vmul.f32 %v1309, %v1178
  %v1311 = vmul.f32 %v1310, %v1309
  %v1312 = vmul.f32 0.5, %v1311
  %v1313 = vsub.f32 1.5, %v1312
  %v1314 = vmul.f32 %v1309, %v1313
  %vm1315 = vweird.f32 %v1178
  %vm1316 = vweird.f32 %v1309
  %vm1317 = vmor %vm1315, %vm1316
  %v1318 = vsel %vm1317, %v1309, %v1314
  %v1319 = vrsqrt.pop %v1179
  %v1320 = vmul.f32 %v1319, %v1179
  %v1321 = vmul.f32 %v1320, %v1319
  %v1322 = vmul.f32 0.5, %v1321
  %v1323 = vsub.f32 1.5, %v1322
  %v1324 = vmul.f32 %v1319, %v1323
  %vm1325 = vweird.f32 %v1179
  %vm1326 = vweird.f32 %v1319
  %vm1327 = vmor %vm1325, %vm1326
  %v1328 = vsel %vm1327, %v1319, %v1324
  %v1329 = vrsqrt.pop %v1180
  %v1330 = vmul.f32 %v1329, %v1180
  %v1331 = vmul.f32 %v1330, %v1329
  %v1332 = vmul.f32 0.5, %v1331
  %v1333 = vsub.f32 1.5, %v1332
  %v1334 = vmul.f32 %v1329, %v1333
  %vm1335 = vweird.f32 %v1180
  %vm1336 = vweird.f32 %v1329
  %vm1337 = vmor %vm1335, %vm1336
  %v1338 = vsel %vm1337, %v1329, %v1334
  %v1339 = vrsqrt.pop %v1181
  %v1340 = vmul.f32 %v1339, %v1181
  %v1341 = vmul.f32 %v1340, %v1339
  %v1342 = vmul.f32 0.5, %v1341
  %v1343 = vsub.f32 1.5, %v1342
  %v1344 = vmul.f32 %v1339, %v1343
  %vm1345 = vweird.f32 %v1181
  %vm1346 = vweird.f32 %v1339
  %vm1347 = vmor %vm1345, %vm1346
  %v1348 = vsel %vm1347, %v1339, %v1344
  %v1349 = vrsqrt.pop %v1182
  %v1350 = vmul.f32 %v1349, %v1182
  %v1351 = vmul.f32 %v1350, %v1349
  %v1352 = vmul.f32 0.5, %v1351
  %v1353 = vsub.f32 1.5, %v1352
  %v1354 = vmul.f32 %v1349, %v1353
  %vm1355 = vweird.f32 %v1182
  %vm1356 = vweird.f32 %v1349
  %vm1357 = vmor %vm1355, %vm1356
  %v1358 = vsel %vm1357, %v1349, %v1354
  %v1359 = vrsqrt.pop %v1183
  %v1360 = vmul.f32 %v1359, %v1183
  %v1361 = vmul.f32 %v1360, %v1359
  %v1362 = vmul.f32 0.5, %v1361
  %v1363 = vsub.f32 1.5, %v1362
  %v1364 = vmul.f32 %v1359, %v1363
  %vm1365 = vweird.f32 %v1183
  %vm1366 = vweird.f32 %v1359
  %vm1367 = vmor %vm1365, %vm1366
  %v1368 = vsel %vm1367, %v1359, %v1364
  %v1369 = vrsqrt.pop %v1184
  %v1370 = vmul.f32 %v1369, %v1184
  %v1371 = vmul.f32 %v1370, %v1369
  %v1372 = vmul.f32 0.5, %v1371
  %v1373 = vsub.f32 1.5, %v1372
  %v1374 = vmul.f32 %v1369, %v1373
  %vm1375 = vweird.f32 %v1184
  %vm1376 = vweird.f32 %v1369
  %vm1377 = vmor %vm1375, %vm1376
  %v1378 = vsel %vm1377, %v1369, %v1374
  %v1379 = vrsqrt.pop %v1185
  %v1380 = vmul.f32 %v1379, %v1185
  %v1381 = vmul.f32 %v1380, %v1379
  %v1382 = vmul.f32 0.5, %v1381
  %v1383 = vsub.f32 1.5, %v1382
  %v1384 = vmul.f32 %v1379, %v1383
  %vm1385 = vweird.f32 %v1185
  %vm1386 = vweird.f32 %v1379
  %vm1387 = vmor %vm1385, %vm1386
  %v1388 = vsel %vm1387, %v1379, %v1384
  %v1389 = vrsqrt.pop %v1186
  %v1390 = vmul.f32 %v1389, %v1186
  %v1391 = vmul.f32 %v1390, %v1389
  %v1392 = vmul.f32 0.5, %v1391
  %v1393 = vsub.f32 1.5, %v1392
  %v1394 = vmul.f32 %v1389, %v1393
  %vm1395 = vweird.f32 %v1186
  %vm1396 = vweird.f32 %v1389
  %vm1397 = vmor %vm1395, %vm1396
  %v1398 = vsel %vm1397, %v1389, %v1394
  %v1399 = vrsqrt.pop %v1187
  %v1400 = vmul.f32 %v1399, %v1187
  %v1401 = vmul.f32 %v1400, %v1399
  %v1402 = vmul.f32 0.5, %v1401
  %v1403 = vsub.f32 1.5, %v1402
  %v1404 = vmul.f32 %v1399, %v1403
  %vm1405 = vweird.f32 %v1187
  %vm1406 = vweird.f32 %v1399
  %vm1407 = vmor %vm1405, %vm1406
  %v1408 = vsel %vm1407, %v1399, %v1404
  %v1409 = vrsqrt.pop %v1188
  %v1410 = vmul.f32 %v1409, %v1188
  %v1411 = vmul.f32 %v1410, %v1409
  %v1412 = vmul.f32 0.5, %v1411
  %v1413 = vsub.f32 1.5, %v1412
  %v1414 = vmul.f32 %v1409, %v1413
  %vm1415 = vweird.f32 %v1188
  %vm1416 = vweird.f32 %v1409
  %vm1417 = vmor %vm1415, %vm1416
  %v1418 = vsel %vm1417, %v1409, %v1414
  %v1419 = vrsqrt.pop %v1189
  %v1420 = vmul.f32 %v1419, %v1189
  %v1421 = vmul.f32 %v1420, %v1419
  %v1422 = vmul.f32 0.5, %v1421
  %v1423 = vsub.f32 1.5, %v1422
  %v1424 = vmul.f32 %v1419, %v1423
  %vm1425 = vweird.f32 %v1189
  %vm1426 = vweird.f32 %v1419
  %vm1427 = vmor %vm1425, %vm1426
  %v1428 = vsel %vm1427, %v1419, %v1424
  %v1429 = vrsqrt.pop %v1190
  %v1430 = vmul.f32 %v1429, %v1190
  %v1431 = vmul.f32 %v1430, %v1429
  %v1432 = vmul.f32 0.5, %v1431
  %v1433 = vsub.f32 1.5, %v1432
  %v1434 = vmul.f32 %v1429, %v1433
  %vm1435 = vweird.f32 %v1190
  %vm1436 = vweird.f32 %v1429
  %vm1437 = vmor %vm1435, %vm1436
  %v1438 = vsel %vm1437, %v1429, %v1434
  %v1439 = vrsqrt.pop %v1191
  %v1440 = vmul.f32 %v1439, %v1191
  %v1441 = vmul.f32 %v1440, %v1439
  %v1442 = vmul.f32 0.5, %v1441
  %v1443 = vsub.f32 1.5, %v1442
  %v1444 = vmul.f32 %v1439, %v1443
  %vm1445 = vweird.f32 %v1191
  %vm1446 = vweird.f32 %v1439
  %vm1447 = vmor %vm1445, %vm1446
  %v1448 = vsel %vm1447, %v1439, %v1444
  %v1449 = vrsqrt.pop %v1192
  %v1450 = vmul.f32 %v1449, %v1192
  %v1451 = vmul.f32 %v1450, %v1449
  %v1452 = vmul.f32 0.5, %v1451
  %v1453 = vsub.f32 1.5, %v1452
  %v1454 = vmul.f32 %v1449, %v1453
  %vm1455 = vweird.f32 %v1192
  %vm1456 = vweird.f32 %v1449
  %vm1457 = vmor %vm1455, %vm1456
  %v1458 = vsel %vm1457, %v1449, %v1454
  %v1459 = vrsqrt.pop %v1193
  %v1460 = vmul.f32 %v1459, %v1193
  %v1461 = vmul.f32 %v1460, %v1459
  %v1462 = vmul.f32 0.5, %v1461
  %v1463 = vsub.f32 1.5, %v1462
  %v1464 = vmul.f32 %v1459, %v1463
  %vm1465 = vweird.f32 %v1193
  %vm1466 = vweird.f32 %v1459
  %vm1467 = vmor %vm1465, %vm1466
  %v1468 = vsel %vm1467, %v1459, %v1464
  %v1469 = vrsqrt.pop %v1194
  %v1470 = vmul.f32 %v1469, %v1194
  %v1471 = vmul.f32 %v1470, %v1469
  %v1472 = vmul.f32 0.5, %v1471
  %v1473 = vsub.f32 1.5, %v1472
  %v1474 = vmul.f32 %v1469, %v1473
  %vm1475 = vweird.f32 %v1194
  %vm1476 = vweird.f32 %v1469
  %vm1477 = vmor %vm1475, %vm1476
  %v1478 = vsel %vm1477, %v1469, %v1474
  %v1479 = vrsqrt.pop %v1195
  %v1480 = vmul.f32 %v1479, %v1195
  %v1481 = vmul.f32 %v1480, %v1479
  %v1482 = vmul.f32 0.5, %v1481
  %v1483 = vsub.f32 1.5, %v1482
  %v1484 = vmul.f32 %v1479, %v1483
  %vm1485 = vweird.f32 %v1195
  %vm1486 = vweird.f32 %v1479
  %vm1487 = vmor %vm1485, %vm1486
  %v1488 = vsel %vm1487, %v1479, %v1484
  %v1489 = vrsqrt.pop %v1196
  %v1490 = vmul.f32 %v1489, %v1196
  %v1491 = vmul.f32 %v1490, %v1489
  %v1492 = vmul.f32 0.5, %v1491
  %v1493 = vsub.f32 1.5, %v1492
  %v1494 = vmul.f32 %v1489, %v1493
  %vm1495 = vweird.f32 %v1196
  %vm1496 = vweird.f32 %v1489
  %vm1497 = vmor %vm1495, %vm1496
  %v1498 = vsel %vm1497, %v1489, %v1494
  %v1499 = vrsqrt.pop %v1197
  %v1500 = vmul.f32 %v1499, %v1197
  %v1501 = vmul.f32 %v1500, %v1499
  %v1502 = vmul.f32 0.5, %v1501
  %v1503 = vsub.f32 1.5, %v1502
  %v1504 = vmul.f32 %v1499, %v1503
  %vm1505 = vweird.f32 %v1197
  %vm1506 = vweird.f32 %v1499
  %vm1507 = vmor %vm1505, %vm1506
  %v1508 = vsel %vm1507, %v1499, %v1504
  %v1509 = vrsqrt.pop %v1198
  %v1510 = vmul.f32 %v1509, %v1198
  %v1511 = vmul.f32 %v1510, %v1509
  %v1512 = vmul.f32 0.5, %v1511
  %v1513 = vsub.f32 1.5, %v1512
  %v1514 = vmul.f32 %v1509, %v1513
  %vm1515 = vweird.f32 %v1198
  %vm1516 = vweird.f32 %v1509
  %vm1517 = vmor %vm1515, %vm1516
  %v1518 = vsel %vm1517, %v1509, %v1514
  %v1519 = vmul.f32 %v1007, %v1208
  %v1520 = vmul.f32 %v1008, %v1218
  %v1521 = vmul.f32 %v1009, %v1228
  %v1522 = vmul.f32 %v1010, %v1238
  %v1523 = vmul.f32 %v1011, %v1248
  %v1524 = vmul.f32 %v1012, %v1258
  %v1525 = vmul.f32 %v1013, %v1268
  %v1526 = vmul.f32 %v1014, %v1278
  %v1527 = vmul.f32 %v1015, %v1288
  %v1528 = vmul.f32 %v1016, %v1298
  %v1529 = vmul.f32 %v1017, %v1308
  %v1530 = vmul.f32 %v1018, %v1318
  %v1531 = vmul.f32 %v1019, %v1328
  %v1532 = vmul.f32 %v1020, %v1338
  %v1533 = vmul.f32 %v1021, %v1348
  %v1534 = vmul.f32 %v1022, %v1358
  %v1535 = vmul.f32 %v1023, %v1368
  %v1536 = vmul.f32 %v1024, %v1378
  %v1537 = vmul.f32 %v1025, %v1388
  %v1538 = vmul.f32 %v1026, %v1398
  %v1539 = vmul.f32 %v1027, %v1408
  %v1540 = vmul.f32 %v1028, %v1418
  %v1541 = vmul.f32 %v1029, %v1428
  %v1542 = vmul.f32 %v1030, %v1438
  %v1543 = vmul.f32 %v1031, %v1448
  %v1544 = vmul.f32 %v1032, %v1458
  %v1545 = vmul.f32 %v1033, %v1468
  %v1546 = vmul.f32 %v1034, %v1478
  %v1547 = vmul.f32 %v1035, %v1488
  %v1548 = vmul.f32 %v1036, %v1498
  %v1549 = vmul.f32 %v1037, %v1508
  %v1550 = vmul.f32 %v1038, %v1518
  %v1551 = vld [vmem:[%s5] sm:$0x1]
  %v1553 = vperm.slane %v1551, 0
  %v1555 = vmul.f32 %v1519, %v1553
  %v1556 = vmul.f32 %v1520, %v1553
  %v1557 = vmul.f32 %v1521, %v1553
  %v1558 = vmul.f32 %v1522, %v1553
  %v1559 = vmul.f32 %v1523, %v1553
  %v1560 = vmul.f32 %v1524, %v1553
  %v1561 = vmul.f32 %v1525, %v1553
  %v1562 = vmul.f32 %v1526, %v1553
  %v1563 = vmul.f32 %v1527, %v1553
  %v1564 = vmul.f32 %v1528, %v1553
  %v1565 = vmul.f32 %v1529, %v1553
  %v1566 = vmul.f32 %v1530, %v1553
  %v1567 = vmul.f32 %v1531, %v1553
  %v1568 = vmul.f32 %v1532, %v1553
  %v1569 = vmul.f32 %v1533, %v1553
  %v1570 = vmul.f32 %v1534, %v1553
  %v1571 = vmul.f32 %v1535, %v1553
  %v1572 = vmul.f32 %v1536, %v1553
  %v1573 = vmul.f32 %v1537, %v1553
  %v1574 = vmul.f32 %v1538, %v1553
  %v1575 = vmul.f32 %v1539, %v1553
  %v1576 = vmul.f32 %v1540, %v1553
  %v1577 = vmul.f32 %v1541, %v1553
  %v1578 = vmul.f32 %v1542, %v1553
  %v1579 = vmul.f32 %v1543, %v1553
  %v1580 = vmul.f32 %v1544, %v1553
  %v1581 = vmul.f32 %v1545, %v1553
  %v1582 = vmul.f32 %v1546, %v1553
  %v1583 = vmul.f32 %v1547, %v1553
  %v1584 = vmul.f32 %v1548, %v1553
  %v1585 = vmul.f32 %v1549, %v1553
  %v1586 = vmul.f32 %v1550, %v1553
  %v1587 = vld [vmem:[%s6] sm:$0x1]
  %v1589 = vperm.slane %v1587, 0
  %v1591 = vadd.f32 %v1555, %v1589
  %v1592 = vadd.f32 %v1556, %v1589
  %v1593 = vadd.f32 %v1557, %v1589
  %v1594 = vadd.f32 %v1558, %v1589
  %v1595 = vadd.f32 %v1559, %v1589
  %v1596 = vadd.f32 %v1560, %v1589
  %v1597 = vadd.f32 %v1561, %v1589
  %v1598 = vadd.f32 %v1562, %v1589
  %v1599 = vadd.f32 %v1563, %v1589
  %v1600 = vadd.f32 %v1564, %v1589
  %v1601 = vadd.f32 %v1565, %v1589
  %v1602 = vadd.f32 %v1566, %v1589
  %v1603 = vadd.f32 %v1567, %v1589
  %v1604 = vadd.f32 %v1568, %v1589
  %v1605 = vadd.f32 %v1569, %v1589
  %v1606 = vadd.f32 %v1570, %v1589
  %v1607 = vadd.f32 %v1571, %v1589
  %v1608 = vadd.f32 %v1572, %v1589
  %v1609 = vadd.f32 %v1573, %v1589
  %v1610 = vadd.f32 %v1574, %v1589
  %v1611 = vadd.f32 %v1575, %v1589
  %v1612 = vadd.f32 %v1576, %v1589
  %v1613 = vadd.f32 %v1577, %v1589
  %v1614 = vadd.f32 %v1578, %v1589
  %v1615 = vadd.f32 %v1579, %v1589
  %v1616 = vadd.f32 %v1580, %v1589
  %v1617 = vadd.f32 %v1581, %v1589
  %v1618 = vadd.f32 %v1582, %v1589
  %v1619 = vadd.f32 %v1583, %v1589
  %v1620 = vadd.f32 %v1584, %v1589
  %v1621 = vadd.f32 %v1585, %v1589
  %v1622 = vadd.f32 %v1586, %v1589
  %v1623 = vpack.c.bf16 %v1591, %v1591
  %v1624 = vpack.c.bf16 %v1592, %v1592
  %v1625 = vpack.c.bf16 %v1593, %v1593
  %v1626 = vpack.c.bf16 %v1594, %v1594
  %v1627 = vpack.c.bf16 %v1595, %v1595
  %v1628 = vpack.c.bf16 %v1596, %v1596
  %v1629 = vpack.c.bf16 %v1597, %v1597
  %v1630 = vpack.c.bf16 %v1598, %v1598
  %v1631 = vpack.c.bf16 %v1599, %v1599
  %v1632 = vpack.c.bf16 %v1600, %v1600
  %v1633 = vpack.c.bf16 %v1601, %v1601
  %v1634 = vpack.c.bf16 %v1602, %v1602
  %v1635 = vpack.c.bf16 %v1603, %v1603
  %v1636 = vpack.c.bf16 %v1604, %v1604
  %v1637 = vpack.c.bf16 %v1605, %v1605
  %v1638 = vpack.c.bf16 %v1606, %v1606
  %v1639 = vpack.c.bf16 %v1607, %v1607
  %v1640 = vpack.c.bf16 %v1608, %v1608
  %v1641 = vpack.c.bf16 %v1609, %v1609
  %v1642 = vpack.c.bf16 %v1610, %v1610
  %v1643 = vpack.c.bf16 %v1611, %v1611
  %v1644 = vpack.c.bf16 %v1612, %v1612
  %v1645 = vpack.c.bf16 %v1613, %v1613
  %v1646 = vpack.c.bf16 %v1614, %v1614
  %v1647 = vpack.c.bf16 %v1615, %v1615
  %v1648 = vpack.c.bf16 %v1616, %v1616
  %v1649 = vpack.c.bf16 %v1617, %v1617
  %v1650 = vpack.c.bf16 %v1618, %v1618
  %v1651 = vpack.c.bf16 %v1619, %v1619
  %v1652 = vpack.c.bf16 %v1620, %v1620
  %v1653 = vpack.c.bf16 %v1621, %v1621
  %v1654 = vpack.c.bf16 %v1622, %v1622
  %1655 = vst [vmem:[%s7] sm:$0xf] %v1623
  %1656 = vst [vmem:[%s7 + $0x4] sm:$0xf] %v1624
  %1657 = vst [vmem:[%s7 + $0x8] sm:$0xf] %v1625
  %1658 = vst [vmem:[%s7 + $0xc] sm:$0xf] %v1626
  %1659 = vst [vmem:[%s7 + $0x10] sm:$0xf] %v1627
  %1660 = vst [vmem:[%s7 + $0x14] sm:$0xf] %v1628
  %1661 = vst [vmem:[%s7 + $0x18] sm:$0xf] %v1629
  %1662 = vst [vmem:[%s7 + $0x1c] sm:$0xf] %v1630
  %1663 = vst [vmem:[%s7 + $0x20] sm:$0xf] %v1631
  %1664 = vst [vmem:[%s7 + $0x24] sm:$0xf] %v1632
  %1665 = vst [vmem:[%s7 + $0x28] sm:$0xf] %v1633
  %1666 = vst [vmem:[%s7 + $0x2c] sm:$0xf] %v1634
  %1667 = vst [vmem:[%s7 + $0x30] sm:$0xf] %v1635
  %1668 = vst [vmem:[%s7 + $0x34] sm:$0xf] %v1636
  %1669 = vst [vmem:[%s7 + $0x38] sm:$0xf] %v1637
  %1670 = vst [vmem:[%s7 + $0x3c] sm:$0xf] %v1638
  %1671 = vst [vmem:[%s7 + $0x40] sm:$0xf] %v1639
  %1672 = vst [vmem:[%s7 + $0x44] sm:$0xf] %v1640
  %1673 = vst [vmem:[%s7 + $0x48] sm:$0xf] %v1641
  %1674 = vst [vmem:[%s7 + $0x4c] sm:$0xf] %v1642
  %1675 = vst [vmem:[%s7 + $0x50] sm:$0xf] %v1643
  %1676 = vst [vmem:[%s7 + $0x54] sm:$0xf] %v1644
  %1677 = vst [vmem:[%s7 + $0x58] sm:$0xf] %v1645
  %1678 = vst [vmem:[%s7 + $0x5c] sm:$0xf] %v1646
  %1679 = vst [vmem:[%s7 + $0x60] sm:$0xf] %v1647
  %1680 = vst [vmem:[%s7 + $0x64] sm:$0xf] %v1648
  %1681 = vst [vmem:[%s7 + $0x68] sm:$0xf] %v1649
  %1682 = vst [vmem:[%s7 + $0x6c] sm:$0xf] %v1650
  %1683 = vst [vmem:[%s7 + $0x70] sm:$0xf] %v1651
  %1684 = vst [vmem:[%s7 + $0x74] sm:$0xf] %v1652
  %1685 = vst [vmem:[%s7 + $0x78] sm:$0xf] %v1653
  %1686 = vst [vmem:[%s7 + $0x7c] sm:$0xf] %v1654
  // Predicated region
  $region30: #{_forward_device.7} parent=0 // pred_check
    _
  $region31: #{_forward_device.7} parent=0 // pred_check_branch
    %1688 = sbr.rel (0) target = $region33
  $region32: #{_forward_device.7} parent=0 // pred_region
    _
  $region33: #{_forward_device.7} parent=0 // pred_fallthru
    _
  // Predicated region
  $region34: #{_forward_device.7} parent=0 // pred_check
    _
  $region35: #{_forward_device.7} parent=0 // pred_check_branch
    %1690 = sbr.rel (0) target = $region37
  $region36: #{_forward_device.7} parent=0 // pred_region
    _
  $region37: #{_forward_device.7} parent=0 // pred_fallthru
    _

// kernel: _forward_device.9
$region0: #{_forward_device.9}
  #allocation0 [shape = 'u32[]', space=smem, size = 0x4, offset = 0x4, fixed_abs, tag = 'smem constant byte address 0x4 - core index']
  #allocation1 [shape = 'u32[72,128]{1,0:T(1,128)}', space=vmem, size = 0x9000, scoped, tag = 'internal scratch']
  #allocation2 [shape = 'f32[2,128]{1,0:T(2,128)}', space=vmem, size = 0x400, scoped, tag = 'scratch operand']
  %s0 = inlined_call_operand.vmem [shape: bf16[2,128,128], index: 0, kind: input, shape index: {}]
  %s1 = inlined_call_operand.vmem [shape: f32[1,128,1], index: 1, kind: input, shape index: {}]
  %s2 = inlined_call_operand.vmem [shape: bf16[128,256], index: 2, kind: input, shape index: {}]
  %s3 = inlined_call_operand.vmem [shape: f32[1,256], index: 3, kind: input, shape index: {}]
  %s4 = inlined_call_operand.vmem [shape: bf16[256,128], index: 4, kind: input, shape index: {}]
  %s5 = inlined_call_operand.vmem [shape: f32[1,128], index: 5, kind: input, shape index: {}]
  %s6 = inlined_call_operand.vmem [shape: f32[1,128], index: 6, kind: input, shape index: {}]
  %s7 = inlined_call_operand.vmem [shape: f32[1,128], index: 7, kind: input, shape index: {}]
  %s8 = inlined_call_operand.vmem [shape: f32[1,128], index: 8, kind: input, shape index: {}]
  %s9 = inlined_call_operand.vmem [shape: f32[1,128], index: 9, kind: input, shape index: {}]
  %s10 = inlined_call_operand.vmem [shape: bf16[128,256], index: 10, kind: input, shape index: {}]
  %s11 = inlined_call_operand.vmem [shape: f32[1,256], index: 11, kind: input, shape index: {}]
  %s12 = inlined_call_operand.vmem [shape: bf16[256,128], index: 12, kind: input, shape index: {}]
  %s13 = inlined_call_operand.vmem [shape: f32[1,128], index: 13, kind: input, shape index: {}]
  %s14 = inlined_call_operand.hbm [shape: f32[2,128], index: 14, kind: output, shape index: {}]
  %s15 = sld [smem:[#allocation0]]
  $region78: #{_forward_device.9} parent=0
    _
  %s17 = ssub.s32 1, %s15
  %s18 = scalar_select 0, %s17, %s15
  $region1: #{_forward_device.9} parent=0
    #allocation3 [shape = 'u8[1024]{0}', space=vmem, size = 0x400, scoped, tag = 'output window, operand 0, single buffered']
    #allocation4 [shape = 's32[1]{0}', space=sflag, size = 0x4, scoped, tag = 'scoped memory for _forward_device.9']
    %19 = vsyncpa [#allocation4], 0
    // Predicated region
    $region2: #{_forward_device.9} parent=1 // pred_check
      _
    $region3: #{_forward_device.9} parent=1 // pred_check_branch
      %21 = sbr.rel (0) target = $region5
    $region4: #{_forward_device.9} parent=1 // pred_region
      _
    $region5: #{_forward_device.9} parent=1 // pred_fallthru
      _
    // Predicated region
    $region6: #{_forward_device.9} parent=1 // pred_check
      _
    $region7: #{_forward_device.9} parent=1 // pred_check_branch
      %23 = sbr.rel (0) target = $region9
    $region8: #{_forward_device.9} parent=1 // pred_region
      _
    $region9: #{_forward_device.9} parent=1 // pred_fallthru
      _
    // Predicated region
    $region10: #{_forward_device.9} parent=1 // pred_check
      _
    $region11: #{_forward_device.9} parent=1 // pred_check_branch
      %25 = sbr.rel (0) target = $region13
    $region12: #{_forward_device.9} parent=1 // pred_region
      _
    $region13: #{_forward_device.9} parent=1 // pred_fallthru
      _
    // Predicated region
    $region14: #{_forward_device.9} parent=1 // pred_check
      _
    $region15: #{_forward_device.9} parent=1 // pred_check_branch
      %27 = sbr.rel (0) target = $region17
    $region16: #{_forward_device.9} parent=1 // pred_region
      _
    $region17: #{_forward_device.9} parent=1 // pred_fallthru
      _
    // Predicated region
    $region18: #{_forward_device.9} parent=1 // pred_check
      _
    $region19: #{_forward_device.9} parent=1 // pred_check_branch
      %29 = sbr.rel (0) target = $region21
    $region20: #{_forward_device.9} parent=1 // pred_region
      _
    $region21: #{_forward_device.9} parent=1 // pred_fallthru
      _
    // Predicated region
    $region22: #{_forward_device.9} parent=1 // pred_check
      _
    $region23: #{_forward_device.9} parent=1 // pred_check_branch
      %31 = sbr.rel (0) target = $region25
    $region24: #{_forward_device.9} parent=1 // pred_region
      _
    $region25: #{_forward_device.9} parent=1 // pred_fallthru
      _
    // Predicated region
    $region26: #{_forward_device.9} parent=1 // pred_check
      _
    $region27: #{_forward_device.9} parent=1 // pred_check_branch
      %33 = sbr.rel (0) target = $region29
    $region28: #{_forward_device.9} parent=1 // pred_region
      _
    $region29: #{_forward_device.9} parent=1 // pred_fallthru
      _
    // Predicated region
    $region30: #{_forward_device.9} parent=1 // pred_check
      _
    $region31: #{_forward_device.9} parent=1 // pred_check_branch
      %35 = sbr.rel (0) target = $region33
    $region32: #{_forward_device.9} parent=1 // pred_region
      _
    $region33: #{_forward_device.9} parent=1 // pred_fallthru
      _
    // Predicated region
    $region34: #{_forward_device.9} parent=1 // pred_check
      _
    $region35: #{_forward_device.9} parent=1 // pred_check_branch
      %37 = sbr.rel (0) target = $region37
    $region36: #{_forward_device.9} parent=1 // pred_region
      _
    $region37: #{_forward_device.9} parent=1 // pred_fallthru
      _
    // Predicated region
    $region38: #{_forward_device.9} parent=1 // pred_check
      _
    $region39: #{_forward_device.9} parent=1 // pred_check_branch
      %39 = sbr.rel (0) target = $region41
    $region40: #{_forward_device.9} parent=1 // pred_region
      _
    $region41: #{_forward_device.9} parent=1 // pred_fallthru
      _
    // Predicated region
    $region42: #{_forward_device.9} parent=1 // pred_check
      _
    $region43: #{_forward_device.9} parent=1 // pred_check_branch
      %41 = sbr.rel (0) target = $region45
    $region44: #{_forward_device.9} parent=1 // pred_region
      _
    $region45: #{_forward_device.9} parent=1 // pred_fallthru
      _
    // Predicated region
    $region46: #{_forward_device.9} parent=1 // pred_check
      _
    $region47: #{_forward_device.9} parent=1 // pred_check_branch
      %43 = sbr.rel (0) target = $region49
    $region48: #{_forward_device.9} parent=1 // pred_region
      _
    $region49: #{_forward_device.9} parent=1 // pred_fallthru
      _
    // Predicated region
    $region50: #{_forward_device.9} parent=1 // pred_check
      _
    $region51: #{_forward_device.9} parent=1 // pred_check_branch
      %45 = sbr.rel (0) target = $region53
    $region52: #{_forward_device.9} parent=1 // pred_region
      _
    $region53: #{_forward_device.9} parent=1 // pred_fallthru
      _
    // Predicated region
    $region54: #{_forward_device.9} parent=1 // pred_check
      _
    $region55: #{_forward_device.9} parent=1 // pred_check_branch
      %47 = sbr.rel (0) target = $region57
    $region56: #{_forward_device.9} parent=1 // pred_region
      _
    $region57: #{_forward_device.9} parent=1 // pred_fallthru
      _
    %v48 = vld [vmem:[%s0] sm:$0xf]
    %v49 = vld [vmem:[%s0 + $0x4] sm:$0xf]
    %v50 = vld [vmem:[%s0 + $0x8] sm:$0xf]
    %v51 = vld [vmem:[%s0 + $0xc] sm:$0xf]
    %v52 = vld [vmem:[%s0 + $0x10] sm:$0xf]
    %v53 = vld [vmem:[%s0 + $0x14] sm:$0xf]
    %v54 = vld [vmem:[%s0 + $0x18] sm:$0xf]
    %v55 = vld [vmem:[%s0 + $0x1c] sm:$0xf]
    %v56 = vld [vmem:[%s0 + $0x20] sm:$0xf]
    %v57 = vld [vmem:[%s0 + $0x24] sm:$0xf]
    %v58 = vld [vmem:[%s0 + $0x28] sm:$0xf]
    %v59 = vld [vmem:[%s0 + $0x2c] sm:$0xf]
    %v60 = vld [vmem:[%s0 + $0x30] sm:$0xf]
    %v61 = vld [vmem:[%s0 + $0x34] sm:$0xf]
    %v62 = vld [vmem:[%s0 + $0x38] sm:$0xf]
    %v63 = vld [vmem:[%s0 + $0x3c] sm:$0xf]
    %v64 = vld [vmem:[%s0 + $0x40] sm:$0xf]
    %v65 = vld [vmem:[%s0 + $0x44] sm:$0xf]
    %v66 = vld [vmem:[%s0 + $0x48] sm:$0xf]
    %v67 = vld [vmem:[%s0 + $0x4c] sm:$0xf]
    %v68 = vld [vmem:[%s0 + $0x50] sm:$0xf]
    %v69 = vld [vmem:[%s0 + $0x54] sm:$0xf]
    %v70 = vld [vmem:[%s0 + $0x58] sm:$0xf]
    %v71 = vld [vmem:[%s0 + $0x5c] sm:$0xf]
    %v72 = vld [vmem:[%s0 + $0x60] sm:$0xf]
    %v73 = vld [vmem:[%s0 + $0x64] sm:$0xf]
    %v74 = vld [vmem:[%s0 + $0x68] sm:$0xf]
    %v75 = vld [vmem:[%s0 + $0x6c] sm:$0xf]
    %v76 = vld [vmem:[%s0 + $0x70] sm:$0xf]
    %v77 = vld [vmem:[%s0 + $0x74] sm:$0xf]
    %v78 = vld [vmem:[%s0 + $0x78] sm:$0xf]
    %v79 = vld [vmem:[%s0 + $0x7c] sm:$0xf]
    %v80 = vld [vmem:[%s2] sm:$0xff]
    %v81 = vld [vmem:[%s2 + $0x8] sm:$0xff]
    %v82 = vld [vmem:[%s2 + $0x10] sm:$0xff]
    %v83 = vld [vmem:[%s2 + $0x18] sm:$0xff]
    %v84 = vld [vmem:[%s2 + $0x20] sm:$0xff]
    %v85 = vld [vmem:[%s2 + $0x28] sm:$0xff]
    %v86 = vld [vmem:[%s2 + $0x30] sm:$0xff]
    %v87 = vld [vmem:[%s2 + $0x38] sm:$0xff]
    %v88 = vld [vmem:[%s2 + $0x40] sm:$0xff]
    %v89 = vld [vmem:[%s2 + $0x48] sm:$0xff]
    %v90 = vld [vmem:[%s2 + $0x50] sm:$0xff]
    %v91 = vld [vmem:[%s2 + $0x58] sm:$0xff]
    %v92 = vld [vmem:[%s2 + $0x60] sm:$0xff]
    %v93 = vld [vmem:[%s2 + $0x68] sm:$0xff]
    %v94 = vld [vmem:[%s2 + $0x70] sm:$0xff]
    %v95 = vld [vmem:[%s2 + $0x78] sm:$0xff]
    %v96 = vld [vmem:[%s3] sm:$0x3]
    %v98 = vperm.slane %v96, 0
    %v99 = vperm.slane %v96, 1
    %v134 = vunpack.c.l.b16 %v48
    %v135 = vunpack.c.l.b16 %v49
    %v136 = vunpack.c.l.b16 %v50
    %v137 = vunpack.c.l.b16 %v51
    %v138 = vunpack.c.l.b16 %v52
    %v139 = vunpack.c.l.b16 %v53
    %v140 = vunpack.c.l.b16 %v54
    %v141 = vunpack.c.l.b16 %v55
    %v142 = vunpack.c.l.b16 %v56
    %v143 = vunpack.c.l.b16 %v57
    %v144 = vunpack.c.l.b16 %v58
    %v145 = vunpack.c.l.b16 %v59
    %v146 = vunpack.c.l.b16 %v60
    %v147 = vunpack.c.l.b16 %v61
    %v148 = vunpack.c.l.b16 %v62
    %v149 = vunpack.c.l.b16 %v63
    %v150 = vunpack.c.l.b16 %v64
    %v151 = vunpack.c.l.b16 %v65
    %v152 = vunpack.c.l.b16 %v66
    %v153 = vunpack.c.l.b16 %v67
    %v154 = vunpack.c.l.b16 %v68
    %v155 = vunpack.c.l.b16 %v69
    %v156 = vunpack.c.l.b16 %v70
    %v157 = vunpack.c.l.b16 %v71
    %v158 = vunpack.c.l.b16 %v72
    %v159 = vunpack.c.l.b16 %v73
    %v160 = vunpack.c.l.b16 %v74
    %v161 = vunpack.c.l.b16 %v75
    %v162 = vunpack.c.l.b16 %v76
    %v163 = vunpack.c.l.b16 %v77
    %v164 = vunpack.c.l.b16 %v78
    %v165 = vunpack.c.l.b16 %v79
    %v166 = vpack.c.b16 %v135, %v134
    %v167 = vpack.c.b16 %v137, %v136
    %v168 = vpack.c.b16 %v139, %v138
    %v169 = vpack.c.b16 %v141, %v140
    %v170 = vpack.c.b16 %v143, %v142
    %v171 = vpack.c.b16 %v145, %v144
    %v172 = vpack.c.b16 %v147, %v146
    %v173 = vpack.c.b16 %v149, %v148
    %v174 = vpack.c.b16 %v151, %v150
    %v175 = vpack.c.b16 %v153, %v152
    %v176 = vpack.c.b16 %v155, %v154
    %v177 = vpack.c.b16 %v157, %v156
    %v178 = vpack.c.b16 %v159, %v158
    %v179 = vpack.c.b16 %v161, %v160
    %v180 = vpack.c.b16 %v163, %v162
    %v181 = vpack.c.b16 %v165, %v164
    %v214 = vunpack.c.l.b16 %v80
    %v215 = vunpack.c.h.b16 %v80
    %v216 = vunpack.c.l.b16 %v81
    %v217 = vunpack.c.h.b16 %v81
    %v218 = vunpack.c.l.b16 %v82
    %v219 = vunpack.c.h.b16 %v82
    %v220 = vunpack.c.l.b16 %v83
    %v221 = vunpack.c.h.b16 %v83
    %v222 = vunpack.c.l.b16 %v84
    %v223 = vunpack.c.h.b16 %v84
    %v224 = vunpack.c.l.b16 %v85
    %v225 = vunpack.c.h.b16 %v85
    %v226 = vunpack.c.l.b16 %v86
    %v227 = vunpack.c.h.b16 %v86
    %v228 = vunpack.c.l.b16 %v87
    %v229 = vunpack.c.h.b16 %v87
    %v230 = vunpack.c.l.b16 %v88
    %v231 = vunpack.c.h.b16 %v88
    %v232 = vunpack.c.l.b16 %v89
    %v233 = vunpack.c.h.b16 %v89
    %v234 = vunpack.c.l.b16 %v90
    %v235 = vunpack.c.h.b16 %v90
    %v236 = vunpack.c.l.b16 %v91
    %v237 = vunpack.c.h.b16 %v91
    %v238 = vunpack.c.l.b16 %v92
    %v239 = vunpack.c.h.b16 %v92
    %v240 = vunpack.c.l.b16 %v93
    %v241 = vunpack.c.h.b16 %v93
    %v242 = vunpack.c.l.b16 %v94
    %v243 = vunpack.c.h.b16 %v94
    %v244 = vunpack.c.l.b16 %v95
    %v245 = vunpack.c.h.b16 %v95
    %v246 = vpack.c.b16 %v216, %v214
    %v247 = vpack.c.b16 %v217, %v215
    %v248 = vpack.c.b16 %v220, %v218
    %v249 = vpack.c.b16 %v221, %v219
    %v250 = vpack.c.b16 %v224, %v222
    %v251 = vpack.c.b16 %v225, %v223
    %v252 = vpack.c.b16 %v228, %v226
    %v253 = vpack.c.b16 %v229, %v227
    %v254 = vpack.c.b16 %v232, %v230
    %v255 = vpack.c.b16 %v233, %v231
    %v256 = vpack.c.b16 %v236, %v234
    %v257 = vpack.c.b16 %v237, %v235
    %v258 = vpack.c.b16 %v240, %v238
    %v259 = vpack.c.b16 %v241, %v239
    %v260 = vpack.c.b16 %v244, %v242
    %v261 = vpack.c.b16 %v245, %v243
    %278 = vmatpush.bf16.msra.mxu0 %v260
    %279 = vmatpush.bf16.msra.mxu0 %v258
    %280 = vmatpush.bf16.msra.mxu0 %v256
    %281 = vmatpush.bf16.msra.mxu0 %v254
    %282 = vmatpush.bf16.msra.mxu0 %v252
    %283 = vmatpush.bf16.msra.mxu0 %v250
    %284 = vmatpush.bf16.msra.mxu0 %v248
    %285 = vmatpush.bf16.msra.mxu0 %v246
    %286 = vmatmul.bf16.gmra.mxu0 %v166
    %v287 = vpop.f32.mrf.mxu0
    %v288 = vadd.f32 %v98, %v287
    %v289 = vpop.f32.mrf.mxu0
    %v290 = vadd.f32 %v98, %v289
    %291 = vmatmul.bf16.gmra.mxu0 %v167
    %v292 = vpop.f32.mrf.mxu0
    %v293 = vadd.f32 %v98, %v292
    %v294 = vpop.f32.mrf.mxu0
    %v295 = vadd.f32 %v98, %v294
    %296 = vmatmul.bf16.gmra.mxu0 %v168
    %v297 = vpop.f32.mrf.mxu0
    %v298 = vadd.f32 %v98, %v297
    %v299 = vpop.f32.mrf.mxu0
    %v300 = vadd.f32 %v98, %v299
    %301 = vmatmul.bf16.gmra.mxu0 %v169
    %v302 = vpop.f32.mrf.mxu0
    %v303 = vadd.f32 %v98, %v302
    %v304 = vpop.f32.mrf.mxu0
    %v305 = vadd.f32 %v98, %v304
    %306 = vmatmul.bf16.gmra.mxu0 %v170
    %v307 = vpop.f32.mrf.mxu0
    %v308 = vadd.f32 %v98, %v307
    %v309 = vpop.f32.mrf.mxu0
    %v310 = vadd.f32 %v98, %v309
    %311 = vmatmul.bf16.gmra.mxu0 %v171
    %v312 = vpop.f32.mrf.mxu0
    %v313 = vadd.f32 %v98, %v312
    %v314 = vpop.f32.mrf.mxu0
    %v315 = vadd.f32 %v98, %v314
    %316 = vmatmul.bf16.gmra.mxu0 %v172
    %v317 = vpop.f32.mrf.mxu0
    %v318 = vadd.f32 %v98, %v317
    %v319 = vpop.f32.mrf.mxu0
    %v320 = vadd.f32 %v98, %v319
    %321 = vmatmul.bf16.gmra.mxu0 %v173
    %v322 = vpop.f32.mrf.mxu0
    %v323 = vadd.f32 %v98, %v322
    %v324 = vpop.f32.mrf.mxu0
    %v325 = vadd.f32 %v98, %v324
    %326 = vmatmul.bf16.gmra.mxu0 %v174
    %v327 = vpop.f32.mrf.mxu0
    %v328 = vadd.f32 %v98, %v327
    %v329 = vpop.f32.mrf.mxu0
    %v330 = vadd.f32 %v98, %v329
    %331 = vmatmul.bf16.gmra.mxu0 %v175
    %v332 = vpop.f32.mrf.mxu0
    %v333 = vadd.f32 %v98, %v332
    %v334 = vpop.f32.mrf.mxu0
    %v335 = vadd.f32 %v98, %v334
    %336 = vmatmul.bf16.gmra.mxu0 %v176
    %v337 = vpop.f32.mrf.mxu0
    %v338 = vadd.f32 %v98, %v337
    %v339 = vpop.f32.mrf.mxu0
    %v340 = vadd.f32 %v98, %v339
    %341 = vmatmul.bf16.gmra.mxu0 %v177
    %v342 = vpop.f32.mrf.mxu0
    %v343 = vadd.f32 %v98, %v342
    %v344 = vpop.f32.mrf.mxu0
    %v345 = vadd.f32 %v98, %v344
    %346 = vmatmul.bf16.gmra.mxu0 %v178
    %v347 = vpop.f32.mrf.mxu0
    %v348 = vadd.f32 %v98, %v347
    %v349 = vpop.f32.mrf.mxu0
    %v350 = vadd.f32 %v98, %v349
    %351 = vmatmul.bf16.gmra.mxu0 %v179
    %v352 = vpop.f32.mrf.mxu0
    %v353 = vadd.f32 %v98, %v352
    %v354 = vpop.f32.mrf.mxu0
    %v355 = vadd.f32 %v98, %v354
    %356 = vmatmul.bf16.gmra.mxu0 %v180
    %v357 = vpop.f32.mrf.mxu0
    %v358 = vadd.f32 %v98, %v357
    %v359 = vpop.f32.mrf.mxu0
    %v360 = vadd.f32 %v98, %v359
    %361 = vmatmul.bf16.gmra.mxu0 %v181
    %v362 = vpop.f32.mrf.mxu0
    %v363 = vadd.f32 %v98, %v362
    %v364 = vpop.f32.mrf.mxu0
    %v365 = vadd.f32 %v98, %v364
    %366 = vdwg.mxu0
    %367 = vmatpush.bf16.msra.mxu0 %v261
    %368 = vmatpush.bf16.msra.mxu0 %v259
    %369 = vmatpush.bf16.msra.mxu0 %v257
    %370 = vmatpush.bf16.msra.mxu0 %v255
    %371 = vmatpush.bf16.msra.mxu0 %v253
    %372 = vmatpush.bf16.msra.mxu0 %v251
    %373 = vmatpush.bf16.msra.mxu0 %v249
    %374 = vmatpush.bf16.msra.mxu0 %v247
    %375 = vmatmul.bf16.gmra.mxu0 %v166
    %v376 = vpop.f32.mrf.mxu0
    %v377 = vadd.f32 %v99, %v376
    %v378 = vpop.f32.mrf.mxu0
    %v379 = vadd.f32 %v99, %v378
    %380 = vmatmul.bf16.gmra.mxu0 %v167
    %v381 = vpop.f32.mrf.mxu0
    %v382 = vadd.f32 %v99, %v381
    %v383 = vpop.f32.mrf.mxu0
    %v384 = vadd.f32 %v99, %v383
    %385 = vmatmul.bf16.gmra.mxu0 %v168
    %v386 = vpop.f32.mrf.mxu0
    %v387 = vadd.f32 %v99, %v386
    %v388 = vpop.f32.mrf.mxu0
    %v389 = vadd.f32 %v99, %v388
    %390 = vmatmul.bf16.gmra.mxu0 %v169
    %v391 = vpop.f32.mrf.mxu0
    %v392 = vadd.f32 %v99, %v391
    %v393 = vpop.f32.mrf.mxu0
    %v394 = vadd.f32 %v99, %v393
    %395 = vmatmul.bf16.gmra.mxu0 %v170
    %v396 = vpop.f32.mrf.mxu0
    %v397 = vadd.f32 %v99, %v396
    %v398 = vpop.f32.mrf.mxu0
    %v399 = vadd.f32 %v99, %v398
    %400 = vmatmul.bf16.gmra.mxu0 %v171
    %v401 = vpop.f32.mrf.mxu0
    %v402 = vadd.f32 %v99, %v401
    %v403 = vpop.f32.mrf.mxu0
    %v404 = vadd.f32 %v99, %v403
    %405 = vmatmul.bf16.gmra.mxu0 %v172
    %v406 = vpop.f32.mrf.mxu0
    %v407 = vadd.f32 %v99, %v406
    %v408 = vpop.f32.mrf.mxu0
    %v409 = vadd.f32 %v99, %v408
    %410 = vmatmul.bf16.gmra.mxu0 %v173
    %v411 = vpop.f32.mrf.mxu0
    %v412 = vadd.f32 %v99, %v411
    %v413 = vpop.f32.mrf.mxu0
    %v414 = vadd.f32 %v99, %v413
    %415 = vmatmul.bf16.gmra.mxu0 %v174
    %v416 = vpop.f32.mrf.mxu0
    %v417 = vadd.f32 %v99, %v416
    %v418 = vpop.f32.mrf.mxu0
    %v419 = vadd.f32 %v99, %v418
    %420 = vmatmul.bf16.gmra.mxu0 %v175
    %v421 = vpop.f32.mrf.mxu0
    %v422 = vadd.f32 %v99, %v421
    %v423 = vpop.f32.mrf.mxu0
    %v424 = vadd.f32 %v99, %v423
    %425 = vmatmul.bf16.gmra.mxu0 %v176
    %v426 = vpop.f32.mrf.mxu0
    %v427 = vadd.f32 %v99, %v426
    %v428 = vpop.f32.mrf.mxu0
    %v429 = vadd.f32 %v99, %v428
    %430 = vmatmul.bf16.gmra.mxu0 %v177
    %v431 = vpop.f32.mrf.mxu0
    %v432 = vadd.f32 %v99, %v431
    %v433 = vpop.f32.mrf.mxu0
    %v434 = vadd.f32 %v99, %v433
    %435 = vmatmul.bf16.gmra.mxu0 %v178
    %v436 = vpop.f32.mrf.mxu0
    %v437 = vadd.f32 %v99, %v436
    %v438 = vpop.f32.mrf.mxu0
    %v439 = vadd.f32 %v99, %v438
    %440 = vmatmul.bf16.gmra.mxu0 %v179
    %v441 = vpop.f32.mrf.mxu0
    %v442 = vadd.f32 %v99, %v441
    %v443 = vpop.f32.mrf.mxu0
    %v444 = vadd.f32 %v99, %v443
    %445 = vmatmul.bf16.gmra.mxu0 %v180
    %v446 = vpop.f32.mrf.mxu0
    %v447 = vadd.f32 %v99, %v446
    %v448 = vpop.f32.mrf.mxu0
    %v449 = vadd.f32 %v99, %v448
    %450 = vmatmul.bf16.gmra.mxu0 %v181
    %v451 = vpop.f32.mrf.mxu0
    %v452 = vadd.f32 %v99, %v451
    %v453 = vpop.f32.mrf.mxu0
    %v454 = vadd.f32 %v99, %v453
    %455 = vdwg.mxu0
    %v456 = vmax.f32 %v288, 0.0
    %v457 = vmax.f32 %v377, 0.0
    %v458 = vmax.f32 %v290, 0.0
    %v459 = vmax.f32 %v379, 0.0
    %v460 = vmax.f32 %v293, 0.0
    %v461 = vmax.f32 %v382, 0.0
    %v462 = vmax.f32 %v295, 0.0
    %v463 = vmax.f32 %v384, 0.0
    %v464 = vmax.f32 %v298, 0.0
    %v465 = vmax.f32 %v387, 0.0
    %v466 = vmax.f32 %v300, 0.0
    %v467 = vmax.f32 %v389, 0.0
    %v468 = vmax.f32 %v303, 0.0
    %v469 = vmax.f32 %v392, 0.0
    %v470 = vmax.f32 %v305, 0.0
    %v471 = vmax.f32 %v394, 0.0
    %v472 = vmax.f32 %v308, 0.0
    %v473 = vmax.f32 %v397, 0.0
    %v474 = vmax.f32 %v310, 0.0
    %v475 = vmax.f32 %v399, 0.0
    %v476 = vmax.f32 %v313, 0.0
    %v477 = vmax.f32 %v402, 0.0
    %v478 = vmax.f32 %v315, 0.0
    %v479 = vmax.f32 %v404, 0.0
    %v480 = vmax.f32 %v318, 0.0
    %v481 = vmax.f32 %v407, 0.0
    %v482 = vmax.f32 %v320, 0.0
    %v483 = vmax.f32 %v409, 0.0
    %v484 = vmax.f32 %v323, 0.0
    %v485 = vmax.f32 %v412, 0.0
    %v486 = vmax.f32 %v325, 0.0
    %v487 = vmax.f32 %v414, 0.0
    %v488 = vmax.f32 %v328, 0.0
    %v489 = vmax.f32 %v417, 0.0
    %v490 = vmax.f32 %v330, 0.0
    %v491 = vmax.f32 %v419, 0.0
    %v492 = vmax.f32 %v333, 0.0
    %v493 = vmax.f32 %v422, 0.0
    %v494 = vmax.f32 %v335, 0.0
    %v495 = vmax.f32 %v424, 0.0
    %v496 = vmax.f32 %v338, 0.0
    %v497 = vmax.f32 %v427, 0.0
    %v498 = vmax.f32 %v340, 0.0
    %v499 = vmax.f32 %v429, 0.0
    %v500 = vmax.f32 %v343, 0.0
    %v501 = vmax.f32 %v432, 0.0
    %v502 = vmax.f32 %v345, 0.0
    %v503 = vmax.f32 %v434, 0.0
    %v504 = vmax.f32 %v348, 0.0
    %v505 = vmax.f32 %v437, 0.0
    %v506 = vmax.f32 %v350, 0.0
    %v507 = vmax.f32 %v439, 0.0
    %v508 = vmax.f32 %v353, 0.0
    %v509 = vmax.f32 %v442, 0.0
    %v510 = vmax.f32 %v355, 0.0
    %v511 = vmax.f32 %v444, 0.0
    %v512 = vmax.f32 %v358, 0.0
    %v513 = vmax.f32 %v447, 0.0
    %v514 = vmax.f32 %v360, 0.0
    %v515 = vmax.f32 %v449, 0.0
    %v516 = vmax.f32 %v363, 0.0
    %v517 = vmax.f32 %v452, 0.0
    %v518 = vmax.f32 %v365, 0.0
    %v519 = vmax.f32 %v454, 0.0
    %v520 = vpack.c.bf16 %v458, %v456
    %v521 = vpack.c.bf16 %v459, %v457
    %v522 = vpack.c.bf16 %v462, %v460
    %v523 = vpack.c.bf16 %v463, %v461
    %v524 = vpack.c.bf16 %v466, %v464
    %v525 = vpack.c.bf16 %v467, %v465
    %v526 = vpack.c.bf16 %v470, %v468
    %v527 = vpack.c.bf16 %v471, %v469
    %v528 = vpack.c.bf16 %v474, %v472
    %v529 = vpack.c.bf16 %v475, %v473
    %v530 = vpack.c.bf16 %v478, %v476
    %v531 = vpack.c.bf16 %v479, %v477
    %v532 = vpack.c.bf16 %v482, %v480
    %v533 = vpack.c.bf16 %v483, %v481
    %v534 = vpack.c.bf16 %v486, %v484
    %v535 = vpack.c.bf16 %v487, %v485
    %v536 = vpack.c.bf16 %v490, %v488
    %v537 = vpack.c.bf16 %v491, %v489
    %v538 = vpack.c.bf16 %v494, %v492
    %v539 = vpack.c.bf16 %v495, %v493
    %v540 = vpack.c.bf16 %v498, %v496
    %v541 = vpack.c.bf16 %v499, %v497
    %v542 = vpack.c.bf16 %v502, %v500
    %v543 = vpack.c.bf16 %v503, %v501
    %v544 = vpack.c.bf16 %v506, %v504
    %v545 = vpack.c.bf16 %v507, %v505
    %v546 = vpack.c.bf16 %v510, %v508
    %v547 = vpack.c.bf16 %v511, %v509
    %v548 = vpack.c.bf16 %v514, %v512
    %v549 = vpack.c.bf16 %v515, %v513
    %v550 = vpack.c.bf16 %v518, %v516
    %v551 = vpack.c.bf16 %v519, %v517
    %v552 = vld [vmem:[%s4] sm:$0xf]
    %v553 = vld [vmem:[%s4 + $0x4] sm:$0xf]
    %v554 = vld [vmem:[%s4 + $0x8] sm:$0xf]
    %v555 = vld [vmem:[%s4 + $0xc] sm:$0xf]
    %v556 = vld [vmem:[%s4 + $0x10] sm:$0xf]
    %v557 = vld [vmem:[%s4 + $0x14] sm:$0xf]
    %v558 = vld [vmem:[%s4 + $0x18] sm:$0xf]
    %v559 = vld [vmem:[%s4 + $0x1c] sm:$0xf]
    %v560 = vld [vmem:[%s4 + $0x20] sm:$0xf]
    %v561 = vld [vmem:[%s4 + $0x24] sm:$0xf]
    %v562 = vld [vmem:[%s4 + $0x28] sm:$0xf]
    %v563 = vld [vmem:[%s4 + $0x2c] sm:$0xf]
    %v564 = vld [vmem:[%s4 + $0x30] sm:$0xf]
    %v565 = vld [vmem:[%s4 + $0x34] sm:$0xf]
    %v566 = vld [vmem:[%s4 + $0x38] sm:$0xf]
    %v567 = vld [vmem:[%s4 + $0x3c] sm:$0xf]
    %v568 = vld [vmem:[%s4 + $0x40] sm:$0xf]
    %v569 = vld [vmem:[%s4 + $0x44] sm:$0xf]
    %v570 = vld [vmem:[%s4 + $0x48] sm:$0xf]
    %v571 = vld [vmem:[%s4 + $0x4c] sm:$0xf]
    %v572 = vld [vmem:[%s4 + $0x50] sm:$0xf]
    %v573 = vld [vmem:[%s4 + $0x54] sm:$0xf]
    %v574 = vld [vmem:[%s4 + $0x58] sm:$0xf]
    %v575 = vld [vmem:[%s4 + $0x5c] sm:$0xf]
    %v576 = vld [vmem:[%s4 + $0x60] sm:$0xf]
    %v577 = vld [vmem:[%s4 + $0x64] sm:$0xf]
    %v578 = vld [vmem:[%s4 + $0x68] sm:$0xf]
    %v579 = vld [vmem:[%s4 + $0x6c] sm:$0xf]
    %v580 = vld [vmem:[%s4 + $0x70] sm:$0xf]
    %v581 = vld [vmem:[%s4 + $0x74] sm:$0xf]
    %v582 = vld [vmem:[%s4 + $0x78] sm:$0xf]
    %v583 = vld [vmem:[%s4 + $0x7c] sm:$0xf]
    %v584 = vld [vmem:[%s5] sm:$0x1]
    %v586 = vperm.slane %v584, 0
    %v620 = vunpack.c.l.b16 %v552
    %v621 = vunpack.c.l.b16 %v553
    %v622 = vunpack.c.l.b16 %v554
    %v623 = vunpack.c.l.b16 %v555
    %v624 = vunpack.c.l.b16 %v556
    %v625 = vunpack.c.l.b16 %v557
    %v626 = vunpack.c.l.b16 %v558
    %v627 = vunpack.c.l.b16 %v559
    %v628 = vunpack.c.l.b16 %v560
    %v629 = vunpack.c.l.b16 %v561
    %v630 = vunpack.c.l.b16 %v562
    %v631 = vunpack.c.l.b16 %v563
    %v632 = vunpack.c.l.b16 %v564
    %v633 = vunpack.c.l.b16 %v565
    %v634 = vunpack.c.l.b16 %v566
    %v635 = vunpack.c.l.b16 %v567
    %v636 = vunpack.c.l.b16 %v568
    %v637 = vunpack.c.l.b16 %v569
    %v638 = vunpack.c.l.b16 %v570
    %v639 = vunpack.c.l.b16 %v571
    %v640 = vunpack.c.l.b16 %v572
    %v641 = vunpack.c.l.b16 %v573
    %v642 = vunpack.c.l.b16 %v574
    %v643 = vunpack.c.l.b16 %v575
    %v644 = vunpack.c.l.b16 %v576
    %v645 = vunpack.c.l.b16 %v577
    %v646 = vunpack.c.l.b16 %v578
    %v647 = vunpack.c.l.b16 %v579
    %v648 = vunpack.c.l.b16 %v580
    %v649 = vunpack.c.l.b16 %v581
    %v650 = vunpack.c.l.b16 %v582
    %v651 = vunpack.c.l.b16 %v583
    %v652 = vpack.c.b16 %v621, %v620
    %v653 = vpack.c.b16 %v623, %v622
    %v654 = vpack.c.b16 %v625, %v624
    %v655 = vpack.c.b16 %v627, %v626
    %v656 = vpack.c.b16 %v629, %v628
    %v657 = vpack.c.b16 %v631, %v630
    %v658 = vpack.c.b16 %v633, %v632
    %v659 = vpack.c.b16 %v635, %v634
    %v660 = vpack.c.b16 %v637, %v636
    %v661 = vpack.c.b16 %v639, %v638
    %v662 = vpack.c.b16 %v641, %v640
    %v663 = vpack.c.b16 %v643, %v642
    %v664 = vpack.c.b16 %v645, %v644
    %v665 = vpack.c.b16 %v647, %v646
    %v666 = vpack.c.b16 %v649, %v648
    %v667 = vpack.c.b16 %v651, %v650
    %684 = vmatpush.bf16.msra.mxu0 %v659
    %685 = vmatpush.bf16.msra.mxu0 %v658
    %686 = vmatpush.bf16.msra.mxu0 %v657
    %687 = vmatpush.bf16.msra.mxu0 %v656
    %688 = vmatpush.bf16.msra.mxu0 %v655
    %689 = vmatpush.bf16.msra.mxu0 %v654
    %690 = vmatpush.bf16.msra.mxu0 %v653
    %691 = vmatpush.bf16.msra.mxu0 %v652
    %692 = vmatmul.bf16.gmra.mxu0 %v520
    %v693 = vpop.f32.mrf.mxu0
    %v694 = vadd.f32 %v586, %v693
    %v695 = vpop.f32.mrf.mxu0
    %v696 = vadd.f32 %v586, %v695
    %697 = vmatmul.bf16.gmra.mxu0 %v522
    %v698 = vpop.f32.mrf.mxu0
    %v699 = vadd.f32 %v586, %v698
    %v700 = vpop.f32.mrf.mxu0
    %v701 = vadd.f32 %v586, %v700
    %702 = vmatmul.bf16.gmra.mxu0 %v524
    %v703 = vpop.f32.mrf.mxu0
    %v704 = vadd.f32 %v586, %v703
    %v705 = vpop.f32.mrf.mxu0
    %v706 = vadd.f32 %v586, %v705
    %707 = vmatmul.bf16.gmra.mxu0 %v526
    %v708 = vpop.f32.mrf.mxu0
    %v709 = vadd.f32 %v586, %v708
    %v710 = vpop.f32.mrf.mxu0
    %v711 = vadd.f32 %v586, %v710
    %712 = vmatmul.bf16.gmra.mxu0 %v528
    %v713 = vpop.f32.mrf.mxu0
    %v714 = vadd.f32 %v586, %v713
    %v715 = vpop.f32.mrf.mxu0
    %v716 = vadd.f32 %v586, %v715
    %717 = vmatmul.bf16.gmra.mxu0 %v530
    %v718 = vpop.f32.mrf.mxu0
    %v719 = vadd.f32 %v586, %v718
    %v720 = vpop.f32.mrf.mxu0
    %v721 = vadd.f32 %v586, %v720
    %722 = vmatmul.bf16.gmra.mxu0 %v532
    %v723 = vpop.f32.mrf.mxu0
    %v724 = vadd.f32 %v586, %v723
    %v725 = vpop.f32.mrf.mxu0
    %v726 = vadd.f32 %v586, %v725
    %727 = vmatmul.bf16.gmra.mxu0 %v534
    %v728 = vpop.f32.mrf.mxu0
    %v729 = vadd.f32 %v586, %v728
    %v730 = vpop.f32.mrf.mxu0
    %v731 = vadd.f32 %v586, %v730
    %732 = vmatmul.bf16.gmra.mxu0 %v536
    %v733 = vpop.f32.mrf.mxu0
    %v734 = vadd.f32 %v586, %v733
    %v735 = vpop.f32.mrf.mxu0
    %v736 = vadd.f32 %v586, %v735
    %737 = vmatmul.bf16.gmra.mxu0 %v538
    %v738 = vpop.f32.mrf.mxu0
    %v739 = vadd.f32 %v586, %v738
    %v740 = vpop.f32.mrf.mxu0
    %v741 = vadd.f32 %v586, %v740
    %742 = vmatmul.bf16.gmra.mxu0 %v540
    %v743 = vpop.f32.mrf.mxu0
    %v744 = vadd.f32 %v586, %v743
    %v745 = vpop.f32.mrf.mxu0
    %v746 = vadd.f32 %v586, %v745
    %747 = vmatmul.bf16.gmra.mxu0 %v542
    %v748 = vpop.f32.mrf.mxu0
    %v749 = vadd.f32 %v586, %v748
    %v750 = vpop.f32.mrf.mxu0
    %v751 = vadd.f32 %v586, %v750
    %752 = vmatmul.bf16.gmra.mxu0 %v544
    %v753 = vpop.f32.mrf.mxu0
    %v754 = vadd.f32 %v586, %v753
    %v755 = vpop.f32.mrf.mxu0
    %v756 = vadd.f32 %v586, %v755
    %757 = vmatmul.bf16.gmra.mxu0 %v546
    %v758 = vpop.f32.mrf.mxu0
    %v759 = vadd.f32 %v586, %v758
    %v760 = vpop.f32.mrf.mxu0
    %v761 = vadd.f32 %v586, %v760
    %762 = vmatmul.bf16.gmra.mxu0 %v548
    %v763 = vpop.f32.mrf.mxu0
    %v764 = vadd.f32 %v586, %v763
    %v765 = vpop.f32.mrf.mxu0
    %v766 = vadd.f32 %v586, %v765
    %767 = vmatmul.bf16.gmra.mxu0 %v550
    %v768 = vpop.f32.mrf.mxu0
    %v769 = vadd.f32 %v586, %v768
    %v770 = vpop.f32.mrf.mxu0
    %v771 = vadd.f32 %v586, %v770
    %772 = vdwg.mxu0
    %773 = vmatpush.bf16.msra.mxu0 %v667
    %774 = vmatpush.bf16.msra.mxu0 %v666
    %775 = vmatpush.bf16.msra.mxu0 %v665
    %776 = vmatpush.bf16.msra.mxu0 %v664
    %777 = vmatpush.bf16.msra.mxu0 %v663
    %778 = vmatpush.bf16.msra.mxu0 %v662
    %779 = vmatpush.bf16.msra.mxu0 %v661
    %780 = vmatpush.bf16.msra.mxu0 %v660
    %781 = vmatmul.bf16.gmra.mxu0 %v521
    %v782 = vpop.f32.mrf.mxu0
    %v783 = vadd.f32 %v694, %v782
    %v784 = vpop.f32.mrf.mxu0
    %v785 = vadd.f32 %v696, %v784
    %786 = vmatmul.bf16.gmra.mxu0 %v523
    %v787 = vpop.f32.mrf.mxu0
    %v788 = vadd.f32 %v699, %v787
    %v789 = vpop.f32.mrf.mxu0
    %v790 = vadd.f32 %v701, %v789
    %791 = vmatmul.bf16.gmra.mxu0 %v525
    %v792 = vpop.f32.mrf.mxu0
    %v793 = vadd.f32 %v704, %v792
    %v794 = vpop.f32.mrf.mxu0
    %v795 = vadd.f32 %v706, %v794
    %796 = vmatmul.bf16.gmra.mxu0 %v527
    %v797 = vpop.f32.mrf.mxu0
    %v798 = vadd.f32 %v709, %v797
    %v799 = vpop.f32.mrf.mxu0
    %v800 = vadd.f32 %v711, %v799
    %801 = vmatmul.bf16.gmra.mxu0 %v529
    %v802 = vpop.f32.mrf.mxu0
    %v803 = vadd.f32 %v714, %v802
    %v804 = vpop.f32.mrf.mxu0
    %v805 = vadd.f32 %v716, %v804
    %806 = vmatmul.bf16.gmra.mxu0 %v531
    %v807 = vpop.f32.mrf.mxu0
    %v808 = vadd.f32 %v719, %v807
    %v809 = vpop.f32.mrf.mxu0
    %v810 = vadd.f32 %v721, %v809
    %811 = vmatmul.bf16.gmra.mxu0 %v533
    %v812 = vpop.f32.mrf.mxu0
    %v813 = vadd.f32 %v724, %v812
    %v814 = vpop.f32.mrf.mxu0
    %v815 = vadd.f32 %v726, %v814
    %816 = vmatmul.bf16.gmra.mxu0 %v535
    %v817 = vpop.f32.mrf.mxu0
    %v818 = vadd.f32 %v729, %v817
    %v819 = vpop.f32.mrf.mxu0
    %v820 = vadd.f32 %v731, %v819
    %821 = vmatmul.bf16.gmra.mxu0 %v537
    %v822 = vpop.f32.mrf.mxu0
    %v823 = vadd.f32 %v734, %v822
    %v824 = vpop.f32.mrf.mxu0
    %v825 = vadd.f32 %v736, %v824
    %826 = vmatmul.bf16.gmra.mxu0 %v539
    %v827 = vpop.f32.mrf.mxu0
    %v828 = vadd.f32 %v739, %v827
    %v829 = vpop.f32.mrf.mxu0
    %v830 = vadd.f32 %v741, %v829
    %831 = vmatmul.bf16.gmra.mxu0 %v541
    %v832 = vpop.f32.mrf.mxu0
    %v833 = vadd.f32 %v744, %v832
    %v834 = vpop.f32.mrf.mxu0
    %v835 = vadd.f32 %v746, %v834
    %836 = vmatmul.bf16.gmra.mxu0 %v543
    %v837 = vpop.f32.mrf.mxu0
    %v838 = vadd.f32 %v749, %v837
    %v839 = vpop.f32.mrf.mxu0
    %v840 = vadd.f32 %v751, %v839
    %841 = vmatmul.bf16.gmra.mxu0 %v545
    %v842 = vpop.f32.mrf.mxu0
    %v843 = vadd.f32 %v754, %v842
    %v844 = vpop.f32.mrf.mxu0
    %v845 = vadd.f32 %v756, %v844
    %846 = vmatmul.bf16.gmra.mxu0 %v547
    %v847 = vpop.f32.mrf.mxu0
    %v848 = vadd.f32 %v759, %v847
    %v849 = vpop.f32.mrf.mxu0
    %v850 = vadd.f32 %v761, %v849
    %851 = vmatmul.bf16.gmra.mxu0 %v549
    %v852 = vpop.f32.mrf.mxu0
    %v853 = vadd.f32 %v764, %v852
    %v854 = vpop.f32.mrf.mxu0
    %v855 = vadd.f32 %v766, %v854
    %856 = vmatmul.bf16.gmra.mxu0 %v551
    %v857 = vpop.f32.mrf.mxu0
    %v858 = vadd.f32 %v769, %v857
    %v859 = vpop.f32.mrf.mxu0
    %v860 = vadd.f32 %v771, %v859
    %861 = vdwg.mxu0
    %v862 = vunpack.c.l.bf16 %v48
    %v863 = vunpack.c.l.bf16 %v49
    %v864 = vunpack.c.l.bf16 %v50
    %v865 = vunpack.c.l.bf16 %v51
    %v866 = vunpack.c.l.bf16 %v52
    %v867 = vunpack.c.l.bf16 %v53
    %v868 = vunpack.c.l.bf16 %v54
    %v869 = vunpack.c.l.bf16 %v55
    %v870 = vunpack.c.l.bf16 %v56
    %v871 = vunpack.c.l.bf16 %v57
    %v872 = vunpack.c.l.bf16 %v58
    %v873 = vunpack.c.l.bf16 %v59
    %v874 = vunpack.c.l.bf16 %v60
    %v875 = vunpack.c.l.bf16 %v61
    %v876 = vunpack.c.l.bf16 %v62
    %v877 = vunpack.c.l.bf16 %v63
    %v878 = vunpack.c.l.bf16 %v64
    %v879 = vunpack.c.l.bf16 %v65
    %v880 = vunpack.c.l.bf16 %v66
    %v881 = vunpack.c.l.bf16 %v67
    %v882 = vunpack.c.l.bf16 %v68
    %v883 = vunpack.c.l.bf16 %v69
    %v884 = vunpack.c.l.bf16 %v70
    %v885 = vunpack.c.l.bf16 %v71
    %v886 = vunpack.c.l.bf16 %v72
    %v887 = vunpack.c.l.bf16 %v73
    %v888 = vunpack.c.l.bf16 %v74
    %v889 = vunpack.c.l.bf16 %v75
    %v890 = vunpack.c.l.bf16 %v76
    %v891 = vunpack.c.l.bf16 %v77
    %v892 = vunpack.c.l.bf16 %v78
    %v893 = vunpack.c.l.bf16 %v79
    %v894 = vadd.f32 %v862, %v783
    %v895 = vadd.f32 %v863, %v785
    %v896 = vadd.f32 %v864, %v788
    %v897 = vadd.f32 %v865, %v790
    %v898 = vadd.f32 %v866, %v793
    %v899 = vadd.f32 %v867, %v795
    %v900 = vadd.f32 %v868, %v798
    %v901 = vadd.f32 %v869, %v800
    %v902 = vadd.f32 %v870, %v803
    %v903 = vadd.f32 %v871, %v805
    %v904 = vadd.f32 %v872, %v808
    %v905 = vadd.f32 %v873, %v810
    %v906 = vadd.f32 %v874, %v813
    %v907 = vadd.f32 %v875, %v815
    %v908 = vadd.f32 %v876, %v818
    %v909 = vadd.f32 %v877, %v820
    %v910 = vadd.f32 %v878, %v823
    %v911 = vadd.f32 %v879, %v825
    %v912 = vadd.f32 %v880, %v828
    %v913 = vadd.f32 %v881, %v830
    %v914 = vadd.f32 %v882, %v833
    %v915 = vadd.f32 %v883, %v835
    %v916 = vadd.f32 %v884, %v838
    %v917 = vadd.f32 %v885, %v840
    %v918 = vadd.f32 %v886, %v843
    %v919 = vadd.f32 %v887, %v845
    %v920 = vadd.f32 %v888, %v848
    %v921 = vadd.f32 %v889, %v850
    %v922 = vadd.f32 %v890, %v853
    %v923 = vadd.f32 %v891, %v855
    %v924 = vadd.f32 %v892, %v858
    %v925 = vadd.f32 %v893, %v860
    %926 = vadd.xlane.f32.xlu0 %v894
    %v927 = vpop.xlane.xlu0 %926
    %928 = vadd.xlane.f32.xlu0 %v895
    %v929 = vpop.xlane.xlu0 %928
    %930 = vadd.xlane.f32.xlu0 %v896
    %v931 = vpop.xlane.xlu0 %930
    %932 = vadd.xlane.f32.xlu0 %v897
    %v933 = vpop.xlane.xlu0 %932
    %934 = vadd.xlane.f32.xlu0 %v898
    %v935 = vpop.xlane.xlu0 %934
    %936 = vadd.xlane.f32.xlu0 %v899
    %v937 = vpop.xlane.xlu0 %936
    %938 = vadd.xlane.f32.xlu0 %v900
    %v939 = vpop.xlane.xlu0 %938
    %940 = vadd.xlane.f32.xlu0 %v901
    %v941 = vpop.xlane.xlu0 %940
    %942 = vadd.xlane.f32.xlu0 %v902
    %v943 = vpop.xlane.xlu0 %942
    %944 = vadd.xlane.f32.xlu0 %v903
    %v945 = vpop.xlane.xlu0 %944
    %946 = vadd.xlane.f32.xlu0 %v904
    %v947 = vpop.xlane.xlu0 %946
    %948 = vadd.xlane.f32.xlu0 %v905
    %v949 = vpop.xlane.xlu0 %948
    %950 = vadd.xlane.f32.xlu0 %v906
    %v951 = vpop.xlane.xlu0 %950
    %952 = vadd.xlane.f32.xlu0 %v907
    %v953 = vpop.xlane.xlu0 %952
    %954 = vadd.xlane.f32.xlu0 %v908
    %v955 = vpop.xlane.xlu0 %954
    %956 = vadd.xlane.f32.xlu0 %v909
    %v957 = vpop.xlane.xlu0 %956
    %958 = vadd.xlane.f32.xlu0 %v910
    %v959 = vpop.xlane.xlu0 %958
    %960 = vadd.xlane.f32.xlu0 %v911
    %v961 = vpop.xlane.xlu0 %960
    %962 = vadd.xlane.f32.xlu0 %v912
    %v963 = vpop.xlane.xlu0 %962
    %964 = vadd.xlane.f32.xlu0 %v913
    %v965 = vpop.xlane.xlu0 %964
    %966 = vadd.xlane.f32.xlu0 %v914
    %v967 = vpop.xlane.xlu0 %966
    %968 = vadd.xlane.f32.xlu0 %v915
    %v969 = vpop.xlane.xlu0 %968
    %970 = vadd.xlane.f32.xlu0 %v916
    %v971 = vpop.xlane.xlu0 %970
    %972 = vadd.xlane.f32.xlu0 %v917
    %v973 = vpop.xlane.xlu0 %972
    %974 = vadd.xlane.f32.xlu0 %v918
    %v975 = vpop.xlane.xlu0 %974
    %976 = vadd.xlane.f32.xlu0 %v919
    %v977 = vpop.xlane.xlu0 %976
    %978 = vadd.xlane.f32.xlu0 %v920
    %v979 = vpop.xlane.xlu0 %978
    %980 = vadd.xlane.f32.xlu0 %v921
    %v981 = vpop.xlane.xlu0 %980
    %982 = vadd.xlane.f32.xlu0 %v922
    %v983 = vpop.xlane.xlu0 %982
    %984 = vadd.xlane.f32.xlu0 %v923
    %v985 = vpop.xlane.xlu0 %984
    %986 = vadd.xlane.f32.xlu0 %v924
    %v987 = vpop.xlane.xlu0 %986
    %988 = vadd.xlane.f32.xlu0 %v925
    %v989 = vpop.xlane.xlu0 %988
    %v990 = vrcp.pop 128.0
    %v991 = vmul.f32 128.0, %v990
    %v992 = vsub.f32 1.0, %v991
    %v993 = vmul.f32 %v990, %v992
    %v994 = vadd.f32 %v990, %v993
    %vm995 = vweird.f32 %v990
    %v996 = vsel %vm995, %v990, %v994
    %v997 = vmul.f32 %v927, %v996
    %v998 = vmul.f32 %v929, %v996
    %v999 = vmul.f32 %v931, %v996
    %v1000 = vmul.f32 %v933, %v996
    %v1001 = vmul.f32 %v935, %v996
    %v1002 = vmul.f32 %v937, %v996
    %v1003 = vmul.f32 %v939, %v996
    %v1004 = vmul.f32 %v941, %v996
    %v1005 = vmul.f32 %v943, %v996
    %v1006 = vmul.f32 %v945, %v996
    %v1007 = vmul.f32 %v947, %v996
    %v1008 = vmul.f32 %v949, %v996
    %v1009 = vmul.f32 %v951, %v996
    %v1010 = vmul.f32 %v953, %v996
    %v1011 = vmul.f32 %v955, %v996
    %v1012 = vmul.f32 %v957, %v996
    %v1013 = vmul.f32 %v959, %v996
    %v1014 = vmul.f32 %v961, %v996
    %v1015 = vmul.f32 %v963, %v996
    %v1016 = vmul.f32 %v965, %v996
    %v1017 = vmul.f32 %v967, %v996
    %v1018 = vmul.f32 %v969, %v996
    %v1019 = vmul.f32 %v971, %v996
    %v1020 = vmul.f32 %v973, %v996
    %v1021 = vmul.f32 %v975, %v996
    %v1022 = vmul.f32 %v977, %v996
    %v1023 = vmul.f32 %v979, %v996
    %v1024 = vmul.f32 %v981, %v996
    %v1025 = vmul.f32 %v983, %v996
    %v1026 = vmul.f32 %v985, %v996
    %v1027 = vmul.f32 %v987, %v996
    %v1028 = vmul.f32 %v989, %v996
    %v1029 = vsub.f32 %v894, %v997
    %v1030 = vsub.f32 %v895, %v998
    %v1031 = vsub.f32 %v896, %v999
    %v1032 = vsub.f32 %v897, %v1000
    %v1033 = vsub.f32 %v898, %v1001
    %v1034 = vsub.f32 %v899, %v1002
    %v1035 = vsub.f32 %v900, %v1003
    %v1036 = vsub.f32 %v901, %v1004
    %v1037 = vsub.f32 %v902, %v1005
    %v1038 = vsub.f32 %v903, %v1006
    %v1039 = vsub.f32 %v904, %v1007
    %v1040 = vsub.f32 %v905, %v1008
    %v1041 = vsub.f32 %v906, %v1009
    %v1042 = vsub.f32 %v907, %v1010
    %v1043 = vsub.f32 %v908, %v1011
    %v1044 = vsub.f32 %v909, %v1012
    %v1045 = vsub.f32 %v910, %v1013
    %v1046 = vsub.f32 %v911, %v1014
    %v1047 = vsub.f32 %v912, %v1015
    %v1048 = vsub.f32 %v913, %v1016
    %v1049 = vsub.f32 %v914, %v1017
    %v1050 = vsub.f32 %v915, %v1018
    %v1051 = vsub.f32 %v916, %v1019
    %v1052 = vsub.f32 %v917, %v1020
    %v1053 = vsub.f32 %v918, %v1021
    %v1054 = vsub.f32 %v919, %v1022
    %v1055 = vsub.f32 %v920, %v1023
    %v1056 = vsub.f32 %v921, %v1024
    %v1057 = vsub.f32 %v922, %v1025
    %v1058 = vsub.f32 %v923, %v1026
    %v1059 = vsub.f32 %v924, %v1027
    %v1060 = vsub.f32 %v925, %v1028
    %v1061 = vmul.f32 %v1029, %v1029
    %v1062 = vmul.f32 %v1030, %v1030
    %v1063 = vmul.f32 %v1031, %v1031
    %v1064 = vmul.f32 %v1032, %v1032
    %v1065 = vmul.f32 %v1033, %v1033
    %v1066 = vmul.f32 %v1034, %v1034
    %v1067 = vmul.f32 %v1035, %v1035
    %v1068 = vmul.f32 %v1036, %v1036
    %v1069 = vmul.f32 %v1037, %v1037
    %v1070 = vmul.f32 %v1038, %v1038
    %v1071 = vmul.f32 %v1039, %v1039
    %v1072 = vmul.f32 %v1040, %v1040
    %v1073 = vmul.f32 %v1041, %v1041
    %v1074 = vmul.f32 %v1042, %v1042
    %v1075 = vmul.f32 %v1043, %v1043
    %v1076 = vmul.f32 %v1044, %v1044
    %v1077 = vmul.f32 %v1045, %v1045
    %v1078 = vmul.f32 %v1046, %v1046
    %v1079 = vmul.f32 %v1047, %v1047
    %v1080 = vmul.f32 %v1048, %v1048
    %v1081 = vmul.f32 %v1049, %v1049
    %v1082 = vmul.f32 %v1050, %v1050
    %v1083 = vmul.f32 %v1051, %v1051
    %v1084 = vmul.f32 %v1052, %v1052
    %v1085 = vmul.f32 %v1053, %v1053
    %v1086 = vmul.f32 %v1054, %v1054
    %v1087 = vmul.f32 %v1055, %v1055
    %v1088 = vmul.f32 %v1056, %v1056
    %v1089 = vmul.f32 %v1057, %v1057
    %v1090 = vmul.f32 %v1058, %v1058
    %v1091 = vmul.f32 %v1059, %v1059
    %v1092 = vmul.f32 %v1060, %v1060
    %1093 = vadd.xlane.f32.xlu0 %v1061
    %v1094 = vpop.xlane.xlu0 %1093
    %1095 = vadd.xlane.f32.xlu0 %v1062
    %v1096 = vpop.xlane.xlu0 %1095
    %1097 = vadd.xlane.f32.xlu0 %v1063
    %v1098 = vpop.xlane.xlu0 %1097
    %1099 = vadd.xlane.f32.xlu0 %v1064
    %v1100 = vpop.xlane.xlu0 %1099
    %1101 = vadd.xlane.f32.xlu0 %v1065
    %v1102 = vpop.xlane.xlu0 %1101
    %1103 = vadd.xlane.f32.xlu0 %v1066
    %v1104 = vpop.xlane.xlu0 %1103
    %1105 = vadd.xlane.f32.xlu0 %v1067
    %v1106 = vpop.xlane.xlu0 %1105
    %1107 = vadd.xlane.f32.xlu0 %v1068
    %v1108 = vpop.xlane.xlu0 %1107
    %1109 = vadd.xlane.f32.xlu0 %v1069
    %v1110 = vpop.xlane.xlu0 %1109
    %1111 = vadd.xlane.f32.xlu0 %v1070
    %v1112 = vpop.xlane.xlu0 %1111
    %1113 = vadd.xlane.f32.xlu0 %v1071
    %v1114 = vpop.xlane.xlu0 %1113
    %1115 = vadd.xlane.f32.xlu0 %v1072
    %v1116 = vpop.xlane.xlu0 %1115
    %1117 = vadd.xlane.f32.xlu0 %v1073
    %v1118 = vpop.xlane.xlu0 %1117
    %1119 = vadd.xlane.f32.xlu0 %v1074
    %v1120 = vpop.xlane.xlu0 %1119
    %1121 = vadd.xlane.f32.xlu0 %v1075
    %v1122 = vpop.xlane.xlu0 %1121
    %1123 = vadd.xlane.f32.xlu0 %v1076
    %v1124 = vpop.xlane.xlu0 %1123
    %1125 = vadd.xlane.f32.xlu0 %v1077
    %v1126 = vpop.xlane.xlu0 %1125
    %1127 = vadd.xlane.f32.xlu0 %v1078
    %v1128 = vpop.xlane.xlu0 %1127
    %1129 = vadd.xlane.f32.xlu0 %v1079
    %v1130 = vpop.xlane.xlu0 %1129
    %1131 = vadd.xlane.f32.xlu0 %v1080
    %v1132 = vpop.xlane.xlu0 %1131
    %1133 = vadd.xlane.f32.xlu0 %v1081
    %v1134 = vpop.xlane.xlu0 %1133
    %1135 = vadd.xlane.f32.xlu0 %v1082
    %v1136 = vpop.xlane.xlu0 %1135
    %1137 = vadd.xlane.f32.xlu0 %v1083
    %v1138 = vpop.xlane.xlu0 %1137
    %1139 = vadd.xlane.f32.xlu0 %v1084
    %v1140 = vpop.xlane.xlu0 %1139
    %1141 = vadd.xlane.f32.xlu0 %v1085
    %v1142 = vpop.xlane.xlu0 %1141
    %1143 = vadd.xlane.f32.xlu0 %v1086
    %v1144 = vpop.xlane.xlu0 %1143
    %1145 = vadd.xlane.f32.xlu0 %v1087
    %v1146 = vpop.xlane.xlu0 %1145
    %1147 = vadd.xlane.f32.xlu0 %v1088
    %v1148 = vpop.xlane.xlu0 %1147
    %1149 = vadd.xlane.f32.xlu0 %v1089
    %v1150 = vpop.xlane.xlu0 %1149
    %1151 = vadd.xlane.f32.xlu0 %v1090
    %v1152 = vpop.xlane.xlu0 %1151
    %1153 = vadd.xlane.f32.xlu0 %v1091
    %v1154 = vpop.xlane.xlu0 %1153
    %1155 = vadd.xlane.f32.xlu0 %v1092
    %v1156 = vpop.xlane.xlu0 %1155
    %v1157 = vmul.f32 %v1094, %v996
    %v1158 = vmul.f32 %v1096, %v996
    %v1159 = vmul.f32 %v1098, %v996
    %v1160 = vmul.f32 %v1100, %v996
    %v1161 = vmul.f32 %v1102, %v996
    %v1162 = vmul.f32 %v1104, %v996
    %v1163 = vmul.f32 %v1106, %v996
    %v1164 = vmul.f32 %v1108, %v996
    %v1165 = vmul.f32 %v1110, %v996
    %v1166 = vmul.f32 %v1112, %v996
    %v1167 = vmul.f32 %v1114, %v996
    %v1168 = vmul.f32 %v1116, %v996
    %v1169 = vmul.f32 %v1118, %v996
    %v1170 = vmul.f32 %v1120, %v996
    %v1171 = vmul.f32 %v1122, %v996
    %v1172 = vmul.f32 %v1124, %v996
    %v1173 = vmul.f32 %v1126, %v996
    %v1174 = vmul.f32 %v1128, %v996
    %v1175 = vmul.f32 %v1130, %v996
    %v1176 = vmul.f32 %v1132, %v996
    %v1177 = vmul.f32 %v1134, %v996
    %v1178 = vmul.f32 %v1136, %v996
    %v1179 = vmul.f32 %v1138, %v996
    %v1180 = vmul.f32 %v1140, %v996
    %v1181 = vmul.f32 %v1142, %v996
    %v1182 = vmul.f32 %v1144, %v996
    %v1183 = vmul.f32 %v1146, %v996
    %v1184 = vmul.f32 %v1148, %v996
    %v1185 = vmul.f32 %v1150, %v996
    %v1186 = vmul.f32 %v1152, %v996
    %v1187 = vmul.f32 %v1154, %v996
    %v1188 = vmul.f32 %v1156, %v996
    %v1189 = vadd.f32 %v1157, 1e-05
    %v1190 = vadd.f32 %v1158, 1e-05
    %v1191 = vadd.f32 %v1159, 1e-05
    %v1192 = vadd.f32 %v1160, 1e-05
    %v1193 = vadd.f32 %v1161, 1e-05
    %v1194 = vadd.f32 %v1162, 1e-05
    %v1195 = vadd.f32 %v1163, 1e-05
    %v1196 = vadd.f32 %v1164, 1e-05
    %v1197 = vadd.f32 %v1165, 1e-05
    %v1198 = vadd.f32 %v1166, 1e-05
    %v1199 = vadd.f32 %v1167, 1e-05
    %v1200 = vadd.f32 %v1168, 1e-05
    %v1201 = vadd.f32 %v1169, 1e-05
    %v1202 = vadd.f32 %v1170, 1e-05
    %v1203 = vadd.f32 %v1171, 1e-05
    %v1204 = vadd.f32 %v1172, 1e-05
    %v1205 = vadd.f32 %v1173, 1e-05
    %v1206 = vadd.f32 %v1174, 1e-05
    %v1207 = vadd.f32 %v1175, 1e-05
    %v1208 = vadd.f32 %v1176, 1e-05
    %v1209 = vadd.f32 %v1177, 1e-05
    %v1210 = vadd.f32 %v1178, 1e-05
    %v1211 = vadd.f32 %v1179, 1e-05
    %v1212 = vadd.f32 %v1180, 1e-05
    %v1213 = vadd.f32 %v1181, 1e-05
    %v1214 = vadd.f32 %v1182, 1e-05
    %v1215 = vadd.f32 %v1183, 1e-05
    %v1216 = vadd.f32 %v1184, 1e-05
    %v1217 = vadd.f32 %v1185, 1e-05
    %v1218 = vadd.f32 %v1186, 1e-05
    %v1219 = vadd.f32 %v1187, 1e-05
    %v1220 = vadd.f32 %v1188, 1e-05
    %v1221 = vrsqrt.pop %v1189
    %v1222 = vmul.f32 %v1221, %v1189
    %v1223 = vmul.f32 %v1222, %v1221
    %v1224 = vmul.f32 0.5, %v1223
    %v1225 = vsub.f32 1.5, %v1224
    %v1226 = vmul.f32 %v1221, %v1225
    %vm1227 = vweird.f32 %v1189
    %vm1228 = vweird.f32 %v1221
    %vm1229 = vmor %vm1227, %vm1228
    %v1230 = vsel %vm1229, %v1221, %v1226
    %v1231 = vrsqrt.pop %v1190
    %v1232 = vmul.f32 %v1231, %v1190
    %v1233 = vmul.f32 %v1232, %v1231
    %v1234 = vmul.f32 0.5, %v1233
    %v1235 = vsub.f32 1.5, %v1234
    %v1236 = vmul.f32 %v1231, %v1235
    %vm1237 = vweird.f32 %v1190
    %vm1238 = vweird.f32 %v1231
    %vm1239 = vmor %vm1237, %vm1238
    %v1240 = vsel %vm1239, %v1231, %v1236
    %v1241 = vrsqrt.pop %v1191
    %v1242 = vmul.f32 %v1241, %v1191
    %v1243 = vmul.f32 %v1242, %v1241
    %v1244 = vmul.f32 0.5, %v1243
    %v1245 = vsub.f32 1.5, %v1244
    %v1246 = vmul.f32 %v1241, %v1245
    %vm1247 = vweird.f32 %v1191
    %vm1248 = vweird.f32 %v1241
    %vm1249 = vmor %vm1247, %vm1248
    %v1250 = vsel %vm1249, %v1241, %v1246
    %v1251 = vrsqrt.pop %v1192
    %v1252 = vmul.f32 %v1251, %v1192
    %v1253 = vmul.f32 %v1252, %v1251
    %v1254 = vmul.f32 0.5, %v1253
    %v1255 = vsub.f32 1.5, %v1254
    %v1256 = vmul.f32 %v1251, %v1255
    %vm1257 = vweird.f32 %v1192
    %vm1258 = vweird.f32 %v1251
    %vm1259 = vmor %vm1257, %vm1258
    %v1260 = vsel %vm1259, %v1251, %v1256
    %v1261 = vrsqrt.pop %v1193
    %v1262 = vmul.f32 %v1261, %v1193
    %v1263 = vmul.f32 %v1262, %v1261
    %v1264 = vmul.f32 0.5, %v1263
    %v1265 = vsub.f32 1.5, %v1264
    %v1266 = vmul.f32 %v1261, %v1265
    %vm1267 = vweird.f32 %v1193
    %vm1268 = vweird.f32 %v1261
    %vm1269 = vmor %vm1267, %vm1268
    %v1270 = vsel %vm1269, %v1261, %v1266
    %v1271 = vrsqrt.pop %v1194
    %v1272 = vmul.f32 %v1271, %v1194
    %v1273 = vmul.f32 %v1272, %v1271
    %v1274 = vmul.f32 0.5, %v1273
    %v1275 = vsub.f32 1.5, %v1274
    %v1276 = vmul.f32 %v1271, %v1275
    %vm1277 = vweird.f32 %v1194
    %vm1278 = vweird.f32 %v1271
    %vm1279 = vmor %vm1277, %vm1278
    %v1280 = vsel %vm1279, %v1271, %v1276
    %v1281 = vrsqrt.pop %v1195
    %v1282 = vmul.f32 %v1281, %v1195
    %v1283 = vmul.f32 %v1282, %v1281
    %v1284 = vmul.f32 0.5, %v1283
    %v1285 = vsub.f32 1.5, %v1284
    %v1286 = vmul.f32 %v1281, %v1285
    %vm1287 = vweird.f32 %v1195
    %vm1288 = vweird.f32 %v1281
    %vm1289 = vmor %vm1287, %vm1288
    %v1290 = vsel %vm1289, %v1281, %v1286
    %v1291 = vrsqrt.pop %v1196
    %v1292 = vmul.f32 %v1291, %v1196
    %v1293 = vmul.f32 %v1292, %v1291
    %v1294 = vmul.f32 0.5, %v1293
    %v1295 = vsub.f32 1.5, %v1294
    %v1296 = vmul.f32 %v1291, %v1295
    %vm1297 = vweird.f32 %v1196
    %vm1298 = vweird.f32 %v1291
    %vm1299 = vmor %vm1297, %vm1298
    %v1300 = vsel %vm1299, %v1291, %v1296
    %v1301 = vrsqrt.pop %v1197
    %v1302 = vmul.f32 %v1301, %v1197
    %v1303 = vmul.f32 %v1302, %v1301
    %v1304 = vmul.f32 0.5, %v1303
    %v1305 = vsub.f32 1.5, %v1304
    %v1306 = vmul.f32 %v1301, %v1305
    %vm1307 = vweird.f32 %v1197
    %vm1308 = vweird.f32 %v1301
    %vm1309 = vmor %vm1307, %vm1308
    %v1310 = vsel %vm1309, %v1301, %v1306
    %v1311 = vrsqrt.pop %v1198
    %v1312 = vmul.f32 %v1311, %v1198
    %v1313 = vmul.f32 %v1312, %v1311
    %v1314 = vmul.f32 0.5, %v1313
    %v1315 = vsub.f32 1.5, %v1314
    %v1316 = vmul.f32 %v1311, %v1315
    %vm1317 = vweird.f32 %v1198
    %vm1318 = vweird.f32 %v1311
    %vm1319 = vmor %vm1317, %vm1318
    %v1320 = vsel %vm1319, %v1311, %v1316
    %v1321 = vrsqrt.pop %v1199
    %v1322 = vmul.f32 %v1321, %v1199
    %v1323 = vmul.f32 %v1322, %v1321
    %v1324 = vmul.f32 0.5, %v1323
    %v1325 = vsub.f32 1.5, %v1324
    %v1326 = vmul.f32 %v1321, %v1325
    %vm1327 = vweird.f32 %v1199
    %vm1328 = vweird.f32 %v1321
    %vm1329 = vmor %vm1327, %vm1328
    %v1330 = vsel %vm1329, %v1321, %v1326
    %v1331 = vrsqrt.pop %v1200
    %v1332 = vmul.f32 %v1331, %v1200
    %v1333 = vmul.f32 %v1332, %v1331
    %v1334 = vmul.f32 0.5, %v1333
    %v1335 = vsub.f32 1.5, %v1334
    %v1336 = vmul.f32 %v1331, %v1335
    %vm1337 = vweird.f32 %v1200
    %vm1338 = vweird.f32 %v1331
    %vm1339 = vmor %vm1337, %vm1338
    %v1340 = vsel %vm1339, %v1331, %v1336
    %v1341 = vrsqrt.pop %v1201
    %v1342 = vmul.f32 %v1341, %v1201
    %v1343 = vmul.f32 %v1342, %v1341
    %v1344 = vmul.f32 0.5, %v1343
    %v1345 = vsub.f32 1.5, %v1344
    %v1346 = vmul.f32 %v1341, %v1345
    %vm1347 = vweird.f32 %v1201
    %vm1348 = vweird.f32 %v1341
    %vm1349 = vmor %vm1347, %vm1348
    %v1350 = vsel %vm1349, %v1341, %v1346
    %v1351 = vrsqrt.pop %v1202
    %v1352 = vmul.f32 %v1351, %v1202
    %v1353 = vmul.f32 %v1352, %v1351
    %v1354 = vmul.f32 0.5, %v1353
    %v1355 = vsub.f32 1.5, %v1354
    %v1356 = vmul.f32 %v1351, %v1355
    %vm1357 = vweird.f32 %v1202
    %vm1358 = vweird.f32 %v1351
    %vm1359 = vmor %vm1357, %vm1358
    %v1360 = vsel %vm1359, %v1351, %v1356
    %v1361 = vrsqrt.pop %v1203
    %v1362 = vmul.f32 %v1361, %v1203
    %v1363 = vmul.f32 %v1362, %v1361
    %v1364 = vmul.f32 0.5, %v1363
    %v1365 = vsub.f32 1.5, %v1364
    %v1366 = vmul.f32 %v1361, %v1365
    %vm1367 = vweird.f32 %v1203
    %vm1368 = vweird.f32 %v1361
    %vm1369 = vmor %vm1367, %vm1368
    %v1370 = vsel %vm1369, %v1361, %v1366
    %v1371 = vrsqrt.pop %v1204
    %v1372 = vmul.f32 %v1371, %v1204
    %v1373 = vmul.f32 %v1372, %v1371
    %v1374 = vmul.f32 0.5, %v1373
    %v1375 = vsub.f32 1.5, %v1374
    %v1376 = vmul.f32 %v1371, %v1375
    %vm1377 = vweird.f32 %v1204
    %vm1378 = vweird.f32 %v1371
    %vm1379 = vmor %vm1377, %vm1378
    %v1380 = vsel %vm1379, %v1371, %v1376
    %v1381 = vrsqrt.pop %v1205
    %v1382 = vmul.f32 %v1381, %v1205
    %v1383 = vmul.f32 %v1382, %v1381
    %v1384 = vmul.f32 0.5, %v1383
    %v1385 = vsub.f32 1.5, %v1384
    %v1386 = vmul.f32 %v1381, %v1385
    %vm1387 = vweird.f32 %v1205
    %vm1388 = vweird.f32 %v1381
    %vm1389 = vmor %vm1387, %vm1388
    %v1390 = vsel %vm1389, %v1381, %v1386
    %v1391 = vrsqrt.pop %v1206
    %v1392 = vmul.f32 %v1391, %v1206
    %v1393 = vmul.f32 %v1392, %v1391
    %v1394 = vmul.f32 0.5, %v1393
    %v1395 = vsub.f32 1.5, %v1394
    %v1396 = vmul.f32 %v1391, %v1395
    %vm1397 = vweird.f32 %v1206
    %vm1398 = vweird.f32 %v1391
    %vm1399 = vmor %vm1397, %vm1398
    %v1400 = vsel %vm1399, %v1391, %v1396
    %v1401 = vrsqrt.pop %v1207
    %v1402 = vmul.f32 %v1401, %v1207
    %v1403 = vmul.f32 %v1402, %v1401
    %v1404 = vmul.f32 0.5, %v1403
    %v1405 = vsub.f32 1.5, %v1404
    %v1406 = vmul.f32 %v1401, %v1405
    %vm1407 = vweird.f32 %v1207
    %vm1408 = vweird.f32 %v1401
    %vm1409 = vmor %vm1407, %vm1408
    %v1410 = vsel %vm1409, %v1401, %v1406
    %v1411 = vrsqrt.pop %v1208
    %v1412 = vmul.f32 %v1411, %v1208
    %v1413 = vmul.f32 %v1412, %v1411
    %v1414 = vmul.f32 0.5, %v1413
    %v1415 = vsub.f32 1.5, %v1414
    %v1416 = vmul.f32 %v1411, %v1415
    %vm1417 = vweird.f32 %v1208
    %vm1418 = vweird.f32 %v1411
    %vm1419 = vmor %vm1417, %vm1418
    %v1420 = vsel %vm1419, %v1411, %v1416
    %v1421 = vrsqrt.pop %v1209
    %v1422 = vmul.f32 %v1421, %v1209
    %v1423 = vmul.f32 %v1422, %v1421
    %v1424 = vmul.f32 0.5, %v1423
    %v1425 = vsub.f32 1.5, %v1424
    %v1426 = vmul.f32 %v1421, %v1425
    %vm1427 = vweird.f32 %v1209
    %vm1428 = vweird.f32 %v1421
    %vm1429 = vmor %vm1427, %vm1428
    %v1430 = vsel %vm1429, %v1421, %v1426
    %v1431 = vrsqrt.pop %v1210
    %v1432 = vmul.f32 %v1431, %v1210
    %v1433 = vmul.f32 %v1432, %v1431
    %v1434 = vmul.f32 0.5, %v1433
    %v1435 = vsub.f32 1.5, %v1434
    %v1436 = vmul.f32 %v1431, %v1435
    %vm1437 = vweird.f32 %v1210
    %vm1438 = vweird.f32 %v1431
    %vm1439 = vmor %vm1437, %vm1438
    %v1440 = vsel %vm1439, %v1431, %v1436
    %v1441 = vrsqrt.pop %v1211
    %v1442 = vmul.f32 %v1441, %v1211
    %v1443 = vmul.f32 %v1442, %v1441
    %v1444 = vmul.f32 0.5, %v1443
    %v1445 = vsub.f32 1.5, %v1444
    %v1446 = vmul.f32 %v1441, %v1445
    %vm1447 = vweird.f32 %v1211
    %vm1448 = vweird.f32 %v1441
    %vm1449 = vmor %vm1447, %vm1448
    %v1450 = vsel %vm1449, %v1441, %v1446
    %v1451 = vrsqrt.pop %v1212
    %v1452 = vmul.f32 %v1451, %v1212
    %v1453 = vmul.f32 %v1452, %v1451
    %v1454 = vmul.f32 0.5, %v1453
    %v1455 = vsub.f32 1.5, %v1454
    %v1456 = vmul.f32 %v1451, %v1455
    %vm1457 = vweird.f32 %v1212
    %vm1458 = vweird.f32 %v1451
    %vm1459 = vmor %vm1457, %vm1458
    %v1460 = vsel %vm1459, %v1451, %v1456
    %v1461 = vrsqrt.pop %v1213
    %v1462 = vmul.f32 %v1461, %v1213
    %v1463 = vmul.f32 %v1462, %v1461
    %v1464 = vmul.f32 0.5, %v1463
    %v1465 = vsub.f32 1.5, %v1464
    %v1466 = vmul.f32 %v1461, %v1465
    %vm1467 = vweird.f32 %v1213
    %vm1468 = vweird.f32 %v1461
    %vm1469 = vmor %vm1467, %vm1468
    %v1470 = vsel %vm1469, %v1461, %v1466
    %v1471 = vrsqrt.pop %v1214
    %v1472 = vmul.f32 %v1471, %v1214
    %v1473 = vmul.f32 %v1472, %v1471
    %v1474 = vmul.f32 0.5, %v1473
    %v1475 = vsub.f32 1.5, %v1474
    %v1476 = vmul.f32 %v1471, %v1475
    %vm1477 = vweird.f32 %v1214
    %vm1478 = vweird.f32 %v1471
    %vm1479 = vmor %vm1477, %vm1478
    %v1480 = vsel %vm1479, %v1471, %v1476
    %v1481 = vrsqrt.pop %v1215
    %v1482 = vmul.f32 %v1481, %v1215
    %v1483 = vmul.f32 %v1482, %v1481
    %v1484 = vmul.f32 0.5, %v1483
    %v1485 = vsub.f32 1.5, %v1484
    %v1486 = vmul.f32 %v1481, %v1485
    %vm1487 = vweird.f32 %v1215
    %vm1488 = vweird.f32 %v1481
    %vm1489 = vmor %vm1487, %vm1488
    %v1490 = vsel %vm1489, %v1481, %v1486
    %v1491 = vrsqrt.pop %v1216
    %v1492 = vmul.f32 %v1491, %v1216
    %v1493 = vmul.f32 %v1492, %v1491
    %v1494 = vmul.f32 0.5, %v1493
    %v1495 = vsub.f32 1.5, %v1494
    %v1496 = vmul.f32 %v1491, %v1495
    %vm1497 = vweird.f32 %v1216
    %vm1498 = vweird.f32 %v1491
    %vm1499 = vmor %vm1497, %vm1498
    %v1500 = vsel %vm1499, %v1491, %v1496
    %v1501 = vrsqrt.pop %v1217
    %v1502 = vmul.f32 %v1501, %v1217
    %v1503 = vmul.f32 %v1502, %v1501
    %v1504 = vmul.f32 0.5, %v1503
    %v1505 = vsub.f32 1.5, %v1504
    %v1506 = vmul.f32 %v1501, %v1505
    %vm1507 = vweird.f32 %v1217
    %vm1508 = vweird.f32 %v1501
    %vm1509 = vmor %vm1507, %vm1508
    %v1510 = vsel %vm1509, %v1501, %v1506
    %v1511 = vrsqrt.pop %v1218
    %v1512 = vmul.f32 %v1511, %v1218
    %v1513 = vmul.f32 %v1512, %v1511
    %v1514 = vmul.f32 0.5, %v1513
    %v1515 = vsub.f32 1.5, %v1514
    %v1516 = vmul.f32 %v1511, %v1515
    %vm1517 = vweird.f32 %v1218
    %vm1518 = vweird.f32 %v1511
    %vm1519 = vmor %vm1517, %vm1518
    %v1520 = vsel %vm1519, %v1511, %v1516
    %v1521 = vrsqrt.pop %v1219
    %v1522 = vmul.f32 %v1521, %v1219
    %v1523 = vmul.f32 %v1522, %v1521
    %v1524 = vmul.f32 0.5, %v1523
    %v1525 = vsub.f32 1.5, %v1524
    %v1526 = vmul.f32 %v1521, %v1525
    %vm1527 = vweird.f32 %v1219
    %vm1528 = vweird.f32 %v1521
    %vm1529 = vmor %vm1527, %vm1528
    %v1530 = vsel %vm1529, %v1521, %v1526
    %v1531 = vrsqrt.pop %v1220
    %v1532 = vmul.f32 %v1531, %v1220
    %v1533 = vmul.f32 %v1532, %v1531
    %v1534 = vmul.f32 0.5, %v1533
    %v1535 = vsub.f32 1.5, %v1534
    %v1536 = vmul.f32 %v1531, %v1535
    %vm1537 = vweird.f32 %v1220
    %vm1538 = vweird.f32 %v1531
    %vm1539 = vmor %vm1537, %vm1538
    %v1540 = vsel %vm1539, %v1531, %v1536
    %v1541 = vmul.f32 %v1029, %v1230
    %v1542 = vmul.f32 %v1030, %v1240
    %v1543 = vmul.f32 %v1031, %v1250
    %v1544 = vmul.f32 %v1032, %v1260
    %v1545 = vmul.f32 %v1033, %v1270
    %v1546 = vmul.f32 %v1034, %v1280
    %v1547 = vmul.f32 %v1035, %v1290
    %v1548 = vmul.f32 %v1036, %v1300
    %v1549 = vmul.f32 %v1037, %v1310
    %v1550 = vmul.f32 %v1038, %v1320
    %v1551 = vmul.f32 %v1039, %v1330
    %v1552 = vmul.f32 %v1040, %v1340
    %v1553 = vmul.f32 %v1041, %v1350
    %v1554 = vmul.f32 %v1042, %v1360
    %v1555 = vmul.f32 %v1043, %v1370
    %v1556 = vmul.f32 %v1044, %v1380
    %v1557 = vmul.f32 %v1045, %v1390
    %v1558 = vmul.f32 %v1046, %v1400
    %v1559 = vmul.f32 %v1047, %v1410
    %v1560 = vmul.f32 %v1048, %v1420
    %v1561 = vmul.f32 %v1049, %v1430
    %v1562 = vmul.f32 %v1050, %v1440
    %v1563 = vmul.f32 %v1051, %v1450
    %v1564 = vmul.f32 %v1052, %v1460
    %v1565 = vmul.f32 %v1053, %v1470
    %v1566 = vmul.f32 %v1054, %v1480
    %v1567 = vmul.f32 %v1055, %v1490
    %v1568 = vmul.f32 %v1056, %v1500
    %v1569 = vmul.f32 %v1057, %v1510
    %v1570 = vmul.f32 %v1058, %v1520
    %v1571 = vmul.f32 %v1059, %v1530
    %v1572 = vmul.f32 %v1060, %v1540
    %v1573 = vld [vmem:[%s6] sm:$0x1]
    %v1575 = vperm.slane %v1573, 0
    %v1577 = vmul.f32 %v1541, %v1575
    %v1578 = vmul.f32 %v1542, %v1575
    %v1579 = vmul.f32 %v1543, %v1575
    %v1580 = vmul.f32 %v1544, %v1575
    %v1581 = vmul.f32 %v1545, %v1575
    %v1582 = vmul.f32 %v1546, %v1575
    %v1583 = vmul.f32 %v1547, %v1575
    %v1584 = vmul.f32 %v1548, %v1575
    %v1585 = vmul.f32 %v1549, %v1575
    %v1586 = vmul.f32 %v1550, %v1575
    %v1587 = vmul.f32 %v1551, %v1575
    %v1588 = vmul.f32 %v1552, %v1575
    %v1589 = vmul.f32 %v1553, %v1575
    %v1590 = vmul.f32 %v1554, %v1575
    %v1591 = vmul.f32 %v1555, %v1575
    %v1592 = vmul.f32 %v1556, %v1575
    %v1593 = vmul.f32 %v1557, %v1575
    %v1594 = vmul.f32 %v1558, %v1575
    %v1595 = vmul.f32 %v1559, %v1575
    %v1596 = vmul.f32 %v1560, %v1575
    %v1597 = vmul.f32 %v1561, %v1575
    %v1598 = vmul.f32 %v1562, %v1575
    %v1599 = vmul.f32 %v1563, %v1575
    %v1600 = vmul.f32 %v1564, %v1575
    %v1601 = vmul.f32 %v1565, %v1575
    %v1602 = vmul.f32 %v1566, %v1575
    %v1603 = vmul.f32 %v1567, %v1575
    %v1604 = vmul.f32 %v1568, %v1575
    %v1605 = vmul.f32 %v1569, %v1575
    %v1606 = vmul.f32 %v1570, %v1575
    %v1607 = vmul.f32 %v1571, %v1575
    %v1608 = vmul.f32 %v1572, %v1575
    %v1609 = vld [vmem:[%s7] sm:$0x1]
    %v1611 = vperm.slane %v1609, 0
    %v1613 = vadd.f32 %v1577, %v1611
    %v1614 = vadd.f32 %v1578, %v1611
    %v1615 = vadd.f32 %v1579, %v1611
    %v1616 = vadd.f32 %v1580, %v1611
    %v1617 = vadd.f32 %v1581, %v1611
    %v1618 = vadd.f32 %v1582, %v1611
    %v1619 = vadd.f32 %v1583, %v1611
    %v1620 = vadd.f32 %v1584, %v1611
    %v1621 = vadd.f32 %v1585, %v1611
    %v1622 = vadd.f32 %v1586, %v1611
    %v1623 = vadd.f32 %v1587, %v1611
    %v1624 = vadd.f32 %v1588, %v1611
    %v1625 = vadd.f32 %v1589, %v1611
    %v1626 = vadd.f32 %v1590, %v1611
    %v1627 = vadd.f32 %v1591, %v1611
    %v1628 = vadd.f32 %v1592, %v1611
    %v1629 = vadd.f32 %v1593, %v1611
    %v1630 = vadd.f32 %v1594, %v1611
    %v1631 = vadd.f32 %v1595, %v1611
    %v1632 = vadd.f32 %v1596, %v1611
    %v1633 = vadd.f32 %v1597, %v1611
    %v1634 = vadd.f32 %v1598, %v1611
    %v1635 = vadd.f32 %v1599, %v1611
    %v1636 = vadd.f32 %v1600, %v1611
    %v1637 = vadd.f32 %v1601, %v1611
    %v1638 = vadd.f32 %v1602, %v1611
    %v1639 = vadd.f32 %v1603, %v1611
    %v1640 = vadd.f32 %v1604, %v1611
    %v1641 = vadd.f32 %v1605, %v1611
    %v1642 = vadd.f32 %v1606, %v1611
    %v1643 = vadd.f32 %v1607, %v1611
    %v1644 = vadd.f32 %v1608, %v1611
    %v1645 = vld [vmem:[%s1] sm:$0xff]
    %v1646 = vld [vmem:[%s1 + $0x8] sm:$0xff]
    %v1647 = vld [vmem:[%s1 + $0x10] sm:$0xff]
    %v1648 = vld [vmem:[%s1 + $0x18] sm:$0xff]
    %v1649 = vld [vmem:[%s1 + $0x20] sm:$0xff]
    %v1650 = vld [vmem:[%s1 + $0x28] sm:$0xff]
    %v1651 = vld [vmem:[%s1 + $0x30] sm:$0xff]
    %v1652 = vld [vmem:[%s1 + $0x38] sm:$0xff]
    %v1653 = vld [vmem:[%s1 + $0x40] sm:$0xff]
    %v1654 = vld [vmem:[%s1 + $0x48] sm:$0xff]
    %v1655 = vld [vmem:[%s1 + $0x50] sm:$0xff]
    %v1656 = vld [vmem:[%s1 + $0x58] sm:$0xff]
    %v1657 = vld [vmem:[%s1 + $0x60] sm:$0xff]
    %v1658 = vld [vmem:[%s1 + $0x68] sm:$0xff]
    %v1659 = vld [vmem:[%s1 + $0x70] sm:$0xff]
    %v1660 = vld [vmem:[%s1 + $0x78] sm:$0xff]
    %1662 = vset.pattern.permute.xlu0 0
    %1663 = vperm.xlu0 %1662, %v1645
    %v1664 = vpop.permute.xlu0 %1663
    %1667 = vset.pattern.permute.xlu0 0
    %1668 = vperm.xlu0 %1667, %v1646
    %v1669 = vpop.permute.xlu0 %1668
    %1672 = vset.pattern.permute.xlu0 0
    %1673 = vperm.xlu0 %1672, %v1647
    %v1674 = vpop.permute.xlu0 %1673
    %1677 = vset.pattern.permute.xlu0 0
    %1678 = vperm.xlu0 %1677, %v1648
    %v1679 = vpop.permute.xlu0 %1678
    %1682 = vset.pattern.permute.xlu0 0
    %1683 = vperm.xlu0 %1682, %v1649
    %v1684 = vpop.permute.xlu0 %1683
    %1687 = vset.pattern.permute.xlu0 0
    %1688 = vperm.xlu0 %1687, %v1650
    %v1689 = vpop.permute.xlu0 %1688
    %1692 = vset.pattern.permute.xlu0 0
    %1693 = vperm.xlu0 %1692, %v1651
    %v1694 = vpop.permute.xlu0 %1693
    %1697 = vset.pattern.permute.xlu0 0
    %1698 = vperm.xlu0 %1697, %v1652
    %v1699 = vpop.permute.xlu0 %1698
    %1702 = vset.pattern.permute.xlu0 0
    %1703 = vperm.xlu0 %1702, %v1653
    %v1704 = vpop.permute.xlu0 %1703
    %1707 = vset.pattern.permute.xlu0 0
    %1708 = vperm.xlu0 %1707, %v1654
    %v1709 = vpop.permute.xlu0 %1708
    %1712 = vset.pattern.permute.xlu0 0
    %1713 = vperm.xlu0 %1712, %v1655
    %v1714 = vpop.permute.xlu0 %1713
    %1717 = vset.pattern.permute.xlu0 0
    %1718 = vperm.xlu0 %1717, %v1656
    %v1719 = vpop.permute.xlu0 %1718
    %1722 = vset.pattern.permute.xlu0 0
    %1723 = vperm.xlu0 %1722, %v1657
    %v1724 = vpop.permute.xlu0 %1723
    %1727 = vset.pattern.permute.xlu0 0
    %1728 = vperm.xlu0 %1727, %v1658
    %v1729 = vpop.permute.xlu0 %1728
    %1732 = vset.pattern.permute.xlu0 0
    %1733 = vperm.xlu0 %1732, %v1659
    %v1734 = vpop.permute.xlu0 %1733
    %1737 = vset.pattern.permute.xlu0 0
    %1738 = vperm.xlu0 %1737, %v1660
    %v1739 = vpop.permute.xlu0 %1738
    %v1741 = vadd.f32 %v1613, %v1664
    %v1742 = vadd.f32 %v1614, %v1669
    %v1743 = vadd.f32 %v1615, %v1674
    %v1744 = vadd.f32 %v1616, %v1679
    %v1745 = vadd.f32 %v1617, %v1684
    %v1746 = vadd.f32 %v1618, %v1689
    %v1747 = vadd.f32 %v1619, %v1694
    %v1748 = vadd.f32 %v1620, %v1699
    %v1749 = vadd.f32 %v1621, %v1704
    %v1750 = vadd.f32 %v1622, %v1709
    %v1751 = vadd.f32 %v1623, %v1714
    %v1752 = vadd.f32 %v1624, %v1719
    %v1753 = vadd.f32 %v1625, %v1724
    %v1754 = vadd.f32 %v1626, %v1729
    %v1755 = vadd.f32 %v1627, %v1734
    %v1756 = vadd.f32 %v1628, %v1739
    %v1757 = vadd.f32 %v1629, %v1664
    %v1758 = vadd.f32 %v1630, %v1669
    %v1759 = vadd.f32 %v1631, %v1674
    %v1760 = vadd.f32 %v1632, %v1679
    %v1761 = vadd.f32 %v1633, %v1684
    %v1762 = vadd.f32 %v1634, %v1689
    %v1763 = vadd.f32 %v1635, %v1694
    %v1764 = vadd.f32 %v1636, %v1699
    %v1765 = vadd.f32 %v1637, %v1704
    %v1766 = vadd.f32 %v1638, %v1709
    %v1767 = vadd.f32 %v1639, %v1714
    %v1768 = vadd.f32 %v1640, %v1719
    %v1769 = vadd.f32 %v1641, %v1724
    %v1770 = vadd.f32 %v1642, %v1729
    %v1771 = vadd.f32 %v1643, %v1734
    %v1772 = vadd.f32 %v1644, %v1739
    %v1773 = vmax.f32 %v1741, %v1743
    %v1774 = vmax.f32 %v1742, %v1744
    %v1775 = vmax.f32 %v1773, %v1745
    %v1776 = vmax.f32 %v1774, %v1746
    %v1777 = vmax.f32 %v1775, %v1747
    %v1778 = vmax.f32 %v1776, %v1748
    %v1779 = vmax.f32 %v1777, %v1749
    %v1780 = vmax.f32 %v1778, %v1750
    %v1781 = vmax.f32 %v1779, %v1751
    %v1782 = vmax.f32 %v1780, %v1752
    %v1783 = vmax.f32 %v1781, %v1753
    %v1784 = vmax.f32 %v1782, %v1754
    %v1785 = vmax.f32 %v1783, %v1755
    %v1786 = vmax.f32 %v1784, %v1756
    %v1787 = vmax.f32 %v1785, %v1786
    %v1788 = vrot.slane %v1787, 4
    %v1789 = vmax.f32 %v1787, %v1788
    %v1790 = vrot.slane %v1789, 2
    %v1791 = vmax.f32 %v1789, %v1790
    %v1792 = vrot.slane %v1791, 1
    %v1793 = vmax.f32 %v1791, %v1792
    %v1794 = vmax.f32 %v1757, %v1759
    %v1795 = vmax.f32 %v1758, %v1760
    %v1796 = vmax.f32 %v1794, %v1761
    %v1797 = vmax.f32 %v1795, %v1762
    %v1798 = vmax.f32 %v1796, %v1763
    %v1799 = vmax.f32 %v1797, %v1764
    %v1800 = vmax.f32 %v1798, %v1765
    %v1801 = vmax.f32 %v1799, %v1766
    %v1802 = vmax.f32 %v1800, %v1767
    %v1803 = vmax.f32 %v1801, %v1768
    %v1804 = vmax.f32 %v1802, %v1769
    %v1805 = vmax.f32 %v1803, %v1770
    %v1806 = vmax.f32 %v1804, %v1771
    %v1807 = vmax.f32 %v1805, %v1772
    %v1808 = vmax.f32 %v1806, %v1807
    %v1809 = vrot.slane %v1808, 4
    %v1810 = vmax.f32 %v1808, %v1809
    %v1811 = vrot.slane %v1810, 2
    %v1812 = vmax.f32 %v1810, %v1811
    %v1813 = vrot.slane %v1812, 1
    %v1814 = vmax.f32 %v1812, %v1813
    %p1815 = scmp.eq.s32.totalorder 0, 0
    // Predicated region
    $region58: #{_forward_device.9} parent=1 // pred_check
      %p1816 = pneg %p1815
    $region59: #{_forward_device.9} parent=1 // pred_check_branch
      %1818 = sbr.rel (%p1816) target = $region61
    $region60: #{_forward_device.9} parent=1 // pred_region
      %vm1821 = vcmask 1041409
      %v1822 = vsel %vm1821, %v1814, %v1793
      %1824 = vst [vmem:[#allocation2] sm:$0x3] %v1822
    $region61: #{_forward_device.9} parent=1 // pred_fallthru
      _
    %p1825 = scmp.gt.s32.totalorder 0, 0
    // Predicated region
    $region62: #{_forward_device.9} parent=1 // pred_check
      %p1826 = pneg %p1825
    $region63: #{_forward_device.9} parent=1 // pred_check_branch
      %1828 = sbr.rel (%p1826) target = $region65
    $region64: #{_forward_device.9} parent=1 // pred_region
      %v1829 = vld [vmem:[#allocation2] sm:$0x3]
      %vm1832 = vcmask 1041409
      %v1833 = vsel %vm1832, %v1814, %v1793
      %v1835 = vmax.f32 %v1829, %v1833
      %1836 = vst [vmem:[#allocation2] sm:$0x3] %v1835
    $region65: #{_forward_device.9} parent=1 // pred_fallthru
      _
    // Predicated region
    $region66: #{_forward_device.9} parent=1 // pred_check
      %p1837 = pneg %p1815
    $region67: #{_forward_device.9} parent=1 // pred_check_branch
      %1839 = sbr.rel (%p1837) target = $region69
    $region68: #{_forward_device.9} parent=1 // pred_region
      %v1840 = vld [vmem:[#allocation2] sm:$0x3]
      %v1841 = vld [vmem:[%s8] sm:$0x1]
      %v1843 = vperm.slane %v1841, 0
      %v1845 = vsub.f32 %v1840, %v1843
      %v1846 = vld [vmem:[%s9] sm:$0x1]
      %v1847 = vadd.f32 %v1846, 1e-06
      %v1848 = vrsqrt.pop %v1847
      %v1849 = vmul.f32 %v1848, %v1847
      %v1850 = vmul.f32 %v1849, %v1848
      %v1851 = vmul.f32 0.5, %v1850
      %v1852 = vsub.f32 1.5, %v1851
      %v1853 = vmul.f32 %v1848, %v1852
      %vm1854 = vweird.f32 %v1847
      %vm1855 = vweird.f32 %v1848
      %vm1856 = vmor %vm1854, %vm1855
      %v1857 = vsel %vm1856, %v1848, %v1853
      %v1859 = vperm.slane %v1857, 0
      %v1861 = vmul.f32 %v1845, %v1859
      %v1862 = vpack.c.bf16 %v1861, %v1861
      %v1863 = vld [vmem:[%s10] sm:$0xff]
      %v1864 = vld [vmem:[%s10 + $0x8] sm:$0xff]
      %v1865 = vld [vmem:[%s10 + $0x10] sm:$0xff]
      %v1866 = vld [vmem:[%s10 + $0x18] sm:$0xff]
      %v1867 = vld [vmem:[%s10 + $0x20] sm:$0xff]
      %v1868 = vld [vmem:[%s10 + $0x28] sm:$0xff]
      %v1869 = vld [vmem:[%s10 + $0x30] sm:$0xff]
      %v1870 = vld [vmem:[%s10 + $0x38] sm:$0xff]
      %v1871 = vld [vmem:[%s10 + $0x40] sm:$0xff]
      %v1872 = vld [vmem:[%s10 + $0x48] sm:$0xff]
      %v1873 = vld [vmem:[%s10 + $0x50] sm:$0xff]
      %v1874 = vld [vmem:[%s10 + $0x58] sm:$0xff]
      %v1875 = vld [vmem:[%s10 + $0x60] sm:$0xff]
      %v1876 = vld [vmem:[%s10 + $0x68] sm:$0xff]
      %v1877 = vld [vmem:[%s10 + $0x70] sm:$0xff]
      %v1878 = vld [vmem:[%s10 + $0x78] sm:$0xff]
      %v1879 = vld [vmem:[%s11] sm:$0x3]
      %v1881 = vperm.slane %v1879, 0
      %v1882 = vperm.slane %v1879, 1
      %v1901 = vunpack.c.l.b16 %v1863
      %v1902 = vunpack.c.h.b16 %v1863
      %v1903 = vunpack.c.l.b16 %v1864
      %v1904 = vunpack.c.h.b16 %v1864
      %v1905 = vunpack.c.l.b16 %v1865
      %v1906 = vunpack.c.h.b16 %v1865
      %v1907 = vunpack.c.l.b16 %v1866
      %v1908 = vunpack.c.h.b16 %v1866
      %v1909 = vunpack.c.l.b16 %v1867
      %v1910 = vunpack.c.h.b16 %v1867
      %v1911 = vunpack.c.l.b16 %v1868
      %v1912 = vunpack.c.h.b16 %v1868
      %v1913 = vunpack.c.l.b16 %v1869
      %v1914 = vunpack.c.h.b16 %v1869
      %v1915 = vunpack.c.l.b16 %v1870
      %v1916 = vunpack.c.h.b16 %v1870
      %v1917 = vunpack.c.l.b16 %v1871
      %v1918 = vunpack.c.h.b16 %v1871
      %v1919 = vunpack.c.l.b16 %v1872
      %v1920 = vunpack.c.h.b16 %v1872
      %v1921 = vunpack.c.l.b16 %v1873
      %v1922 = vunpack.c.h.b16 %v1873
      %v1923 = vunpack.c.l.b16 %v1874
      %v1924 = vunpack.c.h.b16 %v1874
      %v1925 = vunpack.c.l.b16 %v1875
      %v1926 = vunpack.c.h.b16 %v1875
      %v1927 = vunpack.c.l.b16 %v1876
      %v1928 = vunpack.c.h.b16 %v1876
      %v1929 = vunpack.c.l.b16 %v1877
      %v1930 = vunpack.c.h.b16 %v1877
      %v1931 = vunpack.c.l.b16 %v1878
      %v1932 = vunpack.c.h.b16 %v1878
      %v1933 = vpack.c.b16 %v1903, %v1901
      %v1934 = vpack.c.b16 %v1904, %v1902
      %v1935 = vpack.c.b16 %v1907, %v1905
      %v1936 = vpack.c.b16 %v1908, %v1906
      %v1937 = vpack.c.b16 %v1911, %v1909
      %v1938 = vpack.c.b16 %v1912, %v1910
      %v1939 = vpack.c.b16 %v1915, %v1913
      %v1940 = vpack.c.b16 %v1916, %v1914
      %v1941 = vpack.c.b16 %v1919, %v1917
      %v1942 = vpack.c.b16 %v1920, %v1918
      %v1943 = vpack.c.b16 %v1923, %v1921
      %v1944 = vpack.c.b16 %v1924, %v1922
      %v1945 = vpack.c.b16 %v1927, %v1925
      %v1946 = vpack.c.b16 %v1928, %v1926
      %v1947 = vpack.c.b16 %v1931, %v1929
      %v1948 = vpack.c.b16 %v1932, %v1930
      %1965 = vmatpush.bf16.msra.mxu0 %v1947
      %1966 = vmatpush.bf16.msra.mxu0 %v1945
      %1967 = vmatpush.bf16.msra.mxu0 %v1943
      %1968 = vmatpush.bf16.msra.mxu0 %v1941
      %1969 = vmatpush.bf16.msra.mxu0 %v1939
      %1970 = vmatpush.bf16.msra.mxu0 %v1937
      %1971 = vmatpush.bf16.msra.mxu0 %v1935
      %1972 = vmatpush.bf16.msra.mxu0 %v1933
      %1973 = vmatmul.bf16.gmra.mxu0 %v1862
      %v1974 = vpop.f32.mrf.mxu0
      %v1975 = vadd.f32 %v1881, %v1974
      %v1976 = vpop.f32.mrf.mxu0
      %1977 = vdwg.mxu0
      %1978 = vmatpush.bf16.msra.mxu0 %v1948
      %1979 = vmatpush.bf16.msra.mxu0 %v1946
      %1980 = vmatpush.bf16.msra.mxu0 %v1944
      %1981 = vmatpush.bf16.msra.mxu0 %v1942
      %1982 = vmatpush.bf16.msra.mxu0 %v1940
      %1983 = vmatpush.bf16.msra.mxu0 %v1938
      %1984 = vmatpush.bf16.msra.mxu0 %v1936
      %1985 = vmatpush.bf16.msra.mxu0 %v1934
      %1986 = vmatmul.bf16.gmra.mxu0 %v1862
      %v1987 = vpop.f32.mrf.mxu0
      %v1988 = vadd.f32 %v1882, %v1987
      %v1989 = vpop.f32.mrf.mxu0
      %1990 = vdwg.mxu0
      %v1991 = vmax.f32 %v1975, 0.0
      %v1992 = vmax.f32 %v1988, 0.0
      %v1993 = vpack.c.bf16 %v1991, %v1991
      %v1994 = vpack.c.bf16 %v1992, %v1992
      %v1995 = vld [vmem:[%s12] sm:$0xf]
      %v1996 = vld [vmem:[%s12 + $0x4] sm:$0xf]
      %v1997 = vld [vmem:[%s12 + $0x8] sm:$0xf]
      %v1998 = vld [vmem:[%s12 + $0xc] sm:$0xf]
      %v1999 = vld [vmem:[%s12 + $0x10] sm:$0xf]
      %v2000 = vld [vmem:[%s12 + $0x14] sm:$0xf]
      %v2001 = vld [vmem:[%s12 + $0x18] sm:$0xf]
      %v2002 = vld [vmem:[%s12 + $0x1c] sm:$0xf]
      %v2003 = vld [vmem:[%s12 + $0x20] sm:$0xf]
      %v2004 = vld [vmem:[%s12 + $0x24] sm:$0xf]
      %v2005 = vld [vmem:[%s12 + $0x28] sm:$0xf]
      %v2006 = vld [vmem:[%s12 + $0x2c] sm:$0xf]
      %v2007 = vld [vmem:[%s12 + $0x30] sm:$0xf]
      %v2008 = vld [vmem:[%s12 + $0x34] sm:$0xf]
      %v2009 = vld [vmem:[%s12 + $0x38] sm:$0xf]
      %v2010 = vld [vmem:[%s12 + $0x3c] sm:$0xf]
      %v2011 = vld [vmem:[%s12 + $0x40] sm:$0xf]
      %v2012 = vld [vmem:[%s12 + $0x44] sm:$0xf]
      %v2013 = vld [vmem:[%s12 + $0x48] sm:$0xf]
      %v2014 = vld [vmem:[%s12 + $0x4c] sm:$0xf]
      %v2015 = vld [vmem:[%s12 + $0x50] sm:$0xf]
      %v2016 = vld [vmem:[%s12 + $0x54] sm:$0xf]
      %v2017 = vld [vmem:[%s12 + $0x58] sm:$0xf]
      %v2018 = vld [vmem:[%s12 + $0x5c] sm:$0xf]
      %v2019 = vld [vmem:[%s12 + $0x60] sm:$0xf]
      %v2020 = vld [vmem:[%s12 + $0x64] sm:$0xf]
      %v2021 = vld [vmem:[%s12 + $0x68] sm:$0xf]
      %v2022 = vld [vmem:[%s12 + $0x6c] sm:$0xf]
      %v2023 = vld [vmem:[%s12 + $0x70] sm:$0xf]
      %v2024 = vld [vmem:[%s12 + $0x74] sm:$0xf]
      %v2025 = vld [vmem:[%s12 + $0x78] sm:$0xf]
      %v2026 = vld [vmem:[%s12 + $0x7c] sm:$0xf]
      %v2027 = vld [vmem:[%s13] sm:$0x1]
      %v2029 = vperm.slane %v2027, 0
      %v2063 = vunpack.c.l.b16 %v1995
      %v2064 = vunpack.c.l.b16 %v1996
      %v2065 = vunpack.c.l.b16 %v1997
      %v2066 = vunpack.c.l.b16 %v1998
      %v2067 = vunpack.c.l.b16 %v1999
      %v2068 = vunpack.c.l.b16 %v2000
      %v2069 = vunpack.c.l.b16 %v2001
      %v2070 = vunpack.c.l.b16 %v2002
      %v2071 = vunpack.c.l.b16 %v2003
      %v2072 = vunpack.c.l.b16 %v2004
      %v2073 = vunpack.c.l.b16 %v2005
      %v2074 = vunpack.c.l.b16 %v2006
      %v2075 = vunpack.c.l.b16 %v2007
      %v2076 = vunpack.c.l.b16 %v2008
      %v2077 = vunpack.c.l.b16 %v2009
      %v2078 = vunpack.c.l.b16 %v2010
      %v2079 = vunpack.c.l.b16 %v2011
      %v2080 = vunpack.c.l.b16 %v2012
      %v2081 = vunpack.c.l.b16 %v2013
      %v2082 = vunpack.c.l.b16 %v2014
      %v2083 = vunpack.c.l.b16 %v2015
      %v2084 = vunpack.c.l.b16 %v2016
      %v2085 = vunpack.c.l.b16 %v2017
      %v2086 = vunpack.c.l.b16 %v2018
      %v2087 = vunpack.c.l.b16 %v2019
      %v2088 = vunpack.c.l.b16 %v2020
      %v2089 = vunpack.c.l.b16 %v2021
      %v2090 = vunpack.c.l.b16 %v2022
      %v2091 = vunpack.c.l.b16 %v2023
      %v2092 = vunpack.c.l.b16 %v2024
      %v2093 = vunpack.c.l.b16 %v2025
      %v2094 = vunpack.c.l.b16 %v2026
      %v2095 = vpack.c.b16 %v2064, %v2063
      %v2096 = vpack.c.b16 %v2066, %v2065
      %v2097 = vpack.c.b16 %v2068, %v2067
      %v2098 = vpack.c.b16 %v2070, %v2069
      %v2099 = vpack.c.b16 %v2072, %v2071
      %v2100 = vpack.c.b16 %v2074, %v2073
      %v2101 = vpack.c.b16 %v2076, %v2075
      %v2102 = vpack.c.b16 %v2078, %v2077
      %v2103 = vpack.c.b16 %v2080, %v2079
      %v2104 = vpack.c.b16 %v2082, %v2081
      %v2105 = vpack.c.b16 %v2084, %v2083
      %v2106 = vpack.c.b16 %v2086, %v2085
      %v2107 = vpack.c.b16 %v2088, %v2087
      %v2108 = vpack.c.b16 %v2090, %v2089
      %v2109 = vpack.c.b16 %v2092, %v2091
      %v2110 = vpack.c.b16 %v2094, %v2093
      %2127 = vmatpush.bf16.msra.mxu0 %v2102
      %2128 = vmatpush.bf16.msra.mxu0 %v2101
      %2129 = vmatpush.bf16.msra.mxu0 %v2100
      %2130 = vmatpush.bf16.msra.mxu0 %v2099
      %2131 = vmatpush.bf16.msra.mxu0 %v2098
      %2132 = vmatpush.bf16.msra.mxu0 %v2097
      %2133 = vmatpush.bf16.msra.mxu0 %v2096
      %2134 = vmatpush.bf16.msra.mxu0 %v2095
      %2135 = vmatmul.bf16.gmra.mxu0 %v1993
      %v2136 = vpop.f32.mrf.mxu0
      %v2137 = vadd.f32 %v2029, %v2136
      %v2138 = vpop.f32.mrf.mxu0
      %2139 = vdwg.mxu0
      %2140 = vmatpush.bf16.msra.mxu0 %v2110
      %2141 = vmatpush.bf16.msra.mxu0 %v2109
      %2142 = vmatpush.bf16.msra.mxu0 %v2108
      %2143 = vmatpush.bf16.msra.mxu0 %v2107
      %2144 = vmatpush.bf16.msra.mxu0 %v2106
      %2145 = vmatpush.bf16.msra.mxu0 %v2105
      %2146 = vmatpush.bf16.msra.mxu0 %v2104
      %2147 = vmatpush.bf16.msra.mxu0 %v2103
      %2148 = vmatmul.bf16.gmra.mxu0 %v1994
      %v2149 = vpop.f32.mrf.mxu0
      %v2150 = vadd.f32 %v2137, %v2149
      %v2151 = vpop.f32.mrf.mxu0
      %2152 = vdwg.mxu0
      %2153 = vst [vmem:[#allocation3] sm:$0x3] %v2150
    $region69: #{_forward_device.9} parent=1 // pred_fallthru
      _
    // Predicated region
    $region70: #{_forward_device.9} parent=1 // pred_check
      _
    $region71: #{_forward_device.9} parent=1 // pred_check_branch
      %2155 = sbr.rel (0) target = $region73
    $region72: #{_forward_device.9} parent=1 // pred_region
      %2157 = vsyncadd [#allocation4], 0
      %s2159 = sshll.u32 [#allocation3], 4
      %s2160 = int_to_ptr.vmem [resolvable:$true] %s2159
      %s2161 = sshll.u32 %s14, 4
      %s2162 = int_to_ptr.hbm [resolvable:$true] %s2161
      %2164 = dma.vmem_to_hbm [thread:$0]  %s2160, 32, %s2162, [#allocation4]
    $region73: #{_forward_device.9} parent=1 // pred_fallthru
      _
    // Predicated region
    $region74: #{_forward_device.9} parent=1 // pred_check
      _
    $region75: #{_forward_device.9} parent=1 // pred_check_branch
      %2166 = sbr.rel (0) target = $region77
    $region76: #{_forward_device.9} parent=1 // pred_region
      %2168 = dma.done [#allocation4], 32
    $region77: #{_forward_device.9} parent=1 // pred_fallthru
      _
    %2169 = vsyncpa [#allocation4], 1

// kernel: _forward_device.6
$region0: #{_forward_device.6}
  #allocation0 [shape = 'u32[]', space=smem, size = 0x4, offset = 0x4, fixed_abs, tag = 'smem constant byte address 0x4 - core index']
  #allocation1 [shape = 'u32[72,128]{1,0:T(1,128)}', space=vmem, size = 0x9000, scoped, tag = 'internal scratch']
  #allocation2 [shape = 'bf16[128,128]{1,0:T(8,128)(2,1)}', space=vmem, size = 0x8000, scoped, tag = 'scratch operand']
  #allocation3 [shape = 'f32[4,128,1]{2,1,0:T(8,128)}', space=vmem, size = 0x40000, scoped, tag = 'scratch operand']
  #allocation4 [shape = 'f32[4,128,1]{2,1,0:T(8,128)}', space=vmem, size = 0x40000, scoped, tag = 'scratch operand']
  #allocation5 [shape = 'f32[128,128]{1,0:T(8,128)}', space=vmem, size = 0x10000, scoped, tag = 'scratch operand']
  %s0 = inlined_call_operand.vmem [shape: bf16[2,128,128], index: 0, kind: input, shape index: {}, may-alias: {0,1}]
  %s1 = inlined_call_operand.vmem [shape: bf16[2,128,128], index: 1, kind: input, shape index: {}, may-alias: {0,1}]
  %s2 = inlined_call_operand.vmem [shape: f32[2,1,128], index: 2, kind: input, shape index: {}]
  %s3 = inlined_call_operand.vmem [shape: bf16[128,384], index: 3, kind: input, shape index: {}]
  %s4 = inlined_call_operand.vmem [shape: f32[1,384], index: 4, kind: input, shape index: {}]
  %s5 = inlined_call_operand.vmem [shape: bf16[128,128], index: 5, kind: input, shape index: {}]
  %s6 = inlined_call_operand.vmem [shape: f32[1,128], index: 6, kind: input, shape index: {}]
  %s7 = inlined_call_operand.vmem [shape: f32[1,128], index: 7, kind: input, shape index: {}]
  %s8 = inlined_call_operand.vmem [shape: f32[1,128], index: 8, kind: input, shape index: {}]
  %s9 = inlined_call_operand.vmem [shape: bf16[2,128,128], index: 9, kind: output, shape index: {}]
  %s10 = sld [smem:[#allocation0]]
  $region77: #{_forward_device.6} parent=0
    _
  %s12 = ssub.s32 1, %s10
  %s13 = scalar_select 0, %s12, %s10
  loop: start=0, step=1, limit=4
  $region2: #{_forward_device.6} parent=0 // loop_pre_header
    _
  $region3: #{_forward_device.6} parent=0 // loop_header
    %s15 = sphi 0, %s19
    %p16 = scmp.ge.s32.totalorder %s15, 4
    %s22 = sphi 0, %s34
    %s23 = sphi 0, %s30
    %s24 = sphi 0, %s22
    %s25 = sphi 0, %s23
    %s26 = sphi 0, %s24
    %s27 = sphi 0, %s25
    %s37 = sphi 0, %s39
    %s40 = sphi 0, %s37
    %s41 = sphi 0, %s40
    %s57 = sphi 0, %s41
    %s65 = sphi 0, %s67
    %s68 = sphi 0, %s65
    %s69 = sphi 0, %s68
    %s85 = sphi 0, %s69
    %s93 = sphi 0, %s95
    %s96 = sphi 0, %s93
    %s97 = sphi 0, %s96
    %s113 = sphi 0, %s97
    %s117 = sphi 0, %s117
    %s119 = sphi 0, %s117
    %s120 = sphi 0, %s119
    %s134 = sphi 0, %s120
    %s138 = sphi 0, %s138
    %s140 = sphi 0, %s138
    %s141 = sphi 0, %s140
    %s155 = sphi 0, %s141
    %s159 = sphi 0, %s159
    %s161 = sphi 0, %s159
    %s162 = sphi 0, %s161
    %s176 = sphi 0, %s162
    %s180 = sphi 0, %s180
    %s182 = sphi 0, %s180
    %s183 = sphi 0, %s182
    %s197 = sphi 0, %s183
    %s201 = sphi 0, %s201
    %s203 = sphi 0, %s201
    %s204 = sphi 0, %s203
    %s218 = sphi 0, %s204
    %s222 = sphi 0, %s222
    %s224 = sphi 0, %s222
    %s225 = sphi 0, %s224
    %s239 = sphi 0, %s225
    %s245 = sphi 0, %s247
    %s248 = sphi 0, %s245
    %s249 = sphi 0, %s248
    %s265 = sphi 0, %s249
  $region4: #{_forward_device.6} parent=0 // loop_header_branch
    %18 = sbr.rel (%p16) target = $region8
  $region5: #{_forward_device.6} parent=0 // loop_body
    %s20 = ssub.s32 %s15, 1
    %s21 = ssub.s32 %s15, 2
    %s28 = sadd.s32 1, %s23
    %p29 = scmp.ge.s32.totalorder %s28, 1
    %s30 = scalar_select %p29, 0, %s28
    %s31 = sadd.s32 1, %s22
    %s32 = scalar_select %p29, %s31, %s22
    %p33 = scmp.ge.s32.totalorder %s32, 2
    %s34 = scalar_select %p33, 0, %s32
    %s35 = ssub.s32 %s22, %s34
    %p36 = scmp.eq.s32.totalorder %s35, 0
    %s38 = sadd.s32 %s37, 1
    %s39 = scalar_select %p36, %s37, %s38
    %p42 = pneg %p36
    %p43 = scmp.eq.s32.totalorder %s15, 1
    %p44 = por %p42, %p43
    %p45 = scmp.ne.s32.totalorder %s37, %s40
    %p46 = scmp.eq.s32.totalorder %s15, 0
    %p47 = por %p45, %p46
    %p48 = scmp.ne.s32.totalorder %s37, %s40
    %p49 = scmp.eq.s32.totalorder %s20, 1
    %p50 = por %p48, %p49
    %p51 = scmp.ne.s32.totalorder %s40, %s41
    %p52 = scmp.eq.s32.totalorder %s20, 0
    %p53 = por %p51, %p52
    %p54 = scmp.ne.s32.totalorder %s40, %s41
    %p55 = scmp.eq.s32.totalorder %s21, 1
    %p56 = por %p54, %p55
    %p58 = scmp.ne.s32.totalorder %s41, %s57
    %p59 = scmp.eq.s32.totalorder %s21, 0
    %p60 = por %p58, %p59
    %s61 = ssub.s32 %s22, %s34
    %s62 = ssub.s32 %s23, %s30
    %s63 = sor.u32 %s61, %s62
    %p64 = scmp.eq.s32.totalorder %s63, 0
    %s66 = sadd.s32 %s65, 1
    %s67 = scalar_select %p64, %s65, %s66
    %p70 = pneg %p64
    %p71 = scmp.eq.s32.totalorder %s15, 1
    %p72 = por %p70, %p71
    %p73 = scmp.ne.s32.totalorder %s65, %s68
    %p74 = scmp.eq.s32.totalorder %s15, 0
    %p75 = por %p73, %p74
    %p76 = scmp.ne.s32.totalorder %s65, %s68
    %p77 = scmp.eq.s32.totalorder %s20, 1
    %p78 = por %p76, %p77
    %p79 = scmp.ne.s32.totalorder %s68, %s69
    %p80 = scmp.eq.s32.totalorder %s20, 0
    %p81 = por %p79, %p80
    %p82 = scmp.ne.s32.totalorder %s68, %s69
    %p83 = scmp.eq.s32.totalorder %s21, 1
    %p84 = por %p82, %p83
    %p86 = scmp.ne.s32.totalorder %s69, %s85
    %p87 = scmp.eq.s32.totalorder %s21, 0
    %p88 = por %p86, %p87
    %s89 = ssub.s32 %s22, %s34
    %s90 = ssub.s32 %s23, %s30
    %s91 = sor.u32 %s89, %s90
    %p92 = scmp.eq.s32.totalorder %s91, 0
    %s94 = sadd.s32 %s93, 1
    %s95 = scalar_select %p92, %s93, %s94
    %p98 = pneg %p92
    %p99 = scmp.eq.s32.totalorder %s15, 1
    %p100 = por %p98, %p99
    %p101 = scmp.ne.s32.totalorder %s93, %s96
    %p102 = scmp.eq.s32.totalorder %s15, 0
    %p103 = por %p101, %p102
    %p104 = scmp.ne.s32.totalorder %s93, %s96
    %p105 = scmp.eq.s32.totalorder %s20, 1
    %p106 = por %p104, %p105
    %p107 = scmp.ne.s32.totalorder %s96, %s97
    %p108 = scmp.eq.s32.totalorder %s20, 0
    %p109 = por %p107, %p108
    %p110 = scmp.ne.s32.totalorder %s96, %s97
    %p111 = scmp.eq.s32.totalorder %s21, 1
    %p112 = por %p110, %p111
    %p114 = scmp.ne.s32.totalorder %s97, %s113
    %p115 = scmp.eq.s32.totalorder %s21, 0
    %p116 = por %p114, %p115
    %s118 = sadd.s32 %s117, 1
    %p121 = scmp.eq.s32.totalorder %s15, 1
    %p122 = scmp.ne.s32.totalorder %s117, %s119
    %p123 = scmp.eq.s32.totalorder %s15, 0
    %p124 = por %p122, %p123
    %p125 = scmp.ne.s32.totalorder %s117, %s119
    %p126 = scmp.eq.s32.totalorder %s20, 1
    %p127 = por %p125, %p126
    %p128 = scmp.ne.s32.totalorder %s119, %s120
    %p129 = scmp.eq.s32.totalorder %s20, 0
    %p130 = por %p128, %p129
    %p131 = scmp.ne.s32.totalorder %s119, %s120
    %p132 = scmp.eq.s32.totalorder %s21, 1
    %p133 = por %p131, %p132
    %p135 = scmp.ne.s32.totalorder %s120, %s134
    %p136 = scmp.eq.s32.totalorder %s21, 0
    %p137 = por %p135, %p136
    %s139 = sadd.s32 %s138, 1
    %p142 = scmp.eq.s32.totalorder %s15, 1
    %p143 = scmp.ne.s32.totalorder %s138, %s140
    %p144 = scmp.eq.s32.totalorder %s15, 0
    %p145 = por %p143, %p144
    %p146 = scmp.ne.s32.totalorder %s138, %s140
    %p147 = scmp.eq.s32.totalorder %s20, 1
    %p148 = por %p146, %p147
    %p149 = scmp.ne.s32.totalorder %s140, %s141
    %p150 = scmp.eq.s32.totalorder %s20, 0
    %p151 = por %p149, %p150
    %p152 = scmp.ne.s32.totalorder %s140, %s141
    %p153 = scmp.eq.s32.totalorder %s21, 1
    %p154 = por %p152, %p153
    %p156 = scmp.ne.s32.totalorder %s141, %s155
    %p157 = scmp.eq.s32.totalorder %s21, 0
    %p158 = por %p156, %p157
    %s160 = sadd.s32 %s159, 1
    %p163 = scmp.eq.s32.totalorder %s15, 1
    %p164 = scmp.ne.s32.totalorder %s159, %s161
    %p165 = scmp.eq.s32.totalorder %s15, 0
    %p166 = por %p164, %p165
    %p167 = scmp.ne.s32.totalorder %s159, %s161
    %p168 = scmp.eq.s32.totalorder %s20, 1
    %p169 = por %p167, %p168
    %p170 = scmp.ne.s32.totalorder %s161, %s162
    %p171 = scmp.eq.s32.totalorder %s20, 0
    %p172 = por %p170, %p171
    %p173 = scmp.ne.s32.totalorder %s161, %s162
    %p174 = scmp.eq.s32.totalorder %s21, 1
    %p175 = por %p173, %p174
    %p177 = scmp.ne.s32.totalorder %s162, %s176
    %p178 = scmp.eq.s32.totalorder %s21, 0
    %p179 = por %p177, %p178
    %s181 = sadd.s32 %s180, 1
    %p184 = scmp.eq.s32.totalorder %s15, 1
    %p185 = scmp.ne.s32.totalorder %s180, %s182
    %p186 = scmp.eq.s32.totalorder %s15, 0
    %p187 = por %p185, %p186
    %p188 = scmp.ne.s32.totalorder %s180, %s182
    %p189 = scmp.eq.s32.totalorder %s20, 1
    %p190 = por %p188, %p189
    %p191 = scmp.ne.s32.totalorder %s182, %s183
    %p192 = scmp.eq.s32.totalorder %s20, 0
    %p193 = por %p191, %p192
    %p194 = scmp.ne.s32.totalorder %s182, %s183
    %p195 = scmp.eq.s32.totalorder %s21, 1
    %p196 = por %p194, %p195
    %p198 = scmp.ne.s32.totalorder %s183, %s197
    %p199 = scmp.eq.s32.totalorder %s21, 0
    %p200 = por %p198, %p199
    %s202 = sadd.s32 %s201, 1
    %p205 = scmp.eq.s32.totalorder %s15, 1
    %p206 = scmp.ne.s32.totalorder %s201, %s203
    %p207 = scmp.eq.s32.totalorder %s15, 0
    %p208 = por %p206, %p207
    %p209 = scmp.ne.s32.totalorder %s201, %s203
    %p210 = scmp.eq.s32.totalorder %s20, 1
    %p211 = por %p209, %p210
    %p212 = scmp.ne.s32.totalorder %s203, %s204
    %p213 = scmp.eq.s32.totalorder %s20, 0
    %p214 = por %p212, %p213
    %p215 = scmp.ne.s32.totalorder %s203, %s204
    %p216 = scmp.eq.s32.totalorder %s21, 1
    %p217 = por %p215, %p216
    %p219 = scmp.ne.s32.totalorder %s204, %s218
    %p220 = scmp.eq.s32.totalorder %s21, 0
    %p221 = por %p219, %p220
    %s223 = sadd.s32 %s222, 1
    %p226 = scmp.eq.s32.totalorder %s15, 1
    %p227 = scmp.ne.s32.totalorder %s222, %s224
    %p228 = scmp.eq.s32.totalorder %s15, 0
    %p229 = por %p227, %p228
    %p230 = scmp.ne.s32.totalorder %s222, %s224
    %p231 = scmp.eq.s32.totalorder %s20, 1
    %p232 = por %p230, %p231
    %p233 = scmp.ne.s32.totalorder %s224, %s225
    %p234 = scmp.eq.s32.totalorder %s20, 0
    %p235 = por %p233, %p234
    %p236 = scmp.ne.s32.totalorder %s224, %s225
    %p237 = scmp.eq.s32.totalorder %s21, 1
    %p238 = por %p236, %p237
    %p240 = scmp.ne.s32.totalorder %s225, %s239
    %p241 = scmp.eq.s32.totalorder %s21, 0
    %p242 = por %p240, %p241
    %s243 = ssub.s32 %s22, %s34
    %p244 = scmp.eq.s32.totalorder %s243, 0
    %s246 = sadd.s32 %s245, 1
    %s247 = scalar_select %p244, %s245, %s246
    %p250 = pneg %p244
    %p251 = scmp.eq.s32.totalorder %s15, 1
    %p252 = por %p250, %p251
    %p253 = scmp.ne.s32.totalorder %s245, %s248
    %p254 = scmp.eq.s32.totalorder %s15, 0
    %p255 = por %p253, %p254
    %p256 = scmp.ne.s32.totalorder %s245, %s248
    %p257 = scmp.eq.s32.totalorder %s20, 1
    %p258 = por %p256, %p257
    %p259 = scmp.ne.s32.totalorder %s248, %s249
    %p260 = scmp.eq.s32.totalorder %s20, 0
    %p261 = por %p259, %p260
    %p262 = scmp.ne.s32.totalorder %s248, %s249
    %p263 = scmp.eq.s32.totalorder %s21, 1
    %p264 = por %p262, %p263
    %p266 = scmp.ne.s32.totalorder %s249, %s265
    %p267 = scmp.eq.s32.totalorder %s21, 0
    %p268 = por %p266, %p267
    %p269 = scmp.le.s32.totalorder 1, %s15
    %p270 = scmp.lt.s32.totalorder %s15, 3
    %p271 = pnand %p269, %p270
    %p272 = pneg %p271
    // Predicated region
    $region9: #{_forward_device.6} parent=5 // pred_check
      _
    $region10: #{_forward_device.6} parent=5 // pred_check_branch
      %274 = sbr.rel (%p271) target = $region12
    $region11: #{_forward_device.6} parent=5 // pred_region
      %s275 = ssub.s32 %s15, 1
      // Predicated region
      $region13: #{_forward_device.6} parent=11 // pred_check
        %p276 = pneg %p130
      $region14: #{_forward_device.6} parent=11 // pred_check_branch
        %278 = sbr.rel (%p276) target = $region16
      $region15: #{_forward_device.6} parent=11 // pred_region
        _
      $region16: #{_forward_device.6} parent=11 // pred_fallthru
        _
      // Predicated region
      $region17: #{_forward_device.6} parent=11 // pred_check
        %p279 = pneg %p151
      $region18: #{_forward_device.6} parent=11 // pred_check_branch
        %281 = sbr.rel (%p279) target = $region20
      $region19: #{_forward_device.6} parent=11 // pred_region
        _
      $region20: #{_forward_device.6} parent=11 // pred_fallthru
        _
      // Predicated region
      $region21: #{_forward_device.6} parent=11 // pred_check
        %p282 = pneg %p172
      $region22: #{_forward_device.6} parent=11 // pred_check_branch
        %284 = sbr.rel (%p282) target = $region24
      $region23: #{_forward_device.6} parent=11 // pred_region
        _
      $region24: #{_forward_device.6} parent=11 // pred_fallthru
        _
      // Predicated region
      $region25: #{_forward_device.6} parent=11 // pred_check
        %p285 = pneg %p193
      $region26: #{_forward_device.6} parent=11 // pred_check_branch
        %287 = sbr.rel (%p285) target = $region28
      $region27: #{_forward_device.6} parent=11 // pred_region
        _
      $region28: #{_forward_device.6} parent=11 // pred_fallthru
        _
      // Predicated region
      $region29: #{_forward_device.6} parent=11 // pred_check
        %p288 = pneg %p214
      $region30: #{_forward_device.6} parent=11 // pred_check_branch
        %290 = sbr.rel (%p288) target = $region32
      $region31: #{_forward_device.6} parent=11 // pred_region
        _
      $region32: #{_forward_device.6} parent=11 // pred_fallthru
        _
      // Predicated region
      $region33: #{_forward_device.6} parent=11 // pred_check
        %p291 = pneg %p235
      $region34: #{_forward_device.6} parent=11 // pred_check_branch
        %293 = sbr.rel (%p291) target = $region36
      $region35: #{_forward_device.6} parent=11 // pred_region
        _
      $region36: #{_forward_device.6} parent=11 // pred_fallthru
        _
    $region12: #{_forward_device.6} parent=5 // pred_fallthru
      _
    %p294 = scmp.lt.s32.totalorder %s15, 2
    // Predicated region
    $region37: #{_forward_device.6} parent=5 // pred_check
      %p295 = pneg %p294
    $region38: #{_forward_device.6} parent=5 // pred_check_branch
      %297 = sbr.rel (%p295) target = $region40
    $region39: #{_forward_device.6} parent=5 // pred_region
      // Predicated region
      $region41: #{_forward_device.6} parent=39 // pred_check
        %p298 = pneg %p47
      $region42: #{_forward_device.6} parent=39 // pred_check_branch
        %300 = sbr.rel (%p298) target = $region44
      $region43: #{_forward_device.6} parent=39 // pred_region
        %p301 = scmp.lt.s32.totalorder %s22, 1
        %s302 = scalar_select %p301, %s22, 1
        %s303 = smul.addr %s302, 16
        %s304 = smul.addr %s303, 4
        %s305 = scalar_lea.vmem %s0, %s304
      $region44: #{_forward_device.6} parent=39 // pred_fallthru
        _
      // Predicated region
      $region45: #{_forward_device.6} parent=39 // pred_check
        %p306 = pneg %p75
      $region46: #{_forward_device.6} parent=39 // pred_check_branch
        %308 = sbr.rel (%p306) target = $region48
      $region47: #{_forward_device.6} parent=39 // pred_region
        %s309 = smul.u32 16, %s23
        %p310 = scmp.lt.s32.totalorder %s22, 1
        %s311 = scalar_select %p310, %s22, 1
        %p312 = scmp.lt.s32.totalorder %s309, 15
        %s313 = scalar_select %p312, %s309, 15
        %s314 = smul.addr %s311, 16
        %s315 = sadd.s32 %s313, %s314
        %s316 = smul.addr %s315, 4
        %s317 = scalar_lea.vmem %s1, %s316
        %s318 = smul.u32 16, %s23
      $region48: #{_forward_device.6} parent=39 // pred_fallthru
        _
      // Predicated region
      $region49: #{_forward_device.6} parent=39 // pred_check
        %p319 = pneg %p103
      $region50: #{_forward_device.6} parent=39 // pred_check_branch
        %321 = sbr.rel (%p319) target = $region52
      $region51: #{_forward_device.6} parent=39 // pred_region
        %p322 = scmp.lt.s32.totalorder %s22, 1
        %s323 = scalar_select %p322, %s22, 1
        %p324 = scmp.lt.s32.totalorder %s23, 0
        %s325 = scalar_select %p324, %s23, 0
        %s326 = sadd.s32 %s325, %s323
        %s327 = scalar_lea.vmem %s2, %s326
      $region52: #{_forward_device.6} parent=39 // pred_fallthru
        _
    $region40: #{_forward_device.6} parent=5 // pred_fallthru
      _
    %p328 = scmp.le.s32.totalorder 1, %s15
    %p329 = scmp.lt.s32.totalorder %s15, 3
    %p330 = pnand %p328, %p329
    %p331 = pneg %p330
    // Predicated region
    $region53: #{_forward_device.6} parent=5 // pred_check
      _
    $region54: #{_forward_device.6} parent=5 // pred_check_branch
      %333 = sbr.rel (%p330) target = $region56
    $region55: #{_forward_device.6} parent=5 // pred_region
      %s334 = ssub.s32 %s15, 1
      %p335 = scmp.lt.s32.totalorder %s24, 1
      %s336 = scalar_select %p335, %s24, 1
      %s337 = smul.addr %s336, 16
      %s338 = smul.addr %s337, 4
      %s339 = scalar_lea.vmem %s0, %s338
      %p340 = pneg %p53
      %p341 = pneg %p50
      %s342 = smul.u32 16, %s25
      %p343 = scmp.lt.s32.totalorder %s24, 1
      %s344 = scalar_select %p343, %s24, 1
      %p345 = scmp.lt.s32.totalorder %s342, 15
      %s346 = scalar_select %p345, %s342, 15
      %s347 = smul.addr %s344, 16
      %s348 = sadd.s32 %s346, %s347
      %s349 = smul.addr %s348, 4
      %s350 = scalar_lea.vmem %s1, %s349
      %p351 = pneg %p81
      %p352 = pneg %p78
      %p353 = scmp.lt.s32.totalorder %s24, 1
      %s354 = scalar_select %p353, %s24, 1
      %p355 = scmp.lt.s32.totalorder %s25, 0
      %s356 = scalar_select %p355, %s25, 0
      %s357 = sadd.s32 %s356, %s354
      %s358 = scalar_lea.vmem %s2, %s357
      %p359 = pneg %p109
      %p360 = pneg %p106
      %p361 = pneg %p130
      %p362 = pneg %p127
      %p363 = pneg %p151
      %p364 = pneg %p148
      %p365 = pneg %p172
      %p366 = pneg %p169
      %p367 = pneg %p193
      %p368 = pneg %p190
      %p369 = pneg %p214
      %p370 = pneg %p211
      %p371 = pneg %p235
      %p372 = pneg %p232
      %p373 = pneg %p261
      %p374 = pneg %p258
      %p375 = scmp.lt.s32.totalorder %s24, 1
      %s376 = scalar_select %p375, %s24, 1
      %s377 = smul.addr %s376, 16
      %s378 = smul.addr %s377, 4
      %s379 = scalar_lea.vmem %s9, %s378
      %p380 = scmp.lt.s32.totalorder %s24, 1
      %s381 = scalar_select %p380, %s24, 1
      %s382 = smul.addr %s381, 16
      %s383 = smul.addr %s382, 4
      %s384 = scalar_lea.vmem %s0, %s383
      %s385 = smul.u32 16, %s25
      %p386 = scmp.lt.s32.totalorder %s24, 1
      %s387 = scalar_select %p386, %s24, 1
      %p388 = scmp.lt.s32.totalorder %s385, 15
      %s389 = scalar_select %p388, %s385, 15
      %s390 = smul.addr %s387, 16
      %s391 = sadd.s32 %s389, %s390
      %s392 = smul.addr %s391, 4
      %s393 = scalar_lea.vmem %s1, %s392
      %s394 = smul.u32 16, %s25
      %p395 = scmp.lt.s32.totalorder %s24, 1
      %s396 = scalar_select %p395, %s24, 1
      %p397 = scmp.lt.s32.totalorder %s25, 0
      %s398 = scalar_select %p397, %s25, 0
      %s399 = sadd.s32 %s398, %s396
      %s400 = scalar_lea.vmem %s2, %s399
      %p401 = scmp.lt.s32.totalorder %s24, 1
      %s402 = scalar_select %p401, %s24, 1
      %s403 = smul.addr %s402, 16
      %s404 = smul.addr %s403, 4
      %s405 = scalar_lea.vmem %s9, %s404
      %p406 = scmp.eq.s32.totalorder %s25, 0
      // Predicated region
      $region57: #{_forward_device.6} parent=55 // pred_check
        %p407 = pneg %p406
      $region58: #{_forward_device.6} parent=55 // pred_check_branch
        %409 = sbr.rel (%p407) target = $region60
      $region59: #{_forward_device.6} parent=55 // pred_region
        %v410 = vld [vmem:[%s384] sm:$0xf]
        %v411 = vld [vmem:[%s384 + $0x4] sm:$0xf]
        %v412 = vld [vmem:[%s384 + $0x8] sm:$0xf]
        %v413 = vld [vmem:[%s384 + $0xc] sm:$0xf]
        %v414 = vld [vmem:[%s384 + $0x10] sm:$0xf]
        %v415 = vld [vmem:[%s384 + $0x14] sm:$0xf]
        %v416 = vld [vmem:[%s384 + $0x18] sm:$0xf]
        %v417 = vld [vmem:[%s384 + $0x1c] sm:$0xf]
        %v418 = vld [vmem:[%s384 + $0x20] sm:$0xf]
        %v419 = vld [vmem:[%s384 + $0x24] sm:$0xf]
        %v420 = vld [vmem:[%s384 + $0x28] sm:$0xf]
        %v421 = vld [vmem:[%s384 + $0x2c] sm:$0xf]
        %v422 = vld [vmem:[%s384 + $0x30] sm:$0xf]
        %v423 = vld [vmem:[%s384 + $0x34] sm:$0xf]
        %v424 = vld [vmem:[%s384 + $0x38] sm:$0xf]
        %v425 = vld [vmem:[%s384 + $0x3c] sm:$0xf]
        %v426 = vld [vmem:[%s3] sm:$0xf]
        %v427 = vld [vmem:[%s3 + $0xc] sm:$0xf]
        %v428 = vld [vmem:[%s3 + $0x18] sm:$0xf]
        %v429 = vld [vmem:[%s3 + $0x24] sm:$0xf]
        %v430 = vld [vmem:[%s3 + $0x30] sm:$0xf]
        %v431 = vld [vmem:[%s3 + $0x3c] sm:$0xf]
        %v432 = vld [vmem:[%s3 + $0x48] sm:$0xf]
        %v433 = vld [vmem:[%s3 + $0x54] sm:$0xf]
        %v434 = vld [vmem:[%s3 + $0x60] sm:$0xf]
        %v435 = vld [vmem:[%s3 + $0x6c] sm:$0xf]
        %v436 = vld [vmem:[%s3 + $0x78] sm:$0xf]
        %v437 = vld [vmem:[%s3 + $0x84] sm:$0xf]
        %v438 = vld [vmem:[%s3 + $0x90] sm:$0xf]
        %v439 = vld [vmem:[%s3 + $0x9c] sm:$0xf]
        %v440 = vld [vmem:[%s3 + $0xa8] sm:$0xf]
        %v441 = vld [vmem:[%s3 + $0xb4] sm:$0xf]
        %v442 = vld [vmem:[%s4] sm:$0x1]
        %v444 = vperm.slane %v442, 0
        %v462 = vunpack.c.l.b16 %v410
        %v463 = vunpack.c.l.b16 %v411
        %v464 = vunpack.c.l.b16 %v412
        %v465 = vunpack.c.l.b16 %v413
        %v466 = vunpack.c.l.b16 %v414
        %v467 = vunpack.c.l.b16 %v415
        %v468 = vunpack.c.l.b16 %v416
        %v469 = vunpack.c.l.b16 %v417
        %v470 = vunpack.c.l.b16 %v418
        %v471 = vunpack.c.l.b16 %v419
        %v472 = vunpack.c.l.b16 %v420
        %v473 = vunpack.c.l.b16 %v421
        %v474 = vunpack.c.l.b16 %v422
        %v475 = vunpack.c.l.b16 %v423
        %v476 = vunpack.c.l.b16 %v424
        %v477 = vunpack.c.l.b16 %v425
        %v478 = vpack.c.b16 %v463, %v462
        %v479 = vpack.c.b16 %v465, %v464
        %v480 = vpack.c.b16 %v467, %v466
        %v481 = vpack.c.b16 %v469, %v468
        %v482 = vpack.c.b16 %v471, %v470
        %v483 = vpack.c.b16 %v473, %v472
        %v484 = vpack.c.b16 %v475, %v474
        %v485 = vpack.c.b16 %v477, %v476
        %v510 = vunpack.c.l.b16 %v426
        %v511 = vunpack.c.l.b16 %v427
        %v512 = vunpack.c.l.b16 %v428
        %v513 = vunpack.c.l.b16 %v429
        %v514 = vunpack.c.l.b16 %v430
        %v515 = vunpack.c.l.b16 %v431
        %v516 = vunpack.c.l.b16 %v432
        %v517 = vunpack.c.l.b16 %v433
        %v518 = vunpack.c.l.b16 %v434
        %v519 = vunpack.c.l.b16 %v435
        %v520 = vunpack.c.l.b16 %v436
        %v521 = vunpack.c.l.b16 %v437
        %v522 = vunpack.c.l.b16 %v438
        %v523 = vunpack.c.l.b16 %v439
        %v524 = vunpack.c.l.b16 %v440
        %v525 = vunpack.c.l.b16 %v441
        %v526 = vpack.c.b16 %v511, %v510
        %v527 = vpack.c.b16 %v513, %v512
        %v528 = vpack.c.b16 %v515, %v514
        %v529 = vpack.c.b16 %v517, %v516
        %v530 = vpack.c.b16 %v519, %v518
        %v531 = vpack.c.b16 %v521, %v520
        %v532 = vpack.c.b16 %v523, %v522
        %v533 = vpack.c.b16 %v525, %v524
        %542 = vmatpush.bf16.msra.mxu0 %v533
        %543 = vmatpush.bf16.msra.mxu0 %v532
        %544 = vmatpush.bf16.msra.mxu0 %v531
        %545 = vmatpush.bf16.msra.mxu0 %v530
        %546 = vmatpush.bf16.msra.mxu0 %v529
        %547 = vmatpush.bf16.msra.mxu0 %v528
        %548 = vmatpush.bf16.msra.mxu0 %v527
        %549 = vmatpush.bf16.msra.mxu0 %v526
        %550 = vmatmul.bf16.gmra.mxu0 %v478
        %v551 = vpop.f32.mrf.mxu0
        %v552 = vadd.f32 %v444, %v551
        %v553 = vpop.f32.mrf.mxu0
        %v554 = vadd.f32 %v444, %v553
        %555 = vmatmul.bf16.gmra.mxu0 %v479
        %v556 = vpop.f32.mrf.mxu0
        %v557 = vadd.f32 %v444, %v556
        %v558 = vpop.f32.mrf.mxu0
        %v559 = vadd.f32 %v444, %v558
        %560 = vmatmul.bf16.gmra.mxu0 %v480
        %v561 = vpop.f32.mrf.mxu0
        %v562 = vadd.f32 %v444, %v561
        %v563 = vpop.f32.mrf.mxu0
        %v564 = vadd.f32 %v444, %v563
        %565 = vmatmul.bf16.gmra.mxu0 %v481
        %v566 = vpop.f32.mrf.mxu0
        %v567 = vadd.f32 %v444, %v566
        %v568 = vpop.f32.mrf.mxu0
        %v569 = vadd.f32 %v444, %v568
        %570 = vmatmul.bf16.gmra.mxu0 %v482
        %v571 = vpop.f32.mrf.mxu0
        %v572 = vadd.f32 %v444, %v571
        %v573 = vpop.f32.mrf.mxu0
        %v574 = vadd.f32 %v444, %v573
        %575 = vmatmul.bf16.gmra.mxu0 %v483
        %v576 = vpop.f32.mrf.mxu0
        %v577 = vadd.f32 %v444, %v576
        %v578 = vpop.f32.mrf.mxu0
        %v579 = vadd.f32 %v444, %v578
        %580 = vmatmul.bf16.gmra.mxu0 %v484
        %v581 = vpop.f32.mrf.mxu0
        %v582 = vadd.f32 %v444, %v581
        %v583 = vpop.f32.mrf.mxu0
        %v584 = vadd.f32 %v444, %v583
        %585 = vmatmul.bf16.gmra.mxu0 %v485
        %v586 = vpop.f32.mrf.mxu0
        %v587 = vadd.f32 %v444, %v586
        %v588 = vpop.f32.mrf.mxu0
        %v589 = vadd.f32 %v444, %v588
        %590 = vdwg.mxu0
        %v591 = vmul.f32 %v552, 0.17677669
        %v592 = vmul.f32 %v554, 0.17677669
        %v593 = vmul.f32 %v557, 0.17677669
        %v594 = vmul.f32 %v559, 0.17677669
        %v595 = vmul.f32 %v562, 0.17677669
        %v596 = vmul.f32 %v564, 0.17677669
        %v597 = vmul.f32 %v567, 0.17677669
        %v598 = vmul.f32 %v569, 0.17677669
        %v599 = vmul.f32 %v572, 0.17677669
        %v600 = vmul.f32 %v574, 0.17677669
        %v601 = vmul.f32 %v577, 0.17677669
        %v602 = vmul.f32 %v579, 0.17677669
        %v603 = vmul.f32 %v582, 0.17677669
        %v604 = vmul.f32 %v584, 0.17677669
        %v605 = vmul.f32 %v587, 0.17677669
        %v606 = vmul.f32 %v589, 0.17677669
        %v607 = vpack.c.bf16 %v591, %v591
        %v608 = vpack.c.bf16 %v592, %v592
        %v609 = vpack.c.bf16 %v593, %v593
        %v610 = vpack.c.bf16 %v594, %v594
        %v611 = vpack.c.bf16 %v595, %v595
        %v612 = vpack.c.bf16 %v596, %v596
        %v613 = vpack.c.bf16 %v597, %v597
        %v614 = vpack.c.bf16 %v598, %v598
        %v615 = vpack.c.bf16 %v599, %v599
        %v616 = vpack.c.bf16 %v600, %v600
        %v617 = vpack.c.bf16 %v601, %v601
        %v618 = vpack.c.bf16 %v602, %v602
        %v619 = vpack.c.bf16 %v603, %v603
        %v620 = vpack.c.bf16 %v604, %v604
        %v621 = vpack.c.bf16 %v605, %v605
        %v622 = vpack.c.bf16 %v606, %v606
        %623 = vst [vmem:[#allocation2] sm:$0xf] %v607
        %624 = vst [vmem:[#allocation2 + $0x4] sm:$0xf] %v608
        %625 = vst [vmem:[#allocation2 + $0x8] sm:$0xf] %v609
        %626 = vst [vmem:[#allocation2 + $0xc] sm:$0xf] %v610
        %627 = vst [vmem:[#allocation2 + $0x10] sm:$0xf] %v611
        %628 = vst [vmem:[#allocation2 + $0x14] sm:$0xf] %v612
        %629 = vst [vmem:[#allocation2 + $0x18] sm:$0xf] %v613
        %630 = vst [vmem:[#allocation2 + $0x1c] sm:$0xf] %v614
        %631 = vst [vmem:[#allocation2 + $0x20] sm:$0xf] %v615
        %632 = vst [vmem:[#allocation2 + $0x24] sm:$0xf] %v616
        %633 = vst [vmem:[#allocation2 + $0x28] sm:$0xf] %v617
        %634 = vst [vmem:[#allocation2 + $0x2c] sm:$0xf] %v618
        %635 = vst [vmem:[#allocation2 + $0x30] sm:$0xf] %v619
        %636 = vst [vmem:[#allocation2 + $0x34] sm:$0xf] %v620
        %637 = vst [vmem:[#allocation2 + $0x38] sm:$0xf] %v621
        %638 = vst [vmem:[#allocation2 + $0x3c] sm:$0xf] %v622
        %vm639 = vcmask 7168
        %640 = vst.msk [vmem:[#allocation3] sm:$0xff] %vm639, -inf
        %641 = vst.msk [vmem:[#allocation3 + $0x8] sm:$0xff] %vm639, -inf
        %642 = vst.msk [vmem:[#allocation3 + $0x10] sm:$0xff] %vm639, -inf
        %643 = vst.msk [vmem:[#allocation3 + $0x18] sm:$0xff] %vm639, -inf
        %644 = vst.msk [vmem:[#allocation3 + $0x20] sm:$0xff] %vm639, -inf
        %645 = vst.msk [vmem:[#allocation3 + $0x28] sm:$0xff] %vm639, -inf
        %646 = vst.msk [vmem:[#allocation3 + $0x30] sm:$0xff] %vm639, -inf
        %647 = vst.msk [vmem:[#allocation3 + $0x38] sm:$0xff] %vm639, -inf
        %648 = vst.msk [vmem:[#allocation3 + $0x40] sm:$0xff] %vm639, -inf
        %649 = vst.msk [vmem:[#allocation3 + $0x48] sm:$0xff] %vm639, -inf
        %650 = vst.msk [vmem:[#allocation3 + $0x50] sm:$0xff] %vm639, -inf
        %651 = vst.msk [vmem:[#allocation3 + $0x58] sm:$0xff] %vm639, -inf
        %652 = vst.msk [vmem:[#allocation3 + $0x60] sm:$0xff] %vm639, -inf
        %653 = vst.msk [vmem:[#allocation3 + $0x68] sm:$0xff] %vm639, -inf
        %654 = vst.msk [vmem:[#allocation3 + $0x70] sm:$0xff] %vm639, -inf
        %655 = vst.msk [vmem:[#allocation3 + $0x78] sm:$0xff] %vm639, -inf
        %656 = vst.msk [vmem:[#allocation3 + $0x80] sm:$0xff] %vm639, -inf
        %657 = vst.msk [vmem:[#allocation3 + $0x88] sm:$0xff] %vm639, -inf
        %658 = vst.msk [vmem:[#allocation3 + $0x90] sm:$0xff] %vm639, -inf
        %659 = vst.msk [vmem:[#allocation3 + $0x98] sm:$0xff] %vm639, -inf
        %660 = vst.msk [vmem:[#allocation3 + $0xa0] sm:$0xff] %vm639, -inf
        %661 = vst.msk [vmem:[#allocation3 + $0xa8] sm:$0xff] %vm639, -inf
        %662 = vst.msk [vmem:[#allocation3 + $0xb0] sm:$0xff] %vm639, -inf
        %663 = vst.msk [vmem:[#allocation3 + $0xb8] sm:$0xff] %vm639, -inf
        %664 = vst.msk [vmem:[#allocation3 + $0xc0] sm:$0xff] %vm639, -inf
        %665 = vst.msk [vmem:[#allocation3 + $0xc8] sm:$0xff] %vm639, -inf
        %666 = vst.msk [vmem:[#allocation3 + $0xd0] sm:$0xff] %vm639, -inf
        %667 = vst.msk [vmem:[#allocation3 + $0xd8] sm:$0xff] %vm639, -inf
        %668 = vst.msk [vmem:[#allocation3 + $0xe0] sm:$0xff] %vm639, -inf
        %669 = vst.msk [vmem:[#allocation3 + $0xe8] sm:$0xff] %vm639, -inf
        %670 = vst.msk [vmem:[#allocation3 + $0xf0] sm:$0xff] %vm639, -inf
        %671 = vst.msk [vmem:[#allocation3 + $0xf8] sm:$0xff] %vm639, -inf
        %672 = vst.msk [vmem:[#allocation3 + $0x100] sm:$0xff] %vm639, -inf
        %673 = vst.msk [vmem:[#allocation3 + $0x108] sm:$0xff] %vm639, -inf
        %674 = vst.msk [vmem:[#allocation3 + $0x110] sm:$0xff] %vm639, -inf
        %675 = vst.msk [vmem:[#allocation3 + $0x118] sm:$0xff] %vm639, -inf
        %676 = vst.msk [vmem:[#allocation3 + $0x120] sm:$0xff] %vm639, -inf
        %677 = vst.msk [vmem:[#allocation3 + $0x128] sm:$0xff] %vm639, -inf
        %678 = vst.msk [vmem:[#allocation3 + $0x130] sm:$0xff] %vm639, -inf
        %679 = vst.msk [vmem:[#allocation3 + $0x138] sm:$0xff] %vm639, -inf
        %680 = vst.msk [vmem:[#allocation3 + $0x140] sm:$0xff] %vm639, -inf
        %681 = vst.msk [vmem:[#allocation3 + $0x148] sm:$0xff] %vm639, -inf
        %682 = vst.msk [vmem:[#allocation3 + $0x150] sm:$0xff] %vm639, -inf
        %683 = vst.msk [vmem:[#allocation3 + $0x158] sm:$0xff] %vm639, -inf
        %684 = vst.msk [vmem:[#allocation3 + $0x160] sm:$0xff] %vm639, -inf
        %685 = vst.msk [vmem:[#allocation3 + $0x168] sm:$0xff] %vm639, -inf
        %686 = vst.msk [vmem:[#allocation3 + $0x170] sm:$0xff] %vm639, -inf
        %687 = vst.msk [vmem:[#allocation3 + $0x178] sm:$0xff] %vm639, -inf
        %688 = vst.msk [vmem:[#allocation3 + $0x180] sm:$0xff] %vm639, -inf
        %689 = vst.msk [vmem:[#allocation3 + $0x188] sm:$0xff] %vm639, -inf
        %690 = vst.msk [vmem:[#allocation3 + $0x190] sm:$0xff] %vm639, -inf
        %691 = vst.msk [vmem:[#allocation3 + $0x198] sm:$0xff] %vm639, -inf
        %692 = vst.msk [vmem:[#allocation3 + $0x1a0] sm:$0xff] %vm639, -inf
        %693 = vst.msk [vmem:[#allocation3 + $0x1a8] sm:$0xff] %vm639, -inf
        %694 = vst.msk [vmem:[#allocation3 + $0x1b0] sm:$0xff] %vm639, -inf
        %695 = vst.msk [vmem:[#allocation3 + $0x1b8] sm:$0xff] %vm639, -inf
        %696 = vst.msk [vmem:[#allocation3 + $0x1c0] sm:$0xff] %vm639, -inf
        %697 = vst.msk [vmem:[#allocation3 + $0x1c8] sm:$0xff] %vm639, -inf
        %698 = vst.msk [vmem:[#allocation3 + $0x1d0] sm:$0xff] %vm639, -inf
        %699 = vst.msk [vmem:[#allocation3 + $0x1d8] sm:$0xff] %vm639, -inf
        %700 = vst.msk [vmem:[#allocation3 + $0x1e0] sm:$0xff] %vm639, -inf
        %701 = vst.msk [vmem:[#allocation3 + $0x1e8] sm:$0xff] %vm639, -inf
        %702 = vst.msk [vmem:[#allocation3 + $0x1f0] sm:$0xff] %vm639, -inf
        %703 = vst.msk [vmem:[#allocation3 + $0x1f8] sm:$0xff] %vm639, -inf
        %704 = vst.msk [vmem:[#allocation4] sm:$0xff] %vm639, 0.0
        %705 = vst.msk [vmem:[#allocation4 + $0x8] sm:$0xff] %vm639, 0.0
        %706 = vst.msk [vmem:[#allocation4 + $0x10] sm:$0xff] %vm639, 0.0
        %707 = vst.msk [vmem:[#allocation4 + $0x18] sm:$0xff] %vm639, 0.0
        %708 = vst.msk [vmem:[#allocation4 + $0x20] sm:$0xff] %vm639, 0.0
        %709 = vst.msk [vmem:[#allocation4 + $0x28] sm:$0xff] %vm639, 0.0
        %710 = vst.msk [vmem:[#allocation4 + $0x30] sm:$0xff] %vm639, 0.0
        %711 = vst.msk [vmem:[#allocation4 + $0x38] sm:$0xff] %vm639, 0.0
        %712 = vst.msk [vmem:[#allocation4 + $0x40] sm:$0xff] %vm639, 0.0
        %713 = vst.msk [vmem:[#allocation4 + $0x48] sm:$0xff] %vm639, 0.0
        %714 = vst.msk [vmem:[#allocation4 + $0x50] sm:$0xff] %vm639, 0.0
        %715 = vst.msk [vmem:[#allocation4 + $0x58] sm:$0xff] %vm639, 0.0
        %716 = vst.msk [vmem:[#allocation4 + $0x60] sm:$0xff] %vm639, 0.0
        %717 = vst.msk [vmem:[#allocation4 + $0x68] sm:$0xff] %vm639, 0.0
        %718 = vst.msk [vmem:[#allocation4 + $0x70] sm:$0xff] %vm639, 0.0
        %719 = vst.msk [vmem:[#allocation4 + $0x78] sm:$0xff] %vm639, 0.0
        %720 = vst.msk [vmem:[#allocation4 + $0x80] sm:$0xff] %vm639, 0.0
        %721 = vst.msk [vmem:[#allocation4 + $0x88] sm:$0xff] %vm639, 0.0
        %722 = vst.msk [vmem:[#allocation4 + $0x90] sm:$0xff] %vm639, 0.0
        %723 = vst.msk [vmem:[#allocation4 + $0x98] sm:$0xff] %vm639, 0.0
        %724 = vst.msk [vmem:[#allocation4 + $0xa0] sm:$0xff] %vm639, 0.0
        %725 = vst.msk [vmem:[#allocation4 + $0xa8] sm:$0xff] %vm639, 0.0
        %726 = vst.msk [vmem:[#allocation4 + $0xb0] sm:$0xff] %vm639, 0.0
        %727 = vst.msk [vmem:[#allocation4 + $0xb8] sm:$0xff] %vm639, 0.0
        %728 = vst.msk [vmem:[#allocation4 + $0xc0] sm:$0xff] %vm639, 0.0
        %729 = vst.msk [vmem:[#allocation4 + $0xc8] sm:$0xff] %vm639, 0.0
        %730 = vst.msk [vmem:[#allocation4 + $0xd0] sm:$0xff] %vm639, 0.0
        %731 = vst.msk [vmem:[#allocation4 + $0xd8] sm:$0xff] %vm639, 0.0
        %732 = vst.msk [vmem:[#allocation4 + $0xe0] sm:$0xff] %vm639, 0.0
        %733 = vst.msk [vmem:[#allocation4 + $0xe8] sm:$0xff] %vm639, 0.0
        %734 = vst.msk [vmem:[#allocation4 + $0xf0] sm:$0xff] %vm639, 0.0
        %735 = vst.msk [vmem:[#allocation4 + $0xf8] sm:$0xff] %vm639, 0.0
        %736 = vst.msk [vmem:[#allocation4 + $0x100] sm:$0xff] %vm639, 0.0
        %737 = vst.msk [vmem:[#allocation4 + $0x108] sm:$0xff] %vm639, 0.0
        %738 = vst.msk [vmem:[#allocation4 + $0x110] sm:$0xff] %vm639, 0.0
        %739 = vst.msk [vmem:[#allocation4 + $0x118] sm:$0xff] %vm639, 0.0
        %740 = vst.msk [vmem:[#allocation4 + $0x120] sm:$0xff] %vm639, 0.0
        %741 = vst.msk [vmem:[#allocation4 + $0x128] sm:$0xff] %vm639, 0.0
        %742 = vst.msk [vmem:[#allocation4 + $0x130] sm:$0xff] %vm639, 0.0
        %743 = vst.msk [vmem:[#allocation4 + $0x138] sm:$0xff] %vm639, 0.0
        %744 = vst.msk [vmem:[#allocation4 + $0x140] sm:$0xff] %vm639, 0.0
        %745 = vst.msk [vmem:[#allocation4 + $0x148] sm:$0xff] %vm639, 0.0
        %746 = vst.msk [vmem:[#allocation4 + $0x150] sm:$0xff] %vm639, 0.0
        %747 = vst.msk [vmem:[#allocation4 + $0x158] sm:$0xff] %vm639, 0.0
        %748 = vst.msk [vmem:[#allocation4 + $0x160] sm:$0xff] %vm639, 0.0
        %749 = vst.msk [vmem:[#allocation4 + $0x168] sm:$0xff] %vm639, 0.0
        %750 = vst.msk [vmem:[#allocation4 + $0x170] sm:$0xff] %vm639, 0.0
        %751 = vst.msk [vmem:[#allocation4 + $0x178] sm:$0xff] %vm639, 0.0
        %752 = vst.msk [vmem:[#allocation4 + $0x180] sm:$0xff] %vm639, 0.0
        %753 = vst.msk [vmem:[#allocation4 + $0x188] sm:$0xff] %vm639, 0.0
        %754 = vst.msk [vmem:[#allocation4 + $0x190] sm:$0xff] %vm639, 0.0
        %755 = vst.msk [vmem:[#allocation4 + $0x198] sm:$0xff] %vm639, 0.0
        %756 = vst.msk [vmem:[#allocation4 + $0x1a0] sm:$0xff] %vm639, 0.0
        %757 = vst.msk [vmem:[#allocation4 + $0x1a8] sm:$0xff] %vm639, 0.0
        %758 = vst.msk [vmem:[#allocation4 + $0x1b0] sm:$0xff] %vm639, 0.0
        %759 = vst.msk [vmem:[#allocation4 + $0x1b8] sm:$0xff] %vm639, 0.0
        %760 = vst.msk [vmem:[#allocation4 + $0x1c0] sm:$0xff] %vm639, 0.0
        %761 = vst.msk [vmem:[#allocation4 + $0x1c8] sm:$0xff] %vm639, 0.0
        %762 = vst.msk [vmem:[#allocation4 + $0x1d0] sm:$0xff] %vm639, 0.0
        %763 = vst.msk [vmem:[#allocation4 + $0x1d8] sm:$0xff] %vm639, 0.0
        %764 = vst.msk [vmem:[#allocation4 + $0x1e0] sm:$0xff] %vm639, 0.0
        %765 = vst.msk [vmem:[#allocation4 + $0x1e8] sm:$0xff] %vm639, 0.0
        %766 = vst.msk [vmem:[#allocation4 + $0x1f0] sm:$0xff] %vm639, 0.0
        %767 = vst.msk [vmem:[#allocation4 + $0x1f8] sm:$0xff] %vm639, 0.0
        %768 = vst [vmem:[#allocation5] sm:$0xff] 0.0
        %769 = vst [vmem:[#allocation5 + $0x8] sm:$0xff] 0.0
        %770 = vst [vmem:[#allocation5 + $0x10] sm:$0xff] 0.0
        %771 = vst [vmem:[#allocation5 + $0x18] sm:$0xff] 0.0
        %772 = vst [vmem:[#allocation5 + $0x20] sm:$0xff] 0.0
        %773 = vst [vmem:[#allocation5 + $0x28] sm:$0xff] 0.0
        %774 = vst [vmem:[#allocation5 + $0x30] sm:$0xff] 0.0
        %775 = vst [vmem:[#allocation5 + $0x38] sm:$0xff] 0.0
        %776 = vst [vmem:[#allocation5 + $0x40] sm:$0xff] 0.0
        %777 = vst [vmem:[#allocation5 + $0x48] sm:$0xff] 0.0
        %778 = vst [vmem:[#allocation5 + $0x50] sm:$0xff] 0.0
        %779 = vst [vmem:[#allocation5 + $0x58] sm:$0xff] 0.0
        %780 = vst [vmem:[#allocation5 + $0x60] sm:$0xff] 0.0
        %781 = vst [vmem:[#allocation5 + $0x68] sm:$0xff] 0.0
        %782 = vst [vmem:[#allocation5 + $0x70] sm:$0xff] 0.0
        %783 = vst [vmem:[#allocation5 + $0x78] sm:$0xff] 0.0
      $region60: #{_forward_device.6} parent=55 // pred_fallthru
        _
      %v784 = vld [vmem:[%s393] sm:$0xf]
      %v785 = vld [vmem:[%s393 + $0x4] sm:$0xf]
      %v786 = vld [vmem:[%s393 + $0x8] sm:$0xf]
      %v787 = vld [vmem:[%s393 + $0xc] sm:$0xf]
      %v788 = vld [vmem:[%s393 + $0x10] sm:$0xf]
      %v789 = vld [vmem:[%s393 + $0x14] sm:$0xf]
      %v790 = vld [vmem:[%s393 + $0x18] sm:$0xf]
      %v791 = vld [vmem:[%s393 + $0x1c] sm:$0xf]
      %v792 = vld [vmem:[%s393 + $0x20] sm:$0xf]
      %v793 = vld [vmem:[%s393 + $0x24] sm:$0xf]
      %v794 = vld [vmem:[%s393 + $0x28] sm:$0xf]
      %v795 = vld [vmem:[%s393 + $0x2c] sm:$0xf]
      %v796 = vld [vmem:[%s393 + $0x30] sm:$0xf]
      %v797 = vld [vmem:[%s393 + $0x34] sm:$0xf]
      %v798 = vld [vmem:[%s393 + $0x38] sm:$0xf]
      %v799 = vld [vmem:[%s393 + $0x3c] sm:$0xf]
      %v800 = vld [vmem:[%s3 + $0x4] sm:$0xf]
      %v801 = vld [vmem:[%s3 + $0x10] sm:$0xf]
      %v802 = vld [vmem:[%s3 + $0x1c] sm:$0xf]
      %v803 = vld [vmem:[%s3 + $0x28] sm:$0xf]
      %v804 = vld [vmem:[%s3 + $0x34] sm:$0xf]
      %v805 = vld [vmem:[%s3 + $0x40] sm:$0xf]
      %v806 = vld [vmem:[%s3 + $0x4c] sm:$0xf]
      %v807 = vld [vmem:[%s3 + $0x58] sm:$0xf]
      %v808 = vld [vmem:[%s3 + $0x64] sm:$0xf]
      %v809 = vld [vmem:[%s3 + $0x70] sm:$0xf]
      %v810 = vld [vmem:[%s3 + $0x7c] sm:$0xf]
      %v811 = vld [vmem:[%s3 + $0x88] sm:$0xf]
      %v812 = vld [vmem:[%s3 + $0x94] sm:$0xf]
      %v813 = vld [vmem:[%s3 + $0xa0] sm:$0xf]
      %v814 = vld [vmem:[%s3 + $0xac] sm:$0xf]
      %v815 = vld [vmem:[%s3 + $0xb8] sm:$0xf]
      %v816 = vld [vmem:[%s4 + $0x1] sm:$0x1]
      %v818 = vperm.slane %v816, 0
      %v836 = vunpack.c.l.b16 %v784
      %v837 = vunpack.c.l.b16 %v785
      %v838 = vunpack.c.l.b16 %v786
      %v839 = vunpack.c.l.b16 %v787
      %v840 = vunpack.c.l.b16 %v788
      %v841 = vunpack.c.l.b16 %v789
      %v842 = vunpack.c.l.b16 %v790
      %v843 = vunpack.c.l.b16 %v791
      %v844 = vunpack.c.l.b16 %v792
      %v845 = vunpack.c.l.b16 %v793
      %v846 = vunpack.c.l.b16 %v794
      %v847 = vunpack.c.l.b16 %v795
      %v848 = vunpack.c.l.b16 %v796
      %v849 = vunpack.c.l.b16 %v797
      %v850 = vunpack.c.l.b16 %v798
      %v851 = vunpack.c.l.b16 %v799
      %v852 = vpack.c.b16 %v837, %v836
      %v853 = vpack.c.b16 %v839, %v838
      %v854 = vpack.c.b16 %v841, %v840
      %v855 = vpack.c.b16 %v843, %v842
      %v856 = vpack.c.b16 %v845, %v844
      %v857 = vpack.c.b16 %v847, %v846
      %v858 = vpack.c.b16 %v849, %v848
      %v859 = vpack.c.b16 %v851, %v850
      %v884 = vunpack.c.l.b16 %v800
      %v885 = vunpack.c.l.b16 %v801
      %v886 = vunpack.c.l.b16 %v802
      %v887 = vunpack.c.l.b16 %v803
      %v888 = vunpack.c.l.b16 %v804
      %v889 = vunpack.c.l.b16 %v805
      %v890 = vunpack.c.l.b16 %v806
      %v891 = vunpack.c.l.b16 %v807
      %v892 = vunpack.c.l.b16 %v808
      %v893 = vunpack.c.l.b16 %v809
      %v894 = vunpack.c.l.b16 %v810
      %v895 = vunpack.c.l.b16 %v811
      %v896 = vunpack.c.l.b16 %v812
      %v897 = vunpack.c.l.b16 %v813
      %v898 = vunpack.c.l.b16 %v814
      %v899 = vunpack.c.l.b16 %v815
      %v900 = vpack.c.b16 %v885, %v884
      %v901 = vpack.c.b16 %v887, %v886
      %v902 = vpack.c.b16 %v889, %v888
      %v903 = vpack.c.b16 %v891, %v890
      %v904 = vpack.c.b16 %v893, %v892
      %v905 = vpack.c.b16 %v895, %v894
      %v906 = vpack.c.b16 %v897, %v896
      %v907 = vpack.c.b16 %v899, %v898
      %916 = vmatpush.bf16.msra.mxu0 %v907
      %917 = vmatpush.bf16.msra.mxu0 %v906
      %918 = vmatpush.bf16.msra.mxu0 %v905
      %919 = vmatpush.bf16.msra.mxu0 %v904
      %920 = vmatpush.bf16.msra.mxu0 %v903
      %921 = vmatpush.bf16.msra.mxu0 %v902
      %922 = vmatpush.bf16.msra.mxu0 %v901
      %923 = vmatpush.bf16.msra.mxu0 %v900
      %924 = vmatmul.bf16.gmra.mxu0 %v852
      %v925 = vpop.f32.mrf.mxu0
      %v926 = vadd.f32 %v818, %v925
      %v927 = vpop.f32.mrf.mxu0
      %v928 = vadd.f32 %v818, %v927
      %929 = vmatmul.bf16.gmra.mxu0 %v853
      %v930 = vpop.f32.mrf.mxu0
      %v931 = vadd.f32 %v818, %v930
      %v932 = vpop.f32.mrf.mxu0
      %v933 = vadd.f32 %v818, %v932
      %934 = vmatmul.bf16.gmra.mxu0 %v854
      %v935 = vpop.f32.mrf.mxu0
      %v936 = vadd.f32 %v818, %v935
      %v937 = vpop.f32.mrf.mxu0
      %v938 = vadd.f32 %v818, %v937
      %939 = vmatmul.bf16.gmra.mxu0 %v855
      %v940 = vpop.f32.mrf.mxu0
      %v941 = vadd.f32 %v818, %v940
      %v942 = vpop.f32.mrf.mxu0
      %v943 = vadd.f32 %v818, %v942
      %944 = vmatmul.bf16.gmra.mxu0 %v856
      %v945 = vpop.f32.mrf.mxu0
      %v946 = vadd.f32 %v818, %v945
      %v947 = vpop.f32.mrf.mxu0
      %v948 = vadd.f32 %v818, %v947
      %949 = vmatmul.bf16.gmra.mxu0 %v857
      %v950 = vpop.f32.mrf.mxu0
      %v951 = vadd.f32 %v818, %v950
      %v952 = vpop.f32.mrf.mxu0
      %v953 = vadd.f32 %v818, %v952
      %954 = vmatmul.bf16.gmra.mxu0 %v858
      %v955 = vpop.f32.mrf.mxu0
      %v956 = vadd.f32 %v818, %v955
      %v957 = vpop.f32.mrf.mxu0
      %v958 = vadd.f32 %v818, %v957
      %959 = vmatmul.bf16.gmra.mxu0 %v859
      %v960 = vpop.f32.mrf.mxu0
      %v961 = vadd.f32 %v818, %v960
      %v962 = vpop.f32.mrf.mxu0
      %v963 = vadd.f32 %v818, %v962
      %964 = vdwg.mxu0
      %v965 = vpack.c.bf16 %v926, %v926
      %v966 = vpack.c.bf16 %v928, %v928
      %v967 = vpack.c.bf16 %v931, %v931
      %v968 = vpack.c.bf16 %v933, %v933
      %v969 = vpack.c.bf16 %v936, %v936
      %v970 = vpack.c.bf16 %v938, %v938
      %v971 = vpack.c.bf16 %v941, %v941
      %v972 = vpack.c.bf16 %v943, %v943
      %v973 = vpack.c.bf16 %v946, %v946
      %v974 = vpack.c.bf16 %v948, %v948
      %v975 = vpack.c.bf16 %v951, %v951
      %v976 = vpack.c.bf16 %v953, %v953
      %v977 = vpack.c.bf16 %v956, %v956
      %v978 = vpack.c.bf16 %v958, %v958
      %v979 = vpack.c.bf16 %v961, %v961
      %v980 = vpack.c.bf16 %v963, %v963
      %v981 = vld [vmem:[%s3 + $0x8] sm:$0xf]
      %v982 = vld [vmem:[%s3 + $0x14] sm:$0xf]
      %v983 = vld [vmem:[%s3 + $0x20] sm:$0xf]
      %v984 = vld [vmem:[%s3 + $0x2c] sm:$0xf]
      %v985 = vld [vmem:[%s3 + $0x38] sm:$0xf]
      %v986 = vld [vmem:[%s3 + $0x44] sm:$0xf]
      %v987 = vld [vmem:[%s3 + $0x50] sm:$0xf]
      %v988 = vld [vmem:[%s3 + $0x5c] sm:$0xf]
      %v989 = vld [vmem:[%s3 + $0x68] sm:$0xf]
      %v990 = vld [vmem:[%s3 + $0x74] sm:$0xf]
      %v991 = vld [vmem:[%s3 + $0x80] sm:$0xf]
      %v992 = vld [vmem:[%s3 + $0x8c] sm:$0xf]
      %v993 = vld [vmem:[%s3 + $0x98] sm:$0xf]
      %v994 = vld [vmem:[%s3 + $0xa4] sm:$0xf]
      %v995 = vld [vmem:[%s3 + $0xb0] sm:$0xf]
      %v996 = vld [vmem:[%s3 + $0xbc] sm:$0xf]
      %v997 = vld [vmem:[%s4 + $0x2] sm:$0x1]
      %v999 = vperm.slane %v997, 0
      %v1017 = vunpack.c.l.b16 %v981
      %v1018 = vunpack.c.l.b16 %v982
      %v1019 = vunpack.c.l.b16 %v983
      %v1020 = vunpack.c.l.b16 %v984
      %v1021 = vunpack.c.l.b16 %v985
      %v1022 = vunpack.c.l.b16 %v986
      %v1023 = vunpack.c.l.b16 %v987
      %v1024 = vunpack.c.l.b16 %v988
      %v1025 = vunpack.c.l.b16 %v989
      %v1026 = vunpack.c.l.b16 %v990
      %v1027 = vunpack.c.l.b16 %v991
      %v1028 = vunpack.c.l.b16 %v992
      %v1029 = vunpack.c.l.b16 %v993
      %v1030 = vunpack.c.l.b16 %v994
      %v1031 = vunpack.c.l.b16 %v995
      %v1032 = vunpack.c.l.b16 %v996
      %v1033 = vpack.c.b16 %v1018, %v1017
      %v1034 = vpack.c.b16 %v1020, %v1019
      %v1035 = vpack.c.b16 %v1022, %v1021
      %v1036 = vpack.c.b16 %v1024, %v1023
      %v1037 = vpack.c.b16 %v1026, %v1025
      %v1038 = vpack.c.b16 %v1028, %v1027
      %v1039 = vpack.c.b16 %v1030, %v1029
      %v1040 = vpack.c.b16 %v1032, %v1031
      %1049 = vmatpush.bf16.msra.mxu0 %v1040
      %1050 = vmatpush.bf16.msra.mxu0 %v1039
      %1051 = vmatpush.bf16.msra.mxu0 %v1038
      %1052 = vmatpush.bf16.msra.mxu0 %v1037
      %1053 = vmatpush.bf16.msra.mxu0 %v1036
      %1054 = vmatpush.bf16.msra.mxu0 %v1035
      %1055 = vmatpush.bf16.msra.mxu0 %v1034
      %1056 = vmatpush.bf16.msra.mxu0 %v1033
      %1057 = vmatmul.bf16.gmra.mxu0 %v852
      %v1058 = vpop.f32.mrf.mxu0
      %v1059 = vadd.f32 %v999, %v1058
      %v1060 = vpop.f32.mrf.mxu0
      %v1061 = vadd.f32 %v999, %v1060
      %1062 = vmatmul.bf16.gmra.mxu0 %v853
      %v1063 = vpop.f32.mrf.mxu0
      %v1064 = vadd.f32 %v999, %v1063
      %v1065 = vpop.f32.mrf.mxu0
      %v1066 = vadd.f32 %v999, %v1065
      %1067 = vmatmul.bf16.gmra.mxu0 %v854
      %v1068 = vpop.f32.mrf.mxu0
      %v1069 = vadd.f32 %v999, %v1068
      %v1070 = vpop.f32.mrf.mxu0
      %v1071 = vadd.f32 %v999, %v1070
      %1072 = vmatmul.bf16.gmra.mxu0 %v855
      %v1073 = vpop.f32.mrf.mxu0
      %v1074 = vadd.f32 %v999, %v1073
      %v1075 = vpop.f32.mrf.mxu0
      %v1076 = vadd.f32 %v999, %v1075
      %1077 = vmatmul.bf16.gmra.mxu0 %v856
      %v1078 = vpop.f32.mrf.mxu0
      %v1079 = vadd.f32 %v999, %v1078
      %v1080 = vpop.f32.mrf.mxu0
      %v1081 = vadd.f32 %v999, %v1080
      %1082 = vmatmul.bf16.gmra.mxu0 %v857
      %v1083 = vpop.f32.mrf.mxu0
      %v1084 = vadd.f32 %v999, %v1083
      %v1085 = vpop.f32.mrf.mxu0
      %v1086 = vadd.f32 %v999, %v1085
      %1087 = vmatmul.bf16.gmra.mxu0 %v858
      %v1088 = vpop.f32.mrf.mxu0
      %v1089 = vadd.f32 %v999, %v1088
      %v1090 = vpop.f32.mrf.mxu0
      %v1091 = vadd.f32 %v999, %v1090
      %1092 = vmatmul.bf16.gmra.mxu0 %v859
      %v1093 = vpop.f32.mrf.mxu0
      %v1094 = vadd.f32 %v999, %v1093
      %v1095 = vpop.f32.mrf.mxu0
      %v1096 = vadd.f32 %v999, %v1095
      %1097 = vdwg.mxu0
      %v1098 = vpack.c.bf16 %v1059, %v1059
      %v1099 = vpack.c.bf16 %v1061, %v1061
      %v1100 = vpack.c.bf16 %v1064, %v1064
      %v1101 = vpack.c.bf16 %v1066, %v1066
      %v1102 = vpack.c.bf16 %v1069, %v1069
      %v1103 = vpack.c.bf16 %v1071, %v1071
      %v1104 = vpack.c.bf16 %v1074, %v1074
      %v1105 = vpack.c.bf16 %v1076, %v1076
      %v1106 = vpack.c.bf16 %v1079, %v1079
      %v1107 = vpack.c.bf16 %v1081, %v1081
      %v1108 = vpack.c.bf16 %v1084, %v1084
      %v1109 = vpack.c.bf16 %v1086, %v1086
      %v1110 = vpack.c.bf16 %v1089, %v1089
      %v1111 = vpack.c.bf16 %v1091, %v1091
      %v1112 = vpack.c.bf16 %v1094, %v1094
      %v1113 = vpack.c.bf16 %v1096, %v1096
      %v1114 = vld [vmem:[%s400] sm:$0x1]
      %v1115 = vld [vmem:[#allocation2] sm:$0xf]
      %v1116 = vld [vmem:[#allocation2 + $0x4] sm:$0xf]
      %v1117 = vld [vmem:[#allocation2 + $0x8] sm:$0xf]
      %v1118 = vld [vmem:[#allocation2 + $0xc] sm:$0xf]
      %v1119 = vld [vmem:[#allocation2 + $0x10] sm:$0xf]
      %v1120 = vld [vmem:[#allocation2 + $0x14] sm:$0xf]
      %v1121 = vld [vmem:[#allocation2 + $0x18] sm:$0xf]
      %v1122 = vld [vmem:[#allocation2 + $0x1c] sm:$0xf]
      %v1123 = vld [vmem:[#allocation2 + $0x20] sm:$0xf]
      %v1124 = vld [vmem:[#allocation2 + $0x24] sm:$0xf]
      %v1125 = vld [vmem:[#allocation2 + $0x28] sm:$0xf]
      %v1126 = vld [vmem:[#allocation2 + $0x2c] sm:$0xf]
      %v1127 = vld [vmem:[#allocation2 + $0x30] sm:$0xf]
      %v1128 = vld [vmem:[#allocation2 + $0x34] sm:$0xf]
      %v1129 = vld [vmem:[#allocation2 + $0x38] sm:$0xf]
      %v1130 = vld [vmem:[#allocation2 + $0x3c] sm:$0xf]
      %v1132 = vperm.slane %v1114, 0
      %v1150 = vunpack.c.l.b16 %v1115
      %v1151 = vunpack.c.l.b16 %v1116
      %v1152 = vunpack.c.l.b16 %v1117
      %v1153 = vunpack.c.l.b16 %v1118
      %v1154 = vunpack.c.l.b16 %v1119
      %v1155 = vunpack.c.l.b16 %v1120
      %v1156 = vunpack.c.l.b16 %v1121
      %v1157 = vunpack.c.l.b16 %v1122
      %v1158 = vunpack.c.l.b16 %v1123
      %v1159 = vunpack.c.l.b16 %v1124
      %v1160 = vunpack.c.l.b16 %v1125
      %v1161 = vunpack.c.l.b16 %v1126
      %v1162 = vunpack.c.l.b16 %v1127
      %v1163 = vunpack.c.l.b16 %v1128
      %v1164 = vunpack.c.l.b16 %v1129
      %v1165 = vunpack.c.l.b16 %v1130
      %v1166 = vpack.c.b16 %v1151, %v1150
      %v1167 = vpack.c.b16 %v1153, %v1152
      %v1168 = vpack.c.b16 %v1155, %v1154
      %v1169 = vpack.c.b16 %v1157, %v1156
      %v1170 = vpack.c.b16 %v1159, %v1158
      %v1171 = vpack.c.b16 %v1161, %v1160
      %v1172 = vpack.c.b16 %v1163, %v1162
      %v1173 = vpack.c.b16 %v1165, %v1164
      %v1190 = vunpack.c.l.b16 %v965
      %v1191 = vunpack.c.l.b16 %v966
      %v1192 = vunpack.c.l.b16 %v967
      %v1193 = vunpack.c.l.b16 %v968
      %v1194 = vunpack.c.l.b16 %v969
      %v1195 = vunpack.c.l.b16 %v970
      %v1196 = vunpack.c.l.b16 %v971
      %v1197 = vunpack.c.l.b16 %v972
      %v1198 = vunpack.c.l.b16 %v973
      %v1199 = vunpack.c.l.b16 %v974
      %v1200 = vunpack.c.l.b16 %v975
      %v1201 = vunpack.c.l.b16 %v976
      %v1202 = vunpack.c.l.b16 %v977
      %v1203 = vunpack.c.l.b16 %v978
      %v1204 = vunpack.c.l.b16 %v979
      %v1205 = vunpack.c.l.b16 %v980
      %v1206 = vpack.c.b16 %v1191, %v1190
      %v1207 = vpack.c.b16 %v1193, %v1192
      %v1208 = vpack.c.b16 %v1195, %v1194
      %v1209 = vpack.c.b16 %v1197, %v1196
      %v1210 = vpack.c.b16 %v1199, %v1198
      %v1211 = vpack.c.b16 %v1201, %v1200
      %v1212 = vpack.c.b16 %v1203, %v1202
      %v1213 = vpack.c.b16 %v1205, %v1204
      %vm1214 = vcmask 261120
      %v1216 = vsel %vm1214, %v1166, 0
      %v1219 = vsel %vm1214, %v1167, 0
      %v1222 = vsel %vm1214, %v1168, 0
      %v1225 = vsel %vm1214, %v1169, 0
      %v1228 = vsel %vm1214, %v1170, 0
      %v1231 = vsel %vm1214, %v1171, 0
      %v1234 = vsel %vm1214, %v1172, 0
      %v1237 = vsel %vm1214, %v1173, 0
      %v1240 = vsel %vm1214, %v1206, 0
      %v1243 = vsel %vm1214, %v1207, 0
      %v1246 = vsel %vm1214, %v1208, 0
      %v1249 = vsel %vm1214, %v1209, 0
      %v1252 = vsel %vm1214, %v1210, 0
      %v1255 = vsel %vm1214, %v1211, 0
      %v1258 = vsel %vm1214, %v1212, 0
      %v1261 = vsel %vm1214, %v1213, 0
      %1263 = vmatpush.bf16.xpose.msra.mxu0 %v1261
      %1264 = vmatpush.bf16.xpose.msra.mxu0 %v1258
      %1265 = vmatpush.bf16.xpose.msra.mxu0 %v1255
      %1266 = vmatpush.bf16.xpose.msra.mxu0 %v1252
      %1267 = vmatpush.bf16.xpose.msra.mxu0 %v1249
      %1268 = vmatpush.bf16.xpose.msra.mxu0 %v1246
      %1269 = vmatpush.bf16.xpose.msra.mxu0 %v1243
      %1270 = vmatpush.bf16.xpose.msra.mxu0 %v1240
      %1271 = vmatmul.bf16.gmra.mxu0 %v1216
      %v1272 = vpop.f32.mrf.mxu0
      %v1273 = vadd.f32 %v1132, %v1272
      %v1274 = vpop.f32.mrf.mxu0
      %v1275 = vadd.f32 %v1132, %v1274
      %1276 = vmatmul.bf16.gmra.mxu0 %v1219
      %v1277 = vpop.f32.mrf.mxu0
      %v1278 = vadd.f32 %v1132, %v1277
      %v1279 = vpop.f32.mrf.mxu0
      %v1280 = vadd.f32 %v1132, %v1279
      %1281 = vmatmul.bf16.gmra.mxu0 %v1222
      %v1282 = vpop.f32.mrf.mxu0
      %v1283 = vadd.f32 %v1132, %v1282
      %v1284 = vpop.f32.mrf.mxu0
      %v1285 = vadd.f32 %v1132, %v1284
      %1286 = vmatmul.bf16.gmra.mxu0 %v1225
      %v1287 = vpop.f32.mrf.mxu0
      %v1288 = vadd.f32 %v1132, %v1287
      %v1289 = vpop.f32.mrf.mxu0
      %v1290 = vadd.f32 %v1132, %v1289
      %1291 = vmatmul.bf16.gmra.mxu0 %v1228
      %v1292 = vpop.f32.mrf.mxu0
      %v1293 = vadd.f32 %v1132, %v1292
      %v1294 = vpop.f32.mrf.mxu0
      %v1295 = vadd.f32 %v1132, %v1294
      %1296 = vmatmul.bf16.gmra.mxu0 %v1231
      %v1297 = vpop.f32.mrf.mxu0
      %v1298 = vadd.f32 %v1132, %v1297
      %v1299 = vpop.f32.mrf.mxu0
      %v1300 = vadd.f32 %v1132, %v1299
      %1301 = vmatmul.bf16.gmra.mxu0 %v1234
      %v1302 = vpop.f32.mrf.mxu0
      %v1303 = vadd.f32 %v1132, %v1302
      %v1304 = vpop.f32.mrf.mxu0
      %v1305 = vadd.f32 %v1132, %v1304
      %1306 = vmatmul.bf16.gmra.mxu0 %v1237
      %v1307 = vpop.f32.mrf.mxu0
      %v1308 = vadd.f32 %v1132, %v1307
      %v1309 = vpop.f32.mrf.mxu0
      %v1310 = vadd.f32 %v1132, %v1309
      %1311 = vdwg.mxu0
      %v1312 = vld [vmem:[#allocation3] sm:$0xff]
      %v1313 = vld [vmem:[#allocation3 + $0x8] sm:$0xff]
      %v1314 = vld [vmem:[#allocation3 + $0x10] sm:$0xff]
      %v1315 = vld [vmem:[#allocation3 + $0x18] sm:$0xff]
      %v1316 = vld [vmem:[#allocation3 + $0x20] sm:$0xff]
      %v1317 = vld [vmem:[#allocation3 + $0x28] sm:$0xff]
      %v1318 = vld [vmem:[#allocation3 + $0x30] sm:$0xff]
      %v1319 = vld [vmem:[#allocation3 + $0x38] sm:$0xff]
      %v1320 = vld [vmem:[#allocation3 + $0x40] sm:$0xff]
      %v1321 = vld [vmem:[#allocation3 + $0x48] sm:$0xff]
      %v1322 = vld [vmem:[#allocation3 + $0x50] sm:$0xff]
      %v1323 = vld [vmem:[#allocation3 + $0x58] sm:$0xff]
      %v1324 = vld [vmem:[#allocation3 + $0x60] sm:$0xff]
      %v1325 = vld [vmem:[#allocation3 + $0x68] sm:$0xff]
      %v1326 = vld [vmem:[#allocation3 + $0x70] sm:$0xff]
      %v1327 = vld [vmem:[#allocation3 + $0x78] sm:$0xff]
      %1328 = vmax.xlane.f32.xlu0 %v1273
      %v1329 = vpop.xlane.xlu0 %1328
      %1330 = vmax.xlane.f32.xlu0 %v1275
      %v1331 = vpop.xlane.xlu0 %1330
      %1332 = vmax.xlane.f32.xlu0 %v1278
      %v1333 = vpop.xlane.xlu0 %1332
      %1334 = vmax.xlane.f32.xlu0 %v1280
      %v1335 = vpop.xlane.xlu0 %1334
      %1336 = vmax.xlane.f32.xlu0 %v1283
      %v1337 = vpop.xlane.xlu0 %1336
      %1338 = vmax.xlane.f32.xlu0 %v1285
      %v1339 = vpop.xlane.xlu0 %1338
      %1340 = vmax.xlane.f32.xlu0 %v1288
      %v1341 = vpop.xlane.xlu0 %1340
      %1342 = vmax.xlane.f32.xlu0 %v1290
      %v1343 = vpop.xlane.xlu0 %1342
      %1344 = vmax.xlane.f32.xlu0 %v1293
      %v1345 = vpop.xlane.xlu0 %1344
      %1346 = vmax.xlane.f32.xlu0 %v1295
      %v1347 = vpop.xlane.xlu0 %1346
      %1348 = vmax.xlane.f32.xlu0 %v1298
      %v1349 = vpop.xlane.xlu0 %1348
      %1350 = vmax.xlane.f32.xlu0 %v1300
      %v1351 = vpop.xlane.xlu0 %1350
      %1352 = vmax.xlane.f32.xlu0 %v1303
      %v1353 = vpop.xlane.xlu0 %1352
      %1354 = vmax.xlane.f32.xlu0 %v1305
      %v1355 = vpop.xlane.xlu0 %1354
      %1356 = vmax.xlane.f32.xlu0 %v1308
      %v1357 = vpop.xlane.xlu0 %1356
      %1358 = vmax.xlane.f32.xlu0 %v1310
      %v1359 = vpop.xlane.xlu0 %1358
      %v1360 = vmax.f32 %v1312, %v1329
      %v1361 = vmax.f32 %v1313, %v1331
      %v1362 = vmax.f32 %v1314, %v1333
      %v1363 = vmax.f32 %v1315, %v1335
      %v1364 = vmax.f32 %v1316, %v1337
      %v1365 = vmax.f32 %v1317, %v1339
      %v1366 = vmax.f32 %v1318, %v1341
      %v1367 = vmax.f32 %v1319, %v1343
      %v1368 = vmax.f32 %v1320, %v1345
      %v1369 = vmax.f32 %v1321, %v1347
      %v1370 = vmax.f32 %v1322, %v1349
      %v1371 = vmax.f32 %v1323, %v1351
      %v1372 = vmax.f32 %v1324, %v1353
      %v1373 = vmax.f32 %v1325, %v1355
      %v1374 = vmax.f32 %v1326, %v1357
      %v1375 = vmax.f32 %v1327, %v1359
      %v1376 = vsub.f32 %v1312, %v1360
      %v1377 = vsub.f32 %v1313, %v1361
      %v1378 = vsub.f32 %v1314, %v1362
      %v1379 = vsub.f32 %v1315, %v1363
      %v1380 = vsub.f32 %v1316, %v1364
      %v1381 = vsub.f32 %v1317, %v1365
      %v1382 = vsub.f32 %v1318, %v1366
      %v1383 = vsub.f32 %v1319, %v1367
      %v1384 = vsub.f32 %v1320, %v1368
      %v1385 = vsub.f32 %v1321, %v1369
      %v1386 = vsub.f32 %v1322, %v1370
      %v1387 = vsub.f32 %v1323, %v1371
      %v1388 = vsub.f32 %v1324, %v1372
      %v1389 = vsub.f32 %v1325, %v1373
      %v1390 = vsub.f32 %v1326, %v1374
      %v1391 = vsub.f32 %v1327, %v1375
      %v1392 = vmul.f32 %v1376, 1.442695
      %v1393 = vpow.pop %v1392
      %v1394 = vmul.f32 %v1377, 1.442695
      %v1395 = vpow.pop %v1394
      %v1396 = vmul.f32 %v1378, 1.442695
      %v1397 = vpow.pop %v1396
      %v1398 = vmul.f32 %v1379, 1.442695
      %v1399 = vpow.pop %v1398
      %v1400 = vmul.f32 %v1380, 1.442695
      %v1401 = vpow.pop %v1400
      %v1402 = vmul.f32 %v1381, 1.442695
      %v1403 = vpow.pop %v1402
      %v1404 = vmul.f32 %v1382, 1.442695
      %v1405 = vpow.pop %v1404
      %v1406 = vmul.f32 %v1383, 1.442695
      %v1407 = vpow.pop %v1406
      %v1408 = vmul.f32 %v1384, 1.442695
      %v1409 = vpow.pop %v1408
      %v1410 = vmul.f32 %v1385, 1.442695
      %v1411 = vpow.pop %v1410
      %v1412 = vmul.f32 %v1386, 1.442695
      %v1413 = vpow.pop %v1412
      %v1414 = vmul.f32 %v1387, 1.442695
      %v1415 = vpow.pop %v1414
      %v1416 = vmul.f32 %v1388, 1.442695
      %v1417 = vpow.pop %v1416
      %v1418 = vmul.f32 %v1389, 1.442695
      %v1419 = vpow.pop %v1418
      %v1420 = vmul.f32 %v1390, 1.442695
      %v1421 = vpow.pop %v1420
      %v1422 = vmul.f32 %v1391, 1.442695
      %v1423 = vpow.pop %v1422
      %1425 = vset.pattern.permute.xlu0 0
      %1426 = vperm.xlu0 %1425, %v1360
      %v1427 = vpop.permute.xlu0 %1426
      %1430 = vset.pattern.permute.xlu0 0
      %1431 = vperm.xlu0 %1430, %v1361
      %v1432 = vpop.permute.xlu0 %1431
      %1435 = vset.pattern.permute.xlu0 0
      %1436 = vperm.xlu0 %1435, %v1362
      %v1437 = vpop.permute.xlu0 %1436
      %1440 = vset.pattern.permute.xlu0 0
      %1441 = vperm.xlu0 %1440, %v1363
      %v1442 = vpop.permute.xlu0 %1441
      %1445 = vset.pattern.permute.xlu0 0
      %1446 = vperm.xlu0 %1445, %v1364
      %v1447 = vpop.permute.xlu0 %1446
      %1450 = vset.pattern.permute.xlu0 0
      %1451 = vperm.xlu0 %1450, %v1365
      %v1452 = vpop.permute.xlu0 %1451
      %1455 = vset.pattern.permute.xlu0 0
      %1456 = vperm.xlu0 %1455, %v1366
      %v1457 = vpop.permute.xlu0 %1456
      %1460 = vset.pattern.permute.xlu0 0
      %1461 = vperm.xlu0 %1460, %v1367
      %v1462 = vpop.permute.xlu0 %1461
      %1465 = vset.pattern.permute.xlu0 0
      %1466 = vperm.xlu0 %1465, %v1368
      %v1467 = vpop.permute.xlu0 %1466
      %1470 = vset.pattern.permute.xlu0 0
      %1471 = vperm.xlu0 %1470, %v1369
      %v1472 = vpop.permute.xlu0 %1471
      %1475 = vset.pattern.permute.xlu0 0
      %1476 = vperm.xlu0 %1475, %v1370
      %v1477 = vpop.permute.xlu0 %1476
      %1480 = vset.pattern.permute.xlu0 0
      %1481 = vperm.xlu0 %1480, %v1371
      %v1482 = vpop.permute.xlu0 %1481
      %1485 = vset.pattern.permute.xlu0 0
      %1486 = vperm.xlu0 %1485, %v1372
      %v1487 = vpop.permute.xlu0 %1486
      %1490 = vset.pattern.permute.xlu0 0
      %1491 = vperm.xlu0 %1490, %v1373
      %v1492 = vpop.permute.xlu0 %1491
      %1495 = vset.pattern.permute.xlu0 0
      %1496 = vperm.xlu0 %1495, %v1374
      %v1497 = vpop.permute.xlu0 %1496
      %1500 = vset.pattern.permute.xlu0 0
      %1501 = vperm.xlu0 %1500, %v1375
      %v1502 = vpop.permute.xlu0 %1501
      %v1504 = vsub.f32 %v1273, %v1427
      %v1505 = vsub.f32 %v1275, %v1432
      %v1506 = vsub.f32 %v1278, %v1437
      %v1507 = vsub.f32 %v1280, %v1442
      %v1508 = vsub.f32 %v1283, %v1447
      %v1509 = vsub.f32 %v1285, %v1452
      %v1510 = vsub.f32 %v1288, %v1457
      %v1511 = vsub.f32 %v1290, %v1462
      %v1512 = vsub.f32 %v1293, %v1467
      %v1513 = vsub.f32 %v1295, %v1472
      %v1514 = vsub.f32 %v1298, %v1477
      %v1515 = vsub.f32 %v1300, %v1482
      %v1516 = vsub.f32 %v1303, %v1487
      %v1517 = vsub.f32 %v1305, %v1492
      %v1518 = vsub.f32 %v1308, %v1497
      %v1519 = vsub.f32 %v1310, %v1502
      %v1520 = vpack.c.bf16 %v1505, %v1504
      %v1521 = vpack.c.bf16 %v1507, %v1506
      %v1522 = vpack.c.bf16 %v1509, %v1508
      %v1523 = vpack.c.bf16 %v1511, %v1510
      %v1524 = vpack.c.bf16 %v1513, %v1512
      %v1525 = vpack.c.bf16 %v1515, %v1514
      %v1526 = vpack.c.bf16 %v1517, %v1516
      %v1527 = vpack.c.bf16 %v1519, %v1518
      %v1528 = vunpack.c.l.bf16 %v1520
      %v1529 = vunpack.c.h.bf16 %v1520
      %v1530 = vunpack.c.l.bf16 %v1521
      %v1531 = vunpack.c.h.bf16 %v1521
      %v1532 = vunpack.c.l.bf16 %v1522
      %v1533 = vunpack.c.h.bf16 %v1522
      %v1534 = vunpack.c.l.bf16 %v1523
      %v1535 = vunpack.c.h.bf16 %v1523
      %v1536 = vunpack.c.l.bf16 %v1524
      %v1537 = vunpack.c.h.bf16 %v1524
      %v1538 = vunpack.c.l.bf16 %v1525
      %v1539 = vunpack.c.h.bf16 %v1525
      %v1540 = vunpack.c.l.bf16 %v1526
      %v1541 = vunpack.c.h.bf16 %v1526
      %v1542 = vunpack.c.l.bf16 %v1527
      %v1543 = vunpack.c.h.bf16 %v1527
      %v1544 = vmul.f32 %v1528, 1.442695
      %v1545 = vpow.pop %v1544
      %v1546 = vmul.f32 %v1529, 1.442695
      %v1547 = vpow.pop %v1546
      %v1548 = vmul.f32 %v1530, 1.442695
      %v1549 = vpow.pop %v1548
      %v1550 = vmul.f32 %v1531, 1.442695
      %v1551 = vpow.pop %v1550
      %v1552 = vmul.f32 %v1532, 1.442695
      %v1553 = vpow.pop %v1552
      %v1554 = vmul.f32 %v1533, 1.442695
      %v1555 = vpow.pop %v1554
      %v1556 = vmul.f32 %v1534, 1.442695
      %v1557 = vpow.pop %v1556
      %v1558 = vmul.f32 %v1535, 1.442695
      %v1559 = vpow.pop %v1558
      %v1560 = vmul.f32 %v1536, 1.442695
      %v1561 = vpow.pop %v1560
      %v1562 = vmul.f32 %v1537, 1.442695
      %v1563 = vpow.pop %v1562
      %v1564 = vmul.f32 %v1538, 1.442695
      %v1565 = vpow.pop %v1564
      %v1566 = vmul.f32 %v1539, 1.442695
      %v1567 = vpow.pop %v1566
      %v1568 = vmul.f32 %v1540, 1.442695
      %v1569 = vpow.pop %v1568
      %v1570 = vmul.f32 %v1541, 1.442695
      %v1571 = vpow.pop %v1570
      %v1572 = vmul.f32 %v1542, 1.442695
      %v1573 = vpow.pop %v1572
      %v1574 = vmul.f32 %v1543, 1.442695
      %v1575 = vpow.pop %v1574
      %v1576 = vpack.c.bf16 %v1547, %v1545
      %v1577 = vpack.c.bf16 %v1551, %v1549
      %v1578 = vpack.c.bf16 %v1555, %v1553
      %v1579 = vpack.c.bf16 %v1559, %v1557
      %v1580 = vpack.c.bf16 %v1563, %v1561
      %v1581 = vpack.c.bf16 %v1567, %v1565
      %v1582 = vpack.c.bf16 %v1571, %v1569
      %v1583 = vpack.c.bf16 %v1575, %v1573
      %v1584 = vld [vmem:[#allocation4] sm:$0xff]
      %v1585 = vld [vmem:[#allocation4 + $0x8] sm:$0xff]
      %v1586 = vld [vmem:[#allocation4 + $0x10] sm:$0xff]
      %v1587 = vld [vmem:[#allocation4 + $0x18] sm:$0xff]
      %v1588 = vld [vmem:[#allocation4 + $0x20] sm:$0xff]
      %v1589 = vld [vmem:[#allocation4 + $0x28] sm:$0xff]
      %v1590 = vld [vmem:[#allocation4 + $0x30] sm:$0xff]
      %v1591 = vld [vmem:[#allocation4 + $0x38] sm:$0xff]
      %v1592 = vld [vmem:[#allocation4 + $0x40] sm:$0xff]
      %v1593 = vld [vmem:[#allocation4 + $0x48] sm:$0xff]
      %v1594 = vld [vmem:[#allocation4 + $0x50] sm:$0xff]
      %v1595 = vld [vmem:[#allocation4 + $0x58] sm:$0xff]
      %v1596 = vld [vmem:[#allocation4 + $0x60] sm:$0xff]
      %v1597 = vld [vmem:[#allocation4 + $0x68] sm:$0xff]
      %v1598 = vld [vmem:[#allocation4 + $0x70] sm:$0xff]
      %v1599 = vld [vmem:[#allocation4 + $0x78] sm:$0xff]
      %v1600 = vmul.f32 %v1393, %v1584
      %v1601 = vmul.f32 %v1395, %v1585
      %v1602 = vmul.f32 %v1397, %v1586
      %v1603 = vmul.f32 %v1399, %v1587
      %v1604 = vmul.f32 %v1401, %v1588
      %v1605 = vmul.f32 %v1403, %v1589
      %v1606 = vmul.f32 %v1405, %v1590
      %v1607 = vmul.f32 %v1407, %v1591
      %v1608 = vmul.f32 %v1409, %v1592
      %v1609 = vmul.f32 %v1411, %v1593
      %v1610 = vmul.f32 %v1413, %v1594
      %v1611 = vmul.f32 %v1415, %v1595
      %v1612 = vmul.f32 %v1417, %v1596
      %v1613 = vmul.f32 %v1419, %v1597
      %v1614 = vmul.f32 %v1421, %v1598
      %v1615 = vmul.f32 %v1423, %v1599
      %v1616 = vunpack.c.l.bf16 %v1576
      %v1617 = vunpack.c.h.bf16 %v1576
      %v1618 = vunpack.c.l.bf16 %v1577
      %v1619 = vunpack.c.h.bf16 %v1577
      %v1620 = vunpack.c.l.bf16 %v1578
      %v1621 = vunpack.c.h.bf16 %v1578
      %v1622 = vunpack.c.l.bf16 %v1579
      %v1623 = vunpack.c.h.bf16 %v1579
      %v1624 = vunpack.c.l.bf16 %v1580
      %v1625 = vunpack.c.h.bf16 %v1580
      %v1626 = vunpack.c.l.bf16 %v1581
      %v1627 = vunpack.c.h.bf16 %v1581
      %v1628 = vunpack.c.l.bf16 %v1582
      %v1629 = vunpack.c.h.bf16 %v1582
      %v1630 = vunpack.c.l.bf16 %v1583
      %v1631 = vunpack.c.h.bf16 %v1583
      %1632 = vadd.xlane.f32.xlu0 %v1616
      %v1633 = vpop.xlane.xlu0 %1632
      %1634 = vadd.xlane.f32.xlu0 %v1617
      %v1635 = vpop.xlane.xlu0 %1634
      %1636 = vadd.xlane.f32.xlu0 %v1618
      %v1637 = vpop.xlane.xlu0 %1636
      %1638 = vadd.xlane.f32.xlu0 %v1619
      %v1639 = vpop.xlane.xlu0 %1638
      %1640 = vadd.xlane.f32.xlu0 %v1620
      %v1641 = vpop.xlane.xlu0 %1640
      %1642 = vadd.xlane.f32.xlu0 %v1621
      %v1643 = vpop.xlane.xlu0 %1642
      %1644 = vadd.xlane.f32.xlu0 %v1622
      %v1645 = vpop.xlane.xlu0 %1644
      %1646 = vadd.xlane.f32.xlu0 %v1623
      %v1647 = vpop.xlane.xlu0 %1646
      %1648 = vadd.xlane.f32.xlu0 %v1624
      %v1649 = vpop.xlane.xlu0 %1648
      %1650 = vadd.xlane.f32.xlu0 %v1625
      %v1651 = vpop.xlane.xlu0 %1650
      %1652 = vadd.xlane.f32.xlu0 %v1626
      %v1653 = vpop.xlane.xlu0 %1652
      %1654 = vadd.xlane.f32.xlu0 %v1627
      %v1655 = vpop.xlane.xlu0 %1654
      %1656 = vadd.xlane.f32.xlu0 %v1628
      %v1657 = vpop.xlane.xlu0 %1656
      %1658 = vadd.xlane.f32.xlu0 %v1629
      %v1659 = vpop.xlane.xlu0 %1658
      %1660 = vadd.xlane.f32.xlu0 %v1630
      %v1661 = vpop.xlane.xlu0 %1660
      %1662 = vadd.xlane.f32.xlu0 %v1631
      %v1663 = vpop.xlane.xlu0 %1662
      %v1664 = vadd.f32 %v1600, %v1633
      %v1665 = vadd.f32 %v1601, %v1635
      %v1666 = vadd.f32 %v1602, %v1637
      %v1667 = vadd.f32 %v1603, %v1639
      %v1668 = vadd.f32 %v1604, %v1641
      %v1669 = vadd.f32 %v1605, %v1643
      %v1670 = vadd.f32 %v1606, %v1645
      %v1671 = vadd.f32 %v1607, %v1647
      %v1672 = vadd.f32 %v1608, %v1649
      %v1673 = vadd.f32 %v1609, %v1651
      %v1674 = vadd.f32 %v1610, %v1653
      %v1675 = vadd.f32 %v1611, %v1655
      %v1676 = vadd.f32 %v1612, %v1657
      %v1677 = vadd.f32 %v1613, %v1659
      %v1678 = vadd.f32 %v1614, %v1661
      %v1679 = vadd.f32 %v1615, %v1663
      %vm1680 = vcmask 7168
      %1681 = vst.msk [vmem:[#allocation4] sm:$0xff] %vm1680, %v1664
      %1682 = vst.msk [vmem:[#allocation4 + $0x8] sm:$0xff] %vm1680, %v1665
      %1683 = vst.msk [vmem:[#allocation4 + $0x10] sm:$0xff] %vm1680, %v1666
      %1684 = vst.msk [vmem:[#allocation4 + $0x18] sm:$0xff] %vm1680, %v1667
      %1685 = vst.msk [vmem:[#allocation4 + $0x20] sm:$0xff] %vm1680, %v1668
      %1686 = vst.msk [vmem:[#allocation4 + $0x28] sm:$0xff] %vm1680, %v1669
      %1687 = vst.msk [vmem:[#allocation4 + $0x30] sm:$0xff] %vm1680, %v1670
      %1688 = vst.msk [vmem:[#allocation4 + $0x38] sm:$0xff] %vm1680, %v1671
      %1689 = vst.msk [vmem:[#allocation4 + $0x40] sm:$0xff] %vm1680, %v1672
      %1690 = vst.msk [vmem:[#allocation4 + $0x48] sm:$0xff] %vm1680, %v1673
      %1691 = vst.msk [vmem:[#allocation4 + $0x50] sm:$0xff] %vm1680, %v1674
      %1692 = vst.msk [vmem:[#allocation4 + $0x58] sm:$0xff] %vm1680, %v1675
      %1693 = vst.msk [vmem:[#allocation4 + $0x60] sm:$0xff] %vm1680, %v1676
      %1694 = vst.msk [vmem:[#allocation4 + $0x68] sm:$0xff] %vm1680, %v1677
      %1695 = vst.msk [vmem:[#allocation4 + $0x70] sm:$0xff] %vm1680, %v1678
      %1696 = vst.msk [vmem:[#allocation4 + $0x78] sm:$0xff] %vm1680, %v1679
      %v1697 = vld [vmem:[#allocation5] sm:$0xff]
      %v1698 = vld [vmem:[#allocation5 + $0x8] sm:$0xff]
      %v1699 = vld [vmem:[#allocation5 + $0x10] sm:$0xff]
      %v1700 = vld [vmem:[#allocation5 + $0x18] sm:$0xff]
      %v1701 = vld [vmem:[#allocation5 + $0x20] sm:$0xff]
      %v1702 = vld [vmem:[#allocation5 + $0x28] sm:$0xff]
      %v1703 = vld [vmem:[#allocation5 + $0x30] sm:$0xff]
      %v1704 = vld [vmem:[#allocation5 + $0x38] sm:$0xff]
      %v1705 = vld [vmem:[#allocation5 + $0x40] sm:$0xff]
      %v1706 = vld [vmem:[#allocation5 + $0x48] sm:$0xff]
      %v1707 = vld [vmem:[#allocation5 + $0x50] sm:$0xff]
      %v1708 = vld [vmem:[#allocation5 + $0x58] sm:$0xff]
      %v1709 = vld [vmem:[#allocation5 + $0x60] sm:$0xff]
      %v1710 = vld [vmem:[#allocation5 + $0x68] sm:$0xff]
      %v1711 = vld [vmem:[#allocation5 + $0x70] sm:$0xff]
      %v1712 = vld [vmem:[#allocation5 + $0x78] sm:$0xff]
      %1714 = vset.pattern.permute.xlu0 0
      %1715 = vperm.xlu0 %1714, %v1393
      %v1716 = vpop.permute.xlu0 %1715
      %1719 = vset.pattern.permute.xlu0 0
      %1720 = vperm.xlu0 %1719, %v1395
      %v1721 = vpop.permute.xlu0 %1720
      %1724 = vset.pattern.permute.xlu0 0
      %1725 = vperm.xlu0 %1724, %v1397
      %v1726 = vpop.permute.xlu0 %1725
      %1729 = vset.pattern.permute.xlu0 0
      %1730 = vperm.xlu0 %1729, %v1399
      %v1731 = vpop.permute.xlu0 %1730
      %1734 = vset.pattern.permute.xlu0 0
      %1735 = vperm.xlu0 %1734, %v1401
      %v1736 = vpop.permute.xlu0 %1735
      %1739 = vset.pattern.permute.xlu0 0
      %1740 = vperm.xlu0 %1739, %v1403
      %v1741 = vpop.permute.xlu0 %1740
      %1744 = vset.pattern.permute.xlu0 0
      %1745 = vperm.xlu0 %1744, %v1405
      %v1746 = vpop.permute.xlu0 %1745
      %1749 = vset.pattern.permute.xlu0 0
      %1750 = vperm.xlu0 %1749, %v1407
      %v1751 = vpop.permute.xlu0 %1750
      %1754 = vset.pattern.permute.xlu0 0
      %1755 = vperm.xlu0 %1754, %v1409
      %v1756 = vpop.permute.xlu0 %1755
      %1759 = vset.pattern.permute.xlu0 0
      %1760 = vperm.xlu0 %1759, %v1411
      %v1761 = vpop.permute.xlu0 %1760
      %1764 = vset.pattern.permute.xlu0 0
      %1765 = vperm.xlu0 %1764, %v1413
      %v1766 = vpop.permute.xlu0 %1765
      %1769 = vset.pattern.permute.xlu0 0
      %1770 = vperm.xlu0 %1769, %v1415
      %v1771 = vpop.permute.xlu0 %1770
      %1774 = vset.pattern.permute.xlu0 0
      %1775 = vperm.xlu0 %1774, %v1417
      %v1776 = vpop.permute.xlu0 %1775
      %1779 = vset.pattern.permute.xlu0 0
      %1780 = vperm.xlu0 %1779, %v1419
      %v1781 = vpop.permute.xlu0 %1780
      %1784 = vset.pattern.permute.xlu0 0
      %1785 = vperm.xlu0 %1784, %v1421
      %v1786 = vpop.permute.xlu0 %1785
      %1789 = vset.pattern.permute.xlu0 0
      %1790 = vperm.xlu0 %1789, %v1423
      %v1791 = vpop.permute.xlu0 %1790
      %v1793 = vmul.f32 %v1716, %v1697
      %v1794 = vmul.f32 %v1721, %v1698
      %v1795 = vmul.f32 %v1726, %v1699
      %v1796 = vmul.f32 %v1731, %v1700
      %v1797 = vmul.f32 %v1736, %v1701
      %v1798 = vmul.f32 %v1741, %v1702
      %v1799 = vmul.f32 %v1746, %v1703
      %v1800 = vmul.f32 %v1751, %v1704
      %v1801 = vmul.f32 %v1756, %v1705
      %v1802 = vmul.f32 %v1761, %v1706
      %v1803 = vmul.f32 %v1766, %v1707
      %v1804 = vmul.f32 %v1771, %v1708
      %v1805 = vmul.f32 %v1776, %v1709
      %v1806 = vmul.f32 %v1781, %v1710
      %v1807 = vmul.f32 %v1786, %v1711
      %v1808 = vmul.f32 %v1791, %v1712
      %v1825 = vunpack.c.l.b16 %v1098
      %v1826 = vunpack.c.l.b16 %v1099
      %v1827 = vunpack.c.l.b16 %v1100
      %v1828 = vunpack.c.l.b16 %v1101
      %v1829 = vunpack.c.l.b16 %v1102
      %v1830 = vunpack.c.l.b16 %v1103
      %v1831 = vunpack.c.l.b16 %v1104
      %v1832 = vunpack.c.l.b16 %v1105
      %v1833 = vunpack.c.l.b16 %v1106
      %v1834 = vunpack.c.l.b16 %v1107
      %v1835 = vunpack.c.l.b16 %v1108
      %v1836 = vunpack.c.l.b16 %v1109
      %v1837 = vunpack.c.l.b16 %v1110
      %v1838 = vunpack.c.l.b16 %v1111
      %v1839 = vunpack.c.l.b16 %v1112
      %v1840 = vunpack.c.l.b16 %v1113
      %v1841 = vpack.c.b16 %v1826, %v1825
      %v1842 = vpack.c.b16 %v1828, %v1827
      %v1843 = vpack.c.b16 %v1830, %v1829
      %v1844 = vpack.c.b16 %v1832, %v1831
      %v1845 = vpack.c.b16 %v1834, %v1833
      %v1846 = vpack.c.b16 %v1836, %v1835
      %v1847 = vpack.c.b16 %v1838, %v1837
      %v1848 = vpack.c.b16 %v1840, %v1839
      %1857 = vmatpush.bf16.msra.mxu0 %v1848
      %1858 = vmatpush.bf16.msra.mxu0 %v1847
      %1859 = vmatpush.bf16.msra.mxu0 %v1846
      %1860 = vmatpush.bf16.msra.mxu0 %v1845
      %1861 = vmatpush.bf16.msra.mxu0 %v1844
      %1862 = vmatpush.bf16.msra.mxu0 %v1843
      %1863 = vmatpush.bf16.msra.mxu0 %v1842
      %1864 = vmatpush.bf16.msra.mxu0 %v1841
      %1865 = vmatmul.bf16.gmra.mxu0 %v1576
      %v1866 = vpop.f32.mrf.mxu0
      %v1867 = vadd.f32 0.0, %v1866
      %v1868 = vpop.f32.mrf.mxu0
      %v1869 = vadd.f32 0.0, %v1868
      %1870 = vmatmul.bf16.gmra.mxu0 %v1577
      %v1871 = vpop.f32.mrf.mxu0
      %v1872 = vadd.f32 0.0, %v1871
      %v1873 = vpop.f32.mrf.mxu0
      %v1874 = vadd.f32 0.0, %v1873
      %1875 = vmatmul.bf16.gmra.mxu0 %v1578
      %v1876 = vpop.f32.mrf.mxu0
      %v1877 = vadd.f32 0.0, %v1876
      %v1878 = vpop.f32.mrf.mxu0
      %v1879 = vadd.f32 0.0, %v1878
      %1880 = vmatmul.bf16.gmra.mxu0 %v1579
      %v1881 = vpop.f32.mrf.mxu0
      %v1882 = vadd.f32 0.0, %v1881
      %v1883 = vpop.f32.mrf.mxu0
      %v1884 = vadd.f32 0.0, %v1883
      %1885 = vmatmul.bf16.gmra.mxu0 %v1580
      %v1886 = vpop.f32.mrf.mxu0
      %v1887 = vadd.f32 0.0, %v1886
      %v1888 = vpop.f32.mrf.mxu0
      %v1889 = vadd.f32 0.0, %v1888
      %1890 = vmatmul.bf16.gmra.mxu0 %v1581
      %v1891 = vpop.f32.mrf.mxu0
      %v1892 = vadd.f32 0.0, %v1891
      %v1893 = vpop.f32.mrf.mxu0
      %v1894 = vadd.f32 0.0, %v1893
      %1895 = vmatmul.bf16.gmra.mxu0 %v1582
      %v1896 = vpop.f32.mrf.mxu0
      %v1897 = vadd.f32 0.0, %v1896
      %v1898 = vpop.f32.mrf.mxu0
      %v1899 = vadd.f32 0.0, %v1898
      %1900 = vmatmul.bf16.gmra.mxu0 %v1583
      %v1901 = vpop.f32.mrf.mxu0
      %v1902 = vadd.f32 0.0, %v1901
      %v1903 = vpop.f32.mrf.mxu0
      %v1904 = vadd.f32 0.0, %v1903
      %1905 = vdwg.mxu0
      %v1906 = vadd.f32 %v1793, %v1867
      %v1907 = vadd.f32 %v1794, %v1869
      %v1908 = vadd.f32 %v1795, %v1872
      %v1909 = vadd.f32 %v1796, %v1874
      %v1910 = vadd.f32 %v1797, %v1877
      %v1911 = vadd.f32 %v1798, %v1879
      %v1912 = vadd.f32 %v1799, %v1882
      %v1913 = vadd.f32 %v1800, %v1884
      %v1914 = vadd.f32 %v1801, %v1887
      %v1915 = vadd.f32 %v1802, %v1889
      %v1916 = vadd.f32 %v1803, %v1892
      %v1917 = vadd.f32 %v1804, %v1894
      %v1918 = vadd.f32 %v1805, %v1897
      %v1919 = vadd.f32 %v1806, %v1899
      %v1920 = vadd.f32 %v1807, %v1902
      %v1921 = vadd.f32 %v1808, %v1904
      %1922 = vst.msk [vmem:[#allocation5] sm:$0xff] %vm1214, %v1906
      %1923 = vst.msk [vmem:[#allocation5 + $0x8] sm:$0xff] %vm1214, %v1907
      %1924 = vst.msk [vmem:[#allocation5 + $0x10] sm:$0xff] %vm1214, %v1908
      %1925 = vst.msk [vmem:[#allocation5 + $0x18] sm:$0xff] %vm1214, %v1909
      %1926 = vst.msk [vmem:[#allocation5 + $0x20] sm:$0xff] %vm1214, %v1910
      %1927 = vst.msk [vmem:[#allocation5 + $0x28] sm:$0xff] %vm1214, %v1911
      %1928 = vst.msk [vmem:[#allocation5 + $0x30] sm:$0xff] %vm1214, %v1912
      %1929 = vst.msk [vmem:[#allocation5 + $0x38] sm:$0xff] %vm1214, %v1913
      %1930 = vst.msk [vmem:[#allocation5 + $0x40] sm:$0xff] %vm1214, %v1914
      %1931 = vst.msk [vmem:[#allocation5 + $0x48] sm:$0xff] %vm1214, %v1915
      %1932 = vst.msk [vmem:[#allocation5 + $0x50] sm:$0xff] %vm1214, %v1916
      %1933 = vst.msk [vmem:[#allocation5 + $0x58] sm:$0xff] %vm1214, %v1917
      %1934 = vst.msk [vmem:[#allocation5 + $0x60] sm:$0xff] %vm1214, %v1918
      %1935 = vst.msk [vmem:[#allocation5 + $0x68] sm:$0xff] %vm1214, %v1919
      %1936 = vst.msk [vmem:[#allocation5 + $0x70] sm:$0xff] %vm1214, %v1920
      %1937 = vst.msk [vmem:[#allocation5 + $0x78] sm:$0xff] %vm1214, %v1921
      %1938 = vst.msk [vmem:[#allocation3] sm:$0xff] %vm1680, %v1360
      %1939 = vst.msk [vmem:[#allocation3 + $0x8] sm:$0xff] %vm1680, %v1361
      %1940 = vst.msk [vmem:[#allocation3 + $0x10] sm:$0xff] %vm1680, %v1362
      %1941 = vst.msk [vmem:[#allocation3 + $0x18] sm:$0xff] %vm1680, %v1363
      %1942 = vst.msk [vmem:[#allocation3 + $0x20] sm:$0xff] %vm1680, %v1364
      %1943 = vst.msk [vmem:[#allocation3 + $0x28] sm:$0xff] %vm1680, %v1365
      %1944 = vst.msk [vmem:[#allocation3 + $0x30] sm:$0xff] %vm1680, %v1366
      %1945 = vst.msk [vmem:[#allocation3 + $0x38] sm:$0xff] %vm1680, %v1367
      %1946 = vst.msk [vmem:[#allocation3 + $0x40] sm:$0xff] %vm1680, %v1368
      %1947 = vst.msk [vmem:[#allocation3 + $0x48] sm:$0xff] %vm1680, %v1369
      %1948 = vst.msk [vmem:[#allocation3 + $0x50] sm:$0xff] %vm1680, %v1370
      %1949 = vst.msk [vmem:[#allocation3 + $0x58] sm:$0xff] %vm1680, %v1371
      %1950 = vst.msk [vmem:[#allocation3 + $0x60] sm:$0xff] %vm1680, %v1372
      %1951 = vst.msk [vmem:[#allocation3 + $0x68] sm:$0xff] %vm1680, %v1373
      %1952 = vst.msk [vmem:[#allocation3 + $0x70] sm:$0xff] %vm1680, %v1374
      %1953 = vst.msk [vmem:[#allocation3 + $0x78] sm:$0xff] %vm1680, %v1375
      %v1954 = vld [vmem:[#allocation2] sm:$0xf]
      %v1955 = vld [vmem:[#allocation2 + $0x4] sm:$0xf]
      %v1956 = vld [vmem:[#allocation2 + $0x8] sm:$0xf]
      %v1957 = vld [vmem:[#allocation2 + $0xc] sm:$0xf]
      %v1958 = vld [vmem:[#allocation2 + $0x10] sm:$0xf]
      %v1959 = vld [vmem:[#allocation2 + $0x14] sm:$0xf]
      %v1960 = vld [vmem:[#allocation2 + $0x18] sm:$0xf]
      %v1961 = vld [vmem:[#allocation2 + $0x1c] sm:$0xf]
      %v1962 = vld [vmem:[#allocation2 + $0x20] sm:$0xf]
      %v1963 = vld [vmem:[#allocation2 + $0x24] sm:$0xf]
      %v1964 = vld [vmem:[#allocation2 + $0x28] sm:$0xf]
      %v1965 = vld [vmem:[#allocation2 + $0x2c] sm:$0xf]
      %v1966 = vld [vmem:[#allocation2 + $0x30] sm:$0xf]
      %v1967 = vld [vmem:[#allocation2 + $0x34] sm:$0xf]
      %v1968 = vld [vmem:[#allocation2 + $0x38] sm:$0xf]
      %v1969 = vld [vmem:[#allocation2 + $0x3c] sm:$0xf]
      %v1986 = vunpack.c.l.b16 %v1954
      %v1987 = vunpack.c.l.b16 %v1955
      %v1988 = vunpack.c.l.b16 %v1956
      %v1989 = vunpack.c.l.b16 %v1957
      %v1990 = vunpack.c.l.b16 %v1958
      %v1991 = vunpack.c.l.b16 %v1959
      %v1992 = vunpack.c.l.b16 %v1960
      %v1993 = vunpack.c.l.b16 %v1961
      %v1994 = vunpack.c.l.b16 %v1962
      %v1995 = vunpack.c.l.b16 %v1963
      %v1996 = vunpack.c.l.b16 %v1964
      %v1997 = vunpack.c.l.b16 %v1965
      %v1998 = vunpack.c.l.b16 %v1966
      %v1999 = vunpack.c.l.b16 %v1967
      %v2000 = vunpack.c.l.b16 %v1968
      %v2001 = vunpack.c.l.b16 %v1969
      %v2002 = vpack.c.b16 %v1987, %v1986
      %v2003 = vpack.c.b16 %v1989, %v1988
      %v2004 = vpack.c.b16 %v1991, %v1990
      %v2005 = vpack.c.b16 %v1993, %v1992
      %v2006 = vpack.c.b16 %v1995, %v1994
      %v2007 = vpack.c.b16 %v1997, %v1996
      %v2008 = vpack.c.b16 %v1999, %v1998
      %v2009 = vpack.c.b16 %v2001, %v2000
      %2010 = vrot.lane.b32.xlu0 %v2002, 96
      %v2011 = vpop.permute.xlu0 %2010
      %2012 = vrot.lane.b32.xlu0 %v2003, 96
      %v2013 = vpop.permute.xlu0 %2012
      %2014 = vrot.lane.b32.xlu0 %v2004, 96
      %v2015 = vpop.permute.xlu0 %2014
      %2016 = vrot.lane.b32.xlu0 %v2005, 96
      %v2017 = vpop.permute.xlu0 %2016
      %2018 = vrot.lane.b32.xlu0 %v2006, 96
      %v2019 = vpop.permute.xlu0 %2018
      %2020 = vrot.lane.b32.xlu0 %v2007, 96
      %v2021 = vpop.permute.xlu0 %2020
      %2022 = vrot.lane.b32.xlu0 %v2008, 96
      %v2023 = vpop.permute.xlu0 %2022
      %2024 = vrot.lane.b32.xlu0 %v2009, 96
      %v2025 = vpop.permute.xlu0 %2024
      %2026 = vrot.lane.b32.xlu0 %v1206, 96
      %v2027 = vpop.permute.xlu0 %2026
      %2028 = vrot.lane.b32.xlu0 %v1207, 96
      %v2029 = vpop.permute.xlu0 %2028
      %2030 = vrot.lane.b32.xlu0 %v1208, 96
      %v2031 = vpop.permute.xlu0 %2030
      %2032 = vrot.lane.b32.xlu0 %v1209, 96
      %v2033 = vpop.permute.xlu0 %2032
      %2034 = vrot.lane.b32.xlu0 %v1210, 96
      %v2035 = vpop.permute.xlu0 %2034
      %2036 = vrot.lane.b32.xlu0 %v1211, 96
      %v2037 = vpop.permute.xlu0 %2036
      %2038 = vrot.lane.b32.xlu0 %v1212, 96
      %v2039 = vpop.permute.xlu0 %2038
      %2040 = vrot.lane.b32.xlu0 %v1213, 96
      %v2041 = vpop.permute.xlu0 %2040
      %v2043 = vsel %vm1214, %v2011, 0
      %v2046 = vsel %vm1214, %v2013, 0
      %v2049 = vsel %vm1214, %v2015, 0
      %v2052 = vsel %vm1214, %v2017, 0
      %v2055 = vsel %vm1214, %v2019, 0
      %v2058 = vsel %vm1214, %v2021, 0
      %v2061 = vsel %vm1214, %v2023, 0
      %v2064 = vsel %vm1214, %v2025, 0
      %v2067 = vsel %vm1214, %v2027, 0
      %v2070 = vsel %vm1214, %v2029, 0
      %v2073 = vsel %vm1214, %v2031, 0
      %v2076 = vsel %vm1214, %v2033, 0
      %v2079 = vsel %vm1214, %v2035, 0
      %v2082 = vsel %vm1214, %v2037, 0
      %v2085 = vsel %vm1214, %v2039, 0
      %v2088 = vsel %vm1214, %v2041, 0
      %2090 = vmatpush.bf16.xpose.msra.mxu0 %v2088
      %2091 = vmatpush.bf16.xpose.msra.mxu0 %v2085
      %2092 = vmatpush.bf16.xpose.msra.mxu0 %v2082
      %2093 = vmatpush.bf16.xpose.msra.mxu0 %v2079
      %2094 = vmatpush.bf16.xpose.msra.mxu0 %v2076
      %2095 = vmatpush.bf16.xpose.msra.mxu0 %v2073
      %2096 = vmatpush.bf16.xpose.msra.mxu0 %v2070
      %2097 = vmatpush.bf16.xpose.msra.mxu0 %v2067
      %2098 = vmatmul.bf16.gmra.mxu0 %v2043
      %v2099 = vpop.f32.mrf.mxu0
      %v2100 = vadd.f32 %v1132, %v2099
      %v2101 = vpop.f32.mrf.mxu0
      %v2102 = vadd.f32 %v1132, %v2101
      %2103 = vmatmul.bf16.gmra.mxu0 %v2046
      %v2104 = vpop.f32.mrf.mxu0
      %v2105 = vadd.f32 %v1132, %v2104
      %v2106 = vpop.f32.mrf.mxu0
      %v2107 = vadd.f32 %v1132, %v2106
      %2108 = vmatmul.bf16.gmra.mxu0 %v2049
      %v2109 = vpop.f32.mrf.mxu0
      %v2110 = vadd.f32 %v1132, %v2109
      %v2111 = vpop.f32.mrf.mxu0
      %v2112 = vadd.f32 %v1132, %v2111
      %2113 = vmatmul.bf16.gmra.mxu0 %v2052
      %v2114 = vpop.f32.mrf.mxu0
      %v2115 = vadd.f32 %v1132, %v2114
      %v2116 = vpop.f32.mrf.mxu0
      %v2117 = vadd.f32 %v1132, %v2116
      %2118 = vmatmul.bf16.gmra.mxu0 %v2055
      %v2119 = vpop.f32.mrf.mxu0
      %v2120 = vadd.f32 %v1132, %v2119
      %v2121 = vpop.f32.mrf.mxu0
      %v2122 = vadd.f32 %v1132, %v2121
      %2123 = vmatmul.bf16.gmra.mxu0 %v2058
      %v2124 = vpop.f32.mrf.mxu0
      %v2125 = vadd.f32 %v1132, %v2124
      %v2126 = vpop.f32.mrf.mxu0
      %v2127 = vadd.f32 %v1132, %v2126
      %2128 = vmatmul.bf16.gmra.mxu0 %v2061
      %v2129 = vpop.f32.mrf.mxu0
      %v2130 = vadd.f32 %v1132, %v2129
      %v2131 = vpop.f32.mrf.mxu0
      %v2132 = vadd.f32 %v1132, %v2131
      %2133 = vmatmul.bf16.gmra.mxu0 %v2064
      %v2134 = vpop.f32.mrf.mxu0
      %v2135 = vadd.f32 %v1132, %v2134
      %v2136 = vpop.f32.mrf.mxu0
      %v2137 = vadd.f32 %v1132, %v2136
      %2138 = vdwg.mxu0
      %s2139 = scalar_lea.vmem [#allocation3], 128
      %v2140 = vld [vmem:[%s2139] sm:$0xff]
      %v2141 = vld [vmem:[%s2139 + $0x8] sm:$0xff]
      %v2142 = vld [vmem:[%s2139 + $0x10] sm:$0xff]
      %v2143 = vld [vmem:[%s2139 + $0x18] sm:$0xff]
      %v2144 = vld [vmem:[%s2139 + $0x20] sm:$0xff]
      %v2145 = vld [vmem:[%s2139 + $0x28] sm:$0xff]
      %v2146 = vld [vmem:[%s2139 + $0x30] sm:$0xff]
      %v2147 = vld [vmem:[%s2139 + $0x38] sm:$0xff]
      %v2148 = vld [vmem:[%s2139 + $0x40] sm:$0xff]
      %v2149 = vld [vmem:[%s2139 + $0x48] sm:$0xff]
      %v2150 = vld [vmem:[%s2139 + $0x50] sm:$0xff]
      %v2151 = vld [vmem:[%s2139 + $0x58] sm:$0xff]
      %v2152 = vld [vmem:[%s2139 + $0x60] sm:$0xff]
      %v2153 = vld [vmem:[%s2139 + $0x68] sm:$0xff]
      %v2154 = vld [vmem:[%s2139 + $0x70] sm:$0xff]
      %v2155 = vld [vmem:[%s2139 + $0x78] sm:$0xff]
      %2156 = vmax.xlane.f32.xlu0 %v2100
      %v2157 = vpop.xlane.xlu0 %2156
      %2158 = vmax.xlane.f32.xlu0 %v2102
      %v2159 = vpop.xlane.xlu0 %2158
      %2160 = vmax.xlane.f32.xlu0 %v2105
      %v2161 = vpop.xlane.xlu0 %2160
      %2162 = vmax.xlane.f32.xlu0 %v2107
      %v2163 = vpop.xlane.xlu0 %2162
      %2164 = vmax.xlane.f32.xlu0 %v2110
      %v2165 = vpop.xlane.xlu0 %2164
      %2166 = vmax.xlane.f32.xlu0 %v2112
      %v2167 = vpop.xlane.xlu0 %2166
      %2168 = vmax.xlane.f32.xlu0 %v2115
      %v2169 = vpop.xlane.xlu0 %2168
      %2170 = vmax.xlane.f32.xlu0 %v2117
      %v2171 = vpop.xlane.xlu0 %2170
      %2172 = vmax.xlane.f32.xlu0 %v2120
      %v2173 = vpop.xlane.xlu0 %2172
      %2174 = vmax.xlane.f32.xlu0 %v2122
      %v2175 = vpop.xlane.xlu0 %2174
      %2176 = vmax.xlane.f32.xlu0 %v2125
      %v2177 = vpop.xlane.xlu0 %2176
      %2178 = vmax.xlane.f32.xlu0 %v2127
      %v2179 = vpop.xlane.xlu0 %2178
      %2180 = vmax.xlane.f32.xlu0 %v2130
      %v2181 = vpop.xlane.xlu0 %2180
      %2182 = vmax.xlane.f32.xlu0 %v2132
      %v2183 = vpop.xlane.xlu0 %2182
      %2184 = vmax.xlane.f32.xlu0 %v2135
      %v2185 = vpop.xlane.xlu0 %2184
      %2186 = vmax.xlane.f32.xlu0 %v2137
      %v2187 = vpop.xlane.xlu0 %2186
      %v2188 = vmax.f32 %v2140, %v2157
      %v2189 = vmax.f32 %v2141, %v2159
      %v2190 = vmax.f32 %v2142, %v2161
      %v2191 = vmax.f32 %v2143, %v2163
      %v2192 = vmax.f32 %v2144, %v2165
      %v2193 = vmax.f32 %v2145, %v2167
      %v2194 = vmax.f32 %v2146, %v2169
      %v2195 = vmax.f32 %v2147, %v2171
      %v2196 = vmax.f32 %v2148, %v2173
      %v2197 = vmax.f32 %v2149, %v2175
      %v2198 = vmax.f32 %v2150, %v2177
      %v2199 = vmax.f32 %v2151, %v2179
      %v2200 = vmax.f32 %v2152, %v2181
      %v2201 = vmax.f32 %v2153, %v2183
      %v2202 = vmax.f32 %v2154, %v2185
      %v2203 = vmax.f32 %v2155, %v2187
      %v2204 = vsub.f32 %v2140, %v2188
      %v2205 = vsub.f32 %v2141, %v2189
      %v2206 = vsub.f32 %v2142, %v2190
      %v2207 = vsub.f32 %v2143, %v2191
      %v2208 = vsub.f32 %v2144, %v2192
      %v2209 = vsub.f32 %v2145, %v2193
      %v2210 = vsub.f32 %v2146, %v2194
      %v2211 = vsub.f32 %v2147, %v2195
      %v2212 = vsub.f32 %v2148, %v2196
      %v2213 = vsub.f32 %v2149, %v2197
      %v2214 = vsub.f32 %v2150, %v2198
      %v2215 = vsub.f32 %v2151, %v2199
      %v2216 = vsub.f32 %v2152, %v2200
      %v2217 = vsub.f32 %v2153, %v2201
      %v2218 = vsub.f32 %v2154, %v2202
      %v2219 = vsub.f32 %v2155, %v2203
      %v2220 = vmul.f32 %v2204, 1.442695
      %v2221 = vpow.pop %v2220
      %v2222 = vmul.f32 %v2205, 1.442695
      %v2223 = vpow.pop %v2222
      %v2224 = vmul.f32 %v2206, 1.442695
      %v2225 = vpow.pop %v2224
      %v2226 = vmul.f32 %v2207, 1.442695
      %v2227 = vpow.pop %v2226
      %v2228 = vmul.f32 %v2208, 1.442695
      %v2229 = vpow.pop %v2228
      %v2230 = vmul.f32 %v2209, 1.442695
      %v2231 = vpow.pop %v2230
      %v2232 = vmul.f32 %v2210, 1.442695
      %v2233 = vpow.pop %v2232
      %v2234 = vmul.f32 %v2211, 1.442695
      %v2235 = vpow.pop %v2234
      %v2236 = vmul.f32 %v2212, 1.442695
      %v2237 = vpow.pop %v2236
      %v2238 = vmul.f32 %v2213, 1.442695
      %v2239 = vpow.pop %v2238
      %v2240 = vmul.f32 %v2214, 1.442695
      %v2241 = vpow.pop %v2240
      %v2242 = vmul.f32 %v2215, 1.442695
      %v2243 = vpow.pop %v2242
      %v2244 = vmul.f32 %v2216, 1.442695
      %v2245 = vpow.pop %v2244
      %v2246 = vmul.f32 %v2217, 1.442695
      %v2247 = vpow.pop %v2246
      %v2248 = vmul.f32 %v2218, 1.442695
      %v2249 = vpow.pop %v2248
      %v2250 = vmul.f32 %v2219, 1.442695
      %v2251 = vpow.pop %v2250
      %2253 = vset.pattern.permute.xlu0 0
      %2254 = vperm.xlu0 %2253, %v2188
      %v2255 = vpop.permute.xlu0 %2254
      %2258 = vset.pattern.permute.xlu0 0
      %2259 = vperm.xlu0 %2258, %v2189
      %v2260 = vpop.permute.xlu0 %2259
      %2263 = vset.pattern.permute.xlu0 0
      %2264 = vperm.xlu0 %2263, %v2190
      %v2265 = vpop.permute.xlu0 %2264
      %2268 = vset.pattern.permute.xlu0 0
      %2269 = vperm.xlu0 %2268, %v2191
      %v2270 = vpop.permute.xlu0 %2269
      %2273 = vset.pattern.permute.xlu0 0
      %2274 = vperm.xlu0 %2273, %v2192
      %v2275 = vpop.permute.xlu0 %2274
      %2278 = vset.pattern.permute.xlu0 0
      %2279 = vperm.xlu0 %2278, %v2193
      %v2280 = vpop.permute.xlu0 %2279
      %2283 = vset.pattern.permute.xlu0 0
      %2284 = vperm.xlu0 %2283, %v2194
      %v2285 = vpop.permute.xlu0 %2284
      %2288 = vset.pattern.permute.xlu0 0
      %2289 = vperm.xlu0 %2288, %v2195
      %v2290 = vpop.permute.xlu0 %2289
      %2293 = vset.pattern.permute.xlu0 0
      %2294 = vperm.xlu0 %2293, %v2196
      %v2295 = vpop.permute.xlu0 %2294
      %2298 = vset.pattern.permute.xlu0 0
      %2299 = vperm.xlu0 %2298, %v2197
      %v2300 = vpop.permute.xlu0 %2299
      %2303 = vset.pattern.permute.xlu0 0
      %2304 = vperm.xlu0 %2303, %v2198
      %v2305 = vpop.permute.xlu0 %2304
      %2308 = vset.pattern.permute.xlu0 0
      %2309 = vperm.xlu0 %2308, %v2199
      %v2310 = vpop.permute.xlu0 %2309
      %2313 = vset.pattern.permute.xlu0 0
      %2314 = vperm.xlu0 %2313, %v2200
      %v2315 = vpop.permute.xlu0 %2314
      %2318 = vset.pattern.permute.xlu0 0
      %2319 = vperm.xlu0 %2318, %v2201
      %v2320 = vpop.permute.xlu0 %2319
      %2323 = vset.pattern.permute.xlu0 0
      %2324 = vperm.xlu0 %2323, %v2202
      %v2325 = vpop.permute.xlu0 %2324
      %2328 = vset.pattern.permute.xlu0 0
      %2329 = vperm.xlu0 %2328, %v2203
      %v2330 = vpop.permute.xlu0 %2329
      %v2332 = vsub.f32 %v2100, %v2255
      %v2333 = vsub.f32 %v2102, %v2260
      %v2334 = vsub.f32 %v2105, %v2265
      %v2335 = vsub.f32 %v2107, %v2270
      %v2336 = vsub.f32 %v2110, %v2275
      %v2337 = vsub.f32 %v2112, %v2280
      %v2338 = vsub.f32 %v2115, %v2285
      %v2339 = vsub.f32 %v2117, %v2290
      %v2340 = vsub.f32 %v2120, %v2295
      %v2341 = vsub.f32 %v2122, %v2300
      %v2342 = vsub.f32 %v2125, %v2305
      %v2343 = vsub.f32 %v2127, %v2310
      %v2344 = vsub.f32 %v2130, %v2315
      %v2345 = vsub.f32 %v2132, %v2320
      %v2346 = vsub.f32 %v2135, %v2325
      %v2347 = vsub.f32 %v2137, %v2330
      %v2348 = vpack.c.bf16 %v2333, %v2332
      %v2349 = vpack.c.bf16 %v2335, %v2334
      %v2350 = vpack.c.bf16 %v2337, %v2336
      %v2351 = vpack.c.bf16 %v2339, %v2338
      %v2352 = vpack.c.bf16 %v2341, %v2340
      %v2353 = vpack.c.bf16 %v2343, %v2342
      %v2354 = vpack.c.bf16 %v2345, %v2344
      %v2355 = vpack.c.bf16 %v2347, %v2346
      %v2356 = vunpack.c.l.bf16 %v2348
      %v2357 = vunpack.c.h.bf16 %v2348
      %v2358 = vunpack.c.l.bf16 %v2349
      %v2359 = vunpack.c.h.bf16 %v2349
      %v2360 = vunpack.c.l.bf16 %v2350
      %v2361 = vunpack.c.h.bf16 %v2350
      %v2362 = vunpack.c.l.bf16 %v2351
      %v2363 = vunpack.c.h.bf16 %v2351
      %v2364 = vunpack.c.l.bf16 %v2352
      %v2365 = vunpack.c.h.bf16 %v2352
      %v2366 = vunpack.c.l.bf16 %v2353
      %v2367 = vunpack.c.h.bf16 %v2353
      %v2368 = vunpack.c.l.bf16 %v2354
      %v2369 = vunpack.c.h.bf16 %v2354
      %v2370 = vunpack.c.l.bf16 %v2355
      %v2371 = vunpack.c.h.bf16 %v2355
      %v2372 = vmul.f32 %v2356, 1.442695
      %v2373 = vpow.pop %v2372
      %v2374 = vmul.f32 %v2357, 1.442695
      %v2375 = vpow.pop %v2374
      %v2376 = vmul.f32 %v2358, 1.442695
      %v2377 = vpow.pop %v2376
      %v2378 = vmul.f32 %v2359, 1.442695
      %v2379 = vpow.pop %v2378
      %v2380 = vmul.f32 %v2360, 1.442695
      %v2381 = vpow.pop %v2380
      %v2382 = vmul.f32 %v2361, 1.442695
      %v2383 = vpow.pop %v2382
      %v2384 = vmul.f32 %v2362, 1.442695
      %v2385 = vpow.pop %v2384
      %v2386 = vmul.f32 %v2363, 1.442695
      %v2387 = vpow.pop %v2386
      %v2388 = vmul.f32 %v2364, 1.442695
      %v2389 = vpow.pop %v2388
      %v2390 = vmul.f32 %v2365, 1.442695
      %v2391 = vpow.pop %v2390
      %v2392 = vmul.f32 %v2366, 1.442695
      %v2393 = vpow.pop %v2392
      %v2394 = vmul.f32 %v2367, 1.442695
      %v2395 = vpow.pop %v2394
      %v2396 = vmul.f32 %v2368, 1.442695
      %v2397 = vpow.pop %v2396
      %v2398 = vmul.f32 %v2369, 1.442695
      %v2399 = vpow.pop %v2398
      %v2400 = vmul.f32 %v2370, 1.442695
      %v2401 = vpow.pop %v2400
      %v2402 = vmul.f32 %v2371, 1.442695
      %v2403 = vpow.pop %v2402
      %v2404 = vpack.c.bf16 %v2375, %v2373
      %v2405 = vpack.c.bf16 %v2379, %v2377
      %v2406 = vpack.c.bf16 %v2383, %v2381
      %v2407 = vpack.c.bf16 %v2387, %v2385
      %v2408 = vpack.c.bf16 %v2391, %v2389
      %v2409 = vpack.c.bf16 %v2395, %v2393
      %v2410 = vpack.c.bf16 %v2399, %v2397
      %v2411 = vpack.c.bf16 %v2403, %v2401
      %s2412 = scalar_lea.vmem [#allocation4], 128
      %v2413 = vld [vmem:[%s2412] sm:$0xff]
      %v2414 = vld [vmem:[%s2412 + $0x8] sm:$0xff]
      %v2415 = vld [vmem:[%s2412 + $0x10] sm:$0xff]
      %v2416 = vld [vmem:[%s2412 + $0x18] sm:$0xff]
      %v2417 = vld [vmem:[%s2412 + $0x20] sm:$0xff]
      %v2418 = vld [vmem:[%s2412 + $0x28] sm:$0xff]
      %v2419 = vld [vmem:[%s2412 + $0x30] sm:$0xff]
      %v2420 = vld [vmem:[%s2412 + $0x38] sm:$0xff]
      %v2421 = vld [vmem:[%s2412 + $0x40] sm:$0xff]
      %v2422 = vld [vmem:[%s2412 + $0x48] sm:$0xff]
      %v2423 = vld [vmem:[%s2412 + $0x50] sm:$0xff]
      %v2424 = vld [vmem:[%s2412 + $0x58] sm:$0xff]
      %v2425 = vld [vmem:[%s2412 + $0x60] sm:$0xff]
      %v2426 = vld [vmem:[%s2412 + $0x68] sm:$0xff]
      %v2427 = vld [vmem:[%s2412 + $0x70] sm:$0xff]
      %v2428 = vld [vmem:[%s2412 + $0x78] sm:$0xff]
      %v2429 = vmul.f32 %v2221, %v2413
      %v2430 = vmul.f32 %v2223, %v2414
      %v2431 = vmul.f32 %v2225, %v2415
      %v2432 = vmul.f32 %v2227, %v2416
      %v2433 = vmul.f32 %v2229, %v2417
      %v2434 = vmul.f32 %v2231, %v2418
      %v2435 = vmul.f32 %v2233, %v2419
      %v2436 = vmul.f32 %v2235, %v2420
      %v2437 = vmul.f32 %v2237, %v2421
      %v2438 = vmul.f32 %v2239, %v2422
      %v2439 = vmul.f32 %v2241, %v2423
      %v2440 = vmul.f32 %v2243, %v2424
      %v2441 = vmul.f32 %v2245, %v2425
      %v2442 = vmul.f32 %v2247, %v2426
      %v2443 = vmul.f32 %v2249, %v2427
      %v2444 = vmul.f32 %v2251, %v2428
      %v2445 = vunpack.c.l.bf16 %v2404
      %v2446 = vunpack.c.h.bf16 %v2404
      %v2447 = vunpack.c.l.bf16 %v2405
      %v2448 = vunpack.c.h.bf16 %v2405
      %v2449 = vunpack.c.l.bf16 %v2406
      %v2450 = vunpack.c.h.bf16 %v2406
      %v2451 = vunpack.c.l.bf16 %v2407
      %v2452 = vunpack.c.h.bf16 %v2407
      %v2453 = vunpack.c.l.bf16 %v2408
      %v2454 = vunpack.c.h.bf16 %v2408
      %v2455 = vunpack.c.l.bf16 %v2409
      %v2456 = vunpack.c.h.bf16 %v2409
      %v2457 = vunpack.c.l.bf16 %v2410
      %v2458 = vunpack.c.h.bf16 %v2410
      %v2459 = vunpack.c.l.bf16 %v2411
      %v2460 = vunpack.c.h.bf16 %v2411
      %2461 = vadd.xlane.f32.xlu0 %v2445
      %v2462 = vpop.xlane.xlu0 %2461
      %2463 = vadd.xlane.f32.xlu0 %v2446
      %v2464 = vpop.xlane.xlu0 %2463
      %2465 = vadd.xlane.f32.xlu0 %v2447
      %v2466 = vpop.xlane.xlu0 %2465
      %2467 = vadd.xlane.f32.xlu0 %v2448
      %v2468 = vpop.xlane.xlu0 %2467
      %2469 = vadd.xlane.f32.xlu0 %v2449
      %v2470 = vpop.xlane.xlu0 %2469
      %2471 = vadd.xlane.f32.xlu0 %v2450
      %v2472 = vpop.xlane.xlu0 %2471
      %2473 = vadd.xlane.f32.xlu0 %v2451
      %v2474 = vpop.xlane.xlu0 %2473
      %2475 = vadd.xlane.f32.xlu0 %v2452
      %v2476 = vpop.xlane.xlu0 %2475
      %2477 = vadd.xlane.f32.xlu0 %v2453
      %v2478 = vpop.xlane.xlu0 %2477
      %2479 = vadd.xlane.f32.xlu0 %v2454
      %v2480 = vpop.xlane.xlu0 %2479
      %2481 = vadd.xlane.f32.xlu0 %v2455
      %v2482 = vpop.xlane.xlu0 %2481
      %2483 = vadd.xlane.f32.xlu0 %v2456
      %v2484 = vpop.xlane.xlu0 %2483
      %2485 = vadd.xlane.f32.xlu0 %v2457
      %v2486 = vpop.xlane.xlu0 %2485
      %2487 = vadd.xlane.f32.xlu0 %v2458
      %v2488 = vpop.xlane.xlu0 %2487
      %2489 = vadd.xlane.f32.xlu0 %v2459
      %v2490 = vpop.xlane.xlu0 %2489
      %2491 = vadd.xlane.f32.xlu0 %v2460
      %v2492 = vpop.xlane.xlu0 %2491
      %v2493 = vadd.f32 %v2429, %v2462
      %v2494 = vadd.f32 %v2430, %v2464
      %v2495 = vadd.f32 %v2431, %v2466
      %v2496 = vadd.f32 %v2432, %v2468
      %v2497 = vadd.f32 %v2433, %v2470
      %v2498 = vadd.f32 %v2434, %v2472
      %v2499 = vadd.f32 %v2435, %v2474
      %v2500 = vadd.f32 %v2436, %v2476
      %v2501 = vadd.f32 %v2437, %v2478
      %v2502 = vadd.f32 %v2438, %v2480
      %v2503 = vadd.f32 %v2439, %v2482
      %v2504 = vadd.f32 %v2440, %v2484
      %v2505 = vadd.f32 %v2441, %v2486
      %v2506 = vadd.f32 %v2442, %v2488
      %v2507 = vadd.f32 %v2443, %v2490
      %v2508 = vadd.f32 %v2444, %v2492
      %2509 = vst.msk [vmem:[%s2412] sm:$0xff] %vm1680, %v2493
      %2510 = vst.msk [vmem:[%s2412 + $0x8] sm:$0xff] %vm1680, %v2494
      %2511 = vst.msk [vmem:[%s2412 + $0x10] sm:$0xff] %vm1680, %v2495
      %2512 = vst.msk [vmem:[%s2412 + $0x18] sm:$0xff] %vm1680, %v2496
      %2513 = vst.msk [vmem:[%s2412 + $0x20] sm:$0xff] %vm1680, %v2497
      %2514 = vst.msk [vmem:[%s2412 + $0x28] sm:$0xff] %vm1680, %v2498
      %2515 = vst.msk [vmem:[%s2412 + $0x30] sm:$0xff] %vm1680, %v2499
      %2516 = vst.msk [vmem:[%s2412 + $0x38] sm:$0xff] %vm1680, %v2500
      %2517 = vst.msk [vmem:[%s2412 + $0x40] sm:$0xff] %vm1680, %v2501
      %2518 = vst.msk [vmem:[%s2412 + $0x48] sm:$0xff] %vm1680, %v2502
      %2519 = vst.msk [vmem:[%s2412 + $0x50] sm:$0xff] %vm1680, %v2503
      %2520 = vst.msk [vmem:[%s2412 + $0x58] sm:$0xff] %vm1680, %v2504
      %2521 = vst.msk [vmem:[%s2412 + $0x60] sm:$0xff] %vm1680, %v2505
      %2522 = vst.msk [vmem:[%s2412 + $0x68] sm:$0xff] %vm1680, %v2506
      %2523 = vst.msk [vmem:[%s2412 + $0x70] sm:$0xff] %vm1680, %v2507
      %2524 = vst.msk [vmem:[%s2412 + $0x78] sm:$0xff] %vm1680, %v2508
      %v2525 = vld [vmem:[#allocation5] sm:$0xff]
      %v2526 = vld [vmem:[#allocation5 + $0x8] sm:$0xff]
      %v2527 = vld [vmem:[#allocation5 + $0x10] sm:$0xff]
      %v2528 = vld [vmem:[#allocation5 + $0x18] sm:$0xff]
      %v2529 = vld [vmem:[#allocation5 + $0x20] sm:$0xff]
      %v2530 = vld [vmem:[#allocation5 + $0x28] sm:$0xff]
      %v2531 = vld [vmem:[#allocation5 + $0x30] sm:$0xff]
      %v2532 = vld [vmem:[#allocation5 + $0x38] sm:$0xff]
      %v2533 = vld [vmem:[#allocation5 + $0x40] sm:$0xff]
      %v2534 = vld [vmem:[#allocation5 + $0x48] sm:$0xff]
      %v2535 = vld [vmem:[#allocation5 + $0x50] sm:$0xff]
      %v2536 = vld [vmem:[#allocation5 + $0x58] sm:$0xff]
      %v2537 = vld [vmem:[#allocation5 + $0x60] sm:$0xff]
      %v2538 = vld [vmem:[#allocation5 + $0x68] sm:$0xff]
      %v2539 = vld [vmem:[#allocation5 + $0x70] sm:$0xff]
      %v2540 = vld [vmem:[#allocation5 + $0x78] sm:$0xff]
      %2542 = vset.pattern.permute.xlu0 0
      %2543 = vperm.xlu0 %2542, %v2221
      %v2544 = vpop.permute.xlu0 %2543
      %2547 = vset.pattern.permute.xlu0 0
      %2548 = vperm.xlu0 %2547, %v2223
      %v2549 = vpop.permute.xlu0 %2548
      %2552 = vset.pattern.permute.xlu0 0
      %2553 = vperm.xlu0 %2552, %v2225
      %v2554 = vpop.permute.xlu0 %2553
      %2557 = vset.pattern.permute.xlu0 0
      %2558 = vperm.xlu0 %2557, %v2227
      %v2559 = vpop.permute.xlu0 %2558
      %2562 = vset.pattern.permute.xlu0 0
      %2563 = vperm.xlu0 %2562, %v2229
      %v2564 = vpop.permute.xlu0 %2563
      %2567 = vset.pattern.permute.xlu0 0
      %2568 = vperm.xlu0 %2567, %v2231
      %v2569 = vpop.permute.xlu0 %2568
      %2572 = vset.pattern.permute.xlu0 0
      %2573 = vperm.xlu0 %2572, %v2233
      %v2574 = vpop.permute.xlu0 %2573
      %2577 = vset.pattern.permute.xlu0 0
      %2578 = vperm.xlu0 %2577, %v2235
      %v2579 = vpop.permute.xlu0 %2578
      %2582 = vset.pattern.permute.xlu0 0
      %2583 = vperm.xlu0 %2582, %v2237
      %v2584 = vpop.permute.xlu0 %2583
      %2587 = vset.pattern.permute.xlu0 0
      %2588 = vperm.xlu0 %2587, %v2239
      %v2589 = vpop.permute.xlu0 %2588
      %2592 = vset.pattern.permute.xlu0 0
      %2593 = vperm.xlu0 %2592, %v2241
      %v2594 = vpop.permute.xlu0 %2593
      %2597 = vset.pattern.permute.xlu0 0
      %2598 = vperm.xlu0 %2597, %v2243
      %v2599 = vpop.permute.xlu0 %2598
      %2602 = vset.pattern.permute.xlu0 0
      %2603 = vperm.xlu0 %2602, %v2245
      %v2604 = vpop.permute.xlu0 %2603
      %2607 = vset.pattern.permute.xlu0 0
      %2608 = vperm.xlu0 %2607, %v2247
      %v2609 = vpop.permute.xlu0 %2608
      %2612 = vset.pattern.permute.xlu0 0
      %2613 = vperm.xlu0 %2612, %v2249
      %v2614 = vpop.permute.xlu0 %2613
      %2617 = vset.pattern.permute.xlu0 0
      %2618 = vperm.xlu0 %2617, %v2251
      %v2619 = vpop.permute.xlu0 %2618
      %v2621 = vmul.f32 %v2544, %v2525
      %v2622 = vmul.f32 %v2549, %v2526
      %v2623 = vmul.f32 %v2554, %v2527
      %v2624 = vmul.f32 %v2559, %v2528
      %v2625 = vmul.f32 %v2564, %v2529
      %v2626 = vmul.f32 %v2569, %v2530
      %v2627 = vmul.f32 %v2574, %v2531
      %v2628 = vmul.f32 %v2579, %v2532
      %v2629 = vmul.f32 %v2584, %v2533
      %v2630 = vmul.f32 %v2589, %v2534
      %v2631 = vmul.f32 %v2594, %v2535
      %v2632 = vmul.f32 %v2599, %v2536
      %v2633 = vmul.f32 %v2604, %v2537
      %v2634 = vmul.f32 %v2609, %v2538
      %v2635 = vmul.f32 %v2614, %v2539
      %v2636 = vmul.f32 %v2619, %v2540
      %2637 = vrot.lane.b32.xlu0 %v1841, 96
      %v2638 = vpop.permute.xlu0 %2637
      %2639 = vrot.lane.b32.xlu0 %v1842, 96
      %v2640 = vpop.permute.xlu0 %2639
      %2641 = vrot.lane.b32.xlu0 %v1843, 96
      %v2642 = vpop.permute.xlu0 %2641
      %2643 = vrot.lane.b32.xlu0 %v1844, 96
      %v2644 = vpop.permute.xlu0 %2643
      %2645 = vrot.lane.b32.xlu0 %v1845, 96
      %v2646 = vpop.permute.xlu0 %2645
      %2647 = vrot.lane.b32.xlu0 %v1846, 96
      %v2648 = vpop.permute.xlu0 %2647
      %2649 = vrot.lane.b32.xlu0 %v1847, 96
      %v2650 = vpop.permute.xlu0 %2649
      %2651 = vrot.lane.b32.xlu0 %v1848, 96
      %v2652 = vpop.permute.xlu0 %2651
      %2661 = vmatpush.bf16.msra.mxu0 %v2652
      %2662 = vmatpush.bf16.msra.mxu0 %v2650
      %2663 = vmatpush.bf16.msra.mxu0 %v2648
      %2664 = vmatpush.bf16.msra.mxu0 %v2646
      %2665 = vmatpush.bf16.msra.mxu0 %v2644
      %2666 = vmatpush.bf16.msra.mxu0 %v2642
      %2667 = vmatpush.bf16.msra.mxu0 %v2640
      %2668 = vmatpush.bf16.msra.mxu0 %v2638
      %2669 = vmatmul.bf16.gmra.mxu0 %v2404
      %v2670 = vpop.f32.mrf.mxu0
      %v2671 = vadd.f32 0.0, %v2670
      %v2672 = vpop.f32.mrf.mxu0
      %v2673 = vadd.f32 0.0, %v2672
      %2674 = vmatmul.bf16.gmra.mxu0 %v2405
      %v2675 = vpop.f32.mrf.mxu0
      %v2676 = vadd.f32 0.0, %v2675
      %v2677 = vpop.f32.mrf.mxu0
      %v2678 = vadd.f32 0.0, %v2677
      %2679 = vmatmul.bf16.gmra.mxu0 %v2406
      %v2680 = vpop.f32.mrf.mxu0
      %v2681 = vadd.f32 0.0, %v2680
      %v2682 = vpop.f32.mrf.mxu0
      %v2683 = vadd.f32 0.0, %v2682
      %2684 = vmatmul.bf16.gmra.mxu0 %v2407
      %v2685 = vpop.f32.mrf.mxu0
      %v2686 = vadd.f32 0.0, %v2685
      %v2687 = vpop.f32.mrf.mxu0
      %v2688 = vadd.f32 0.0, %v2687
      %2689 = vmatmul.bf16.gmra.mxu0 %v2408
      %v2690 = vpop.f32.mrf.mxu0
      %v2691 = vadd.f32 0.0, %v2690
      %v2692 = vpop.f32.mrf.mxu0
      %v2693 = vadd.f32 0.0, %v2692
      %2694 = vmatmul.bf16.gmra.mxu0 %v2409
      %v2695 = vpop.f32.mrf.mxu0
      %v2696 = vadd.f32 0.0, %v2695
      %v2697 = vpop.f32.mrf.mxu0
      %v2698 = vadd.f32 0.0, %v2697
      %2699 = vmatmul.bf16.gmra.mxu0 %v2410
      %v2700 = vpop.f32.mrf.mxu0
      %v2701 = vadd.f32 0.0, %v2700
      %v2702 = vpop.f32.mrf.mxu0
      %v2703 = vadd.f32 0.0, %v2702
      %2704 = vmatmul.bf16.gmra.mxu0 %v2411
      %v2705 = vpop.f32.mrf.mxu0
      %v2706 = vadd.f32 0.0, %v2705
      %v2707 = vpop.f32.mrf.mxu0
      %v2708 = vadd.f32 0.0, %v2707
      %2709 = vdwg.mxu0
      %2726 = vrot.lane.b32.xlu0 %v2671, 32
      %v2727 = vpop.permute.xlu0 %2726
      %2728 = vrot.lane.b32.xlu0 %v2673, 32
      %v2729 = vpop.permute.xlu0 %2728
      %2730 = vrot.lane.b32.xlu0 %v2676, 32
      %v2731 = vpop.permute.xlu0 %2730
      %2732 = vrot.lane.b32.xlu0 %v2678, 32
      %v2733 = vpop.permute.xlu0 %2732
      %2734 = vrot.lane.b32.xlu0 %v2681, 32
      %v2735 = vpop.permute.xlu0 %2734
      %2736 = vrot.lane.b32.xlu0 %v2683, 32
      %v2737 = vpop.permute.xlu0 %2736
      %2738 = vrot.lane.b32.xlu0 %v2686, 32
      %v2739 = vpop.permute.xlu0 %2738
      %2740 = vrot.lane.b32.xlu0 %v2688, 32
      %v2741 = vpop.permute.xlu0 %2740
      %2742 = vrot.lane.b32.xlu0 %v2691, 32
      %v2743 = vpop.permute.xlu0 %2742
      %2744 = vrot.lane.b32.xlu0 %v2693, 32
      %v2745 = vpop.permute.xlu0 %2744
      %2746 = vrot.lane.b32.xlu0 %v2696, 32
      %v2747 = vpop.permute.xlu0 %2746
      %2748 = vrot.lane.b32.xlu0 %v2698, 32
      %v2749 = vpop.permute.xlu0 %2748
      %2750 = vrot.lane.b32.xlu0 %v2701, 32
      %v2751 = vpop.permute.xlu0 %2750
      %2752 = vrot.lane.b32.xlu0 %v2703, 32
      %v2753 = vpop.permute.xlu0 %2752
      %2754 = vrot.lane.b32.xlu0 %v2706, 32
      %v2755 = vpop.permute.xlu0 %2754
      %2756 = vrot.lane.b32.xlu0 %v2708, 32
      %v2757 = vpop.permute.xlu0 %2756
      %v2774 = vadd.f32 %v2621, %v2727
      %v2775 = vadd.f32 %v2622, %v2729
      %v2776 = vadd.f32 %v2623, %v2731
      %v2777 = vadd.f32 %v2624, %v2733
      %v2778 = vadd.f32 %v2625, %v2735
      %v2779 = vadd.f32 %v2626, %v2737
      %v2780 = vadd.f32 %v2627, %v2739
      %v2781 = vadd.f32 %v2628, %v2741
      %v2782 = vadd.f32 %v2629, %v2743
      %v2783 = vadd.f32 %v2630, %v2745
      %v2784 = vadd.f32 %v2631, %v2747
      %v2785 = vadd.f32 %v2632, %v2749
      %v2786 = vadd.f32 %v2633, %v2751
      %v2787 = vadd.f32 %v2634, %v2753
      %v2788 = vadd.f32 %v2635, %v2755
      %v2789 = vadd.f32 %v2636, %v2757
      %vm2790 = vcmask 523520
      %2791 = vst.msk [vmem:[#allocation5] sm:$0xff] %vm2790, %v2774
      %2792 = vst.msk [vmem:[#allocation5 + $0x8] sm:$0xff] %vm2790, %v2775
      %2793 = vst.msk [vmem:[#allocation5 + $0x10] sm:$0xff] %vm2790, %v2776
      %2794 = vst.msk [vmem:[#allocation5 + $0x18] sm:$0xff] %vm2790, %v2777
      %2795 = vst.msk [vmem:[#allocation5 + $0x20] sm:$0xff] %vm2790, %v2778
      %2796 = vst.msk [vmem:[#allocation5 + $0x28] sm:$0xff] %vm2790, %v2779
      %2797 = vst.msk [vmem:[#allocation5 + $0x30] sm:$0xff] %vm2790, %v2780
      %2798 = vst.msk [vmem:[#allocation5 + $0x38] sm:$0xff] %vm2790, %v2781
      %2799 = vst.msk [vmem:[#allocation5 + $0x40] sm:$0xff] %vm2790, %v2782
      %2800 = vst.msk [vmem:[#allocation5 + $0x48] sm:$0xff] %vm2790, %v2783
      %2801 = vst.msk [vmem:[#allocation5 + $0x50] sm:$0xff] %vm2790, %v2784
      %2802 = vst.msk [vmem:[#allocation5 + $0x58] sm:$0xff] %vm2790, %v2785
      %2803 = vst.msk [vmem:[#allocation5 + $0x60] sm:$0xff] %vm2790, %v2786
      %2804 = vst.msk [vmem:[#allocation5 + $0x68] sm:$0xff] %vm2790, %v2787
      %2805 = vst.msk [vmem:[#allocation5 + $0x70] sm:$0xff] %vm2790, %v2788
      %2806 = vst.msk [vmem:[#allocation5 + $0x78] sm:$0xff] %vm2790, %v2789
      %2807 = vst.msk [vmem:[%s2139] sm:$0xff] %vm1680, %v2188
      %2808 = vst.msk [vmem:[%s2139 + $0x8] sm:$0xff] %vm1680, %v2189
      %2809 = vst.msk [vmem:[%s2139 + $0x10] sm:$0xff] %vm1680, %v2190
      %2810 = vst.msk [vmem:[%s2139 + $0x18] sm:$0xff] %vm1680, %v2191
      %2811 = vst.msk [vmem:[%s2139 + $0x20] sm:$0xff] %vm1680, %v2192
      %2812 = vst.msk [vmem:[%s2139 + $0x28] sm:$0xff] %vm1680, %v2193
      %2813 = vst.msk [vmem:[%s2139 + $0x30] sm:$0xff] %vm1680, %v2194
      %2814 = vst.msk [vmem:[%s2139 + $0x38] sm:$0xff] %vm1680, %v2195
      %2815 = vst.msk [vmem:[%s2139 + $0x40] sm:$0xff] %vm1680, %v2196
      %2816 = vst.msk [vmem:[%s2139 + $0x48] sm:$0xff] %vm1680, %v2197
      %2817 = vst.msk [vmem:[%s2139 + $0x50] sm:$0xff] %vm1680, %v2198
      %2818 = vst.msk [vmem:[%s2139 + $0x58] sm:$0xff] %vm1680, %v2199
      %2819 = vst.msk [vmem:[%s2139 + $0x60] sm:$0xff] %vm1680, %v2200
      %2820 = vst.msk [vmem:[%s2139 + $0x68] sm:$0xff] %vm1680, %v2201
      %2821 = vst.msk [vmem:[%s2139 + $0x70] sm:$0xff] %vm1680, %v2202
      %2822 = vst.msk [vmem:[%s2139 + $0x78] sm:$0xff] %vm1680, %v2203
      %v2823 = vld [vmem:[#allocation2] sm:$0xf]
      %v2824 = vld [vmem:[#allocation2 + $0x4] sm:$0xf]
      %v2825 = vld [vmem:[#allocation2 + $0x8] sm:$0xf]
      %v2826 = vld [vmem:[#allocation2 + $0xc] sm:$0xf]
      %v2827 = vld [vmem:[#allocation2 + $0x10] sm:$0xf]
      %v2828 = vld [vmem:[#allocation2 + $0x14] sm:$0xf]
      %v2829 = vld [vmem:[#allocation2 + $0x18] sm:$0xf]
      %v2830 = vld [vmem:[#allocation2 + $0x1c] sm:$0xf]
      %v2831 = vld [vmem:[#allocation2 + $0x20] sm:$0xf]
      %v2832 = vld [vmem:[#allocation2 + $0x24] sm:$0xf]
      %v2833 = vld [vmem:[#allocation2 + $0x28] sm:$0xf]
      %v2834 = vld [vmem:[#allocation2 + $0x2c] sm:$0xf]
      %v2835 = vld [vmem:[#allocation2 + $0x30] sm:$0xf]
      %v2836 = vld [vmem:[#allocation2 + $0x34] sm:$0xf]
      %v2837 = vld [vmem:[#allocation2 + $0x38] sm:$0xf]
      %v2838 = vld [vmem:[#allocation2 + $0x3c] sm:$0xf]
      %v2855 = vunpack.c.l.b16 %v2823
      %v2856 = vunpack.c.l.b16 %v2824
      %v2857 = vunpack.c.l.b16 %v2825
      %v2858 = vunpack.c.l.b16 %v2826
      %v2859 = vunpack.c.l.b16 %v2827
      %v2860 = vunpack.c.l.b16 %v2828
      %v2861 = vunpack.c.l.b16 %v2829
      %v2862 = vunpack.c.l.b16 %v2830
      %v2863 = vunpack.c.l.b16 %v2831
      %v2864 = vunpack.c.l.b16 %v2832
      %v2865 = vunpack.c.l.b16 %v2833
      %v2866 = vunpack.c.l.b16 %v2834
      %v2867 = vunpack.c.l.b16 %v2835
      %v2868 = vunpack.c.l.b16 %v2836
      %v2869 = vunpack.c.l.b16 %v2837
      %v2870 = vunpack.c.l.b16 %v2838
      %v2871 = vpack.c.b16 %v2856, %v2855
      %v2872 = vpack.c.b16 %v2858, %v2857
      %v2873 = vpack.c.b16 %v2860, %v2859
      %v2874 = vpack.c.b16 %v2862, %v2861
      %v2875 = vpack.c.b16 %v2864, %v2863
      %v2876 = vpack.c.b16 %v2866, %v2865
      %v2877 = vpack.c.b16 %v2868, %v2867
      %v2878 = vpack.c.b16 %v2870, %v2869
      %2879 = vrot.lane.b32.xlu0 %v2871, 64
      %v2880 = vpop.permute.xlu0 %2879
      %2881 = vrot.lane.b32.xlu0 %v2872, 64
      %v2882 = vpop.permute.xlu0 %2881
      %2883 = vrot.lane.b32.xlu0 %v2873, 64
      %v2884 = vpop.permute.xlu0 %2883
      %2885 = vrot.lane.b32.xlu0 %v2874, 64
      %v2886 = vpop.permute.xlu0 %2885
      %2887 = vrot.lane.b32.xlu0 %v2875, 64
      %v2888 = vpop.permute.xlu0 %2887
      %2889 = vrot.lane.b32.xlu0 %v2876, 64
      %v2890 = vpop.permute.xlu0 %2889
      %2891 = vrot.lane.b32.xlu0 %v2877, 64
      %v2892 = vpop.permute.xlu0 %2891
      %2893 = vrot.lane.b32.xlu0 %v2878, 64
      %v2894 = vpop.permute.xlu0 %2893
      %2895 = vrot.lane.b32.xlu0 %v1206, 64
      %v2896 = vpop.permute.xlu0 %2895
      %2897 = vrot.lane.b32.xlu0 %v1207, 64
      %v2898 = vpop.permute.xlu0 %2897
      %2899 = vrot.lane.b32.xlu0 %v1208, 64
      %v2900 = vpop.permute.xlu0 %2899
      %2901 = vrot.lane.b32.xlu0 %v1209, 64
      %v2902 = vpop.permute.xlu0 %2901
      %2903 = vrot.lane.b32.xlu0 %v1210, 64
      %v2904 = vpop.permute.xlu0 %2903
      %2905 = vrot.lane.b32.xlu0 %v1211, 64
      %v2906 = vpop.permute.xlu0 %2905
      %2907 = vrot.lane.b32.xlu0 %v1212, 64
      %v2908 = vpop.permute.xlu0 %2907
      %2909 = vrot.lane.b32.xlu0 %v1213, 64
      %v2910 = vpop.permute.xlu0 %2909
      %v2912 = vsel %vm1214, %v2880, 0
      %v2915 = vsel %vm1214, %v2882, 0
      %v2918 = vsel %vm1214, %v2884, 0
      %v2921 = vsel %vm1214, %v2886, 0
      %v2924 = vsel %vm1214, %v2888, 0
      %v2927 = vsel %vm1214, %v2890, 0
      %v2930 = vsel %vm1214, %v2892, 0
      %v2933 = vsel %vm1214, %v2894, 0
      %v2936 = vsel %vm1214, %v2896, 0
      %v2939 = vsel %vm1214, %v2898, 0
      %v2942 = vsel %vm1214, %v2900, 0
      %v2945 = vsel %vm1214, %v2902, 0
      %v2948 = vsel %vm1214, %v2904, 0
      %v2951 = vsel %vm1214, %v2906, 0
      %v2954 = vsel %vm1214, %v2908, 0
      %v2957 = vsel %vm1214, %v2910, 0
      %2959 = vmatpush.bf16.xpose.msra.mxu0 %v2957
      %2960 = vmatpush.bf16.xpose.msra.mxu0 %v2954
      %2961 = vmatpush.bf16.xpose.msra.mxu0 %v2951
      %2962 = vmatpush.bf16.xpose.msra.mxu0 %v2948
      %2963 = vmatpush.bf16.xpose.msra.mxu0 %v2945
      %2964 = vmatpush.bf16.xpose.msra.mxu0 %v2942
      %2965 = vmatpush.bf16.xpose.msra.mxu0 %v2939
      %2966 = vmatpush.bf16.xpose.msra.mxu0 %v2936
      %2967 = vmatmul.bf16.gmra.mxu0 %v2912
      %v2968 = vpop.f32.mrf.mxu0
      %v2969 = vadd.f32 %v1132, %v2968
      %v2970 = vpop.f32.mrf.mxu0
      %v2971 = vadd.f32 %v1132, %v2970
      %2972 = vmatmul.bf16.gmra.mxu0 %v2915
      %v2973 = vpop.f32.mrf.mxu0
      %v2974 = vadd.f32 %v1132, %v2973
      %v2975 = vpop.f32.mrf.mxu0
      %v2976 = vadd.f32 %v1132, %v2975
      %2977 = vmatmul.bf16.gmra.mxu0 %v2918
      %v2978 = vpop.f32.mrf.mxu0
      %v2979 = vadd.f32 %v1132, %v2978
      %v2980 = vpop.f32.mrf.mxu0
      %v2981 = vadd.f32 %v1132, %v2980
      %2982 = vmatmul.bf16.gmra.mxu0 %v2921
      %v2983 = vpop.f32.mrf.mxu0
      %v2984 = vadd.f32 %v1132, %v2983
      %v2985 = vpop.f32.mrf.mxu0
      %v2986 = vadd.f32 %v1132, %v2985
      %2987 = vmatmul.bf16.gmra.mxu0 %v2924
      %v2988 = vpop.f32.mrf.mxu0
      %v2989 = vadd.f32 %v1132, %v2988
      %v2990 = vpop.f32.mrf.mxu0
      %v2991 = vadd.f32 %v1132, %v2990
      %2992 = vmatmul.bf16.gmra.mxu0 %v2927
      %v2993 = vpop.f32.mrf.mxu0
      %v2994 = vadd.f32 %v1132, %v2993
      %v2995 = vpop.f32.mrf.mxu0
      %v2996 = vadd.f32 %v1132, %v2995
      %2997 = vmatmul.bf16.gmra.mxu0 %v2930
      %v2998 = vpop.f32.mrf.mxu0
      %v2999 = vadd.f32 %v1132, %v2998
      %v3000 = vpop.f32.mrf.mxu0
      %v3001 = vadd.f32 %v1132, %v3000
      %3002 = vmatmul.bf16.gmra.mxu0 %v2933
      %v3003 = vpop.f32.mrf.mxu0
      %v3004 = vadd.f32 %v1132, %v3003
      %v3005 = vpop.f32.mrf.mxu0
      %v3006 = vadd.f32 %v1132, %v3005
      %3007 = vdwg.mxu0
      %s3008 = scalar_lea.vmem [#allocation3], 256
      %v3009 = vld [vmem:[%s3008] sm:$0xff]
      %v3010 = vld [vmem:[%s3008 + $0x8] sm:$0xff]
      %v3011 = vld [vmem:[%s3008 + $0x10] sm:$0xff]
      %v3012 = vld [vmem:[%s3008 + $0x18] sm:$0xff]
      %v3013 = vld [vmem:[%s3008 + $0x20] sm:$0xff]
      %v3014 = vld [vmem:[%s3008 + $0x28] sm:$0xff]
      %v3015 = vld [vmem:[%s3008 + $0x30] sm:$0xff]
      %v3016 = vld [vmem:[%s3008 + $0x38] sm:$0xff]
      %v3017 = vld [vmem:[%s3008 + $0x40] sm:$0xff]
      %v3018 = vld [vmem:[%s3008 + $0x48] sm:$0xff]
      %v3019 = vld [vmem:[%s3008 + $0x50] sm:$0xff]
      %v3020 = vld [vmem:[%s3008 + $0x58] sm:$0xff]
      %v3021 = vld [vmem:[%s3008 + $0x60] sm:$0xff]
      %v3022 = vld [vmem:[%s3008 + $0x68] sm:$0xff]
      %v3023 = vld [vmem:[%s3008 + $0x70] sm:$0xff]
      %v3024 = vld [vmem:[%s3008 + $0x78] sm:$0xff]
      %3025 = vmax.xlane.f32.xlu0 %v2969
      %v3026 = vpop.xlane.xlu0 %3025
      %3027 = vmax.xlane.f32.xlu0 %v2971
      %v3028 = vpop.xlane.xlu0 %3027
      %3029 = vmax.xlane.f32.xlu0 %v2974
      %v3030 = vpop.xlane.xlu0 %3029
      %3031 = vmax.xlane.f32.xlu0 %v2976
      %v3032 = vpop.xlane.xlu0 %3031
      %3033 = vmax.xlane.f32.xlu0 %v2979
      %v3034 = vpop.xlane.xlu0 %3033
      %3035 = vmax.xlane.f32.xlu0 %v2981
      %v3036 = vpop.xlane.xlu0 %3035
      %3037 = vmax.xlane.f32.xlu0 %v2984
      %v3038 = vpop.xlane.xlu0 %3037
      %3039 = vmax.xlane.f32.xlu0 %v2986
      %v3040 = vpop.xlane.xlu0 %3039
      %3041 = vmax.xlane.f32.xlu0 %v2989
      %v3042 = vpop.xlane.xlu0 %3041
      %3043 = vmax.xlane.f32.xlu0 %v2991
      %v3044 = vpop.xlane.xlu0 %3043
      %3045 = vmax.xlane.f32.xlu0 %v2994
      %v3046 = vpop.xlane.xlu0 %3045
      %3047 = vmax.xlane.f32.xlu0 %v2996
      %v3048 = vpop.xlane.xlu0 %3047
      %3049 = vmax.xlane.f32.xlu0 %v2999
      %v3050 = vpop.xlane.xlu0 %3049
      %3051 = vmax.xlane.f32.xlu0 %v3001
      %v3052 = vpop.xlane.xlu0 %3051
      %3053 = vmax.xlane.f32.xlu0 %v3004
      %v3054 = vpop.xlane.xlu0 %3053
      %3055 = vmax.xlane.f32.xlu0 %v3006
      %v3056 = vpop.xlane.xlu0 %3055
      %v3057 = vmax.f32 %v3009, %v3026
      %v3058 = vmax.f32 %v3010, %v3028
      %v3059 = vmax.f32 %v3011, %v3030
      %v3060 = vmax.f32 %v3012, %v3032
      %v3061 = vmax.f32 %v3013, %v3034
      %v3062 = vmax.f32 %v3014, %v3036
      %v3063 = vmax.f32 %v3015, %v3038
      %v3064 = vmax.f32 %v3016, %v3040
      %v3065 = vmax.f32 %v3017, %v3042
      %v3066 = vmax.f32 %v3018, %v3044
      %v3067 = vmax.f32 %v3019, %v3046
      %v3068 = vmax.f32 %v3020, %v3048
      %v3069 = vmax.f32 %v3021, %v3050
      %v3070 = vmax.f32 %v3022, %v3052
      %v3071 = vmax.f32 %v3023, %v3054
      %v3072 = vmax.f32 %v3024, %v3056
      %v3073 = vsub.f32 %v3009, %v3057
      %v3074 = vsub.f32 %v3010, %v3058
      %v3075 = vsub.f32 %v3011, %v3059
      %v3076 = vsub.f32 %v3012, %v3060
      %v3077 = vsub.f32 %v3013, %v3061
      %v3078 = vsub.f32 %v3014, %v3062
      %v3079 = vsub.f32 %v3015, %v3063
      %v3080 = vsub.f32 %v3016, %v3064
      %v3081 = vsub.f32 %v3017, %v3065
      %v3082 = vsub.f32 %v3018, %v3066
      %v3083 = vsub.f32 %v3019, %v3067
      %v3084 = vsub.f32 %v3020, %v3068
      %v3085 = vsub.f32 %v3021, %v3069
      %v3086 = vsub.f32 %v3022, %v3070
      %v3087 = vsub.f32 %v3023, %v3071
      %v3088 = vsub.f32 %v3024, %v3072
      %v3089 = vmul.f32 %v3073, 1.442695
      %v3090 = vpow.pop %v3089
      %v3091 = vmul.f32 %v3074, 1.442695
      %v3092 = vpow.pop %v3091
      %v3093 = vmul.f32 %v3075, 1.442695
      %v3094 = vpow.pop %v3093
      %v3095 = vmul.f32 %v3076, 1.442695
      %v3096 = vpow.pop %v3095
      %v3097 = vmul.f32 %v3077, 1.442695
      %v3098 = vpow.pop %v3097
      %v3099 = vmul.f32 %v3078, 1.442695
      %v3100 = vpow.pop %v3099
      %v3101 = vmul.f32 %v3079, 1.442695
      %v3102 = vpow.pop %v3101
      %v3103 = vmul.f32 %v3080, 1.442695
      %v3104 = vpow.pop %v3103
      %v3105 = vmul.f32 %v3081, 1.442695
      %v3106 = vpow.pop %v3105
      %v3107 = vmul.f32 %v3082, 1.442695
      %v3108 = vpow.pop %v3107
      %v3109 = vmul.f32 %v3083, 1.442695
      %v3110 = vpow.pop %v3109
      %v3111 = vmul.f32 %v3084, 1.442695
      %v3112 = vpow.pop %v3111
      %v3113 = vmul.f32 %v3085, 1.442695
      %v3114 = vpow.pop %v3113
      %v3115 = vmul.f32 %v3086, 1.442695
      %v3116 = vpow.pop %v3115
      %v3117 = vmul.f32 %v3087, 1.442695
      %v3118 = vpow.pop %v3117
      %v3119 = vmul.f32 %v3088, 1.442695
      %v3120 = vpow.pop %v3119
      %3122 = vset.pattern.permute.xlu0 0
      %3123 = vperm.xlu0 %3122, %v3057
      %v3124 = vpop.permute.xlu0 %3123
      %3127 = vset.pattern.permute.xlu0 0
      %3128 = vperm.xlu0 %3127, %v3058
      %v3129 = vpop.permute.xlu0 %3128
      %3132 = vset.pattern.permute.xlu0 0
      %3133 = vperm.xlu0 %3132, %v3059
      %v3134 = vpop.permute.xlu0 %3133
      %3137 = vset.pattern.permute.xlu0 0
      %3138 = vperm.xlu0 %3137, %v3060
      %v3139 = vpop.permute.xlu0 %3138
      %3142 = vset.pattern.permute.xlu0 0
      %3143 = vperm.xlu0 %3142, %v3061
      %v3144 = vpop.permute.xlu0 %3143
      %3147 = vset.pattern.permute.xlu0 0
      %3148 = vperm.xlu0 %3147, %v3062
      %v3149 = vpop.permute.xlu0 %3148
      %3152 = vset.pattern.permute.xlu0 0
      %3153 = vperm.xlu0 %3152, %v3063
      %v3154 = vpop.permute.xlu0 %3153
      %3157 = vset.pattern.permute.xlu0 0
      %3158 = vperm.xlu0 %3157, %v3064
      %v3159 = vpop.permute.xlu0 %3158
      %3162 = vset.pattern.permute.xlu0 0
      %3163 = vperm.xlu0 %3162, %v3065
      %v3164 = vpop.permute.xlu0 %3163
      %3167 = vset.pattern.permute.xlu0 0
      %3168 = vperm.xlu0 %3167, %v3066
      %v3169 = vpop.permute.xlu0 %3168
      %3172 = vset.pattern.permute.xlu0 0
      %3173 = vperm.xlu0 %3172, %v3067
      %v3174 = vpop.permute.xlu0 %3173
      %3177 = vset.pattern.permute.xlu0 0
      %3178 = vperm.xlu0 %3177, %v3068
      %v3179 = vpop.permute.xlu0 %3178
      %3182 = vset.pattern.permute.xlu0 0
      %3183 = vperm.xlu0 %3182, %v3069
      %v3184 = vpop.permute.xlu0 %3183
      %3187 = vset.pattern.permute.xlu0 0
      %3188 = vperm.xlu0 %3187, %v3070
      %v3189 = vpop.permute.xlu0 %3188
      %3192 = vset.pattern.permute.xlu0 0
      %3193 = vperm.xlu0 %3192, %v3071
      %v3194 = vpop.permute.xlu0 %3193
      %3197 = vset.pattern.permute.xlu0 0
      %3198 = vperm.xlu0 %3197, %v3072
      %v3199 = vpop.permute.xlu0 %3198
      %v3201 = vsub.f32 %v2969, %v3124
      %v3202 = vsub.f32 %v2971, %v3129
      %v3203 = vsub.f32 %v2974, %v3134
      %v3204 = vsub.f32 %v2976, %v3139
      %v3205 = vsub.f32 %v2979, %v3144
      %v3206 = vsub.f32 %v2981, %v3149
      %v3207 = vsub.f32 %v2984, %v3154
      %v3208 = vsub.f32 %v2986, %v3159
      %v3209 = vsub.f32 %v2989, %v3164
      %v3210 = vsub.f32 %v2991, %v3169
      %v3211 = vsub.f32 %v2994, %v3174
      %v3212 = vsub.f32 %v2996, %v3179
      %v3213 = vsub.f32 %v2999, %v3184
      %v3214 = vsub.f32 %v3001, %v3189
      %v3215 = vsub.f32 %v3004, %v3194
      %v3216 = vsub.f32 %v3006, %v3199
      %v3217 = vpack.c.bf16 %v3202, %v3201
      %v3218 = vpack.c.bf16 %v3204, %v3203
      %v3219 = vpack.c.bf16 %v3206, %v3205
      %v3220 = vpack.c.bf16 %v3208, %v3207
      %v3221 = vpack.c.bf16 %v3210, %v3209
      %v3222 = vpack.c.bf16 %v3212, %v3211
      %v3223 = vpack.c.bf16 %v3214, %v3213
      %v3224 = vpack.c.bf16 %v3216, %v3215
      %v3225 = vunpack.c.l.bf16 %v3217
      %v3226 = vunpack.c.h.bf16 %v3217
      %v3227 = vunpack.c.l.bf16 %v3218
      %v3228 = vunpack.c.h.bf16 %v3218
      %v3229 = vunpack.c.l.bf16 %v3219
      %v3230 = vunpack.c.h.bf16 %v3219
      %v3231 = vunpack.c.l.bf16 %v3220
      %v3232 = vunpack.c.h.bf16 %v3220
      %v3233 = vunpack.c.l.bf16 %v3221
      %v3234 = vunpack.c.h.bf16 %v3221
      %v3235 = vunpack.c.l.bf16 %v3222
      %v3236 = vunpack.c.h.bf16 %v3222
      %v3237 = vunpack.c.l.bf16 %v3223
      %v3238 = vunpack.c.h.bf16 %v3223
      %v3239 = vunpack.c.l.bf16 %v3224
      %v3240 = vunpack.c.h.bf16 %v3224
      %v3241 = vmul.f32 %v3225, 1.442695
      %v3242 = vpow.pop %v3241
      %v3243 = vmul.f32 %v3226, 1.442695
      %v3244 = vpow.pop %v3243
      %v3245 = vmul.f32 %v3227, 1.442695
      %v3246 = vpow.pop %v3245
      %v3247 = vmul.f32 %v3228, 1.442695
      %v3248 = vpow.pop %v3247
      %v3249 = vmul.f32 %v3229, 1.442695
      %v3250 = vpow.pop %v3249
      %v3251 = vmul.f32 %v3230, 1.442695
      %v3252 = vpow.pop %v3251
      %v3253 = vmul.f32 %v3231, 1.442695
      %v3254 = vpow.pop %v3253
      %v3255 = vmul.f32 %v3232, 1.442695
      %v3256 = vpow.pop %v3255
      %v3257 = vmul.f32 %v3233, 1.442695
      %v3258 = vpow.pop %v3257
      %v3259 = vmul.f32 %v3234, 1.442695
      %v3260 = vpow.pop %v3259
      %v3261 = vmul.f32 %v3235, 1.442695
      %v3262 = vpow.pop %v3261
      %v3263 = vmul.f32 %v3236, 1.442695
      %v3264 = vpow.pop %v3263
      %v3265 = vmul.f32 %v3237, 1.442695
      %v3266 = vpow.pop %v3265
      %v3267 = vmul.f32 %v3238, 1.442695
      %v3268 = vpow.pop %v3267
      %v3269 = vmul.f32 %v3239, 1.442695
      %v3270 = vpow.pop %v3269
      %v3271 = vmul.f32 %v3240, 1.442695
      %v3272 = vpow.pop %v3271
      %v3273 = vpack.c.bf16 %v3244, %v3242
      %v3274 = vpack.c.bf16 %v3248, %v3246
      %v3275 = vpack.c.bf16 %v3252, %v3250
      %v3276 = vpack.c.bf16 %v3256, %v3254
      %v3277 = vpack.c.bf16 %v3260, %v3258
      %v3278 = vpack.c.bf16 %v3264, %v3262
      %v3279 = vpack.c.bf16 %v3268, %v3266
      %v3280 = vpack.c.bf16 %v3272, %v3270
      %s3281 = scalar_lea.vmem [#allocation4], 256
      %v3282 = vld [vmem:[%s3281] sm:$0xff]
      %v3283 = vld [vmem:[%s3281 + $0x8] sm:$0xff]
      %v3284 = vld [vmem:[%s3281 + $0x10] sm:$0xff]
      %v3285 = vld [vmem:[%s3281 + $0x18] sm:$0xff]
      %v3286 = vld [vmem:[%s3281 + $0x20] sm:$0xff]
      %v3287 = vld [vmem:[%s3281 + $0x28] sm:$0xff]
      %v3288 = vld [vmem:[%s3281 + $0x30] sm:$0xff]
      %v3289 = vld [vmem:[%s3281 + $0x38] sm:$0xff]
      %v3290 = vld [vmem:[%s3281 + $0x40] sm:$0xff]
      %v3291 = vld [vmem:[%s3281 + $0x48] sm:$0xff]
      %v3292 = vld [vmem:[%s3281 + $0x50] sm:$0xff]
      %v3293 = vld [vmem:[%s3281 + $0x58] sm:$0xff]
      %v3294 = vld [vmem:[%s3281 + $0x60] sm:$0xff]
      %v3295 = vld [vmem:[%s3281 + $0x68] sm:$0xff]
      %v3296 = vld [vmem:[%s3281 + $0x70] sm:$0xff]
      %v3297 = vld [vmem:[%s3281 + $0x78] sm:$0xff]
      %v3298 = vmul.f32 %v3090, %v3282
      %v3299 = vmul.f32 %v3092, %v3283
      %v3300 = vmul.f32 %v3094, %v3284
      %v3301 = vmul.f32 %v3096, %v3285
      %v3302 = vmul.f32 %v3098, %v3286
      %v3303 = vmul.f32 %v3100, %v3287
      %v3304 = vmul.f32 %v3102, %v3288
      %v3305 = vmul.f32 %v3104, %v3289
      %v3306 = vmul.f32 %v3106, %v3290
      %v3307 = vmul.f32 %v3108, %v3291
      %v3308 = vmul.f32 %v3110, %v3292
      %v3309 = vmul.f32 %v3112, %v3293
      %v3310 = vmul.f32 %v3114, %v3294
      %v3311 = vmul.f32 %v3116, %v3295
      %v3312 = vmul.f32 %v3118, %v3296
      %v3313 = vmul.f32 %v3120, %v3297
      %v3314 = vunpack.c.l.bf16 %v3273
      %v3315 = vunpack.c.h.bf16 %v3273
      %v3316 = vunpack.c.l.bf16 %v3274
      %v3317 = vunpack.c.h.bf16 %v3274
      %v3318 = vunpack.c.l.bf16 %v3275
      %v3319 = vunpack.c.h.bf16 %v3275
      %v3320 = vunpack.c.l.bf16 %v3276
      %v3321 = vunpack.c.h.bf16 %v3276
      %v3322 = vunpack.c.l.bf16 %v3277
      %v3323 = vunpack.c.h.bf16 %v3277
      %v3324 = vunpack.c.l.bf16 %v3278
      %v3325 = vunpack.c.h.bf16 %v3278
      %v3326 = vunpack.c.l.bf16 %v3279
      %v3327 = vunpack.c.h.bf16 %v3279
      %v3328 = vunpack.c.l.bf16 %v3280
      %v3329 = vunpack.c.h.bf16 %v3280
      %3330 = vadd.xlane.f32.xlu0 %v3314
      %v3331 = vpop.xlane.xlu0 %3330
      %3332 = vadd.xlane.f32.xlu0 %v3315
      %v3333 = vpop.xlane.xlu0 %3332
      %3334 = vadd.xlane.f32.xlu0 %v3316
      %v3335 = vpop.xlane.xlu0 %3334
      %3336 = vadd.xlane.f32.xlu0 %v3317
      %v3337 = vpop.xlane.xlu0 %3336
      %3338 = vadd.xlane.f32.xlu0 %v3318
      %v3339 = vpop.xlane.xlu0 %3338
      %3340 = vadd.xlane.f32.xlu0 %v3319
      %v3341 = vpop.xlane.xlu0 %3340
      %3342 = vadd.xlane.f32.xlu0 %v3320
      %v3343 = vpop.xlane.xlu0 %3342
      %3344 = vadd.xlane.f32.xlu0 %v3321
      %v3345 = vpop.xlane.xlu0 %3344
      %3346 = vadd.xlane.f32.xlu0 %v3322
      %v3347 = vpop.xlane.xlu0 %3346
      %3348 = vadd.xlane.f32.xlu0 %v3323
      %v3349 = vpop.xlane.xlu0 %3348
      %3350 = vadd.xlane.f32.xlu0 %v3324
      %v3351 = vpop.xlane.xlu0 %3350
      %3352 = vadd.xlane.f32.xlu0 %v3325
      %v3353 = vpop.xlane.xlu0 %3352
      %3354 = vadd.xlane.f32.xlu0 %v3326
      %v3355 = vpop.xlane.xlu0 %3354
      %3356 = vadd.xlane.f32.xlu0 %v3327
      %v3357 = vpop.xlane.xlu0 %3356
      %3358 = vadd.xlane.f32.xlu0 %v3328
      %v3359 = vpop.xlane.xlu0 %3358
      %3360 = vadd.xlane.f32.xlu0 %v3329
      %v3361 = vpop.xlane.xlu0 %3360
      %v3362 = vadd.f32 %v3298, %v3331
      %v3363 = vadd.f32 %v3299, %v3333
      %v3364 = vadd.f32 %v3300, %v3335
      %v3365 = vadd.f32 %v3301, %v3337
      %v3366 = vadd.f32 %v3302, %v3339
      %v3367 = vadd.f32 %v3303, %v3341
      %v3368 = vadd.f32 %v3304, %v3343
      %v3369 = vadd.f32 %v3305, %v3345
      %v3370 = vadd.f32 %v3306, %v3347
      %v3371 = vadd.f32 %v3307, %v3349
      %v3372 = vadd.f32 %v3308, %v3351
      %v3373 = vadd.f32 %v3309, %v3353
      %v3374 = vadd.f32 %v3310, %v3355
      %v3375 = vadd.f32 %v3311, %v3357
      %v3376 = vadd.f32 %v3312, %v3359
      %v3377 = vadd.f32 %v3313, %v3361
      %3378 = vst.msk [vmem:[%s3281] sm:$0xff] %vm1680, %v3362
      %3379 = vst.msk [vmem:[%s3281 + $0x8] sm:$0xff] %vm1680, %v3363
      %3380 = vst.msk [vmem:[%s3281 + $0x10] sm:$0xff] %vm1680, %v3364
      %3381 = vst.msk [vmem:[%s3281 + $0x18] sm:$0xff] %vm1680, %v3365
      %3382 = vst.msk [vmem:[%s3281 + $0x20] sm:$0xff] %vm1680, %v3366
      %3383 = vst.msk [vmem:[%s3281 + $0x28] sm:$0xff] %vm1680, %v3367
      %3384 = vst.msk [vmem:[%s3281 + $0x30] sm:$0xff] %vm1680, %v3368
      %3385 = vst.msk [vmem:[%s3281 + $0x38] sm:$0xff] %vm1680, %v3369
      %3386 = vst.msk [vmem:[%s3281 + $0x40] sm:$0xff] %vm1680, %v3370
      %3387 = vst.msk [vmem:[%s3281 + $0x48] sm:$0xff] %vm1680, %v3371
      %3388 = vst.msk [vmem:[%s3281 + $0x50] sm:$0xff] %vm1680, %v3372
      %3389 = vst.msk [vmem:[%s3281 + $0x58] sm:$0xff] %vm1680, %v3373
      %3390 = vst.msk [vmem:[%s3281 + $0x60] sm:$0xff] %vm1680, %v3374
      %3391 = vst.msk [vmem:[%s3281 + $0x68] sm:$0xff] %vm1680, %v3375
      %3392 = vst.msk [vmem:[%s3281 + $0x70] sm:$0xff] %vm1680, %v3376
      %3393 = vst.msk [vmem:[%s3281 + $0x78] sm:$0xff] %vm1680, %v3377
      %v3394 = vld [vmem:[#allocation5] sm:$0xff]
      %v3395 = vld [vmem:[#allocation5 + $0x8] sm:$0xff]
      %v3396 = vld [vmem:[#allocation5 + $0x10] sm:$0xff]
      %v3397 = vld [vmem:[#allocation5 + $0x18] sm:$0xff]
      %v3398 = vld [vmem:[#allocation5 + $0x20] sm:$0xff]
      %v3399 = vld [vmem:[#allocation5 + $0x28] sm:$0xff]
      %v3400 = vld [vmem:[#allocation5 + $0x30] sm:$0xff]
      %v3401 = vld [vmem:[#allocation5 + $0x38] sm:$0xff]
      %v3402 = vld [vmem:[#allocation5 + $0x40] sm:$0xff]
      %v3403 = vld [vmem:[#allocation5 + $0x48] sm:$0xff]
      %v3404 = vld [vmem:[#allocation5 + $0x50] sm:$0xff]
      %v3405 = vld [vmem:[#allocation5 + $0x58] sm:$0xff]
      %v3406 = vld [vmem:[#allocation5 + $0x60] sm:$0xff]
      %v3407 = vld [vmem:[#allocation5 + $0x68] sm:$0xff]
      %v3408 = vld [vmem:[#allocation5 + $0x70] sm:$0xff]
      %v3409 = vld [vmem:[#allocation5 + $0x78] sm:$0xff]
      %3411 = vset.pattern.permute.xlu0 0
      %3412 = vperm.xlu0 %3411, %v3090
      %v3413 = vpop.permute.xlu0 %3412
      %3416 = vset.pattern.permute.xlu0 0
      %3417 = vperm.xlu0 %3416, %v3092
      %v3418 = vpop.permute.xlu0 %3417
      %3421 = vset.pattern.permute.xlu0 0
      %3422 = vperm.xlu0 %3421, %v3094
      %v3423 = vpop.permute.xlu0 %3422
      %3426 = vset.pattern.permute.xlu0 0
      %3427 = vperm.xlu0 %3426, %v3096
      %v3428 = vpop.permute.xlu0 %3427
      %3431 = vset.pattern.permute.xlu0 0
      %3432 = vperm.xlu0 %3431, %v3098
      %v3433 = vpop.permute.xlu0 %3432
      %3436 = vset.pattern.permute.xlu0 0
      %3437 = vperm.xlu0 %3436, %v3100
      %v3438 = vpop.permute.xlu0 %3437
      %3441 = vset.pattern.permute.xlu0 0
      %3442 = vperm.xlu0 %3441, %v3102
      %v3443 = vpop.permute.xlu0 %3442
      %3446 = vset.pattern.permute.xlu0 0
      %3447 = vperm.xlu0 %3446, %v3104
      %v3448 = vpop.permute.xlu0 %3447
      %3451 = vset.pattern.permute.xlu0 0
      %3452 = vperm.xlu0 %3451, %v3106
      %v3453 = vpop.permute.xlu0 %3452
      %3456 = vset.pattern.permute.xlu0 0
      %3457 = vperm.xlu0 %3456, %v3108
      %v3458 = vpop.permute.xlu0 %3457
      %3461 = vset.pattern.permute.xlu0 0
      %3462 = vperm.xlu0 %3461, %v3110
      %v3463 = vpop.permute.xlu0 %3462
      %3466 = vset.pattern.permute.xlu0 0
      %3467 = vperm.xlu0 %3466, %v3112
      %v3468 = vpop.permute.xlu0 %3467
      %3471 = vset.pattern.permute.xlu0 0
      %3472 = vperm.xlu0 %3471, %v3114
      %v3473 = vpop.permute.xlu0 %3472
      %3476 = vset.pattern.permute.xlu0 0
      %3477 = vperm.xlu0 %3476, %v3116
      %v3478 = vpop.permute.xlu0 %3477
      %3481 = vset.pattern.permute.xlu0 0
      %3482 = vperm.xlu0 %3481, %v3118
      %v3483 = vpop.permute.xlu0 %3482
      %3486 = vset.pattern.permute.xlu0 0
      %3487 = vperm.xlu0 %3486, %v3120
      %v3488 = vpop.permute.xlu0 %3487
      %v3490 = vmul.f32 %v3413, %v3394
      %v3491 = vmul.f32 %v3418, %v3395
      %v3492 = vmul.f32 %v3423, %v3396
      %v3493 = vmul.f32 %v3428, %v3397
      %v3494 = vmul.f32 %v3433, %v3398
      %v3495 = vmul.f32 %v3438, %v3399
      %v3496 = vmul.f32 %v3443, %v3400
      %v3497 = vmul.f32 %v3448, %v3401
      %v3498 = vmul.f32 %v3453, %v3402
      %v3499 = vmul.f32 %v3458, %v3403
      %v3500 = vmul.f32 %v3463, %v3404
      %v3501 = vmul.f32 %v3468, %v3405
      %v3502 = vmul.f32 %v3473, %v3406
      %v3503 = vmul.f32 %v3478, %v3407
      %v3504 = vmul.f32 %v3483, %v3408
      %v3505 = vmul.f32 %v3488, %v3409
      %3506 = vrot.lane.b32.xlu0 %v1841, 64
      %v3507 = vpop.permute.xlu0 %3506
      %3508 = vrot.lane.b32.xlu0 %v1842, 64
      %v3509 = vpop.permute.xlu0 %3508
      %3510 = vrot.lane.b32.xlu0 %v1843, 64
      %v3511 = vpop.permute.xlu0 %3510
      %3512 = vrot.lane.b32.xlu0 %v1844, 64
      %v3513 = vpop.permute.xlu0 %3512
      %3514 = vrot.lane.b32.xlu0 %v1845, 64
      %v3515 = vpop.permute.xlu0 %3514
      %3516 = vrot.lane.b32.xlu0 %v1846, 64
      %v3517 = vpop.permute.xlu0 %3516
      %3518 = vrot.lane.b32.xlu0 %v1847, 64
      %v3519 = vpop.permute.xlu0 %3518
      %3520 = vrot.lane.b32.xlu0 %v1848, 64
      %v3521 = vpop.permute.xlu0 %3520
      %3530 = vmatpush.bf16.msra.mxu0 %v3521
      %3531 = vmatpush.bf16.msra.mxu0 %v3519
      %3532 = vmatpush.bf16.msra.mxu0 %v3517
      %3533 = vmatpush.bf16.msra.mxu0 %v3515
      %3534 = vmatpush.bf16.msra.mxu0 %v3513
      %3535 = vmatpush.bf16.msra.mxu0 %v3511
      %3536 = vmatpush.bf16.msra.mxu0 %v3509
      %3537 = vmatpush.bf16.msra.mxu0 %v3507
      %3538 = vmatmul.bf16.gmra.mxu0 %v3273
      %v3539 = vpop.f32.mrf.mxu0
      %v3540 = vadd.f32 0.0, %v3539
      %v3541 = vpop.f32.mrf.mxu0
      %v3542 = vadd.f32 0.0, %v3541
      %3543 = vmatmul.bf16.gmra.mxu0 %v3274
      %v3544 = vpop.f32.mrf.mxu0
      %v3545 = vadd.f32 0.0, %v3544
      %v3546 = vpop.f32.mrf.mxu0
      %v3547 = vadd.f32 0.0, %v3546
      %3548 = vmatmul.bf16.gmra.mxu0 %v3275
      %v3549 = vpop.f32.mrf.mxu0
      %v3550 = vadd.f32 0.0, %v3549
      %v3551 = vpop.f32.mrf.mxu0
      %v3552 = vadd.f32 0.0, %v3551
      %3553 = vmatmul.bf16.gmra.mxu0 %v3276
      %v3554 = vpop.f32.mrf.mxu0
      %v3555 = vadd.f32 0.0, %v3554
      %v3556 = vpop.f32.mrf.mxu0
      %v3557 = vadd.f32 0.0, %v3556
      %3558 = vmatmul.bf16.gmra.mxu0 %v3277
      %v3559 = vpop.f32.mrf.mxu0
      %v3560 = vadd.f32 0.0, %v3559
      %v3561 = vpop.f32.mrf.mxu0
      %v3562 = vadd.f32 0.0, %v3561
      %3563 = vmatmul.bf16.gmra.mxu0 %v3278
      %v3564 = vpop.f32.mrf.mxu0
      %v3565 = vadd.f32 0.0, %v3564
      %v3566 = vpop.f32.mrf.mxu0
      %v3567 = vadd.f32 0.0, %v3566
      %3568 = vmatmul.bf16.gmra.mxu0 %v3279
      %v3569 = vpop.f32.mrf.mxu0
      %v3570 = vadd.f32 0.0, %v3569
      %v3571 = vpop.f32.mrf.mxu0
      %v3572 = vadd.f32 0.0, %v3571
      %3573 = vmatmul.bf16.gmra.mxu0 %v3280
      %v3574 = vpop.f32.mrf.mxu0
      %v3575 = vadd.f32 0.0, %v3574
      %v3576 = vpop.f32.mrf.mxu0
      %v3577 = vadd.f32 0.0, %v3576
      %3578 = vdwg.mxu0
      %3595 = vrot.lane.b32.xlu0 %v3540, 64
      %v3596 = vpop.permute.xlu0 %3595
      %3597 = vrot.lane.b32.xlu0 %v3542, 64
      %v3598 = vpop.permute.xlu0 %3597
      %3599 = vrot.lane.b32.xlu0 %v3545, 64
      %v3600 = vpop.permute.xlu0 %3599
      %3601 = vrot.lane.b32.xlu0 %v3547, 64
      %v3602 = vpop.permute.xlu0 %3601
      %3603 = vrot.lane.b32.xlu0 %v3550, 64
      %v3604 = vpop.permute.xlu0 %3603
      %3605 = vrot.lane.b32.xlu0 %v3552, 64
      %v3606 = vpop.permute.xlu0 %3605
      %3607 = vrot.lane.b32.xlu0 %v3555, 64
      %v3608 = vpop.permute.xlu0 %3607
      %3609 = vrot.lane.b32.xlu0 %v3557, 64
      %v3610 = vpop.permute.xlu0 %3609
      %3611 = vrot.lane.b32.xlu0 %v3560, 64
      %v3612 = vpop.permute.xlu0 %3611
      %3613 = vrot.lane.b32.xlu0 %v3562, 64
      %v3614 = vpop.permute.xlu0 %3613
      %3615 = vrot.lane.b32.xlu0 %v3565, 64
      %v3616 = vpop.permute.xlu0 %3615
      %3617 = vrot.lane.b32.xlu0 %v3567, 64
      %v3618 = vpop.permute.xlu0 %3617
      %3619 = vrot.lane.b32.xlu0 %v3570, 64
      %v3620 = vpop.permute.xlu0 %3619
      %3621 = vrot.lane.b32.xlu0 %v3572, 64
      %v3622 = vpop.permute.xlu0 %3621
      %3623 = vrot.lane.b32.xlu0 %v3575, 64
      %v3624 = vpop.permute.xlu0 %3623
      %3625 = vrot.lane.b32.xlu0 %v3577, 64
      %v3626 = vpop.permute.xlu0 %3625
      %v3643 = vadd.f32 %v3490, %v3596
      %v3644 = vadd.f32 %v3491, %v3598
      %v3645 = vadd.f32 %v3492, %v3600
      %v3646 = vadd.f32 %v3493, %v3602
      %v3647 = vadd.f32 %v3494, %v3604
      %v3648 = vadd.f32 %v3495, %v3606
      %v3649 = vadd.f32 %v3496, %v3608
      %v3650 = vadd.f32 %v3497, %v3610
      %v3651 = vadd.f32 %v3498, %v3612
      %v3652 = vadd.f32 %v3499, %v3614
      %v3653 = vadd.f32 %v3500, %v3616
      %v3654 = vadd.f32 %v3501, %v3618
      %v3655 = vadd.f32 %v3502, %v3620
      %v3656 = vadd.f32 %v3503, %v3622
      %v3657 = vadd.f32 %v3504, %v3624
      %v3658 = vadd.f32 %v3505, %v3626
      %vm3659 = vcmask 785920
      %3660 = vst.msk [vmem:[#allocation5] sm:$0xff] %vm3659, %v3643
      %3661 = vst.msk [vmem:[#allocation5 + $0x8] sm:$0xff] %vm3659, %v3644
      %3662 = vst.msk [vmem:[#allocation5 + $0x10] sm:$0xff] %vm3659, %v3645
      %3663 = vst.msk [vmem:[#allocation5 + $0x18] sm:$0xff] %vm3659, %v3646
      %3664 = vst.msk [vmem:[#allocation5 + $0x20] sm:$0xff] %vm3659, %v3647
      %3665 = vst.msk [vmem:[#allocation5 + $0x28] sm:$0xff] %vm3659, %v3648
      %3666 = vst.msk [vmem:[#allocation5 + $0x30] sm:$0xff] %vm3659, %v3649
      %3667 = vst.msk [vmem:[#allocation5 + $0x38] sm:$0xff] %vm3659, %v3650
      %3668 = vst.msk [vmem:[#allocation5 + $0x40] sm:$0xff] %vm3659, %v3651
      %3669 = vst.msk [vmem:[#allocation5 + $0x48] sm:$0xff] %vm3659, %v3652
      %3670 = vst.msk [vmem:[#allocation5 + $0x50] sm:$0xff] %vm3659, %v3653
      %3671 = vst.msk [vmem:[#allocation5 + $0x58] sm:$0xff] %vm3659, %v3654
      %3672 = vst.msk [vmem:[#allocation5 + $0x60] sm:$0xff] %vm3659, %v3655
      %3673 = vst.msk [vmem:[#allocation5 + $0x68] sm:$0xff] %vm3659, %v3656
      %3674 = vst.msk [vmem:[#allocation5 + $0x70] sm:$0xff] %vm3659, %v3657
      %3675 = vst.msk [vmem:[#allocation5 + $0x78] sm:$0xff] %vm3659, %v3658
      %3676 = vst.msk [vmem:[%s3008] sm:$0xff] %vm1680, %v3057
      %3677 = vst.msk [vmem:[%s3008 + $0x8] sm:$0xff] %vm1680, %v3058
      %3678 = vst.msk [vmem:[%s3008 + $0x10] sm:$0xff] %vm1680, %v3059
      %3679 = vst.msk [vmem:[%s3008 + $0x18] sm:$0xff] %vm1680, %v3060
      %3680 = vst.msk [vmem:[%s3008 + $0x20] sm:$0xff] %vm1680, %v3061
      %3681 = vst.msk [vmem:[%s3008 + $0x28] sm:$0xff] %vm1680, %v3062
      %3682 = vst.msk [vmem:[%s3008 + $0x30] sm:$0xff] %vm1680, %v3063
      %3683 = vst.msk [vmem:[%s3008 + $0x38] sm:$0xff] %vm1680, %v3064
      %3684 = vst.msk [vmem:[%s3008 + $0x40] sm:$0xff] %vm1680, %v3065
      %3685 = vst.msk [vmem:[%s3008 + $0x48] sm:$0xff] %vm1680, %v3066
      %3686 = vst.msk [vmem:[%s3008 + $0x50] sm:$0xff] %vm1680, %v3067
      %3687 = vst.msk [vmem:[%s3008 + $0x58] sm:$0xff] %vm1680, %v3068
      %3688 = vst.msk [vmem:[%s3008 + $0x60] sm:$0xff] %vm1680, %v3069
      %3689 = vst.msk [vmem:[%s3008 + $0x68] sm:$0xff] %vm1680, %v3070
      %3690 = vst.msk [vmem:[%s3008 + $0x70] sm:$0xff] %vm1680, %v3071
      %3691 = vst.msk [vmem:[%s3008 + $0x78] sm:$0xff] %vm1680, %v3072
      %v3692 = vld [vmem:[#allocation2] sm:$0xf]
      %v3693 = vld [vmem:[#allocation2 + $0x4] sm:$0xf]
      %v3694 = vld [vmem:[#allocation2 + $0x8] sm:$0xf]
      %v3695 = vld [vmem:[#allocation2 + $0xc] sm:$0xf]
      %v3696 = vld [vmem:[#allocation2 + $0x10] sm:$0xf]
      %v3697 = vld [vmem:[#allocation2 + $0x14] sm:$0xf]
      %v3698 = vld [vmem:[#allocation2 + $0x18] sm:$0xf]
      %v3699 = vld [vmem:[#allocation2 + $0x1c] sm:$0xf]
      %v3700 = vld [vmem:[#allocation2 + $0x20] sm:$0xf]
      %v3701 = vld [vmem:[#allocation2 + $0x24] sm:$0xf]
      %v3702 = vld [vmem:[#allocation2 + $0x28] sm:$0xf]
      %v3703 = vld [vmem:[#allocation2 + $0x2c] sm:$0xf]
      %v3704 = vld [vmem:[#allocation2 + $0x30] sm:$0xf]
      %v3705 = vld [vmem:[#allocation2 + $0x34] sm:$0xf]
      %v3706 = vld [vmem:[#allocation2 + $0x38] sm:$0xf]
      %v3707 = vld [vmem:[#allocation2 + $0x3c] sm:$0xf]
      %v3724 = vunpack.c.l.b16 %v3692
      %v3725 = vunpack.c.l.b16 %v3693
      %v3726 = vunpack.c.l.b16 %v3694
      %v3727 = vunpack.c.l.b16 %v3695
      %v3728 = vunpack.c.l.b16 %v3696
      %v3729 = vunpack.c.l.b16 %v3697
      %v3730 = vunpack.c.l.b16 %v3698
      %v3731 = vunpack.c.l.b16 %v3699
      %v3732 = vunpack.c.l.b16 %v3700
      %v3733 = vunpack.c.l.b16 %v3701
      %v3734 = vunpack.c.l.b16 %v3702
      %v3735 = vunpack.c.l.b16 %v3703
      %v3736 = vunpack.c.l.b16 %v3704
      %v3737 = vunpack.c.l.b16 %v3705
      %v3738 = vunpack.c.l.b16 %v3706
      %v3739 = vunpack.c.l.b16 %v3707
      %v3740 = vpack.c.b16 %v3725, %v3724
      %v3741 = vpack.c.b16 %v3727, %v3726
      %v3742 = vpack.c.b16 %v3729, %v3728
      %v3743 = vpack.c.b16 %v3731, %v3730
      %v3744 = vpack.c.b16 %v3733, %v3732
      %v3745 = vpack.c.b16 %v3735, %v3734
      %v3746 = vpack.c.b16 %v3737, %v3736
      %v3747 = vpack.c.b16 %v3739, %v3738
      %3748 = vrot.lane.b32.xlu0 %v3740, 32
      %v3749 = vpop.permute.xlu0 %3748
      %3750 = vrot.lane.b32.xlu0 %v3741, 32
      %v3751 = vpop.permute.xlu0 %3750
      %3752 = vrot.lane.b32.xlu0 %v3742, 32
      %v3753 = vpop.permute.xlu0 %3752
      %3754 = vrot.lane.b32.xlu0 %v3743, 32
      %v3755 = vpop.permute.xlu0 %3754
      %3756 = vrot.lane.b32.xlu0 %v3744, 32
      %v3757 = vpop.permute.xlu0 %3756
      %3758 = vrot.lane.b32.xlu0 %v3745, 32
      %v3759 = vpop.permute.xlu0 %3758
      %3760 = vrot.lane.b32.xlu0 %v3746, 32
      %v3761 = vpop.permute.xlu0 %3760
      %3762 = vrot.lane.b32.xlu0 %v3747, 32
      %v3763 = vpop.permute.xlu0 %3762
      %3764 = vrot.lane.b32.xlu0 %v1206, 32
      %v3765 = vpop.permute.xlu0 %3764
      %3766 = vrot.lane.b32.xlu0 %v1207, 32
      %v3767 = vpop.permute.xlu0 %3766
      %3768 = vrot.lane.b32.xlu0 %v1208, 32
      %v3769 = vpop.permute.xlu0 %3768
      %3770 = vrot.lane.b32.xlu0 %v1209, 32
      %v3771 = vpop.permute.xlu0 %3770
      %3772 = vrot.lane.b32.xlu0 %v1210, 32
      %v3773 = vpop.permute.xlu0 %3772
      %3774 = vrot.lane.b32.xlu0 %v1211, 32
      %v3775 = vpop.permute.xlu0 %3774
      %3776 = vrot.lane.b32.xlu0 %v1212, 32
      %v3777 = vpop.permute.xlu0 %3776
      %3778 = vrot.lane.b32.xlu0 %v1213, 32
      %v3779 = vpop.permute.xlu0 %3778
      %v3781 = vsel %vm1214, %v3749, 0
      %v3784 = vsel %vm1214, %v3751, 0
      %v3787 = vsel %vm1214, %v3753, 0
      %v3790 = vsel %vm1214, %v3755, 0
      %v3793 = vsel %vm1214, %v3757, 0
      %v3796 = vsel %vm1214, %v3759, 0
      %v3799 = vsel %vm1214, %v3761, 0
      %v3802 = vsel %vm1214, %v3763, 0
      %v3805 = vsel %vm1214, %v3765, 0
      %v3808 = vsel %vm1214, %v3767, 0
      %v3811 = vsel %vm1214, %v3769, 0
      %v3814 = vsel %vm1214, %v3771, 0
      %v3817 = vsel %vm1214, %v3773, 0
      %v3820 = vsel %vm1214, %v3775, 0
      %v3823 = vsel %vm1214, %v3777, 0
      %v3826 = vsel %vm1214, %v3779, 0
      %3828 = vmatpush.bf16.xpose.msra.mxu0 %v3826
      %3829 = vmatpush.bf16.xpose.msra.mxu0 %v3823
      %3830 = vmatpush.bf16.xpose.msra.mxu0 %v3820
      %3831 = vmatpush.bf16.xpose.msra.mxu0 %v3817
      %3832 = vmatpush.bf16.xpose.msra.mxu0 %v3814
      %3833 = vmatpush.bf16.xpose.msra.mxu0 %v3811
      %3834 = vmatpush.bf16.xpose.msra.mxu0 %v3808
      %3835 = vmatpush.bf16.xpose.msra.mxu0 %v3805
      %3836 = vmatmul.bf16.gmra.mxu0 %v3781
      %v3837 = vpop.f32.mrf.mxu0
      %v3838 = vadd.f32 %v1132, %v3837
      %v3839 = vpop.f32.mrf.mxu0
      %v3840 = vadd.f32 %v1132, %v3839
      %3841 = vmatmul.bf16.gmra.mxu0 %v3784
      %v3842 = vpop.f32.mrf.mxu0
      %v3843 = vadd.f32 %v1132, %v3842
      %v3844 = vpop.f32.mrf.mxu0
      %v3845 = vadd.f32 %v1132, %v3844
      %3846 = vmatmul.bf16.gmra.mxu0 %v3787
      %v3847 = vpop.f32.mrf.mxu0
      %v3848 = vadd.f32 %v1132, %v3847
      %v3849 = vpop.f32.mrf.mxu0
      %v3850 = vadd.f32 %v1132, %v3849
      %3851 = vmatmul.bf16.gmra.mxu0 %v3790
      %v3852 = vpop.f32.mrf.mxu0
      %v3853 = vadd.f32 %v1132, %v3852
      %v3854 = vpop.f32.mrf.mxu0
      %v3855 = vadd.f32 %v1132, %v3854
      %3856 = vmatmul.bf16.gmra.mxu0 %v3793
      %v3857 = vpop.f32.mrf.mxu0
      %v3858 = vadd.f32 %v1132, %v3857
      %v3859 = vpop.f32.mrf.mxu0
      %v3860 = vadd.f32 %v1132, %v3859
      %3861 = vmatmul.bf16.gmra.mxu0 %v3796
      %v3862 = vpop.f32.mrf.mxu0
      %v3863 = vadd.f32 %v1132, %v3862
      %v3864 = vpop.f32.mrf.mxu0
      %v3865 = vadd.f32 %v1132, %v3864
      %3866 = vmatmul.bf16.gmra.mxu0 %v3799
      %v3867 = vpop.f32.mrf.mxu0
      %v3868 = vadd.f32 %v1132, %v3867
      %v3869 = vpop.f32.mrf.mxu0
      %v3870 = vadd.f32 %v1132, %v3869
      %3871 = vmatmul.bf16.gmra.mxu0 %v3802
      %v3872 = vpop.f32.mrf.mxu0
      %v3873 = vadd.f32 %v1132, %v3872
      %v3874 = vpop.f32.mrf.mxu0
      %v3875 = vadd.f32 %v1132, %v3874
      %3876 = vdwg.mxu0
      %s3877 = scalar_lea.vmem [#allocation3], 384
      %v3878 = vld [vmem:[%s3877] sm:$0xff]
      %v3879 = vld [vmem:[%s3877 + $0x8] sm:$0xff]
      %v3880 = vld [vmem:[%s3877 + $0x10] sm:$0xff]
      %v3881 = vld [vmem:[%s3877 + $0x18] sm:$0xff]
      %v3882 = vld [vmem:[%s3877 + $0x20] sm:$0xff]
      %v3883 = vld [vmem:[%s3877 + $0x28] sm:$0xff]
      %v3884 = vld [vmem:[%s3877 + $0x30] sm:$0xff]
      %v3885 = vld [vmem:[%s3877 + $0x38] sm:$0xff]
      %v3886 = vld [vmem:[%s3877 + $0x40] sm:$0xff]
      %v3887 = vld [vmem:[%s3877 + $0x48] sm:$0xff]
      %v3888 = vld [vmem:[%s3877 + $0x50] sm:$0xff]
      %v3889 = vld [vmem:[%s3877 + $0x58] sm:$0xff]
      %v3890 = vld [vmem:[%s3877 + $0x60] sm:$0xff]
      %v3891 = vld [vmem:[%s3877 + $0x68] sm:$0xff]
      %v3892 = vld [vmem:[%s3877 + $0x70] sm:$0xff]
      %v3893 = vld [vmem:[%s3877 + $0x78] sm:$0xff]
      %3894 = vmax.xlane.f32.xlu0 %v3838
      %v3895 = vpop.xlane.xlu0 %3894
      %3896 = vmax.xlane.f32.xlu0 %v3840
      %v3897 = vpop.xlane.xlu0 %3896
      %3898 = vmax.xlane.f32.xlu0 %v3843
      %v3899 = vpop.xlane.xlu0 %3898
      %3900 = vmax.xlane.f32.xlu0 %v3845
      %v3901 = vpop.xlane.xlu0 %3900
      %3902 = vmax.xlane.f32.xlu0 %v3848
      %v3903 = vpop.xlane.xlu0 %3902
      %3904 = vmax.xlane.f32.xlu0 %v3850
      %v3905 = vpop.xlane.xlu0 %3904
      %3906 = vmax.xlane.f32.xlu0 %v3853
      %v3907 = vpop.xlane.xlu0 %3906
      %3908 = vmax.xlane.f32.xlu0 %v3855
      %v3909 = vpop.xlane.xlu0 %3908
      %3910 = vmax.xlane.f32.xlu0 %v3858
      %v3911 = vpop.xlane.xlu0 %3910
      %3912 = vmax.xlane.f32.xlu0 %v3860
      %v3913 = vpop.xlane.xlu0 %3912
      %3914 = vmax.xlane.f32.xlu0 %v3863
      %v3915 = vpop.xlane.xlu0 %3914
      %3916 = vmax.xlane.f32.xlu0 %v3865
      %v3917 = vpop.xlane.xlu0 %3916
      %3918 = vmax.xlane.f32.xlu0 %v3868
      %v3919 = vpop.xlane.xlu0 %3918
      %3920 = vmax.xlane.f32.xlu0 %v3870
      %v3921 = vpop.xlane.xlu0 %3920
      %3922 = vmax.xlane.f32.xlu0 %v3873
      %v3923 = vpop.xlane.xlu0 %3922
      %3924 = vmax.xlane.f32.xlu0 %v3875
      %v3925 = vpop.xlane.xlu0 %3924
      %v3926 = vmax.f32 %v3878, %v3895
      %v3927 = vmax.f32 %v3879, %v3897
      %v3928 = vmax.f32 %v3880, %v3899
      %v3929 = vmax.f32 %v3881, %v3901
      %v3930 = vmax.f32 %v3882, %v3903
      %v3931 = vmax.f32 %v3883, %v3905
      %v3932 = vmax.f32 %v3884, %v3907
      %v3933 = vmax.f32 %v3885, %v3909
      %v3934 = vmax.f32 %v3886, %v3911
      %v3935 = vmax.f32 %v3887, %v3913
      %v3936 = vmax.f32 %v3888, %v3915
      %v3937 = vmax.f32 %v3889, %v3917
      %v3938 = vmax.f32 %v3890, %v3919
      %v3939 = vmax.f32 %v3891, %v3921
      %v3940 = vmax.f32 %v3892, %v3923
      %v3941 = vmax.f32 %v3893, %v3925
      %v3942 = vsub.f32 %v3878, %v3926
      %v3943 = vsub.f32 %v3879, %v3927
      %v3944 = vsub.f32 %v3880, %v3928
      %v3945 = vsub.f32 %v3881, %v3929
      %v3946 = vsub.f32 %v3882, %v3930
      %v3947 = vsub.f32 %v3883, %v3931
      %v3948 = vsub.f32 %v3884, %v3932
      %v3949 = vsub.f32 %v3885, %v3933
      %v3950 = vsub.f32 %v3886, %v3934
      %v3951 = vsub.f32 %v3887, %v3935
      %v3952 = vsub.f32 %v3888, %v3936
      %v3953 = vsub.f32 %v3889, %v3937
      %v3954 = vsub.f32 %v3890, %v3938
      %v3955 = vsub.f32 %v3891, %v3939
      %v3956 = vsub.f32 %v3892, %v3940
      %v3957 = vsub.f32 %v3893, %v3941
      %v3958 = vmul.f32 %v3942, 1.442695
      %v3959 = vpow.pop %v3958
      %v3960 = vmul.f32 %v3943, 1.442695
      %v3961 = vpow.pop %v3960
      %v3962 = vmul.f32 %v3944, 1.442695
      %v3963 = vpow.pop %v3962
      %v3964 = vmul.f32 %v3945, 1.442695
      %v3965 = vpow.pop %v3964
      %v3966 = vmul.f32 %v3946, 1.442695
      %v3967 = vpow.pop %v3966
      %v3968 = vmul.f32 %v3947, 1.442695
      %v3969 = vpow.pop %v3968
      %v3970 = vmul.f32 %v3948, 1.442695
      %v3971 = vpow.pop %v3970
      %v3972 = vmul.f32 %v3949, 1.442695
      %v3973 = vpow.pop %v3972
      %v3974 = vmul.f32 %v3950, 1.442695
      %v3975 = vpow.pop %v3974
      %v3976 = vmul.f32 %v3951, 1.442695
      %v3977 = vpow.pop %v3976
      %v3978 = vmul.f32 %v3952, 1.442695
      %v3979 = vpow.pop %v3978
      %v3980 = vmul.f32 %v3953, 1.442695
      %v3981 = vpow.pop %v3980
      %v3982 = vmul.f32 %v3954, 1.442695
      %v3983 = vpow.pop %v3982
      %v3984 = vmul.f32 %v3955, 1.442695
      %v3985 = vpow.pop %v3984
      %v3986 = vmul.f32 %v3956, 1.442695
      %v3987 = vpow.pop %v3986
      %v3988 = vmul.f32 %v3957, 1.442695
      %v3989 = vpow.pop %v3988
      %3991 = vset.pattern.permute.xlu0 0
      %3992 = vperm.xlu0 %3991, %v3926
      %v3993 = vpop.permute.xlu0 %3992
      %3996 = vset.pattern.permute.xlu0 0
      %3997 = vperm.xlu0 %3996, %v3927
      %v3998 = vpop.permute.xlu0 %3997
      %4001 = vset.pattern.permute.xlu0 0
      %4002 = vperm.xlu0 %4001, %v3928
      %v4003 = vpop.permute.xlu0 %4002
      %4006 = vset.pattern.permute.xlu0 0
      %4007 = vperm.xlu0 %4006, %v3929
      %v4008 = vpop.permute.xlu0 %4007
      %4011 = vset.pattern.permute.xlu0 0
      %4012 = vperm.xlu0 %4011, %v3930
      %v4013 = vpop.permute.xlu0 %4012
      %4016 = vset.pattern.permute.xlu0 0
      %4017 = vperm.xlu0 %4016, %v3931
      %v4018 = vpop.permute.xlu0 %4017
      %4021 = vset.pattern.permute.xlu0 0
      %4022 = vperm.xlu0 %4021, %v3932
      %v4023 = vpop.permute.xlu0 %4022
      %4026 = vset.pattern.permute.xlu0 0
      %4027 = vperm.xlu0 %4026, %v3933
      %v4028 = vpop.permute.xlu0 %4027
      %4031 = vset.pattern.permute.xlu0 0
      %4032 = vperm.xlu0 %4031, %v3934
      %v4033 = vpop.permute.xlu0 %4032
      %4036 = vset.pattern.permute.xlu0 0
      %4037 = vperm.xlu0 %4036, %v3935
      %v4038 = vpop.permute.xlu0 %4037
      %4041 = vset.pattern.permute.xlu0 0
      %4042 = vperm.xlu0 %4041, %v3936
      %v4043 = vpop.permute.xlu0 %4042
      %4046 = vset.pattern.permute.xlu0 0
      %4047 = vperm.xlu0 %4046, %v3937
      %v4048 = vpop.permute.xlu0 %4047
      %4051 = vset.pattern.permute.xlu0 0
      %4052 = vperm.xlu0 %4051, %v3938
      %v4053 = vpop.permute.xlu0 %4052
      %4056 = vset.pattern.permute.xlu0 0
      %4057 = vperm.xlu0 %4056, %v3939
      %v4058 = vpop.permute.xlu0 %4057
      %4061 = vset.pattern.permute.xlu0 0
      %4062 = vperm.xlu0 %4061, %v3940
      %v4063 = vpop.permute.xlu0 %4062
      %4066 = vset.pattern.permute.xlu0 0
      %4067 = vperm.xlu0 %4066, %v3941
      %v4068 = vpop.permute.xlu0 %4067
      %v4070 = vsub.f32 %v3838, %v3993
      %v4071 = vsub.f32 %v3840, %v3998
      %v4072 = vsub.f32 %v3843, %v4003
      %v4073 = vsub.f32 %v3845, %v4008
      %v4074 = vsub.f32 %v3848, %v4013
      %v4075 = vsub.f32 %v3850, %v4018
      %v4076 = vsub.f32 %v3853, %v4023
      %v4077 = vsub.f32 %v3855, %v4028
      %v4078 = vsub.f32 %v3858, %v4033
      %v4079 = vsub.f32 %v3860, %v4038
      %v4080 = vsub.f32 %v3863, %v4043
      %v4081 = vsub.f32 %v3865, %v4048
      %v4082 = vsub.f32 %v3868, %v4053
      %v4083 = vsub.f32 %v3870, %v4058
      %v4084 = vsub.f32 %v3873, %v4063
      %v4085 = vsub.f32 %v3875, %v4068
      %v4086 = vpack.c.bf16 %v4071, %v4070
      %v4087 = vpack.c.bf16 %v4073, %v4072
      %v4088 = vpack.c.bf16 %v4075, %v4074
      %v4089 = vpack.c.bf16 %v4077, %v4076
      %v4090 = vpack.c.bf16 %v4079, %v4078
      %v4091 = vpack.c.bf16 %v4081, %v4080
      %v4092 = vpack.c.bf16 %v4083, %v4082
      %v4093 = vpack.c.bf16 %v4085, %v4084
      %v4094 = vunpack.c.l.bf16 %v4086
      %v4095 = vunpack.c.h.bf16 %v4086
      %v4096 = vunpack.c.l.bf16 %v4087
      %v4097 = vunpack.c.h.bf16 %v4087
      %v4098 = vunpack.c.l.bf16 %v4088
      %v4099 = vunpack.c.h.bf16 %v4088
      %v4100 = vunpack.c.l.bf16 %v4089
      %v4101 = vunpack.c.h.bf16 %v4089
      %v4102 = vunpack.c.l.bf16 %v4090
      %v4103 = vunpack.c.h.bf16 %v4090
      %v4104 = vunpack.c.l.bf16 %v4091
      %v4105 = vunpack.c.h.bf16 %v4091
      %v4106 = vunpack.c.l.bf16 %v4092
      %v4107 = vunpack.c.h.bf16 %v4092
      %v4108 = vunpack.c.l.bf16 %v4093
      %v4109 = vunpack.c.h.bf16 %v4093
      %v4110 = vmul.f32 %v4094, 1.442695
      %v4111 = vpow.pop %v4110
      %v4112 = vmul.f32 %v4095, 1.442695
      %v4113 = vpow.pop %v4112
      %v4114 = vmul.f32 %v4096, 1.442695
      %v4115 = vpow.pop %v4114
      %v4116 = vmul.f32 %v4097, 1.442695
      %v4117 = vpow.pop %v4116
      %v4118 = vmul.f32 %v4098, 1.442695
      %v4119 = vpow.pop %v4118
      %v4120 = vmul.f32 %v4099, 1.442695
      %v4121 = vpow.pop %v4120
      %v4122 = vmul.f32 %v4100, 1.442695
      %v4123 = vpow.pop %v4122
      %v4124 = vmul.f32 %v4101, 1.442695
      %v4125 = vpow.pop %v4124
      %v4126 = vmul.f32 %v4102, 1.442695
      %v4127 = vpow.pop %v4126
      %v4128 = vmul.f32 %v4103, 1.442695
      %v4129 = vpow.pop %v4128
      %v4130 = vmul.f32 %v4104, 1.442695
      %v4131 = vpow.pop %v4130
      %v4132 = vmul.f32 %v4105, 1.442695
      %v4133 = vpow.pop %v4132
      %v4134 = vmul.f32 %v4106, 1.442695
      %v4135 = vpow.pop %v4134
      %v4136 = vmul.f32 %v4107, 1.442695
      %v4137 = vpow.pop %v4136
      %v4138 = vmul.f32 %v4108, 1.442695
      %v4139 = vpow.pop %v4138
      %v4140 = vmul.f32 %v4109, 1.442695
      %v4141 = vpow.pop %v4140
      %v4142 = vpack.c.bf16 %v4113, %v4111
      %v4143 = vpack.c.bf16 %v4117, %v4115
      %v4144 = vpack.c.bf16 %v4121, %v4119
      %v4145 = vpack.c.bf16 %v4125, %v4123
      %v4146 = vpack.c.bf16 %v4129, %v4127
      %v4147 = vpack.c.bf16 %v4133, %v4131
      %v4148 = vpack.c.bf16 %v4137, %v4135
      %v4149 = vpack.c.bf16 %v4141, %v4139
      %s4150 = scalar_lea.vmem [#allocation4], 384
      %v4151 = vld [vmem:[%s4150] sm:$0xff]
      %v4152 = vld [vmem:[%s4150 + $0x8] sm:$0xff]
      %v4153 = vld [vmem:[%s4150 + $0x10] sm:$0xff]
      %v4154 = vld [vmem:[%s4150 + $0x18] sm:$0xff]
      %v4155 = vld [vmem:[%s4150 + $0x20] sm:$0xff]
      %v4156 = vld [vmem:[%s4150 + $0x28] sm:$0xff]
      %v4157 = vld [vmem:[%s4150 + $0x30] sm:$0xff]
      %v4158 = vld [vmem:[%s4150 + $0x38] sm:$0xff]
      %v4159 = vld [vmem:[%s4150 + $0x40] sm:$0xff]
      %v4160 = vld [vmem:[%s4150 + $0x48] sm:$0xff]
      %v4161 = vld [vmem:[%s4150 + $0x50] sm:$0xff]
      %v4162 = vld [vmem:[%s4150 + $0x58] sm:$0xff]
      %v4163 = vld [vmem:[%s4150 + $0x60] sm:$0xff]
      %v4164 = vld [vmem:[%s4150 + $0x68] sm:$0xff]
      %v4165 = vld [vmem:[%s4150 + $0x70] sm:$0xff]
      %v4166 = vld [vmem:[%s4150 + $0x78] sm:$0xff]
      %v4167 = vmul.f32 %v3959, %v4151
      %v4168 = vmul.f32 %v3961, %v4152
      %v4169 = vmul.f32 %v3963, %v4153
      %v4170 = vmul.f32 %v3965, %v4154
      %v4171 = vmul.f32 %v3967, %v4155
      %v4172 = vmul.f32 %v3969, %v4156
      %v4173 = vmul.f32 %v3971, %v4157
      %v4174 = vmul.f32 %v3973, %v4158
      %v4175 = vmul.f32 %v3975, %v4159
      %v4176 = vmul.f32 %v3977, %v4160
      %v4177 = vmul.f32 %v3979, %v4161
      %v4178 = vmul.f32 %v3981, %v4162
      %v4179 = vmul.f32 %v3983, %v4163
      %v4180 = vmul.f32 %v3985, %v4164
      %v4181 = vmul.f32 %v3987, %v4165
      %v4182 = vmul.f32 %v3989, %v4166
      %v4183 = vunpack.c.l.bf16 %v4142
      %v4184 = vunpack.c.h.bf16 %v4142
      %v4185 = vunpack.c.l.bf16 %v4143
      %v4186 = vunpack.c.h.bf16 %v4143
      %v4187 = vunpack.c.l.bf16 %v4144
      %v4188 = vunpack.c.h.bf16 %v4144
      %v4189 = vunpack.c.l.bf16 %v4145
      %v4190 = vunpack.c.h.bf16 %v4145
      %v4191 = vunpack.c.l.bf16 %v4146
      %v4192 = vunpack.c.h.bf16 %v4146
      %v4193 = vunpack.c.l.bf16 %v4147
      %v4194 = vunpack.c.h.bf16 %v4147
      %v4195 = vunpack.c.l.bf16 %v4148
      %v4196 = vunpack.c.h.bf16 %v4148
      %v4197 = vunpack.c.l.bf16 %v4149
      %v4198 = vunpack.c.h.bf16 %v4149
      %4199 = vadd.xlane.f32.xlu0 %v4183
      %v4200 = vpop.xlane.xlu0 %4199
      %4201 = vadd.xlane.f32.xlu0 %v4184
      %v4202 = vpop.xlane.xlu0 %4201
      %4203 = vadd.xlane.f32.xlu0 %v4185
      %v4204 = vpop.xlane.xlu0 %4203
      %4205 = vadd.xlane.f32.xlu0 %v4186
      %v4206 = vpop.xlane.xlu0 %4205
      %4207 = vadd.xlane.f32.xlu0 %v4187
      %v4208 = vpop.xlane.xlu0 %4207
      %4209 = vadd.xlane.f32.xlu0 %v4188
      %v4210 = vpop.xlane.xlu0 %4209
      %4211 = vadd.xlane.f32.xlu0 %v4189
      %v4212 = vpop.xlane.xlu0 %4211
      %4213 = vadd.xlane.f32.xlu0 %v4190
      %v4214 = vpop.xlane.xlu0 %4213
      %4215 = vadd.xlane.f32.xlu0 %v4191
      %v4216 = vpop.xlane.xlu0 %4215
      %4217 = vadd.xlane.f32.xlu0 %v4192
      %v4218 = vpop.xlane.xlu0 %4217
      %4219 = vadd.xlane.f32.xlu0 %v4193
      %v4220 = vpop.xlane.xlu0 %4219
      %4221 = vadd.xlane.f32.xlu0 %v4194
      %v4222 = vpop.xlane.xlu0 %4221
      %4223 = vadd.xlane.f32.xlu0 %v4195
      %v4224 = vpop.xlane.xlu0 %4223
      %4225 = vadd.xlane.f32.xlu0 %v4196
      %v4226 = vpop.xlane.xlu0 %4225
      %4227 = vadd.xlane.f32.xlu0 %v4197
      %v4228 = vpop.xlane.xlu0 %4227
      %4229 = vadd.xlane.f32.xlu0 %v4198
      %v4230 = vpop.xlane.xlu0 %4229
      %v4231 = vadd.f32 %v4167, %v4200
      %v4232 = vadd.f32 %v4168, %v4202
      %v4233 = vadd.f32 %v4169, %v4204
      %v4234 = vadd.f32 %v4170, %v4206
      %v4235 = vadd.f32 %v4171, %v4208
      %v4236 = vadd.f32 %v4172, %v4210
      %v4237 = vadd.f32 %v4173, %v4212
      %v4238 = vadd.f32 %v4174, %v4214
      %v4239 = vadd.f32 %v4175, %v4216
      %v4240 = vadd.f32 %v4176, %v4218
      %v4241 = vadd.f32 %v4177, %v4220
      %v4242 = vadd.f32 %v4178, %v4222
      %v4243 = vadd.f32 %v4179, %v4224
      %v4244 = vadd.f32 %v4180, %v4226
      %v4245 = vadd.f32 %v4181, %v4228
      %v4246 = vadd.f32 %v4182, %v4230
      %4247 = vst.msk [vmem:[%s4150] sm:$0xff] %vm1680, %v4231
      %4248 = vst.msk [vmem:[%s4150 + $0x8] sm:$0xff] %vm1680, %v4232
      %4249 = vst.msk [vmem:[%s4150 + $0x10] sm:$0xff] %vm1680, %v4233
      %4250 = vst.msk [vmem:[%s4150 + $0x18] sm:$0xff] %vm1680, %v4234
      %4251 = vst.msk [vmem:[%s4150 + $0x20] sm:$0xff] %vm1680, %v4235
      %4252 = vst.msk [vmem:[%s4150 + $0x28] sm:$0xff] %vm1680, %v4236
      %4253 = vst.msk [vmem:[%s4150 + $0x30] sm:$0xff] %vm1680, %v4237
      %4254 = vst.msk [vmem:[%s4150 + $0x38] sm:$0xff] %vm1680, %v4238
      %4255 = vst.msk [vmem:[%s4150 + $0x40] sm:$0xff] %vm1680, %v4239
      %4256 = vst.msk [vmem:[%s4150 + $0x48] sm:$0xff] %vm1680, %v4240
      %4257 = vst.msk [vmem:[%s4150 + $0x50] sm:$0xff] %vm1680, %v4241
      %4258 = vst.msk [vmem:[%s4150 + $0x58] sm:$0xff] %vm1680, %v4242
      %4259 = vst.msk [vmem:[%s4150 + $0x60] sm:$0xff] %vm1680, %v4243
      %4260 = vst.msk [vmem:[%s4150 + $0x68] sm:$0xff] %vm1680, %v4244
      %4261 = vst.msk [vmem:[%s4150 + $0x70] sm:$0xff] %vm1680, %v4245
      %4262 = vst.msk [vmem:[%s4150 + $0x78] sm:$0xff] %vm1680, %v4246
      %v4263 = vld [vmem:[#allocation5] sm:$0xff]
      %v4264 = vld [vmem:[#allocation5 + $0x8] sm:$0xff]
      %v4265 = vld [vmem:[#allocation5 + $0x10] sm:$0xff]
      %v4266 = vld [vmem:[#allocation5 + $0x18] sm:$0xff]
      %v4267 = vld [vmem:[#allocation5 + $0x20] sm:$0xff]
      %v4268 = vld [vmem:[#allocation5 + $0x28] sm:$0xff]
      %v4269 = vld [vmem:[#allocation5 + $0x30] sm:$0xff]
      %v4270 = vld [vmem:[#allocation5 + $0x38] sm:$0xff]
      %v4271 = vld [vmem:[#allocation5 + $0x40] sm:$0xff]
      %v4272 = vld [vmem:[#allocation5 + $0x48] sm:$0xff]
      %v4273 = vld [vmem:[#allocation5 + $0x50] sm:$0xff]
      %v4274 = vld [vmem:[#allocation5 + $0x58] sm:$0xff]
      %v4275 = vld [vmem:[#allocation5 + $0x60] sm:$0xff]
      %v4276 = vld [vmem:[#allocation5 + $0x68] sm:$0xff]
      %v4277 = vld [vmem:[#allocation5 + $0x70] sm:$0xff]
      %v4278 = vld [vmem:[#allocation5 + $0x78] sm:$0xff]
      %4280 = vset.pattern.permute.xlu0 0
      %4281 = vperm.xlu0 %4280, %v3959
      %v4282 = vpop.permute.xlu0 %4281
      %4285 = vset.pattern.permute.xlu0 0
      %4286 = vperm.xlu0 %4285, %v3961
      %v4287 = vpop.permute.xlu0 %4286
      %4290 = vset.pattern.permute.xlu0 0
      %4291 = vperm.xlu0 %4290, %v3963
      %v4292 = vpop.permute.xlu0 %4291
      %4295 = vset.pattern.permute.xlu0 0
      %4296 = vperm.xlu0 %4295, %v3965
      %v4297 = vpop.permute.xlu0 %4296
      %4300 = vset.pattern.permute.xlu0 0
      %4301 = vperm.xlu0 %4300, %v3967
      %v4302 = vpop.permute.xlu0 %4301
      %4305 = vset.pattern.permute.xlu0 0
      %4306 = vperm.xlu0 %4305, %v3969
      %v4307 = vpop.permute.xlu0 %4306
      %4310 = vset.pattern.permute.xlu0 0
      %4311 = vperm.xlu0 %4310, %v3971
      %v4312 = vpop.permute.xlu0 %4311
      %4315 = vset.pattern.permute.xlu0 0
      %4316 = vperm.xlu0 %4315, %v3973
      %v4317 = vpop.permute.xlu0 %4316
      %4320 = vset.pattern.permute.xlu0 0
      %4321 = vperm.xlu0 %4320, %v3975
      %v4322 = vpop.permute.xlu0 %4321
      %4325 = vset.pattern.permute.xlu0 0
      %4326 = vperm.xlu0 %4325, %v3977
      %v4327 = vpop.permute.xlu0 %4326
      %4330 = vset.pattern.permute.xlu0 0
      %4331 = vperm.xlu0 %4330, %v3979
      %v4332 = vpop.permute.xlu0 %4331
      %4335 = vset.pattern.permute.xlu0 0
      %4336 = vperm.xlu0 %4335, %v3981
      %v4337 = vpop.permute.xlu0 %4336
      %4340 = vset.pattern.permute.xlu0 0
      %4341 = vperm.xlu0 %4340, %v3983
      %v4342 = vpop.permute.xlu0 %4341
      %4345 = vset.pattern.permute.xlu0 0
      %4346 = vperm.xlu0 %4345, %v3985
      %v4347 = vpop.permute.xlu0 %4346
      %4350 = vset.pattern.permute.xlu0 0
      %4351 = vperm.xlu0 %4350, %v3987
      %v4352 = vpop.permute.xlu0 %4351
      %4355 = vset.pattern.permute.xlu0 0
      %4356 = vperm.xlu0 %4355, %v3989
      %v4357 = vpop.permute.xlu0 %4356
      %v4359 = vmul.f32 %v4282, %v4263
      %v4360 = vmul.f32 %v4287, %v4264
      %v4361 = vmul.f32 %v4292, %v4265
      %v4362 = vmul.f32 %v4297, %v4266
      %v4363 = vmul.f32 %v4302, %v4267
      %v4364 = vmul.f32 %v4307, %v4268
      %v4365 = vmul.f32 %v4312, %v4269
      %v4366 = vmul.f32 %v4317, %v4270
      %v4367 = vmul.f32 %v4322, %v4271
      %v4368 = vmul.f32 %v4327, %v4272
      %v4369 = vmul.f32 %v4332, %v4273
      %v4370 = vmul.f32 %v4337, %v4274
      %v4371 = vmul.f32 %v4342, %v4275
      %v4372 = vmul.f32 %v4347, %v4276
      %v4373 = vmul.f32 %v4352, %v4277
      %v4374 = vmul.f32 %v4357, %v4278
      %4375 = vrot.lane.b32.xlu0 %v1841, 32
      %v4376 = vpop.permute.xlu0 %4375
      %4377 = vrot.lane.b32.xlu0 %v1842, 32
      %v4378 = vpop.permute.xlu0 %4377
      %4379 = vrot.lane.b32.xlu0 %v1843, 32
      %v4380 = vpop.permute.xlu0 %4379
      %4381 = vrot.lane.b32.xlu0 %v1844, 32
      %v4382 = vpop.permute.xlu0 %4381
      %4383 = vrot.lane.b32.xlu0 %v1845, 32
      %v4384 = vpop.permute.xlu0 %4383
      %4385 = vrot.lane.b32.xlu0 %v1846, 32
      %v4386 = vpop.permute.xlu0 %4385
      %4387 = vrot.lane.b32.xlu0 %v1847, 32
      %v4388 = vpop.permute.xlu0 %4387
      %4389 = vrot.lane.b32.xlu0 %v1848, 32
      %v4390 = vpop.permute.xlu0 %4389
      %4399 = vmatpush.bf16.msra.mxu0 %v4390
      %4400 = vmatpush.bf16.msra.mxu0 %v4388
      %4401 = vmatpush.bf16.msra.mxu0 %v4386
      %4402 = vmatpush.bf16.msra.mxu0 %v4384
      %4403 = vmatpush.bf16.msra.mxu0 %v4382
      %4404 = vmatpush.bf16.msra.mxu0 %v4380
      %4405 = vmatpush.bf16.msra.mxu0 %v4378
      %4406 = vmatpush.bf16.msra.mxu0 %v4376
      %4407 = vmatmul.bf16.gmra.mxu0 %v4142
      %v4408 = vpop.f32.mrf.mxu0
      %v4409 = vadd.f32 0.0, %v4408
      %v4410 = vpop.f32.mrf.mxu0
      %v4411 = vadd.f32 0.0, %v4410
      %4412 = vmatmul.bf16.gmra.mxu0 %v4143
      %v4413 = vpop.f32.mrf.mxu0
      %v4414 = vadd.f32 0.0, %v4413
      %v4415 = vpop.f32.mrf.mxu0
      %v4416 = vadd.f32 0.0, %v4415
      %4417 = vmatmul.bf16.gmra.mxu0 %v4144
      %v4418 = vpop.f32.mrf.mxu0
      %v4419 = vadd.f32 0.0, %v4418
      %v4420 = vpop.f32.mrf.mxu0
      %v4421 = vadd.f32 0.0, %v4420
      %4422 = vmatmul.bf16.gmra.mxu0 %v4145
      %v4423 = vpop.f32.mrf.mxu0
      %v4424 = vadd.f32 0.0, %v4423
      %v4425 = vpop.f32.mrf.mxu0
      %v4426 = vadd.f32 0.0, %v4425
      %4427 = vmatmul.bf16.gmra.mxu0 %v4146
      %v4428 = vpop.f32.mrf.mxu0
      %v4429 = vadd.f32 0.0, %v4428
      %v4430 = vpop.f32.mrf.mxu0
      %v4431 = vadd.f32 0.0, %v4430
      %4432 = vmatmul.bf16.gmra.mxu0 %v4147
      %v4433 = vpop.f32.mrf.mxu0
      %v4434 = vadd.f32 0.0, %v4433
      %v4435 = vpop.f32.mrf.mxu0
      %v4436 = vadd.f32 0.0, %v4435
      %4437 = vmatmul.bf16.gmra.mxu0 %v4148
      %v4438 = vpop.f32.mrf.mxu0
      %v4439 = vadd.f32 0.0, %v4438
      %v4440 = vpop.f32.mrf.mxu0
      %v4441 = vadd.f32 0.0, %v4440
      %4442 = vmatmul.bf16.gmra.mxu0 %v4149
      %v4443 = vpop.f32.mrf.mxu0
      %v4444 = vadd.f32 0.0, %v4443
      %v4445 = vpop.f32.mrf.mxu0
      %v4446 = vadd.f32 0.0, %v4445
      %4447 = vdwg.mxu0
      %4464 = vrot.lane.b32.xlu0 %v4409, 96
      %v4465 = vpop.permute.xlu0 %4464
      %4466 = vrot.lane.b32.xlu0 %v4411, 96
      %v4467 = vpop.permute.xlu0 %4466
      %4468 = vrot.lane.b32.xlu0 %v4414, 96
      %v4469 = vpop.permute.xlu0 %4468
      %4470 = vrot.lane.b32.xlu0 %v4416, 96
      %v4471 = vpop.permute.xlu0 %4470
      %4472 = vrot.lane.b32.xlu0 %v4419, 96
      %v4473 = vpop.permute.xlu0 %4472
      %4474 = vrot.lane.b32.xlu0 %v4421, 96
      %v4475 = vpop.permute.xlu0 %4474
      %4476 = vrot.lane.b32.xlu0 %v4424, 96
      %v4477 = vpop.permute.xlu0 %4476
      %4478 = vrot.lane.b32.xlu0 %v4426, 96
      %v4479 = vpop.permute.xlu0 %4478
      %4480 = vrot.lane.b32.xlu0 %v4429, 96
      %v4481 = vpop.permute.xlu0 %4480
      %4482 = vrot.lane.b32.xlu0 %v4431, 96
      %v4483 = vpop.permute.xlu0 %4482
      %4484 = vrot.lane.b32.xlu0 %v4434, 96
      %v4485 = vpop.permute.xlu0 %4484
      %4486 = vrot.lane.b32.xlu0 %v4436, 96
      %v4487 = vpop.permute.xlu0 %4486
      %4488 = vrot.lane.b32.xlu0 %v4439, 96
      %v4489 = vpop.permute.xlu0 %4488
      %4490 = vrot.lane.b32.xlu0 %v4441, 96
      %v4491 = vpop.permute.xlu0 %4490
      %4492 = vrot.lane.b32.xlu0 %v4444, 96
      %v4493 = vpop.permute.xlu0 %4492
      %4494 = vrot.lane.b32.xlu0 %v4446, 96
      %v4495 = vpop.permute.xlu0 %4494
      %v4512 = vadd.f32 %v4359, %v4465
      %v4513 = vadd.f32 %v4360, %v4467
      %v4514 = vadd.f32 %v4361, %v4469
      %v4515 = vadd.f32 %v4362, %v4471
      %v4516 = vadd.f32 %v4363, %v4473
      %v4517 = vadd.f32 %v4364, %v4475
      %v4518 = vadd.f32 %v4365, %v4477
      %v4519 = vadd.f32 %v4366, %v4479
      %v4520 = vadd.f32 %v4367, %v4481
      %v4521 = vadd.f32 %v4368, %v4483
      %v4522 = vadd.f32 %v4369, %v4485
      %v4523 = vadd.f32 %v4370, %v4487
      %v4524 = vadd.f32 %v4371, %v4489
      %v4525 = vadd.f32 %v4372, %v4491
      %v4526 = vadd.f32 %v4373, %v4493
      %v4527 = vadd.f32 %v4374, %v4495
      %vm4528 = vcmask 1048320
      %4529 = vst.msk [vmem:[#allocation5] sm:$0xff] %vm4528, %v4512
      %4530 = vst.msk [vmem:[#allocation5 + $0x8] sm:$0xff] %vm4528, %v4513
      %4531 = vst.msk [vmem:[#allocation5 + $0x10] sm:$0xff] %vm4528, %v4514
      %4532 = vst.msk [vmem:[#allocation5 + $0x18] sm:$0xff] %vm4528, %v4515
      %4533 = vst.msk [vmem:[#allocation5 + $0x20] sm:$0xff] %vm4528, %v4516
      %4534 = vst.msk [vmem:[#allocation5 + $0x28] sm:$0xff] %vm4528, %v4517
      %4535 = vst.msk [vmem:[#allocation5 + $0x30] sm:$0xff] %vm4528, %v4518
      %4536 = vst.msk [vmem:[#allocation5 + $0x38] sm:$0xff] %vm4528, %v4519
      %4537 = vst.msk [vmem:[#allocation5 + $0x40] sm:$0xff] %vm4528, %v4520
      %4538 = vst.msk [vmem:[#allocation5 + $0x48] sm:$0xff] %vm4528, %v4521
      %4539 = vst.msk [vmem:[#allocation5 + $0x50] sm:$0xff] %vm4528, %v4522
      %4540 = vst.msk [vmem:[#allocation5 + $0x58] sm:$0xff] %vm4528, %v4523
      %4541 = vst.msk [vmem:[#allocation5 + $0x60] sm:$0xff] %vm4528, %v4524
      %4542 = vst.msk [vmem:[#allocation5 + $0x68] sm:$0xff] %vm4528, %v4525
      %4543 = vst.msk [vmem:[#allocation5 + $0x70] sm:$0xff] %vm4528, %v4526
      %4544 = vst.msk [vmem:[#allocation5 + $0x78] sm:$0xff] %vm4528, %v4527
      %4545 = vst.msk [vmem:[%s3877] sm:$0xff] %vm1680, %v3926
      %4546 = vst.msk [vmem:[%s3877 + $0x8] sm:$0xff] %vm1680, %v3927
      %4547 = vst.msk [vmem:[%s3877 + $0x10] sm:$0xff] %vm1680, %v3928
      %4548 = vst.msk [vmem:[%s3877 + $0x18] sm:$0xff] %vm1680, %v3929
      %4549 = vst.msk [vmem:[%s3877 + $0x20] sm:$0xff] %vm1680, %v3930
      %4550 = vst.msk [vmem:[%s3877 + $0x28] sm:$0xff] %vm1680, %v3931
      %4551 = vst.msk [vmem:[%s3877 + $0x30] sm:$0xff] %vm1680, %v3932
      %4552 = vst.msk [vmem:[%s3877 + $0x38] sm:$0xff] %vm1680, %v3933
      %4553 = vst.msk [vmem:[%s3877 + $0x40] sm:$0xff] %vm1680, %v3934
      %4554 = vst.msk [vmem:[%s3877 + $0x48] sm:$0xff] %vm1680, %v3935
      %4555 = vst.msk [vmem:[%s3877 + $0x50] sm:$0xff] %vm1680, %v3936
      %4556 = vst.msk [vmem:[%s3877 + $0x58] sm:$0xff] %vm1680, %v3937
      %4557 = vst.msk [vmem:[%s3877 + $0x60] sm:$0xff] %vm1680, %v3938
      %4558 = vst.msk [vmem:[%s3877 + $0x68] sm:$0xff] %vm1680, %v3939
      %4559 = vst.msk [vmem:[%s3877 + $0x70] sm:$0xff] %vm1680, %v3940
      %4560 = vst.msk [vmem:[%s3877 + $0x78] sm:$0xff] %vm1680, %v3941
      // Predicated region
      $region61: #{_forward_device.6} parent=55 // pred_check
        %p4561 = pneg %p406
      $region62: #{_forward_device.6} parent=55 // pred_check_branch
        %4563 = sbr.rel (%p4561) target = $region64
      $region63: #{_forward_device.6} parent=55 // pred_region
        %v4564 = vld [vmem:[#allocation4] sm:$0xff]
        %v4565 = vld [vmem:[#allocation4 + $0x8] sm:$0xff]
        %v4566 = vld [vmem:[#allocation4 + $0x10] sm:$0xff]
        %v4567 = vld [vmem:[#allocation4 + $0x18] sm:$0xff]
        %v4568 = vld [vmem:[#allocation4 + $0x20] sm:$0xff]
        %v4569 = vld [vmem:[#allocation4 + $0x28] sm:$0xff]
        %v4570 = vld [vmem:[#allocation4 + $0x30] sm:$0xff]
        %v4571 = vld [vmem:[#allocation4 + $0x38] sm:$0xff]
        %v4572 = vld [vmem:[#allocation4 + $0x40] sm:$0xff]
        %v4573 = vld [vmem:[#allocation4 + $0x48] sm:$0xff]
        %v4574 = vld [vmem:[#allocation4 + $0x50] sm:$0xff]
        %v4575 = vld [vmem:[#allocation4 + $0x58] sm:$0xff]
        %v4576 = vld [vmem:[#allocation4 + $0x60] sm:$0xff]
        %v4577 = vld [vmem:[#allocation4 + $0x68] sm:$0xff]
        %v4578 = vld [vmem:[#allocation4 + $0x70] sm:$0xff]
        %v4579 = vld [vmem:[#allocation4 + $0x78] sm:$0xff]
        %v4580 = vrcp.pop %v4564
        %v4581 = vrcp.pop %v4565
        %v4582 = vrcp.pop %v4566
        %v4583 = vrcp.pop %v4567
        %v4584 = vrcp.pop %v4568
        %v4585 = vrcp.pop %v4569
        %v4586 = vrcp.pop %v4570
        %v4587 = vrcp.pop %v4571
        %v4588 = vrcp.pop %v4572
        %v4589 = vrcp.pop %v4573
        %v4590 = vrcp.pop %v4574
        %v4591 = vrcp.pop %v4575
        %v4592 = vrcp.pop %v4576
        %v4593 = vrcp.pop %v4577
        %v4594 = vrcp.pop %v4578
        %v4595 = vrcp.pop %v4579
        %v4596 = vld [vmem:[#allocation5] sm:$0xff]
        %v4597 = vld [vmem:[#allocation5 + $0x8] sm:$0xff]
        %v4598 = vld [vmem:[#allocation5 + $0x10] sm:$0xff]
        %v4599 = vld [vmem:[#allocation5 + $0x18] sm:$0xff]
        %v4600 = vld [vmem:[#allocation5 + $0x20] sm:$0xff]
        %v4601 = vld [vmem:[#allocation5 + $0x28] sm:$0xff]
        %v4602 = vld [vmem:[#allocation5 + $0x30] sm:$0xff]
        %v4603 = vld [vmem:[#allocation5 + $0x38] sm:$0xff]
        %v4604 = vld [vmem:[#allocation5 + $0x40] sm:$0xff]
        %v4605 = vld [vmem:[#allocation5 + $0x48] sm:$0xff]
        %v4606 = vld [vmem:[#allocation5 + $0x50] sm:$0xff]
        %v4607 = vld [vmem:[#allocation5 + $0x58] sm:$0xff]
        %v4608 = vld [vmem:[#allocation5 + $0x60] sm:$0xff]
        %v4609 = vld [vmem:[#allocation5 + $0x68] sm:$0xff]
        %v4610 = vld [vmem:[#allocation5 + $0x70] sm:$0xff]
        %v4611 = vld [vmem:[#allocation5 + $0x78] sm:$0xff]
        %4613 = vset.pattern.permute.xlu0 0
        %4614 = vperm.xlu0 %4613, %v4580
        %v4615 = vpop.permute.xlu0 %4614
        %4618 = vset.pattern.permute.xlu0 0
        %4619 = vperm.xlu0 %4618, %v4581
        %v4620 = vpop.permute.xlu0 %4619
        %4623 = vset.pattern.permute.xlu0 0
        %4624 = vperm.xlu0 %4623, %v4582
        %v4625 = vpop.permute.xlu0 %4624
        %4628 = vset.pattern.permute.xlu0 0
        %4629 = vperm.xlu0 %4628, %v4583
        %v4630 = vpop.permute.xlu0 %4629
        %4633 = vset.pattern.permute.xlu0 0
        %4634 = vperm.xlu0 %4633, %v4584
        %v4635 = vpop.permute.xlu0 %4634
        %4638 = vset.pattern.permute.xlu0 0
        %4639 = vperm.xlu0 %4638, %v4585
        %v4640 = vpop.permute.xlu0 %4639
        %4643 = vset.pattern.permute.xlu0 0
        %4644 = vperm.xlu0 %4643, %v4586
        %v4645 = vpop.permute.xlu0 %4644
        %4648 = vset.pattern.permute.xlu0 0
        %4649 = vperm.xlu0 %4648, %v4587
        %v4650 = vpop.permute.xlu0 %4649
        %4653 = vset.pattern.permute.xlu0 0
        %4654 = vperm.xlu0 %4653, %v4588
        %v4655 = vpop.permute.xlu0 %4654
        %4658 = vset.pattern.permute.xlu0 0
        %4659 = vperm.xlu0 %4658, %v4589
        %v4660 = vpop.permute.xlu0 %4659
        %4663 = vset.pattern.permute.xlu0 0
        %4664 = vperm.xlu0 %4663, %v4590
        %v4665 = vpop.permute.xlu0 %4664
        %4668 = vset.pattern.permute.xlu0 0
        %4669 = vperm.xlu0 %4668, %v4591
        %v4670 = vpop.permute.xlu0 %4669
        %4673 = vset.pattern.permute.xlu0 0
        %4674 = vperm.xlu0 %4673, %v4592
        %v4675 = vpop.permute.xlu0 %4674
        %4678 = vset.pattern.permute.xlu0 0
        %4679 = vperm.xlu0 %4678, %v4593
        %v4680 = vpop.permute.xlu0 %4679
        %4683 = vset.pattern.permute.xlu0 0
        %4684 = vperm.xlu0 %4683, %v4594
        %v4685 = vpop.permute.xlu0 %4684
        %4688 = vset.pattern.permute.xlu0 0
        %4689 = vperm.xlu0 %4688, %v4595
        %v4690 = vpop.permute.xlu0 %4689
        %v4692 = vmul.f32 %v4596, %v4615
        %v4693 = vmul.f32 %v4597, %v4620
        %v4694 = vmul.f32 %v4598, %v4625
        %v4695 = vmul.f32 %v4599, %v4630
        %v4696 = vmul.f32 %v4600, %v4635
        %v4697 = vmul.f32 %v4601, %v4640
        %v4698 = vmul.f32 %v4602, %v4645
        %v4699 = vmul.f32 %v4603, %v4650
        %v4700 = vmul.f32 %v4604, %v4655
        %v4701 = vmul.f32 %v4605, %v4660
        %v4702 = vmul.f32 %v4606, %v4665
        %v4703 = vmul.f32 %v4607, %v4670
        %v4704 = vmul.f32 %v4608, %v4675
        %v4705 = vmul.f32 %v4609, %v4680
        %v4706 = vmul.f32 %v4610, %v4685
        %v4707 = vmul.f32 %v4611, %v4690
        %v4708 = vpack.c.bf16 %v4692, %v4692
        %v4709 = vpack.c.bf16 %v4693, %v4693
        %v4710 = vpack.c.bf16 %v4694, %v4694
        %v4711 = vpack.c.bf16 %v4695, %v4695
        %v4712 = vpack.c.bf16 %v4696, %v4696
        %v4713 = vpack.c.bf16 %v4697, %v4697
        %v4714 = vpack.c.bf16 %v4698, %v4698
        %v4715 = vpack.c.bf16 %v4699, %v4699
        %v4716 = vpack.c.bf16 %v4700, %v4700
        %v4717 = vpack.c.bf16 %v4701, %v4701
        %v4718 = vpack.c.bf16 %v4702, %v4702
        %v4719 = vpack.c.bf16 %v4703, %v4703
        %v4720 = vpack.c.bf16 %v4704, %v4704
        %v4721 = vpack.c.bf16 %v4705, %v4705
        %v4722 = vpack.c.bf16 %v4706, %v4706
        %v4723 = vpack.c.bf16 %v4707, %v4707
        %vm4724 = vcmask 257024
        %4725 = vst.msk [vmem:[#allocation2] sm:$0xf] %vm4724, %v4708
        %4726 = vst.msk [vmem:[#allocation2 + $0x4] sm:$0xf] %vm4724, %v4709
        %4727 = vst.msk [vmem:[#allocation2 + $0x8] sm:$0xf] %vm4724, %v4710
        %4728 = vst.msk [vmem:[#allocation2 + $0xc] sm:$0xf] %vm4724, %v4711
        %4729 = vst.msk [vmem:[#allocation2 + $0x10] sm:$0xf] %vm4724, %v4712
        %4730 = vst.msk [vmem:[#allocation2 + $0x14] sm:$0xf] %vm4724, %v4713
        %4731 = vst.msk [vmem:[#allocation2 + $0x18] sm:$0xf] %vm4724, %v4714
        %4732 = vst.msk [vmem:[#allocation2 + $0x1c] sm:$0xf] %vm4724, %v4715
        %4733 = vst.msk [vmem:[#allocation2 + $0x20] sm:$0xf] %vm4724, %v4716
        %4734 = vst.msk [vmem:[#allocation2 + $0x24] sm:$0xf] %vm4724, %v4717
        %4735 = vst.msk [vmem:[#allocation2 + $0x28] sm:$0xf] %vm4724, %v4718
        %4736 = vst.msk [vmem:[#allocation2 + $0x2c] sm:$0xf] %vm4724, %v4719
        %4737 = vst.msk [vmem:[#allocation2 + $0x30] sm:$0xf] %vm4724, %v4720
        %4738 = vst.msk [vmem:[#allocation2 + $0x34] sm:$0xf] %vm4724, %v4721
        %4739 = vst.msk [vmem:[#allocation2 + $0x38] sm:$0xf] %vm4724, %v4722
        %4740 = vst.msk [vmem:[#allocation2 + $0x3c] sm:$0xf] %vm4724, %v4723
        %v4741 = vld [vmem:[%s2412] sm:$0xff]
        %v4742 = vld [vmem:[%s2412 + $0x8] sm:$0xff]
        %v4743 = vld [vmem:[%s2412 + $0x10] sm:$0xff]
        %v4744 = vld [vmem:[%s2412 + $0x18] sm:$0xff]
        %v4745 = vld [vmem:[%s2412 + $0x20] sm:$0xff]
        %v4746 = vld [vmem:[%s2412 + $0x28] sm:$0xff]
        %v4747 = vld [vmem:[%s2412 + $0x30] sm:$0xff]
        %v4748 = vld [vmem:[%s2412 + $0x38] sm:$0xff]
        %v4749 = vld [vmem:[%s2412 + $0x40] sm:$0xff]
        %v4750 = vld [vmem:[%s2412 + $0x48] sm:$0xff]
        %v4751 = vld [vmem:[%s2412 + $0x50] sm:$0xff]
        %v4752 = vld [vmem:[%s2412 + $0x58] sm:$0xff]
        %v4753 = vld [vmem:[%s2412 + $0x60] sm:$0xff]
        %v4754 = vld [vmem:[%s2412 + $0x68] sm:$0xff]
        %v4755 = vld [vmem:[%s2412 + $0x70] sm:$0xff]
        %v4756 = vld [vmem:[%s2412 + $0x78] sm:$0xff]
        %v4757 = vrcp.pop %v4741
        %v4758 = vrcp.pop %v4742
        %v4759 = vrcp.pop %v4743
        %v4760 = vrcp.pop %v4744
        %v4761 = vrcp.pop %v4745
        %v4762 = vrcp.pop %v4746
        %v4763 = vrcp.pop %v4747
        %v4764 = vrcp.pop %v4748
        %v4765 = vrcp.pop %v4749
        %v4766 = vrcp.pop %v4750
        %v4767 = vrcp.pop %v4751
        %v4768 = vrcp.pop %v4752
        %v4769 = vrcp.pop %v4753
        %v4770 = vrcp.pop %v4754
        %v4771 = vrcp.pop %v4755
        %v4772 = vrcp.pop %v4756
        %v4773 = vld [vmem:[#allocation5] sm:$0xff]
        %v4774 = vld [vmem:[#allocation5 + $0x8] sm:$0xff]
        %v4775 = vld [vmem:[#allocation5 + $0x10] sm:$0xff]
        %v4776 = vld [vmem:[#allocation5 + $0x18] sm:$0xff]
        %v4777 = vld [vmem:[#allocation5 + $0x20] sm:$0xff]
        %v4778 = vld [vmem:[#allocation5 + $0x28] sm:$0xff]
        %v4779 = vld [vmem:[#allocation5 + $0x30] sm:$0xff]
        %v4780 = vld [vmem:[#allocation5 + $0x38] sm:$0xff]
        %v4781 = vld [vmem:[#allocation5 + $0x40] sm:$0xff]
        %v4782 = vld [vmem:[#allocation5 + $0x48] sm:$0xff]
        %v4783 = vld [vmem:[#allocation5 + $0x50] sm:$0xff]
        %v4784 = vld [vmem:[#allocation5 + $0x58] sm:$0xff]
        %v4785 = vld [vmem:[#allocation5 + $0x60] sm:$0xff]
        %v4786 = vld [vmem:[#allocation5 + $0x68] sm:$0xff]
        %v4787 = vld [vmem:[#allocation5 + $0x70] sm:$0xff]
        %v4788 = vld [vmem:[#allocation5 + $0x78] sm:$0xff]
        %4790 = vset.pattern.permute.xlu0 0
        %4791 = vperm.xlu0 %4790, %v4757
        %v4792 = vpop.permute.xlu0 %4791
        %4795 = vset.pattern.permute.xlu0 0
        %4796 = vperm.xlu0 %4795, %v4758
        %v4797 = vpop.permute.xlu0 %4796
        %4800 = vset.pattern.permute.xlu0 0
        %4801 = vperm.xlu0 %4800, %v4759
        %v4802 = vpop.permute.xlu0 %4801
        %4805 = vset.pattern.permute.xlu0 0
        %4806 = vperm.xlu0 %4805, %v4760
        %v4807 = vpop.permute.xlu0 %4806
        %4810 = vset.pattern.permute.xlu0 0
        %4811 = vperm.xlu0 %4810, %v4761
        %v4812 = vpop.permute.xlu0 %4811
        %4815 = vset.pattern.permute.xlu0 0
        %4816 = vperm.xlu0 %4815, %v4762
        %v4817 = vpop.permute.xlu0 %4816
        %4820 = vset.pattern.permute.xlu0 0
        %4821 = vperm.xlu0 %4820, %v4763
        %v4822 = vpop.permute.xlu0 %4821
        %4825 = vset.pattern.permute.xlu0 0
        %4826 = vperm.xlu0 %4825, %v4764
        %v4827 = vpop.permute.xlu0 %4826
        %4830 = vset.pattern.permute.xlu0 0
        %4831 = vperm.xlu0 %4830, %v4765
        %v4832 = vpop.permute.xlu0 %4831
        %4835 = vset.pattern.permute.xlu0 0
        %4836 = vperm.xlu0 %4835, %v4766
        %v4837 = vpop.permute.xlu0 %4836
        %4840 = vset.pattern.permute.xlu0 0
        %4841 = vperm.xlu0 %4840, %v4767
        %v4842 = vpop.permute.xlu0 %4841
        %4845 = vset.pattern.permute.xlu0 0
        %4846 = vperm.xlu0 %4845, %v4768
        %v4847 = vpop.permute.xlu0 %4846
        %4850 = vset.pattern.permute.xlu0 0
        %4851 = vperm.xlu0 %4850, %v4769
        %v4852 = vpop.permute.xlu0 %4851
        %4855 = vset.pattern.permute.xlu0 0
        %4856 = vperm.xlu0 %4855, %v4770
        %v4857 = vpop.permute.xlu0 %4856
        %4860 = vset.pattern.permute.xlu0 0
        %4861 = vperm.xlu0 %4860, %v4771
        %v4862 = vpop.permute.xlu0 %4861
        %4865 = vset.pattern.permute.xlu0 0
        %4866 = vperm.xlu0 %4865, %v4772
        %v4867 = vpop.permute.xlu0 %4866
        %v4869 = vmul.f32 %v4773, %v4792
        %v4870 = vmul.f32 %v4774, %v4797
        %v4871 = vmul.f32 %v4775, %v4802
        %v4872 = vmul.f32 %v4776, %v4807
        %v4873 = vmul.f32 %v4777, %v4812
        %v4874 = vmul.f32 %v4778, %v4817
        %v4875 = vmul.f32 %v4779, %v4822
        %v4876 = vmul.f32 %v4780, %v4827
        %v4877 = vmul.f32 %v4781, %v4832
        %v4878 = vmul.f32 %v4782, %v4837
        %v4879 = vmul.f32 %v4783, %v4842
        %v4880 = vmul.f32 %v4784, %v4847
        %v4881 = vmul.f32 %v4785, %v4852
        %v4882 = vmul.f32 %v4786, %v4857
        %v4883 = vmul.f32 %v4787, %v4862
        %v4884 = vmul.f32 %v4788, %v4867
        %v4885 = vpack.c.bf16 %v4869, %v4869
        %v4886 = vpack.c.bf16 %v4870, %v4870
        %v4887 = vpack.c.bf16 %v4871, %v4871
        %v4888 = vpack.c.bf16 %v4872, %v4872
        %v4889 = vpack.c.bf16 %v4873, %v4873
        %v4890 = vpack.c.bf16 %v4874, %v4874
        %v4891 = vpack.c.bf16 %v4875, %v4875
        %v4892 = vpack.c.bf16 %v4876, %v4876
        %v4893 = vpack.c.bf16 %v4877, %v4877
        %v4894 = vpack.c.bf16 %v4878, %v4878
        %v4895 = vpack.c.bf16 %v4879, %v4879
        %v4896 = vpack.c.bf16 %v4880, %v4880
        %v4897 = vpack.c.bf16 %v4881, %v4881
        %v4898 = vpack.c.bf16 %v4882, %v4882
        %v4899 = vpack.c.bf16 %v4883, %v4883
        %v4900 = vpack.c.bf16 %v4884, %v4884
        %vm4901 = vcmask 519424
        %4902 = vst.msk [vmem:[#allocation2] sm:$0xf] %vm4901, %v4885
        %4903 = vst.msk [vmem:[#allocation2 + $0x4] sm:$0xf] %vm4901, %v4886
        %4904 = vst.msk [vmem:[#allocation2 + $0x8] sm:$0xf] %vm4901, %v4887
        %4905 = vst.msk [vmem:[#allocation2 + $0xc] sm:$0xf] %vm4901, %v4888
        %4906 = vst.msk [vmem:[#allocation2 + $0x10] sm:$0xf] %vm4901, %v4889
        %4907 = vst.msk [vmem:[#allocation2 + $0x14] sm:$0xf] %vm4901, %v4890
        %4908 = vst.msk [vmem:[#allocation2 + $0x18] sm:$0xf] %vm4901, %v4891
        %4909 = vst.msk [vmem:[#allocation2 + $0x1c] sm:$0xf] %vm4901, %v4892
        %4910 = vst.msk [vmem:[#allocation2 + $0x20] sm:$0xf] %vm4901, %v4893
        %4911 = vst.msk [vmem:[#allocation2 + $0x24] sm:$0xf] %vm4901, %v4894
        %4912 = vst.msk [vmem:[#allocation2 + $0x28] sm:$0xf] %vm4901, %v4895
        %4913 = vst.msk [vmem:[#allocation2 + $0x2c] sm:$0xf] %vm4901, %v4896
        %4914 = vst.msk [vmem:[#allocation2 + $0x30] sm:$0xf] %vm4901, %v4897
        %4915 = vst.msk [vmem:[#allocation2 + $0x34] sm:$0xf] %vm4901, %v4898
        %4916 = vst.msk [vmem:[#allocation2 + $0x38] sm:$0xf] %vm4901, %v4899
        %4917 = vst.msk [vmem:[#allocation2 + $0x3c] sm:$0xf] %vm4901, %v4900
        %v4918 = vld [vmem:[%s3281] sm:$0xff]
        %v4919 = vld [vmem:[%s3281 + $0x8] sm:$0xff]
        %v4920 = vld [vmem:[%s3281 + $0x10] sm:$0xff]
        %v4921 = vld [vmem:[%s3281 + $0x18] sm:$0xff]
        %v4922 = vld [vmem:[%s3281 + $0x20] sm:$0xff]
        %v4923 = vld [vmem:[%s3281 + $0x28] sm:$0xff]
        %v4924 = vld [vmem:[%s3281 + $0x30] sm:$0xff]
        %v4925 = vld [vmem:[%s3281 + $0x38] sm:$0xff]
        %v4926 = vld [vmem:[%s3281 + $0x40] sm:$0xff]
        %v4927 = vld [vmem:[%s3281 + $0x48] sm:$0xff]
        %v4928 = vld [vmem:[%s3281 + $0x50] sm:$0xff]
        %v4929 = vld [vmem:[%s3281 + $0x58] sm:$0xff]
        %v4930 = vld [vmem:[%s3281 + $0x60] sm:$0xff]
        %v4931 = vld [vmem:[%s3281 + $0x68] sm:$0xff]
        %v4932 = vld [vmem:[%s3281 + $0x70] sm:$0xff]
        %v4933 = vld [vmem:[%s3281 + $0x78] sm:$0xff]
        %v4934 = vrcp.pop %v4918
        %v4935 = vrcp.pop %v4919
        %v4936 = vrcp.pop %v4920
        %v4937 = vrcp.pop %v4921
        %v4938 = vrcp.pop %v4922
        %v4939 = vrcp.pop %v4923
        %v4940 = vrcp.pop %v4924
        %v4941 = vrcp.pop %v4925
        %v4942 = vrcp.pop %v4926
        %v4943 = vrcp.pop %v4927
        %v4944 = vrcp.pop %v4928
        %v4945 = vrcp.pop %v4929
        %v4946 = vrcp.pop %v4930
        %v4947 = vrcp.pop %v4931
        %v4948 = vrcp.pop %v4932
        %v4949 = vrcp.pop %v4933
        %v4950 = vld [vmem:[#allocation5] sm:$0xff]
        %v4951 = vld [vmem:[#allocation5 + $0x8] sm:$0xff]
        %v4952 = vld [vmem:[#allocation5 + $0x10] sm:$0xff]
        %v4953 = vld [vmem:[#allocation5 + $0x18] sm:$0xff]
        %v4954 = vld [vmem:[#allocation5 + $0x20] sm:$0xff]
        %v4955 = vld [vmem:[#allocation5 + $0x28] sm:$0xff]
        %v4956 = vld [vmem:[#allocation5 + $0x30] sm:$0xff]
        %v4957 = vld [vmem:[#allocation5 + $0x38] sm:$0xff]
        %v4958 = vld [vmem:[#allocation5 + $0x40] sm:$0xff]
        %v4959 = vld [vmem:[#allocation5 + $0x48] sm:$0xff]
        %v4960 = vld [vmem:[#allocation5 + $0x50] sm:$0xff]
        %v4961 = vld [vmem:[#allocation5 + $0x58] sm:$0xff]
        %v4962 = vld [vmem:[#allocation5 + $0x60] sm:$0xff]
        %v4963 = vld [vmem:[#allocation5 + $0x68] sm:$0xff]
        %v4964 = vld [vmem:[#allocation5 + $0x70] sm:$0xff]
        %v4965 = vld [vmem:[#allocation5 + $0x78] sm:$0xff]
        %4967 = vset.pattern.permute.xlu0 0
        %4968 = vperm.xlu0 %4967, %v4934
        %v4969 = vpop.permute.xlu0 %4968
        %4972 = vset.pattern.permute.xlu0 0
        %4973 = vperm.xlu0 %4972, %v4935
        %v4974 = vpop.permute.xlu0 %4973
        %4977 = vset.pattern.permute.xlu0 0
        %4978 = vperm.xlu0 %4977, %v4936
        %v4979 = vpop.permute.xlu0 %4978
        %4982 = vset.pattern.permute.xlu0 0
        %4983 = vperm.xlu0 %4982, %v4937
        %v4984 = vpop.permute.xlu0 %4983
        %4987 = vset.pattern.permute.xlu0 0
        %4988 = vperm.xlu0 %4987, %v4938
        %v4989 = vpop.permute.xlu0 %4988
        %4992 = vset.pattern.permute.xlu0 0
        %4993 = vperm.xlu0 %4992, %v4939
        %v4994 = vpop.permute.xlu0 %4993
        %4997 = vset.pattern.permute.xlu0 0
        %4998 = vperm.xlu0 %4997, %v4940
        %v4999 = vpop.permute.xlu0 %4998
        %5002 = vset.pattern.permute.xlu0 0
        %5003 = vperm.xlu0 %5002, %v4941
        %v5004 = vpop.permute.xlu0 %5003
        %5007 = vset.pattern.permute.xlu0 0
        %5008 = vperm.xlu0 %5007, %v4942
        %v5009 = vpop.permute.xlu0 %5008
        %5012 = vset.pattern.permute.xlu0 0
        %5013 = vperm.xlu0 %5012, %v4943
        %v5014 = vpop.permute.xlu0 %5013
        %5017 = vset.pattern.permute.xlu0 0
        %5018 = vperm.xlu0 %5017, %v4944
        %v5019 = vpop.permute.xlu0 %5018
        %5022 = vset.pattern.permute.xlu0 0
        %5023 = vperm.xlu0 %5022, %v4945
        %v5024 = vpop.permute.xlu0 %5023
        %5027 = vset.pattern.permute.xlu0 0
        %5028 = vperm.xlu0 %5027, %v4946
        %v5029 = vpop.permute.xlu0 %5028
        %5032 = vset.pattern.permute.xlu0 0
        %5033 = vperm.xlu0 %5032, %v4947
        %v5034 = vpop.permute.xlu0 %5033
        %5037 = vset.pattern.permute.xlu0 0
        %5038 = vperm.xlu0 %5037, %v4948
        %v5039 = vpop.permute.xlu0 %5038
        %5042 = vset.pattern.permute.xlu0 0
        %5043 = vperm.xlu0 %5042, %v4949
        %v5044 = vpop.permute.xlu0 %5043
        %v5046 = vmul.f32 %v4950, %v4969
        %v5047 = vmul.f32 %v4951, %v4974
        %v5048 = vmul.f32 %v4952, %v4979
        %v5049 = vmul.f32 %v4953, %v4984
        %v5050 = vmul.f32 %v4954, %v4989
        %v5051 = vmul.f32 %v4955, %v4994
        %v5052 = vmul.f32 %v4956, %v4999
        %v5053 = vmul.f32 %v4957, %v5004
        %v5054 = vmul.f32 %v4958, %v5009
        %v5055 = vmul.f32 %v4959, %v5014
        %v5056 = vmul.f32 %v4960, %v5019
        %v5057 = vmul.f32 %v4961, %v5024
        %v5058 = vmul.f32 %v4962, %v5029
        %v5059 = vmul.f32 %v4963, %v5034
        %v5060 = vmul.f32 %v4964, %v5039
        %v5061 = vmul.f32 %v4965, %v5044
        %v5062 = vpack.c.bf16 %v5046, %v5046
        %v5063 = vpack.c.bf16 %v5047, %v5047
        %v5064 = vpack.c.bf16 %v5048, %v5048
        %v5065 = vpack.c.bf16 %v5049, %v5049
        %v5066 = vpack.c.bf16 %v5050, %v5050
        %v5067 = vpack.c.bf16 %v5051, %v5051
        %v5068 = vpack.c.bf16 %v5052, %v5052
        %v5069 = vpack.c.bf16 %v5053, %v5053
        %v5070 = vpack.c.bf16 %v5054, %v5054
        %v5071 = vpack.c.bf16 %v5055, %v5055
        %v5072 = vpack.c.bf16 %v5056, %v5056
        %v5073 = vpack.c.bf16 %v5057, %v5057
        %v5074 = vpack.c.bf16 %v5058, %v5058
        %v5075 = vpack.c.bf16 %v5059, %v5059
        %v5076 = vpack.c.bf16 %v5060, %v5060
        %v5077 = vpack.c.bf16 %v5061, %v5061
        %vm5078 = vcmask 781824
        %5079 = vst.msk [vmem:[#allocation2] sm:$0xf] %vm5078, %v5062
        %5080 = vst.msk [vmem:[#allocation2 + $0x4] sm:$0xf] %vm5078, %v5063
        %5081 = vst.msk [vmem:[#allocation2 + $0x8] sm:$0xf] %vm5078, %v5064
        %5082 = vst.msk [vmem:[#allocation2 + $0xc] sm:$0xf] %vm5078, %v5065
        %5083 = vst.msk [vmem:[#allocation2 + $0x10] sm:$0xf] %vm5078, %v5066
        %5084 = vst.msk [vmem:[#allocation2 + $0x14] sm:$0xf] %vm5078, %v5067
        %5085 = vst.msk [vmem:[#allocation2 + $0x18] sm:$0xf] %vm5078, %v5068
        %5086 = vst.msk [vmem:[#allocation2 + $0x1c] sm:$0xf] %vm5078, %v5069
        %5087 = vst.msk [vmem:[#allocation2 + $0x20] sm:$0xf] %vm5078, %v5070
        %5088 = vst.msk [vmem:[#allocation2 + $0x24] sm:$0xf] %vm5078, %v5071
        %5089 = vst.msk [vmem:[#allocation2 + $0x28] sm:$0xf] %vm5078, %v5072
        %5090 = vst.msk [vmem:[#allocation2 + $0x2c] sm:$0xf] %vm5078, %v5073
        %5091 = vst.msk [vmem:[#allocation2 + $0x30] sm:$0xf] %vm5078, %v5074
        %5092 = vst.msk [vmem:[#allocation2 + $0x34] sm:$0xf] %vm5078, %v5075
        %5093 = vst.msk [vmem:[#allocation2 + $0x38] sm:$0xf] %vm5078, %v5076
        %5094 = vst.msk [vmem:[#allocation2 + $0x3c] sm:$0xf] %vm5078, %v5077
        %v5095 = vld [vmem:[%s4150] sm:$0xff]
        %v5096 = vld [vmem:[%s4150 + $0x8] sm:$0xff]
        %v5097 = vld [vmem:[%s4150 + $0x10] sm:$0xff]
        %v5098 = vld [vmem:[%s4150 + $0x18] sm:$0xff]
        %v5099 = vld [vmem:[%s4150 + $0x20] sm:$0xff]
        %v5100 = vld [vmem:[%s4150 + $0x28] sm:$0xff]
        %v5101 = vld [vmem:[%s4150 + $0x30] sm:$0xff]
        %v5102 = vld [vmem:[%s4150 + $0x38] sm:$0xff]
        %v5103 = vld [vmem:[%s4150 + $0x40] sm:$0xff]
        %v5104 = vld [vmem:[%s4150 + $0x48] sm:$0xff]
        %v5105 = vld [vmem:[%s4150 + $0x50] sm:$0xff]
        %v5106 = vld [vmem:[%s4150 + $0x58] sm:$0xff]
        %v5107 = vld [vmem:[%s4150 + $0x60] sm:$0xff]
        %v5108 = vld [vmem:[%s4150 + $0x68] sm:$0xff]
        %v5109 = vld [vmem:[%s4150 + $0x70] sm:$0xff]
        %v5110 = vld [vmem:[%s4150 + $0x78] sm:$0xff]
        %v5111 = vrcp.pop %v5095
        %v5112 = vrcp.pop %v5096
        %v5113 = vrcp.pop %v5097
        %v5114 = vrcp.pop %v5098
        %v5115 = vrcp.pop %v5099
        %v5116 = vrcp.pop %v5100
        %v5117 = vrcp.pop %v5101
        %v5118 = vrcp.pop %v5102
        %v5119 = vrcp.pop %v5103
        %v5120 = vrcp.pop %v5104
        %v5121 = vrcp.pop %v5105
        %v5122 = vrcp.pop %v5106
        %v5123 = vrcp.pop %v5107
        %v5124 = vrcp.pop %v5108
        %v5125 = vrcp.pop %v5109
        %v5126 = vrcp.pop %v5110
        %v5127 = vld [vmem:[#allocation5] sm:$0xff]
        %v5128 = vld [vmem:[#allocation5 + $0x8] sm:$0xff]
        %v5129 = vld [vmem:[#allocation5 + $0x10] sm:$0xff]
        %v5130 = vld [vmem:[#allocation5 + $0x18] sm:$0xff]
        %v5131 = vld [vmem:[#allocation5 + $0x20] sm:$0xff]
        %v5132 = vld [vmem:[#allocation5 + $0x28] sm:$0xff]
        %v5133 = vld [vmem:[#allocation5 + $0x30] sm:$0xff]
        %v5134 = vld [vmem:[#allocation5 + $0x38] sm:$0xff]
        %v5135 = vld [vmem:[#allocation5 + $0x40] sm:$0xff]
        %v5136 = vld [vmem:[#allocation5 + $0x48] sm:$0xff]
        %v5137 = vld [vmem:[#allocation5 + $0x50] sm:$0xff]
        %v5138 = vld [vmem:[#allocation5 + $0x58] sm:$0xff]
        %v5139 = vld [vmem:[#allocation5 + $0x60] sm:$0xff]
        %v5140 = vld [vmem:[#allocation5 + $0x68] sm:$0xff]
        %v5141 = vld [vmem:[#allocation5 + $0x70] sm:$0xff]
        %v5142 = vld [vmem:[#allocation5 + $0x78] sm:$0xff]
        %5144 = vset.pattern.permute.xlu0 0
        %5145 = vperm.xlu0 %5144, %v5111
        %v5146 = vpop.permute.xlu0 %5145
        %5149 = vset.pattern.permute.xlu0 0
        %5150 = vperm.xlu0 %5149, %v5112
        %v5151 = vpop.permute.xlu0 %5150
        %5154 = vset.pattern.permute.xlu0 0
        %5155 = vperm.xlu0 %5154, %v5113
        %v5156 = vpop.permute.xlu0 %5155
        %5159 = vset.pattern.permute.xlu0 0
        %5160 = vperm.xlu0 %5159, %v5114
        %v5161 = vpop.permute.xlu0 %5160
        %5164 = vset.pattern.permute.xlu0 0
        %5165 = vperm.xlu0 %5164, %v5115
        %v5166 = vpop.permute.xlu0 %5165
        %5169 = vset.pattern.permute.xlu0 0
        %5170 = vperm.xlu0 %5169, %v5116
        %v5171 = vpop.permute.xlu0 %5170
        %5174 = vset.pattern.permute.xlu0 0
        %5175 = vperm.xlu0 %5174, %v5117
        %v5176 = vpop.permute.xlu0 %5175
        %5179 = vset.pattern.permute.xlu0 0
        %5180 = vperm.xlu0 %5179, %v5118
        %v5181 = vpop.permute.xlu0 %5180
        %5184 = vset.pattern.permute.xlu0 0
        %5185 = vperm.xlu0 %5184, %v5119
        %v5186 = vpop.permute.xlu0 %5185
        %5189 = vset.pattern.permute.xlu0 0
        %5190 = vperm.xlu0 %5189, %v5120
        %v5191 = vpop.permute.xlu0 %5190
        %5194 = vset.pattern.permute.xlu0 0
        %5195 = vperm.xlu0 %5194, %v5121
        %v5196 = vpop.permute.xlu0 %5195
        %5199 = vset.pattern.permute.xlu0 0
        %5200 = vperm.xlu0 %5199, %v5122
        %v5201 = vpop.permute.xlu0 %5200
        %5204 = vset.pattern.permute.xlu0 0
        %5205 = vperm.xlu0 %5204, %v5123
        %v5206 = vpop.permute.xlu0 %5205
        %5209 = vset.pattern.permute.xlu0 0
        %5210 = vperm.xlu0 %5209, %v5124
        %v5211 = vpop.permute.xlu0 %5210
        %5214 = vset.pattern.permute.xlu0 0
        %5215 = vperm.xlu0 %5214, %v5125
        %v5216 = vpop.permute.xlu0 %5215
        %5219 = vset.pattern.permute.xlu0 0
        %5220 = vperm.xlu0 %5219, %v5126
        %v5221 = vpop.permute.xlu0 %5220
        %v5223 = vmul.f32 %v5127, %v5146
        %v5224 = vmul.f32 %v5128, %v5151
        %v5225 = vmul.f32 %v5129, %v5156
        %v5226 = vmul.f32 %v5130, %v5161
        %v5227 = vmul.f32 %v5131, %v5166
        %v5228 = vmul.f32 %v5132, %v5171
        %v5229 = vmul.f32 %v5133, %v5176
        %v5230 = vmul.f32 %v5134, %v5181
        %v5231 = vmul.f32 %v5135, %v5186
        %v5232 = vmul.f32 %v5136, %v5191
        %v5233 = vmul.f32 %v5137, %v5196
        %v5234 = vmul.f32 %v5138, %v5201
        %v5235 = vmul.f32 %v5139, %v5206
        %v5236 = vmul.f32 %v5140, %v5211
        %v5237 = vmul.f32 %v5141, %v5216
        %v5238 = vmul.f32 %v5142, %v5221
        %v5239 = vpack.c.bf16 %v5223, %v5223
        %v5240 = vpack.c.bf16 %v5224, %v5224
        %v5241 = vpack.c.bf16 %v5225, %v5225
        %v5242 = vpack.c.bf16 %v5226, %v5226
        %v5243 = vpack.c.bf16 %v5227, %v5227
        %v5244 = vpack.c.bf16 %v5228, %v5228
        %v5245 = vpack.c.bf16 %v5229, %v5229
        %v5246 = vpack.c.bf16 %v5230, %v5230
        %v5247 = vpack.c.bf16 %v5231, %v5231
        %v5248 = vpack.c.bf16 %v5232, %v5232
        %v5249 = vpack.c.bf16 %v5233, %v5233
        %v5250 = vpack.c.bf16 %v5234, %v5234
        %v5251 = vpack.c.bf16 %v5235, %v5235
        %v5252 = vpack.c.bf16 %v5236, %v5236
        %v5253 = vpack.c.bf16 %v5237, %v5237
        %v5254 = vpack.c.bf16 %v5238, %v5238
        %vm5255 = vcmask 1044224
        %5256 = vst.msk [vmem:[#allocation2] sm:$0xf] %vm5255, %v5239
        %5257 = vst.msk [vmem:[#allocation2 + $0x4] sm:$0xf] %vm5255, %v5240
        %5258 = vst.msk [vmem:[#allocation2 + $0x8] sm:$0xf] %vm5255, %v5241
        %5259 = vst.msk [vmem:[#allocation2 + $0xc] sm:$0xf] %vm5255, %v5242
        %5260 = vst.msk [vmem:[#allocation2 + $0x10] sm:$0xf] %vm5255, %v5243
        %5261 = vst.msk [vmem:[#allocation2 + $0x14] sm:$0xf] %vm5255, %v5244
        %5262 = vst.msk [vmem:[#allocation2 + $0x18] sm:$0xf] %vm5255, %v5245
        %5263 = vst.msk [vmem:[#allocation2 + $0x1c] sm:$0xf] %vm5255, %v5246
        %5264 = vst.msk [vmem:[#allocation2 + $0x20] sm:$0xf] %vm5255, %v5247
        %5265 = vst.msk [vmem:[#allocation2 + $0x24] sm:$0xf] %vm5255, %v5248
        %5266 = vst.msk [vmem:[#allocation2 + $0x28] sm:$0xf] %vm5255, %v5249
        %5267 = vst.msk [vmem:[#allocation2 + $0x2c] sm:$0xf] %vm5255, %v5250
        %5268 = vst.msk [vmem:[#allocation2 + $0x30] sm:$0xf] %vm5255, %v5251
        %5269 = vst.msk [vmem:[#allocation2 + $0x34] sm:$0xf] %vm5255, %v5252
        %5270 = vst.msk [vmem:[#allocation2 + $0x38] sm:$0xf] %vm5255, %v5253
        %5271 = vst.msk [vmem:[#allocation2 + $0x3c] sm:$0xf] %vm5255, %v5254
        %v5272 = vld [vmem:[#allocation2] sm:$0xf]
        %v5273 = vld [vmem:[#allocation2 + $0x4] sm:$0xf]
        %v5274 = vld [vmem:[#allocation2 + $0x8] sm:$0xf]
        %v5275 = vld [vmem:[#allocation2 + $0xc] sm:$0xf]
        %v5276 = vld [vmem:[#allocation2 + $0x10] sm:$0xf]
        %v5277 = vld [vmem:[#allocation2 + $0x14] sm:$0xf]
        %v5278 = vld [vmem:[#allocation2 + $0x18] sm:$0xf]
        %v5279 = vld [vmem:[#allocation2 + $0x1c] sm:$0xf]
        %v5280 = vld [vmem:[#allocation2 + $0x20] sm:$0xf]
        %v5281 = vld [vmem:[#allocation2 + $0x24] sm:$0xf]
        %v5282 = vld [vmem:[#allocation2 + $0x28] sm:$0xf]
        %v5283 = vld [vmem:[#allocation2 + $0x2c] sm:$0xf]
        %v5284 = vld [vmem:[#allocation2 + $0x30] sm:$0xf]
        %v5285 = vld [vmem:[#allocation2 + $0x34] sm:$0xf]
        %v5286 = vld [vmem:[#allocation2 + $0x38] sm:$0xf]
        %v5287 = vld [vmem:[#allocation2 + $0x3c] sm:$0xf]
        %v5288 = vld [vmem:[%s5] sm:$0xf]
        %v5289 = vld [vmem:[%s5 + $0x4] sm:$0xf]
        %v5290 = vld [vmem:[%s5 + $0x8] sm:$0xf]
        %v5291 = vld [vmem:[%s5 + $0xc] sm:$0xf]
        %v5292 = vld [vmem:[%s5 + $0x10] sm:$0xf]
        %v5293 = vld [vmem:[%s5 + $0x14] sm:$0xf]
        %v5294 = vld [vmem:[%s5 + $0x18] sm:$0xf]
        %v5295 = vld [vmem:[%s5 + $0x1c] sm:$0xf]
        %v5296 = vld [vmem:[%s5 + $0x20] sm:$0xf]
        %v5297 = vld [vmem:[%s5 + $0x24] sm:$0xf]
        %v5298 = vld [vmem:[%s5 + $0x28] sm:$0xf]
        %v5299 = vld [vmem:[%s5 + $0x2c] sm:$0xf]
        %v5300 = vld [vmem:[%s5 + $0x30] sm:$0xf]
        %v5301 = vld [vmem:[%s5 + $0x34] sm:$0xf]
        %v5302 = vld [vmem:[%s5 + $0x38] sm:$0xf]
        %v5303 = vld [vmem:[%s5 + $0x3c] sm:$0xf]
        %v5320 = vunpack.c.l.b16 %v5272
        %v5321 = vunpack.c.l.b16 %v5273
        %v5322 = vunpack.c.l.b16 %v5274
        %v5323 = vunpack.c.l.b16 %v5275
        %v5324 = vunpack.c.l.b16 %v5276
        %v5325 = vunpack.c.l.b16 %v5277
        %v5326 = vunpack.c.l.b16 %v5278
        %v5327 = vunpack.c.l.b16 %v5279
        %v5328 = vunpack.c.l.b16 %v5280
        %v5329 = vunpack.c.l.b16 %v5281
        %v5330 = vunpack.c.l.b16 %v5282
        %v5331 = vunpack.c.l.b16 %v5283
        %v5332 = vunpack.c.l.b16 %v5284
        %v5333 = vunpack.c.l.b16 %v5285
        %v5334 = vunpack.c.l.b16 %v5286
        %v5335 = vunpack.c.l.b16 %v5287
        %v5336 = vpack.c.b16 %v5321, %v5320
        %v5337 = vpack.c.b16 %v5323, %v5322
        %v5338 = vpack.c.b16 %v5325, %v5324
        %v5339 = vpack.c.b16 %v5327, %v5326
        %v5340 = vpack.c.b16 %v5329, %v5328
        %v5341 = vpack.c.b16 %v5331, %v5330
        %v5342 = vpack.c.b16 %v5333, %v5332
        %v5343 = vpack.c.b16 %v5335, %v5334
        %v5368 = vunpack.c.l.b16 %v5288
        %v5369 = vunpack.c.l.b16 %v5289
        %v5370 = vunpack.c.l.b16 %v5290
        %v5371 = vunpack.c.l.b16 %v5291
        %v5372 = vunpack.c.l.b16 %v5292
        %v5373 = vunpack.c.l.b16 %v5293
        %v5374 = vunpack.c.l.b16 %v5294
        %v5375 = vunpack.c.l.b16 %v5295
        %v5376 = vunpack.c.l.b16 %v5296
        %v5377 = vunpack.c.l.b16 %v5297
        %v5378 = vunpack.c.l.b16 %v5298
        %v5379 = vunpack.c.l.b16 %v5299
        %v5380 = vunpack.c.l.b16 %v5300
        %v5381 = vunpack.c.l.b16 %v5301
        %v5382 = vunpack.c.l.b16 %v5302
        %v5383 = vunpack.c.l.b16 %v5303
        %v5384 = vpack.c.b16 %v5369, %v5368
        %v5385 = vpack.c.b16 %v5371, %v5370
        %v5386 = vpack.c.b16 %v5373, %v5372
        %v5387 = vpack.c.b16 %v5375, %v5374
        %v5388 = vpack.c.b16 %v5377, %v5376
        %v5389 = vpack.c.b16 %v5379, %v5378
        %v5390 = vpack.c.b16 %v5381, %v5380
        %v5391 = vpack.c.b16 %v5383, %v5382
        %5400 = vmatpush.bf16.msra.mxu0 %v5391
        %5401 = vmatpush.bf16.msra.mxu0 %v5390
        %5402 = vmatpush.bf16.msra.mxu0 %v5389
        %5403 = vmatpush.bf16.msra.mxu0 %v5388
        %5404 = vmatpush.bf16.msra.mxu0 %v5387
        %5405 = vmatpush.bf16.msra.mxu0 %v5386
        %5406 = vmatpush.bf16.msra.mxu0 %v5385
        %5407 = vmatpush.bf16.msra.mxu0 %v5384
        %5408 = vmatmul.bf16.gmra.mxu0 %v5336
        %v5409 = vpop.f32.mrf.mxu0
        %v5410 = vadd.f32 0.0, %v5409
        %v5411 = vpop.f32.mrf.mxu0
        %v5412 = vadd.f32 0.0, %v5411
        %5413 = vmatmul.bf16.gmra.mxu0 %v5337
        %v5414 = vpop.f32.mrf.mxu0
        %v5415 = vadd.f32 0.0, %v5414
        %v5416 = vpop.f32.mrf.mxu0
        %v5417 = vadd.f32 0.0, %v5416
        %5418 = vmatmul.bf16.gmra.mxu0 %v5338
        %v5419 = vpop.f32.mrf.mxu0
        %v5420 = vadd.f32 0.0, %v5419
        %v5421 = vpop.f32.mrf.mxu0
        %v5422 = vadd.f32 0.0, %v5421
        %5423 = vmatmul.bf16.gmra.mxu0 %v5339
        %v5424 = vpop.f32.mrf.mxu0
        %v5425 = vadd.f32 0.0, %v5424
        %v5426 = vpop.f32.mrf.mxu0
        %v5427 = vadd.f32 0.0, %v5426
        %5428 = vmatmul.bf16.gmra.mxu0 %v5340
        %v5429 = vpop.f32.mrf.mxu0
        %v5430 = vadd.f32 0.0, %v5429
        %v5431 = vpop.f32.mrf.mxu0
        %v5432 = vadd.f32 0.0, %v5431
        %5433 = vmatmul.bf16.gmra.mxu0 %v5341
        %v5434 = vpop.f32.mrf.mxu0
        %v5435 = vadd.f32 0.0, %v5434
        %v5436 = vpop.f32.mrf.mxu0
        %v5437 = vadd.f32 0.0, %v5436
        %5438 = vmatmul.bf16.gmra.mxu0 %v5342
        %v5439 = vpop.f32.mrf.mxu0
        %v5440 = vadd.f32 0.0, %v5439
        %v5441 = vpop.f32.mrf.mxu0
        %v5442 = vadd.f32 0.0, %v5441
        %5443 = vmatmul.bf16.gmra.mxu0 %v5343
        %v5444 = vpop.f32.mrf.mxu0
        %v5445 = vadd.f32 0.0, %v5444
        %v5446 = vpop.f32.mrf.mxu0
        %v5447 = vadd.f32 0.0, %v5446
        %5448 = vdwg.mxu0
        %v5449 = vld [vmem:[%s384] sm:$0xf]
        %v5450 = vld [vmem:[%s384 + $0x4] sm:$0xf]
        %v5451 = vld [vmem:[%s384 + $0x8] sm:$0xf]
        %v5452 = vld [vmem:[%s384 + $0xc] sm:$0xf]
        %v5453 = vld [vmem:[%s384 + $0x10] sm:$0xf]
        %v5454 = vld [vmem:[%s384 + $0x14] sm:$0xf]
        %v5455 = vld [vmem:[%s384 + $0x18] sm:$0xf]
        %v5456 = vld [vmem:[%s384 + $0x1c] sm:$0xf]
        %v5457 = vld [vmem:[%s384 + $0x20] sm:$0xf]
        %v5458 = vld [vmem:[%s384 + $0x24] sm:$0xf]
        %v5459 = vld [vmem:[%s384 + $0x28] sm:$0xf]
        %v5460 = vld [vmem:[%s384 + $0x2c] sm:$0xf]
        %v5461 = vld [vmem:[%s384 + $0x30] sm:$0xf]
        %v5462 = vld [vmem:[%s384 + $0x34] sm:$0xf]
        %v5463 = vld [vmem:[%s384 + $0x38] sm:$0xf]
        %v5464 = vld [vmem:[%s384 + $0x3c] sm:$0xf]
        %v5465 = vunpack.c.l.bf16 %v5449
        %v5466 = vunpack.c.l.bf16 %v5450
        %v5467 = vunpack.c.l.bf16 %v5451
        %v5468 = vunpack.c.l.bf16 %v5452
        %v5469 = vunpack.c.l.bf16 %v5453
        %v5470 = vunpack.c.l.bf16 %v5454
        %v5471 = vunpack.c.l.bf16 %v5455
        %v5472 = vunpack.c.l.bf16 %v5456
        %v5473 = vunpack.c.l.bf16 %v5457
        %v5474 = vunpack.c.l.bf16 %v5458
        %v5475 = vunpack.c.l.bf16 %v5459
        %v5476 = vunpack.c.l.bf16 %v5460
        %v5477 = vunpack.c.l.bf16 %v5461
        %v5478 = vunpack.c.l.bf16 %v5462
        %v5479 = vunpack.c.l.bf16 %v5463
        %v5480 = vunpack.c.l.bf16 %v5464
        %v5481 = vadd.f32 %v5465, %v5410
        %v5482 = vadd.f32 %v5466, %v5412
        %v5483 = vadd.f32 %v5467, %v5415
        %v5484 = vadd.f32 %v5468, %v5417
        %v5485 = vadd.f32 %v5469, %v5420
        %v5486 = vadd.f32 %v5470, %v5422
        %v5487 = vadd.f32 %v5471, %v5425
        %v5488 = vadd.f32 %v5472, %v5427
        %v5489 = vadd.f32 %v5473, %v5430
        %v5490 = vadd.f32 %v5474, %v5432
        %v5491 = vadd.f32 %v5475, %v5435
        %v5492 = vadd.f32 %v5476, %v5437
        %v5493 = vadd.f32 %v5477, %v5440
        %v5494 = vadd.f32 %v5478, %v5442
        %v5495 = vadd.f32 %v5479, %v5445
        %v5496 = vadd.f32 %v5480, %v5447
        %v5497 = vld [vmem:[%s6] sm:$0x1]
        %v5499 = vperm.slane %v5497, 0
        %v5501 = vadd.f32 %v5481, %v5499
        %v5502 = vadd.f32 %v5482, %v5499
        %v5503 = vadd.f32 %v5483, %v5499
        %v5504 = vadd.f32 %v5484, %v5499
        %v5505 = vadd.f32 %v5485, %v5499
        %v5506 = vadd.f32 %v5486, %v5499
        %v5507 = vadd.f32 %v5487, %v5499
        %v5508 = vadd.f32 %v5488, %v5499
        %v5509 = vadd.f32 %v5489, %v5499
        %v5510 = vadd.f32 %v5490, %v5499
        %v5511 = vadd.f32 %v5491, %v5499
        %v5512 = vadd.f32 %v5492, %v5499
        %v5513 = vadd.f32 %v5493, %v5499
        %v5514 = vadd.f32 %v5494, %v5499
        %v5515 = vadd.f32 %v5495, %v5499
        %v5516 = vadd.f32 %v5496, %v5499
        %5517 = vadd.xlane.f32.xlu0 %v5501
        %v5518 = vpop.xlane.xlu0 %5517
        %5519 = vadd.xlane.f32.xlu0 %v5502
        %v5520 = vpop.xlane.xlu0 %5519
        %5521 = vadd.xlane.f32.xlu0 %v5503
        %v5522 = vpop.xlane.xlu0 %5521
        %5523 = vadd.xlane.f32.xlu0 %v5504
        %v5524 = vpop.xlane.xlu0 %5523
        %5525 = vadd.xlane.f32.xlu0 %v5505
        %v5526 = vpop.xlane.xlu0 %5525
        %5527 = vadd.xlane.f32.xlu0 %v5506
        %v5528 = vpop.xlane.xlu0 %5527
        %5529 = vadd.xlane.f32.xlu0 %v5507
        %v5530 = vpop.xlane.xlu0 %5529
        %5531 = vadd.xlane.f32.xlu0 %v5508
        %v5532 = vpop.xlane.xlu0 %5531
        %5533 = vadd.xlane.f32.xlu0 %v5509
        %v5534 = vpop.xlane.xlu0 %5533
        %5535 = vadd.xlane.f32.xlu0 %v5510
        %v5536 = vpop.xlane.xlu0 %5535
        %5537 = vadd.xlane.f32.xlu0 %v5511
        %v5538 = vpop.xlane.xlu0 %5537
        %5539 = vadd.xlane.f32.xlu0 %v5512
        %v5540 = vpop.xlane.xlu0 %5539
        %5541 = vadd.xlane.f32.xlu0 %v5513
        %v5542 = vpop.xlane.xlu0 %5541
        %5543 = vadd.xlane.f32.xlu0 %v5514
        %v5544 = vpop.xlane.xlu0 %5543
        %5545 = vadd.xlane.f32.xlu0 %v5515
        %v5546 = vpop.xlane.xlu0 %5545
        %5547 = vadd.xlane.f32.xlu0 %v5516
        %v5548 = vpop.xlane.xlu0 %5547
        %v5549 = vrcp.pop 128.0
        %v5550 = vmul.f32 128.0, %v5549
        %v5551 = vsub.f32 1.0, %v5550
        %v5552 = vmul.f32 %v5549, %v5551
        %v5553 = vadd.f32 %v5549, %v5552
        %vm5554 = vweird.f32 %v5549
        %v5555 = vsel %vm5554, %v5549, %v5553
        %v5556 = vmul.f32 %v5518, %v5555
        %v5557 = vmul.f32 %v5520, %v5555
        %v5558 = vmul.f32 %v5522, %v5555
        %v5559 = vmul.f32 %v5524, %v5555
        %v5560 = vmul.f32 %v5526, %v5555
        %v5561 = vmul.f32 %v5528, %v5555
        %v5562 = vmul.f32 %v5530, %v5555
        %v5563 = vmul.f32 %v5532, %v5555
        %v5564 = vmul.f32 %v5534, %v5555
        %v5565 = vmul.f32 %v5536, %v5555
        %v5566 = vmul.f32 %v5538, %v5555
        %v5567 = vmul.f32 %v5540, %v5555
        %v5568 = vmul.f32 %v5542, %v5555
        %v5569 = vmul.f32 %v5544, %v5555
        %v5570 = vmul.f32 %v5546, %v5555
        %v5571 = vmul.f32 %v5548, %v5555
        %v5572 = vsub.f32 %v5501, %v5556
        %v5573 = vsub.f32 %v5502, %v5557
        %v5574 = vsub.f32 %v5503, %v5558
        %v5575 = vsub.f32 %v5504, %v5559
        %v5576 = vsub.f32 %v5505, %v5560
        %v5577 = vsub.f32 %v5506, %v5561
        %v5578 = vsub.f32 %v5507, %v5562
        %v5579 = vsub.f32 %v5508, %v5563
        %v5580 = vsub.f32 %v5509, %v5564
        %v5581 = vsub.f32 %v5510, %v5565
        %v5582 = vsub.f32 %v5511, %v5566
        %v5583 = vsub.f32 %v5512, %v5567
        %v5584 = vsub.f32 %v5513, %v5568
        %v5585 = vsub.f32 %v5514, %v5569
        %v5586 = vsub.f32 %v5515, %v5570
        %v5587 = vsub.f32 %v5516, %v5571
        %v5588 = vmul.f32 %v5572, %v5572
        %v5589 = vmul.f32 %v5573, %v5573
        %v5590 = vmul.f32 %v5574, %v5574
        %v5591 = vmul.f32 %v5575, %v5575
        %v5592 = vmul.f32 %v5576, %v5576
        %v5593 = vmul.f32 %v5577, %v5577
        %v5594 = vmul.f32 %v5578, %v5578
        %v5595 = vmul.f32 %v5579, %v5579
        %v5596 = vmul.f32 %v5580, %v5580
        %v5597 = vmul.f32 %v5581, %v5581
        %v5598 = vmul.f32 %v5582, %v5582
        %v5599 = vmul.f32 %v5583, %v5583
        %v5600 = vmul.f32 %v5584, %v5584
        %v5601 = vmul.f32 %v5585, %v5585
        %v5602 = vmul.f32 %v5586, %v5586
        %v5603 = vmul.f32 %v5587, %v5587
        %5604 = vadd.xlane.f32.xlu0 %v5588
        %v5605 = vpop.xlane.xlu0 %5604
        %5606 = vadd.xlane.f32.xlu0 %v5589
        %v5607 = vpop.xlane.xlu0 %5606
        %5608 = vadd.xlane.f32.xlu0 %v5590
        %v5609 = vpop.xlane.xlu0 %5608
        %5610 = vadd.xlane.f32.xlu0 %v5591
        %v5611 = vpop.xlane.xlu0 %5610
        %5612 = vadd.xlane.f32.xlu0 %v5592
        %v5613 = vpop.xlane.xlu0 %5612
        %5614 = vadd.xlane.f32.xlu0 %v5593
        %v5615 = vpop.xlane.xlu0 %5614
        %5616 = vadd.xlane.f32.xlu0 %v5594
        %v5617 = vpop.xlane.xlu0 %5616
        %5618 = vadd.xlane.f32.xlu0 %v5595
        %v5619 = vpop.xlane.xlu0 %5618
        %5620 = vadd.xlane.f32.xlu0 %v5596
        %v5621 = vpop.xlane.xlu0 %5620
        %5622 = vadd.xlane.f32.xlu0 %v5597
        %v5623 = vpop.xlane.xlu0 %5622
        %5624 = vadd.xlane.f32.xlu0 %v5598
        %v5625 = vpop.xlane.xlu0 %5624
        %5626 = vadd.xlane.f32.xlu0 %v5599
        %v5627 = vpop.xlane.xlu0 %5626
        %5628 = vadd.xlane.f32.xlu0 %v5600
        %v5629 = vpop.xlane.xlu0 %5628
        %5630 = vadd.xlane.f32.xlu0 %v5601
        %v5631 = vpop.xlane.xlu0 %5630
        %5632 = vadd.xlane.f32.xlu0 %v5602
        %v5633 = vpop.xlane.xlu0 %5632
        %5634 = vadd.xlane.f32.xlu0 %v5603
        %v5635 = vpop.xlane.xlu0 %5634
        %v5636 = vmul.f32 %v5605, %v5555
        %v5637 = vmul.f32 %v5607, %v5555
        %v5638 = vmul.f32 %v5609, %v5555
        %v5639 = vmul.f32 %v5611, %v5555
        %v5640 = vmul.f32 %v5613, %v5555
        %v5641 = vmul.f32 %v5615, %v5555
        %v5642 = vmul.f32 %v5617, %v5555
        %v5643 = vmul.f32 %v5619, %v5555
        %v5644 = vmul.f32 %v5621, %v5555
        %v5645 = vmul.f32 %v5623, %v5555
        %v5646 = vmul.f32 %v5625, %v5555
        %v5647 = vmul.f32 %v5627, %v5555
        %v5648 = vmul.f32 %v5629, %v5555
        %v5649 = vmul.f32 %v5631, %v5555
        %v5650 = vmul.f32 %v5633, %v5555
        %v5651 = vmul.f32 %v5635, %v5555
        %v5652 = vadd.f32 %v5636, 1e-05
        %v5653 = vadd.f32 %v5637, 1e-05
        %v5654 = vadd.f32 %v5638, 1e-05
        %v5655 = vadd.f32 %v5639, 1e-05
        %v5656 = vadd.f32 %v5640, 1e-05
        %v5657 = vadd.f32 %v5641, 1e-05
        %v5658 = vadd.f32 %v5642, 1e-05
        %v5659 = vadd.f32 %v5643, 1e-05
        %v5660 = vadd.f32 %v5644, 1e-05
        %v5661 = vadd.f32 %v5645, 1e-05
        %v5662 = vadd.f32 %v5646, 1e-05
        %v5663 = vadd.f32 %v5647, 1e-05
        %v5664 = vadd.f32 %v5648, 1e-05
        %v5665 = vadd.f32 %v5649, 1e-05
        %v5666 = vadd.f32 %v5650, 1e-05
        %v5667 = vadd.f32 %v5651, 1e-05
        %v5668 = vrsqrt.pop %v5652
        %v5669 = vmul.f32 %v5668, %v5652
        %v5670 = vmul.f32 %v5669, %v5668
        %v5671 = vmul.f32 0.5, %v5670
        %v5672 = vsub.f32 1.5, %v5671
        %v5673 = vmul.f32 %v5668, %v5672
        %vm5674 = vweird.f32 %v5652
        %vm5675 = vweird.f32 %v5668
        %vm5676 = vmor %vm5674, %vm5675
        %v5677 = vsel %vm5676, %v5668, %v5673
        %v5678 = vrsqrt.pop %v5653
        %v5679 = vmul.f32 %v5678, %v5653
        %v5680 = vmul.f32 %v5679, %v5678
        %v5681 = vmul.f32 0.5, %v5680
        %v5682 = vsub.f32 1.5, %v5681
        %v5683 = vmul.f32 %v5678, %v5682
        %vm5684 = vweird.f32 %v5653
        %vm5685 = vweird.f32 %v5678
        %vm5686 = vmor %vm5684, %vm5685
        %v5687 = vsel %vm5686, %v5678, %v5683
        %v5688 = vrsqrt.pop %v5654
        %v5689 = vmul.f32 %v5688, %v5654
        %v5690 = vmul.f32 %v5689, %v5688
        %v5691 = vmul.f32 0.5, %v5690
        %v5692 = vsub.f32 1.5, %v5691
        %v5693 = vmul.f32 %v5688, %v5692
        %vm5694 = vweird.f32 %v5654
        %vm5695 = vweird.f32 %v5688
        %vm5696 = vmor %vm5694, %vm5695
        %v5697 = vsel %vm5696, %v5688, %v5693
        %v5698 = vrsqrt.pop %v5655
        %v5699 = vmul.f32 %v5698, %v5655
        %v5700 = vmul.f32 %v5699, %v5698
        %v5701 = vmul.f32 0.5, %v5700
        %v5702 = vsub.f32 1.5, %v5701
        %v5703 = vmul.f32 %v5698, %v5702
        %vm5704 = vweird.f32 %v5655
        %vm5705 = vweird.f32 %v5698
        %vm5706 = vmor %vm5704, %vm5705
        %v5707 = vsel %vm5706, %v5698, %v5703
        %v5708 = vrsqrt.pop %v5656
        %v5709 = vmul.f32 %v5708, %v5656
        %v5710 = vmul.f32 %v5709, %v5708
        %v5711 = vmul.f32 0.5, %v5710
        %v5712 = vsub.f32 1.5, %v5711
        %v5713 = vmul.f32 %v5708, %v5712
        %vm5714 = vweird.f32 %v5656
        %vm5715 = vweird.f32 %v5708
        %vm5716 = vmor %vm5714, %vm5715
        %v5717 = vsel %vm5716, %v5708, %v5713
        %v5718 = vrsqrt.pop %v5657
        %v5719 = vmul.f32 %v5718, %v5657
        %v5720 = vmul.f32 %v5719, %v5718
        %v5721 = vmul.f32 0.5, %v5720
        %v5722 = vsub.f32 1.5, %v5721
        %v5723 = vmul.f32 %v5718, %v5722
        %vm5724 = vweird.f32 %v5657
        %vm5725 = vweird.f32 %v5718
        %vm5726 = vmor %vm5724, %vm5725
        %v5727 = vsel %vm5726, %v5718, %v5723
        %v5728 = vrsqrt.pop %v5658
        %v5729 = vmul.f32 %v5728, %v5658
        %v5730 = vmul.f32 %v5729, %v5728
        %v5731 = vmul.f32 0.5, %v5730
        %v5732 = vsub.f32 1.5, %v5731
        %v5733 = vmul.f32 %v5728, %v5732
        %vm5734 = vweird.f32 %v5658
        %vm5735 = vweird.f32 %v5728
        %vm5736 = vmor %vm5734, %vm5735
        %v5737 = vsel %vm5736, %v5728, %v5733
        %v5738 = vrsqrt.pop %v5659
        %v5739 = vmul.f32 %v5738, %v5659
        %v5740 = vmul.f32 %v5739, %v5738
        %v5741 = vmul.f32 0.5, %v5740
        %v5742 = vsub.f32 1.5, %v5741
        %v5743 = vmul.f32 %v5738, %v5742
        %vm5744 = vweird.f32 %v5659
        %vm5745 = vweird.f32 %v5738
        %vm5746 = vmor %vm5744, %vm5745
        %v5747 = vsel %vm5746, %v5738, %v5743
        %v5748 = vrsqrt.pop %v5660
        %v5749 = vmul.f32 %v5748, %v5660
        %v5750 = vmul.f32 %v5749, %v5748
        %v5751 = vmul.f32 0.5, %v5750
        %v5752 = vsub.f32 1.5, %v5751
        %v5753 = vmul.f32 %v5748, %v5752
        %vm5754 = vweird.f32 %v5660
        %vm5755 = vweird.f32 %v5748
        %vm5756 = vmor %vm5754, %vm5755
        %v5757 = vsel %vm5756, %v5748, %v5753
        %v5758 = vrsqrt.pop %v5661
        %v5759 = vmul.f32 %v5758, %v5661
        %v5760 = vmul.f32 %v5759, %v5758
        %v5761 = vmul.f32 0.5, %v5760
        %v5762 = vsub.f32 1.5, %v5761
        %v5763 = vmul.f32 %v5758, %v5762
        %vm5764 = vweird.f32 %v5661
        %vm5765 = vweird.f32 %v5758
        %vm5766 = vmor %vm5764, %vm5765
        %v5767 = vsel %vm5766, %v5758, %v5763
        %v5768 = vrsqrt.pop %v5662
        %v5769 = vmul.f32 %v5768, %v5662
        %v5770 = vmul.f32 %v5769, %v5768
        %v5771 = vmul.f32 0.5, %v5770
        %v5772 = vsub.f32 1.5, %v5771
        %v5773 = vmul.f32 %v5768, %v5772
        %vm5774 = vweird.f32 %v5662
        %vm5775 = vweird.f32 %v5768
        %vm5776 = vmor %vm5774, %vm5775
        %v5777 = vsel %vm5776, %v5768, %v5773
        %v5778 = vrsqrt.pop %v5663
        %v5779 = vmul.f32 %v5778, %v5663
        %v5780 = vmul.f32 %v5779, %v5778
        %v5781 = vmul.f32 0.5, %v5780
        %v5782 = vsub.f32 1.5, %v5781
        %v5783 = vmul.f32 %v5778, %v5782
        %vm5784 = vweird.f32 %v5663
        %vm5785 = vweird.f32 %v5778
        %vm5786 = vmor %vm5784, %vm5785
        %v5787 = vsel %vm5786, %v5778, %v5783
        %v5788 = vrsqrt.pop %v5664
        %v5789 = vmul.f32 %v5788, %v5664
        %v5790 = vmul.f32 %v5789, %v5788
        %v5791 = vmul.f32 0.5, %v5790
        %v5792 = vsub.f32 1.5, %v5791
        %v5793 = vmul.f32 %v5788, %v5792
        %vm5794 = vweird.f32 %v5664
        %vm5795 = vweird.f32 %v5788
        %vm5796 = vmor %vm5794, %vm5795
        %v5797 = vsel %vm5796, %v5788, %v5793
        %v5798 = vrsqrt.pop %v5665
        %v5799 = vmul.f32 %v5798, %v5665
        %v5800 = vmul.f32 %v5799, %v5798
        %v5801 = vmul.f32 0.5, %v5800
        %v5802 = vsub.f32 1.5, %v5801
        %v5803 = vmul.f32 %v5798, %v5802
        %vm5804 = vweird.f32 %v5665
        %vm5805 = vweird.f32 %v5798
        %vm5806 = vmor %vm5804, %vm5805
        %v5807 = vsel %vm5806, %v5798, %v5803
        %v5808 = vrsqrt.pop %v5666
        %v5809 = vmul.f32 %v5808, %v5666
        %v5810 = vmul.f32 %v5809, %v5808
        %v5811 = vmul.f32 0.5, %v5810
        %v5812 = vsub.f32 1.5, %v5811
        %v5813 = vmul.f32 %v5808, %v5812
        %vm5814 = vweird.f32 %v5666
        %vm5815 = vweird.f32 %v5808
        %vm5816 = vmor %vm5814, %vm5815
        %v5817 = vsel %vm5816, %v5808, %v5813
        %v5818 = vrsqrt.pop %v5667
        %v5819 = vmul.f32 %v5818, %v5667
        %v5820 = vmul.f32 %v5819, %v5818
        %v5821 = vmul.f32 0.5, %v5820
        %v5822 = vsub.f32 1.5, %v5821
        %v5823 = vmul.f32 %v5818, %v5822
        %vm5824 = vweird.f32 %v5667
        %vm5825 = vweird.f32 %v5818
        %vm5826 = vmor %vm5824, %vm5825
        %v5827 = vsel %vm5826, %v5818, %v5823
        %v5828 = vmul.f32 %v5572, %v5677
        %v5829 = vmul.f32 %v5573, %v5687
        %v5830 = vmul.f32 %v5574, %v5697
        %v5831 = vmul.f32 %v5575, %v5707
        %v5832 = vmul.f32 %v5576, %v5717
        %v5833 = vmul.f32 %v5577, %v5727
        %v5834 = vmul.f32 %v5578, %v5737
        %v5835 = vmul.f32 %v5579, %v5747
        %v5836 = vmul.f32 %v5580, %v5757
        %v5837 = vmul.f32 %v5581, %v5767
        %v5838 = vmul.f32 %v5582, %v5777
        %v5839 = vmul.f32 %v5583, %v5787
        %v5840 = vmul.f32 %v5584, %v5797
        %v5841 = vmul.f32 %v5585, %v5807
        %v5842 = vmul.f32 %v5586, %v5817
        %v5843 = vmul.f32 %v5587, %v5827
        %v5844 = vld [vmem:[%s7] sm:$0x1]
        %v5846 = vperm.slane %v5844, 0
        %v5848 = vmul.f32 %v5828, %v5846
        %v5849 = vmul.f32 %v5829, %v5846
        %v5850 = vmul.f32 %v5830, %v5846
        %v5851 = vmul.f32 %v5831, %v5846
        %v5852 = vmul.f32 %v5832, %v5846
        %v5853 = vmul.f32 %v5833, %v5846
        %v5854 = vmul.f32 %v5834, %v5846
        %v5855 = vmul.f32 %v5835, %v5846
        %v5856 = vmul.f32 %v5836, %v5846
        %v5857 = vmul.f32 %v5837, %v5846
        %v5858 = vmul.f32 %v5838, %v5846
        %v5859 = vmul.f32 %v5839, %v5846
        %v5860 = vmul.f32 %v5840, %v5846
        %v5861 = vmul.f32 %v5841, %v5846
        %v5862 = vmul.f32 %v5842, %v5846
        %v5863 = vmul.f32 %v5843, %v5846
        %v5864 = vld [vmem:[%s8] sm:$0x1]
        %v5866 = vperm.slane %v5864, 0
        %v5868 = vadd.f32 %v5848, %v5866
        %v5869 = vadd.f32 %v5849, %v5866
        %v5870 = vadd.f32 %v5850, %v5866
        %v5871 = vadd.f32 %v5851, %v5866
        %v5872 = vadd.f32 %v5852, %v5866
        %v5873 = vadd.f32 %v5853, %v5866
        %v5874 = vadd.f32 %v5854, %v5866
        %v5875 = vadd.f32 %v5855, %v5866
        %v5876 = vadd.f32 %v5856, %v5866
        %v5877 = vadd.f32 %v5857, %v5866
        %v5878 = vadd.f32 %v5858, %v5866
        %v5879 = vadd.f32 %v5859, %v5866
        %v5880 = vadd.f32 %v5860, %v5866
        %v5881 = vadd.f32 %v5861, %v5866
        %v5882 = vadd.f32 %v5862, %v5866
        %v5883 = vadd.f32 %v5863, %v5866
        %v5884 = vpack.c.bf16 %v5868, %v5868
        %v5885 = vpack.c.bf16 %v5869, %v5869
        %v5886 = vpack.c.bf16 %v5870, %v5870
        %v5887 = vpack.c.bf16 %v5871, %v5871
        %v5888 = vpack.c.bf16 %v5872, %v5872
        %v5889 = vpack.c.bf16 %v5873, %v5873
        %v5890 = vpack.c.bf16 %v5874, %v5874
        %v5891 = vpack.c.bf16 %v5875, %v5875
        %v5892 = vpack.c.bf16 %v5876, %v5876
        %v5893 = vpack.c.bf16 %v5877, %v5877
        %v5894 = vpack.c.bf16 %v5878, %v5878
        %v5895 = vpack.c.bf16 %v5879, %v5879
        %v5896 = vpack.c.bf16 %v5880, %v5880
        %v5897 = vpack.c.bf16 %v5881, %v5881
        %v5898 = vpack.c.bf16 %v5882, %v5882
        %v5899 = vpack.c.bf16 %v5883, %v5883
        %5900 = vst [vmem:[%s405] sm:$0xf] %v5884
        %5901 = vst [vmem:[%s405 + $0x4] sm:$0xf] %v5885
        %5902 = vst [vmem:[%s405 + $0x8] sm:$0xf] %v5886
        %5903 = vst [vmem:[%s405 + $0xc] sm:$0xf] %v5887
        %5904 = vst [vmem:[%s405 + $0x10] sm:$0xf] %v5888
        %5905 = vst [vmem:[%s405 + $0x14] sm:$0xf] %v5889
        %5906 = vst [vmem:[%s405 + $0x18] sm:$0xf] %v5890
        %5907 = vst [vmem:[%s405 + $0x1c] sm:$0xf] %v5891
        %5908 = vst [vmem:[%s405 + $0x20] sm:$0xf] %v5892
        %5909 = vst [vmem:[%s405 + $0x24] sm:$0xf] %v5893
        %5910 = vst [vmem:[%s405 + $0x28] sm:$0xf] %v5894
        %5911 = vst [vmem:[%s405 + $0x2c] sm:$0xf] %v5895
        %5912 = vst [vmem:[%s405 + $0x30] sm:$0xf] %v5896
        %5913 = vst [vmem:[%s405 + $0x34] sm:$0xf] %v5897
        %5914 = vst [vmem:[%s405 + $0x38] sm:$0xf] %v5898
        %5915 = vst [vmem:[%s405 + $0x3c] sm:$0xf] %v5899
      $region64: #{_forward_device.6} parent=55 // pred_fallthru
        _
      %p5916 = scmp.lt.s32.totalorder %s24, 1
      %s5917 = scalar_select %p5916, %s24, 1
      %s5918 = smul.addr %s5917, 16
      %s5919 = smul.addr %s5918, 4
      %s5920 = scalar_lea.vmem %s9, %s5919
      // Predicated region
      $region65: #{_forward_device.6} parent=55 // pred_check
        %p5921 = pneg %p258
      $region66: #{_forward_device.6} parent=55 // pred_check_branch
        %5923 = sbr.rel (%p5921) target = $region68
      $region67: #{_forward_device.6} parent=55 // pred_region
        _
      $region68: #{_forward_device.6} parent=55 // pred_fallthru
        _
    $region56: #{_forward_device.6} parent=5 // pred_fallthru
      _
    %p5924 = scmp.le.s32.totalorder 2, %s15
    // Predicated region
    $region69: #{_forward_device.6} parent=5 // pred_check
      %p5925 = pneg %p5924
    $region70: #{_forward_device.6} parent=5 // pred_check_branch
      %5927 = sbr.rel (%p5925) target = $region72
    $region71: #{_forward_device.6} parent=5 // pred_region
      %s5928 = ssub.s32 %s15, 2
      // Predicated region
      $region73: #{_forward_device.6} parent=71 // pred_check
        %p5929 = pneg %p264
      $region74: #{_forward_device.6} parent=71 // pred_check_branch
        %5931 = sbr.rel (%p5929) target = $region76
      $region75: #{_forward_device.6} parent=71 // pred_region
        %p5932 = scmp.lt.s32.totalorder %s26, 1
        %s5933 = scalar_select %p5932, %s26, 1
        %s5934 = smul.addr %s5933, 16
        %s5935 = smul.addr %s5934, 4
        %s5936 = scalar_lea.vmem %s9, %s5935
      $region76: #{_forward_device.6} parent=71 // pred_fallthru
        _
    $region72: #{_forward_device.6} parent=5 // pred_fallthru
      _
  $region6: #{_forward_device.6} parent=0 // loop_footer
    %s19 = sadd.s32 1, %s15
  $region7: #{_forward_device.6} parent=0 // loop_footer_branch
    %14 = sbr.rel target = $region3
  $region8: #{_forward_device.6} parent=0 // loop_exit
    _

</llo_original>
